<compile_context>
chip_gen: v6e
topology: v6e:2x2x1
jax: 0.10.0
libtpu: 0.0.40
codegen_flags: <defaults>
</compile_context>

<pallas_src>
import numpy as np
import jax
import jax.numpy as jnp
from jax.experimental import pallas as pl
from jax.experimental.pallas import tpu as pltpu

NEG_SLOPE = 0.01  # F.leaky_relu default

# padded feature widths
P_IN = 64      # 48 (3*16 pose coords) -> 64
H1 = 128       # 100 -> 128
H2 = 1024      # 1000 -> 1024
PSI = 256      # 16*16 flattened Psi (already lane-aligned)
KCS3 = 768     # 3 coords * 256
OUT_PAD = 128  # 1 -> 128 (lane-dense output slab; wrapper slices [:, :1])


def _leaky_relu(x):
    return jnp.where(x >= 0, x, NEG_SLOPE * x)


# ---------------------------------------------------------------------------
# Pallas kernel: full critic forward for one batch tile of TN rows.
# ---------------------------------------------------------------------------
def critic_kernel(poses_ref, cblk_ref, r_ref, t_ref,
                  w1, b1, w2, b2, w3, b3, w4, b4,
                  w5, b5, w6, b6, w7, b7,
                  w8a, w8b, b8, w9, b9,
                  out_ref):
    def dense(x, w_ref, b_ref):
        # bf16 x bf16 matmul with f32 accumulation; bias added in f32.
        return (jnp.dot(x.astype(jnp.bfloat16), w_ref[...],
                        preferred_element_type=jnp.float32) + b_ref[...])

    x_in = poses_ref[...]                                   # (TN, 64) bf16

    # ---------------- pose MLP branch ----------------
    x1 = _leaky_relu(dense(x_in, w1, b1))                   # (TN, 128) f32
    x = _leaky_relu(dense(x1, w2, b2))
    x = dense(x, w3, b3)
    x = _leaky_relu(x + x1)
    x = dense(x, w4, b4)                                    # (TN, 128) f32

    # ---------------- KCS branch ----------------
    # B_flat[n, c*16+j] = sum_i poses[n, c*16+i] * C[i, j]   (block-diag C)
    # prod[n, c*256+i*16+j] = B[n,c,i] * B[n,c,j]            (repeat/tile selectors)
    # psi[n, i*16+j] = sum_c prod[n, c*256+i*16+j]           (lane-aligned chunk adds)
    bflat = jnp.dot(x_in, cblk_ref[...],
                    preferred_element_type=jnp.float32)     # (TN, 64) f32
    bq = bflat.astype(jnp.bfloat16)
    rep = jnp.dot(bq, r_ref[...], preferred_element_type=jnp.float32)  # (TN, 768)
    til = jnp.dot(bq, t_ref[...], preferred_element_type=jnp.float32)  # (TN, 768)
    prod = rep * til
    psi = prod[:, 0:256] + prod[:, 256:512] + prod[:, 512:768]          # (TN, 256)

    p = _leaky_relu(dense(psi, w5, b5))                     # (TN, 1024)
    xp = _leaky_relu(dense(p, w6, b6))
    xp = dense(xp, w7, b7)
    xp = xp + p

    # ---------------- merge + head ----------------
    # fc8(concat([x, xp])) == x @ W8[:100] + xp @ W8[100:] + b8
    h = (jnp.dot(x.astype(jnp.bfloat16), w8a[...], preferred_element_type=jnp.float32)
         + jnp.dot(xp.astype(jnp.bfloat16), w8b[...], preferred_element_type=jnp.float32)
         + b8[...])
    h = _leaky_relu(h)
    out_ref[...] = (jnp.dot(h.astype(jnp.bfloat16), w9[...],
                            preferred_element_type=jnp.float32) + b9[...])


# ---------------------------------------------------------------------------
# Wrapper
# ---------------------------------------------------------------------------
def critic_forward(poses, kp, *, block_n=256):
    n = poses.shape[0]
    # Don't over-tile small batches: one block (rounded to 8 sublanes) if N is small.
    tn = block_n if n >= block_n else max(8, ((n + 7) // 8) * 8)
    n_blocks = pl.cdiv(n, tn)
    n_pad = n_blocks * tn

    poses_p = jnp.zeros((n_pad, P_IN), jnp.bfloat16)
    poses_p = poses_p.at[:n, :48].set(poses.astype(jnp.bfloat16))

    consts = [kp["C_blk"], kp["R"], kp["T"]]
    weights = [kp["w1"], kp["b1"], kp["w2"], kp["b2"], kp["w3"], kp["b3"],
               kp["w4"], kp["b4"], kp["w5"], kp["b5"], kp["w6"], kp["b6"],
               kp["w7"], kp["b7"], kp["w8a"], kp["w8b"], kp["b8"],
               kp["w9"], kp["b9"]]
    args = [poses_p] + consts + weights

    def resident(a):  # VMEM-resident: same block every grid step -> fetched once
        return pl.BlockSpec(a.shape, lambda i: (0, 0))

    in_specs = ([pl.BlockSpec((tn, P_IN), lambda i: (i, 0))]
                + [resident(a) for a in args[1:]])
    out_specs = pl.BlockSpec((tn, OUT_PAD), lambda i: (i, 0))

    mat_keys = ("w1", "w2", "w3", "w4", "w5", "w6", "w7", "w8a", "w8b", "w9")
    macs = sum(int(a.shape[0]) * int(a.shape[1])
               for a in consts + [kp[k] for k in mat_keys])
    bytes_accessed = (sum(int(a.size) * a.dtype.itemsize for a in args)
                      + n_pad * OUT_PAD * 4)
    cost = pl.CostEstimate(flops=2 * n_pad * macs, transcendentals=0,
                           bytes_accessed=bytes_accessed)

    out = pl.pallas_call(
        critic_kernel,
        out_shape=jax.ShapeDtypeStruct((n_pad, OUT_PAD), jnp.float32),
        grid=(n_blocks,),
        in_specs=in_specs,
        out_specs=out_specs,
        compiler_params=pltpu.CompilerParams(
            dimension_semantics=("parallel",),
            vmem_limit_bytes=48 * 1024 * 1024),
        cost_estimate=cost,
    )(*args)
    return out[:n, :1]


# ---------------------------------------------------------------------------
# Parameters
# ---------------------------------------------------------------------------
_C_ROWS = [
    [1.0, 0, 0, 0, 0, 0, 0, 0, 0, 0, 0, 0, 0, 1, 1, 0],
    [-1, 1, 0, 0, 0, 0, 0, 0, 0, 0, 0, 0, 0, 0, 0, 0],
    [0, -1, 0, 0, 0, 0, 0, 0, 0, 0, 0, 0, 0, 0, 0, 0],
    [0, 0, 1, 0, 0, 0, 0, 0, 0, 0, 0, 0, 0, -1, 0, 1],
    [0, 0, -1, 1, 0, 0, 0, 0, 0, 0, 0, 0, 0, 0, 0, 0],
    [0, 0, 0, -1, 0, 0, 0, 0, 0, 0, 0, 0, 0, 0, 0, 0],
    [0, 0, 0, 0, 1, 0, 0, 0, 0, 0, 0, 0, 0, 0, -1, -1],
    [0, 0, 0, 0, -1, 1, 0, 1, 0, 0, 1, 0, 0, 0, 0, 0],
    [0, 0, 0, 0, 0, -1, 1, 0, 0, 0, 0, 0, 0, 0, 0, 0],
    [0, 0, 0, 0, 0, 0, -1, 0, 0, 0, 0, 0, 0, 0, 0, 0],
    [0, 0, 0, 0, 0, 0, 0, -1, 1, 0, 0, 0, 0, 0, 0, 0],
    [0, 0, 0, 0, 0, 0, 0, 0, -1, 1, 0, 0, 0, 0, 0, 0],
    [0, 0, 0, 0, 0, 0, 0, 0, 0, -1, 0, 0, 0, 0, 0, 0],
    [0, 0, 0, 0, 0, 0, 0, 0, 0, 0, -1, 1, 0, 0, 0, 0],
    [0, 0, 0, 0, 0, 0, 0, 0, 0, 0, 0, -1, 1, 0, 0, 0],
    [0, 0, 0, 0, 0, 0, 0, 0, 0, 0, 0, 0, -1, 0, 0, 0],
]


def make_params(key):
    """f32 master parameters (nn.Linear-style init, weights pre-transposed to (in, out))."""
    layer_dims = [(48, 100), (100, 100), (100, 100), (100, 100),
                  (256, 1000), (1000, 1000), (1000, 1000), (1100, 100), (100, 1)]
    params = {}
    keys = jax.random.split(key, 2 * len(layer_dims))
    for idx, (fan_in, fan_out) in enumerate(layer_dims):
        bound = 1.0 / np.sqrt(fan_in)
        w = jax.random.uniform(keys[2 * idx], (fan_in, fan_out),
                               jnp.float32, -bound, bound)
        b = jax.random.uniform(keys[2 * idx + 1], (1, fan_out),
                               jnp.float32, -bound, bound)
        i = idx + 1
        if i == 8:  # split fc8: rows 0:100 multiply x, rows 100:1100 multiply x_psi
            params["w8a"] = w[:100, :]
            params["w8b"] = w[100:, :]
            params["b8"] = b
        else:
            params[f"w{i}"] = w
            params[f"b{i}"] = b
    params["C"] = jnp.asarray(np.array(_C_ROWS, dtype=np.float32))
    return params


def _pad2d(x, rows, cols, dtype):
    out = np.zeros((rows, cols), np.float32)
    xa = np.asarray(x, np.float32)
    out[:xa.shape[0], :xa.shape[1]] = xa
    return jnp.asarray(out, dtype=dtype)


def prepare_kernel_params(params):
    """Zero-pad to MXU-friendly sizes; weights/constants in bf16, biases in f32."""
    kp = {}
    wpad = {"w1": (P_IN, H1), "w2": (H1, H1), "w3": (H1, H1), "w4": (H1, H1),
            "w5": (PSI, H2), "w6": (H2, H2), "w7": (H2, H2),
            "w8a": (H1, H1), "w8b": (H2, H1), "w9": (H1, OUT_PAD)}
    bpad = {"b1": H1, "b2": H1, "b3": H1, "b4": H1,
            "b5": H2, "b6": H2, "b7": H2, "b8": H1, "b9": OUT_PAD}
    for k, (r, c) in wpad.items():
        kp[k] = _pad2d(params[k], r, c, jnp.bfloat16)
    for k, c in bpad.items():
        kp[k] = _pad2d(params[k], 1, c, jnp.float32)

    C = np.asarray(params["C"], np.float32)               # (16, 16), entries in {0, +-1}
    cblk = np.zeros((P_IN, P_IN), np.float32)
    for c in range(3):
        cblk[c * 16:(c + 1) * 16, c * 16:(c + 1) * 16] = C
    kp["C_blk"] = jnp.asarray(cblk, jnp.bfloat16)

    # repeat / tile selectors:
    #   (Bflat @ R)[n, c*256+i*16+j] = Bflat[n, c*16+i]
    #   (Bflat @ T)[n, c*256+i*16+j] = Bflat[n, c*16+j]
    R = np.zeros((P_IN, KCS3), np.float32)
    T = np.zeros((P_IN, KCS3), np.float32)
    for c in range(3):
        for i in range(16):
            R[c * 16 + i, c * 256 + i * 16: c * 256 + (i + 1) * 16] = 1.0
            T[c * 16 + i, c * 256 + i: c * 256 + 256: 16] = 1.0
    kp["R"] = jnp.asarray(R, jnp.bfloat16)
    kp["T"] = jnp.asarray(T, jnp.bfloat16)
    return kp


# ---------------------------------------------------------------------------
# Pure-JAX reference (mirrors the PyTorch forward); mirror_bf16=True applies the
# same bf16 quantization as the kernel (f32 accumulation) for tight checking.
# ---------------------------------------------------------------------------
def reference_forward(poses, params, *, mirror_bf16):
    cast = (lambda v: v.astype(jnp.bfloat16)) if mirror_bf16 else (lambda v: v)
    lrelu = lambda v: jnp.where(v >= 0, v, NEG_SLOPE * v)

    def dense(x, w, b):
        return jnp.dot(cast(x), cast(w), preferred_element_type=jnp.float32) + b

    x1 = lrelu(dense(poses, params["w1"], params["b1"]))
    x = lrelu(dense(x1, params["w2"], params["b2"]))
    x = dense(x, params["w3"], params["b3"])
    x = lrelu(x + x1)
    x = dense(x, params["w4"], params["b4"])

    pq = cast(poses).astype(jnp.float32).reshape(-1, 3, 16)
    B = jnp.einsum("nci,ij->ncj", pq, params["C"])
    Bq = cast(B).astype(jnp.float32)
    Psi = jnp.einsum("nci,ncj->nij", Bq, Bq)                # KCSLayer output
    psi = Psi.reshape(Psi.shape[0], -1)

    p = lrelu(dense(psi, params["w5"], params["b5"]))
    xp = lrelu(dense(p, params["w6"], params["b6"]))
    xp = dense(xp, params["w7"], params["b7"])
    xp = xp + p

    cat = jnp.concatenate([x, xp], axis=1)
    w8 = jnp.concatenate([params["w8a"], params["w8b"]], axis=0)
    h = lrelu(dense(cat, w8, params["b8"]))
    return dense(h, params["w9"], params["b9"])


if __name__ == "__main__":
    key = jax.random.PRNGKey(0)
    pkey, xkey = jax.random.split(key)
    params = make_params(pkey)
    kparams = prepare_kernel_params(params)

    N = 16
    poses = jax.random.normal(xkey, (N, 48), jnp.float32)   # (batch, 3*16)

    out = jax.block_until_ready(critic_forward(poses, kparams))
    assert out.shape == (N, 1)

    # tight check vs. a reference that mirrors the kernel's bf16 quantization
    ref_q = reference_forward(poses, params, mirror_bf16=True)
    np.testing.assert_allclose(np.asarray(out), np.asarray(ref_q), rtol=5e-3, atol=5e-3)

    # loose check vs. the full-f32 reference (documents the bf16 precision tradeoff)
    ref_f32 = reference_forward(poses, params, mirror_bf16=False)
    np.testing.assert_allclose(np.asarray(out), np.asarray(ref_f32), rtol=1e-1, atol=1e-1)

    print("KERNEL_OK")
</pallas_src>

<mosaic_0001>
module attributes {stable_mosaic.version = 11 : i64} {
  func.func @critic_kernel(%arg0: i32, %arg1: memref<16x64xbf16, #tpu.memory_space<vmem>>, %arg2: memref<64x64xbf16, #tpu.memory_space<vmem>>, %arg3: memref<64x768xbf16, #tpu.memory_space<vmem>>, %arg4: memref<64x768xbf16, #tpu.memory_space<vmem>>, %arg5: memref<64x128xbf16, #tpu.memory_space<vmem>>, %arg6: memref<1x128xf32, #tpu.memory_space<vmem>>, %arg7: memref<128x128xbf16, #tpu.memory_space<vmem>>, %arg8: memref<1x128xf32, #tpu.memory_space<vmem>>, %arg9: memref<128x128xbf16, #tpu.memory_space<vmem>>, %arg10: memref<1x128xf32, #tpu.memory_space<vmem>>, %arg11: memref<128x128xbf16, #tpu.memory_space<vmem>>, %arg12: memref<1x128xf32, #tpu.memory_space<vmem>>, %arg13: memref<256x1024xbf16, #tpu.memory_space<vmem>>, %arg14: memref<1x1024xf32, #tpu.memory_space<vmem>>, %arg15: memref<1024x1024xbf16, #tpu.memory_space<vmem>>, %arg16: memref<1x1024xf32, #tpu.memory_space<vmem>>, %arg17: memref<1024x1024xbf16, #tpu.memory_space<vmem>>, %arg18: memref<1x1024xf32, #tpu.memory_space<vmem>>, %arg19: memref<128x128xbf16, #tpu.memory_space<vmem>>, %arg20: memref<1024x128xbf16, #tpu.memory_space<vmem>>, %arg21: memref<1x128xf32, #tpu.memory_space<vmem>>, %arg22: memref<128x128xbf16, #tpu.memory_space<vmem>>, %arg23: memref<1x128xf32, #tpu.memory_space<vmem>>, %arg24: memref<16x128xf32, #tpu.memory_space<vmem>>) attributes {dimension_semantics = [#tpu.dimension_semantics<parallel>], iteration_bounds = array<i64: 1>, scalar_prefetch = 0 : i64, scratch_operands = 0 : i64, tpu.core_type = #tpu.core_type<tc>, window_params = [{transform_indices = @transform_0, window_bounds = array<i64: 16, 64>}, {pipeline_mode = #tpu.pipeline_mode<synchronous>, transform_indices = @transform_1, window_bounds = array<i64: 64, 64>}, {pipeline_mode = #tpu.pipeline_mode<synchronous>, transform_indices = @transform_2, window_bounds = array<i64: 64, 768>}, {pipeline_mode = #tpu.pipeline_mode<synchronous>, transform_indices = @transform_3, window_bounds = array<i64: 64, 768>}, {pipeline_mode = #tpu.pipeline_mode<synchronous>, transform_indices = @transform_4, window_bounds = array<i64: 64, 128>}, {pipeline_mode = #tpu.pipeline_mode<synchronous>, transform_indices = @transform_5, window_bounds = array<i64: 1, 128>}, {pipeline_mode = #tpu.pipeline_mode<synchronous>, transform_indices = @transform_6, window_bounds = array<i64: 128, 128>}, {pipeline_mode = #tpu.pipeline_mode<synchronous>, transform_indices = @transform_7, window_bounds = array<i64: 1, 128>}, {pipeline_mode = #tpu.pipeline_mode<synchronous>, transform_indices = @transform_8, window_bounds = array<i64: 128, 128>}, {pipeline_mode = #tpu.pipeline_mode<synchronous>, transform_indices = @transform_9, window_bounds = array<i64: 1, 128>}, {pipeline_mode = #tpu.pipeline_mode<synchronous>, transform_indices = @transform_10, window_bounds = array<i64: 128, 128>}, {pipeline_mode = #tpu.pipeline_mode<synchronous>, transform_indices = @transform_11, window_bounds = array<i64: 1, 128>}, {pipeline_mode = #tpu.pipeline_mode<synchronous>, transform_indices = @transform_12, window_bounds = array<i64: 256, 1024>}, {pipeline_mode = #tpu.pipeline_mode<synchronous>, transform_indices = @transform_13, window_bounds = array<i64: 1, 1024>}, {pipeline_mode = #tpu.pipeline_mode<synchronous>, transform_indices = @transform_14, window_bounds = array<i64: 1024, 1024>}, {pipeline_mode = #tpu.pipeline_mode<synchronous>, transform_indices = @transform_15, window_bounds = array<i64: 1, 1024>}, {pipeline_mode = #tpu.pipeline_mode<synchronous>, transform_indices = @transform_16, window_bounds = array<i64: 1024, 1024>}, {pipeline_mode = #tpu.pipeline_mode<synchronous>, transform_indices = @transform_17, window_bounds = array<i64: 1, 1024>}, {pipeline_mode = #tpu.pipeline_mode<synchronous>, transform_indices = @transform_18, window_bounds = array<i64: 128, 128>}, {pipeline_mode = #tpu.pipeline_mode<synchronous>, transform_indices = @transform_19, window_bounds = array<i64: 1024, 128>}, {pipeline_mode = #tpu.pipeline_mode<synchronous>, transform_indices = @transform_20, window_bounds = array<i64: 1, 128>}, {pipeline_mode = #tpu.pipeline_mode<synchronous>, transform_indices = @transform_21, window_bounds = array<i64: 128, 128>}, {pipeline_mode = #tpu.pipeline_mode<synchronous>, transform_indices = @transform_22, window_bounds = array<i64: 1, 128>}, {transform_indices = @transform_23, window_bounds = array<i64: 16, 128>}]} {
    %c0 = arith.constant 0 : index
    %c0_0 = arith.constant 0 : index
    %0 = vector.load %arg1[%c0, %c0_0] : memref<16x64xbf16, #tpu.memory_space<vmem>>, vector<16x64xbf16>
    %c0_1 = arith.constant 0 : index
    %c0_2 = arith.constant 0 : index
    %1 = vector.load %arg5[%c0_1, %c0_2] : memref<64x128xbf16, #tpu.memory_space<vmem>>, vector<64x128xbf16>
    %cst = arith.constant dense<0.000000e+00> : vector<16x128xf32>
    %2 = tpu.matmul %0, %1, %cst {dimension_numbers = #tpu.dot_dimension_numbers<[1], [0], [0], [1], [0, 0, 1, 1], [], []>} : vector<16x64xbf16>, vector<64x128xbf16>, vector<16x128xf32> -> vector<16x128xf32>
    %c0_3 = arith.constant 0 : index
    %c0_4 = arith.constant 0 : index
    %3 = vector.load %arg6[%c0_3, %c0_4] : memref<1x128xf32, #tpu.memory_space<vmem>>, vector<1x128xf32>
    %4 = vector.broadcast %3 : vector<1x128xf32> to vector<16x128xf32>
    %5 = arith.addf %2, %4 : vector<16x128xf32>
    %cst_5 = arith.constant 0.000000e+00 : f32
    %6 = vector.broadcast %cst_5 : f32 to vector<16x128xf32>
    %7 = arith.cmpf oge, %5, %6 : vector<16x128xf32>
    %cst_6 = arith.constant 0.00999999977 : f32
    %8 = vector.broadcast %cst_6 : f32 to vector<16x128xf32>
    %9 = arith.mulf %8, %5 : vector<16x128xf32>
    %10 = arith.select %7, %5, %9 : vector<16x128xi1>, vector<16x128xf32>
    %11 = arith.truncf %10 : vector<16x128xf32> to vector<16x128xbf16>
    %c0_7 = arith.constant 0 : index
    %c0_8 = arith.constant 0 : index
    %12 = vector.load %arg7[%c0_7, %c0_8] : memref<128x128xbf16, #tpu.memory_space<vmem>>, vector<128x128xbf16>
    %cst_9 = arith.constant dense<0.000000e+00> : vector<16x128xf32>
    %13 = tpu.matmul %11, %12, %cst_9 {dimension_numbers = #tpu.dot_dimension_numbers<[1], [0], [0], [1], [0, 0, 1, 1], [], []>} : vector<16x128xbf16>, vector<128x128xbf16>, vector<16x128xf32> -> vector<16x128xf32>
    %c0_10 = arith.constant 0 : index
    %c0_11 = arith.constant 0 : index
    %14 = vector.load %arg8[%c0_10, %c0_11] : memref<1x128xf32, #tpu.memory_space<vmem>>, vector<1x128xf32>
    %15 = vector.broadcast %14 : vector<1x128xf32> to vector<16x128xf32>
    %16 = arith.addf %13, %15 : vector<16x128xf32>
    %cst_12 = arith.constant 0.000000e+00 : f32
    %17 = vector.broadcast %cst_12 : f32 to vector<16x128xf32>
    %18 = arith.cmpf oge, %16, %17 : vector<16x128xf32>
    %cst_13 = arith.constant 0.00999999977 : f32
    %19 = vector.broadcast %cst_13 : f32 to vector<16x128xf32>
    %20 = arith.mulf %19, %16 : vector<16x128xf32>
    %21 = arith.select %18, %16, %20 : vector<16x128xi1>, vector<16x128xf32>
    %22 = arith.truncf %21 : vector<16x128xf32> to vector<16x128xbf16>
    %c0_14 = arith.constant 0 : index
    %c0_15 = arith.constant 0 : index
    %23 = vector.load %arg9[%c0_14, %c0_15] : memref<128x128xbf16, #tpu.memory_space<vmem>>, vector<128x128xbf16>
    %cst_16 = arith.constant dense<0.000000e+00> : vector<16x128xf32>
    %24 = tpu.matmul %22, %23, %cst_16 {dimension_numbers = #tpu.dot_dimension_numbers<[1], [0], [0], [1], [0, 0, 1, 1], [], []>} : vector<16x128xbf16>, vector<128x128xbf16>, vector<16x128xf32> -> vector<16x128xf32>
    %c0_17 = arith.constant 0 : index
    %c0_18 = arith.constant 0 : index
    %25 = vector.load %arg10[%c0_17, %c0_18] : memref<1x128xf32, #tpu.memory_space<vmem>>, vector<1x128xf32>
    %26 = vector.broadcast %25 : vector<1x128xf32> to vector<16x128xf32>
    %27 = arith.addf %24, %26 : vector<16x128xf32>
    %28 = arith.addf %27, %10 : vector<16x128xf32>
    %cst_19 = arith.constant 0.000000e+00 : f32
    %29 = vector.broadcast %cst_19 : f32 to vector<16x128xf32>
    %30 = arith.cmpf oge, %28, %29 : vector<16x128xf32>
    %cst_20 = arith.constant 0.00999999977 : f32
    %31 = vector.broadcast %cst_20 : f32 to vector<16x128xf32>
    %32 = arith.mulf %31, %28 : vector<16x128xf32>
    %33 = arith.select %30, %28, %32 : vector<16x128xi1>, vector<16x128xf32>
    %34 = arith.truncf %33 : vector<16x128xf32> to vector<16x128xbf16>
    %c0_21 = arith.constant 0 : index
    %c0_22 = arith.constant 0 : index
    %35 = vector.load %arg11[%c0_21, %c0_22] : memref<128x128xbf16, #tpu.memory_space<vmem>>, vector<128x128xbf16>
    %cst_23 = arith.constant dense<0.000000e+00> : vector<16x128xf32>
    %36 = tpu.matmul %34, %35, %cst_23 {dimension_numbers = #tpu.dot_dimension_numbers<[1], [0], [0], [1], [0, 0, 1, 1], [], []>} : vector<16x128xbf16>, vector<128x128xbf16>, vector<16x128xf32> -> vector<16x128xf32>
    %c0_24 = arith.constant 0 : index
    %c0_25 = arith.constant 0 : index
    %37 = vector.load %arg12[%c0_24, %c0_25] : memref<1x128xf32, #tpu.memory_space<vmem>>, vector<1x128xf32>
    %38 = vector.broadcast %37 : vector<1x128xf32> to vector<16x128xf32>
    %39 = arith.addf %36, %38 : vector<16x128xf32>
    %c0_26 = arith.constant 0 : index
    %c0_27 = arith.constant 0 : index
    %40 = vector.load %arg2[%c0_26, %c0_27] : memref<64x64xbf16, #tpu.memory_space<vmem>>, vector<64x64xbf16>
    %cst_28 = arith.constant dense<0.000000e+00> : vector<16x64xf32>
    %41 = tpu.matmul %0, %40, %cst_28 {dimension_numbers = #tpu.dot_dimension_numbers<[1], [0], [0], [1], [0, 0, 1, 1], [], []>} : vector<16x64xbf16>, vector<64x64xbf16>, vector<16x64xf32> -> vector<16x64xf32>
    %42 = arith.truncf %41 : vector<16x64xf32> to vector<16x64xbf16>
    %c0_29 = arith.constant 0 : index
    %c0_30 = arith.constant 0 : index
    %43 = vector.load %arg3[%c0_29, %c0_30] : memref<64x768xbf16, #tpu.memory_space<vmem>>, vector<64x768xbf16>
    %cst_31 = arith.constant dense<0.000000e+00> : vector<16x768xf32>
    %44 = tpu.matmul %42, %43, %cst_31 {dimension_numbers = #tpu.dot_dimension_numbers<[1], [0], [0], [1], [0, 0, 1, 1], [], []>} : vector<16x64xbf16>, vector<64x768xbf16>, vector<16x768xf32> -> vector<16x768xf32>
    %c0_32 = arith.constant 0 : index
    %c0_33 = arith.constant 0 : index
    %45 = vector.load %arg4[%c0_32, %c0_33] : memref<64x768xbf16, #tpu.memory_space<vmem>>, vector<64x768xbf16>
    %cst_34 = arith.constant dense<0.000000e+00> : vector<16x768xf32>
    %46 = tpu.matmul %42, %45, %cst_34 {dimension_numbers = #tpu.dot_dimension_numbers<[1], [0], [0], [1], [0, 0, 1, 1], [], []>} : vector<16x64xbf16>, vector<64x768xbf16>, vector<16x768xf32> -> vector<16x768xf32>
    %47 = arith.mulf %44, %46 : vector<16x768xf32>
    %48 = vector.extract_strided_slice %47 {offsets = [0, 0], sizes = [16, 256], strides = [1, 1]} : vector<16x768xf32> to vector<16x256xf32>
    %49 = vector.extract_strided_slice %47 {offsets = [0, 256], sizes = [16, 256], strides = [1, 1]} : vector<16x768xf32> to vector<16x256xf32>
    %50 = arith.addf %48, %49 : vector<16x256xf32>
    %51 = vector.extract_strided_slice %47 {offsets = [0, 512], sizes = [16, 256], strides = [1, 1]} : vector<16x768xf32> to vector<16x256xf32>
    %52 = arith.addf %50, %51 : vector<16x256xf32>
    %53 = arith.truncf %52 : vector<16x256xf32> to vector<16x256xbf16>
    %c0_35 = arith.constant 0 : index
    %c0_36 = arith.constant 0 : index
    %54 = vector.load %arg13[%c0_35, %c0_36] : memref<256x1024xbf16, #tpu.memory_space<vmem>>, vector<256x1024xbf16>
    %cst_37 = arith.constant dense<0.000000e+00> : vector<16x1024xf32>
    %55 = tpu.matmul %53, %54, %cst_37 {dimension_numbers = #tpu.dot_dimension_numbers<[1], [0], [0], [1], [0, 0, 1, 1], [], []>} : vector<16x256xbf16>, vector<256x1024xbf16>, vector<16x1024xf32> -> vector<16x1024xf32>
    %c0_38 = arith.constant 0 : index
    %c0_39 = arith.constant 0 : index
    %56 = vector.load %arg14[%c0_38, %c0_39] : memref<1x1024xf32, #tpu.memory_space<vmem>>, vector<1x1024xf32>
    %57 = vector.broadcast %56 : vector<1x1024xf32> to vector<16x1024xf32>
    %58 = arith.addf %55, %57 : vector<16x1024xf32>
    %cst_40 = arith.constant 0.000000e+00 : f32
    %59 = vector.broadcast %cst_40 : f32 to vector<16x1024xf32>
    %60 = arith.cmpf oge, %58, %59 : vector<16x1024xf32>
    %cst_41 = arith.constant 0.00999999977 : f32
    %61 = vector.broadcast %cst_41 : f32 to vector<16x1024xf32>
    %62 = arith.mulf %61, %58 : vector<16x1024xf32>
    %63 = arith.select %60, %58, %62 : vector<16x1024xi1>, vector<16x1024xf32>
    %64 = arith.truncf %63 : vector<16x1024xf32> to vector<16x1024xbf16>
    %c0_42 = arith.constant 0 : index
    %c0_43 = arith.constant 0 : index
    %65 = vector.load %arg15[%c0_42, %c0_43] : memref<1024x1024xbf16, #tpu.memory_space<vmem>>, vector<1024x1024xbf16>
    %cst_44 = arith.constant dense<0.000000e+00> : vector<16x1024xf32>
    %66 = tpu.matmul %64, %65, %cst_44 {dimension_numbers = #tpu.dot_dimension_numbers<[1], [0], [0], [1], [0, 0, 1, 1], [], []>} : vector<16x1024xbf16>, vector<1024x1024xbf16>, vector<16x1024xf32> -> vector<16x1024xf32>
    %c0_45 = arith.constant 0 : index
    %c0_46 = arith.constant 0 : index
    %67 = vector.load %arg16[%c0_45, %c0_46] : memref<1x1024xf32, #tpu.memory_space<vmem>>, vector<1x1024xf32>
    %68 = vector.broadcast %67 : vector<1x1024xf32> to vector<16x1024xf32>
    %69 = arith.addf %66, %68 : vector<16x1024xf32>
    %cst_47 = arith.constant 0.000000e+00 : f32
    %70 = vector.broadcast %cst_47 : f32 to vector<16x1024xf32>
    %71 = arith.cmpf oge, %69, %70 : vector<16x1024xf32>
    %cst_48 = arith.constant 0.00999999977 : f32
    %72 = vector.broadcast %cst_48 : f32 to vector<16x1024xf32>
    %73 = arith.mulf %72, %69 : vector<16x1024xf32>
    %74 = arith.select %71, %69, %73 : vector<16x1024xi1>, vector<16x1024xf32>
    %75 = arith.truncf %74 : vector<16x1024xf32> to vector<16x1024xbf16>
    %c0_49 = arith.constant 0 : index
    %c0_50 = arith.constant 0 : index
    %76 = vector.load %arg17[%c0_49, %c0_50] : memref<1024x1024xbf16, #tpu.memory_space<vmem>>, vector<1024x1024xbf16>
    %cst_51 = arith.constant dense<0.000000e+00> : vector<16x1024xf32>
    %77 = tpu.matmul %75, %76, %cst_51 {dimension_numbers = #tpu.dot_dimension_numbers<[1], [0], [0], [1], [0, 0, 1, 1], [], []>} : vector<16x1024xbf16>, vector<1024x1024xbf16>, vector<16x1024xf32> -> vector<16x1024xf32>
    %c0_52 = arith.constant 0 : index
    %c0_53 = arith.constant 0 : index
    %78 = vector.load %arg18[%c0_52, %c0_53] : memref<1x1024xf32, #tpu.memory_space<vmem>>, vector<1x1024xf32>
    %79 = vector.broadcast %78 : vector<1x1024xf32> to vector<16x1024xf32>
    %80 = arith.addf %77, %79 : vector<16x1024xf32>
    %81 = arith.addf %80, %63 : vector<16x1024xf32>
    %82 = arith.truncf %39 : vector<16x128xf32> to vector<16x128xbf16>
    %c0_54 = arith.constant 0 : index
    %c0_55 = arith.constant 0 : index
    %83 = vector.load %arg19[%c0_54, %c0_55] : memref<128x128xbf16, #tpu.memory_space<vmem>>, vector<128x128xbf16>
    %cst_56 = arith.constant dense<0.000000e+00> : vector<16x128xf32>
    %84 = tpu.matmul %82, %83, %cst_56 {dimension_numbers = #tpu.dot_dimension_numbers<[1], [0], [0], [1], [0, 0, 1, 1], [], []>} : vector<16x128xbf16>, vector<128x128xbf16>, vector<16x128xf32> -> vector<16x128xf32>
    %85 = arith.truncf %81 : vector<16x1024xf32> to vector<16x1024xbf16>
    %c0_57 = arith.constant 0 : index
    %c0_58 = arith.constant 0 : index
    %86 = vector.load %arg20[%c0_57, %c0_58] : memref<1024x128xbf16, #tpu.memory_space<vmem>>, vector<1024x128xbf16>
    %cst_59 = arith.constant dense<0.000000e+00> : vector<16x128xf32>
    %87 = tpu.matmul %85, %86, %cst_59 {dimension_numbers = #tpu.dot_dimension_numbers<[1], [0], [0], [1], [0, 0, 1, 1], [], []>} : vector<16x1024xbf16>, vector<1024x128xbf16>, vector<16x128xf32> -> vector<16x128xf32>
    %88 = arith.addf %84, %87 : vector<16x128xf32>
    %c0_60 = arith.constant 0 : index
    %c0_61 = arith.constant 0 : index
    %89 = vector.load %arg21[%c0_60, %c0_61] : memref<1x128xf32, #tpu.memory_space<vmem>>, vector<1x128xf32>
    %90 = vector.broadcast %89 : vector<1x128xf32> to vector<16x128xf32>
    %91 = arith.addf %88, %90 : vector<16x128xf32>
    %cst_62 = arith.constant 0.000000e+00 : f32
    %92 = vector.broadcast %cst_62 : f32 to vector<16x128xf32>
    %93 = arith.cmpf oge, %91, %92 : vector<16x128xf32>
    %cst_63 = arith.constant 0.00999999977 : f32
    %94 = vector.broadcast %cst_63 : f32 to vector<16x128xf32>
    %95 = arith.mulf %94, %91 : vector<16x128xf32>
    %96 = arith.select %93, %91, %95 : vector<16x128xi1>, vector<16x128xf32>
    %97 = arith.truncf %96 : vector<16x128xf32> to vector<16x128xbf16>
    %c0_64 = arith.constant 0 : index
    %c0_65 = arith.constant 0 : index
    %98 = vector.load %arg22[%c0_64, %c0_65] : memref<128x128xbf16, #tpu.memory_space<vmem>>, vector<128x128xbf16>
    %cst_66 = arith.constant dense<0.000000e+00> : vector<16x128xf32>
    %99 = tpu.matmul %97, %98, %cst_66 {dimension_numbers = #tpu.dot_dimension_numbers<[1], [0], [0], [1], [0, 0, 1, 1], [], []>} : vector<16x128xbf16>, vector<128x128xbf16>, vector<16x128xf32> -> vector<16x128xf32>
    %c0_67 = arith.constant 0 : index
    %c0_68 = arith.constant 0 : index
    %100 = vector.load %arg23[%c0_67, %c0_68] : memref<1x128xf32, #tpu.memory_space<vmem>>, vector<1x128xf32>
    %101 = vector.broadcast %100 : vector<1x128xf32> to vector<16x128xf32>
    %102 = arith.addf %99, %101 : vector<16x128xf32>
    %c0_69 = arith.constant 0 : index
    %c0_70 = arith.constant 0 : index
    %103 = vector.load %arg24[%c0_69, %c0_70] : memref<16x128xf32, #tpu.memory_space<vmem>>, vector<16x128xf32>
    tpu.vector_store %arg24[%c0_69, %c0_70], %102 {strides = array<i32>} : memref<16x128xf32, #tpu.memory_space<vmem>>, vector<16x128xf32>,
    return
  }
  func.func @transform_0(%arg0: i32) -> (i32, i32) {
    %c0_i32 = arith.constant 0 : i32
    %c0_i32_0 = arith.constant 0 : i32
    return %arg0, %c0_i32 : i32, i32
  }
  func.func @transform_1(%arg0: i32) -> (i32, i32) {
    %c0_i32 = arith.constant 0 : i32
    %c0_i32_0 = arith.constant 0 : i32
    %c0_i32_1 = arith.constant 0 : i32
    return %c0_i32, %c0_i32_0 : i32, i32
  }
  func.func @transform_2(%arg0: i32) -> (i32, i32) {
    %c0_i32 = arith.constant 0 : i32
    %c0_i32_0 = arith.constant 0 : i32
    %c0_i32_1 = arith.constant 0 : i32
    return %c0_i32, %c0_i32_0 : i32, i32
  }
  func.func @transform_3(%arg0: i32) -> (i32, i32) {
    %c0_i32 = arith.constant 0 : i32
    %c0_i32_0 = arith.constant 0 : i32
    %c0_i32_1 = arith.constant 0 : i32
    return %c0_i32, %c0_i32_0 : i32, i32
  }
  func.func @transform_4(%arg0: i32) -> (i32, i32) {
    %c0_i32 = arith.constant 0 : i32
    %c0_i32_0 = arith.constant 0 : i32
    %c0_i32_1 = arith.constant 0 : i32
    return %c0_i32, %c0_i32_0 : i32, i32
  }
  func.func @transform_5(%arg0: i32) -> (i32, i32) {
    %c0_i32 = arith.constant 0 : i32
    %c0_i32_0 = arith.constant 0 : i32
    %c0_i32_1 = arith.constant 0 : i32
    return %c0_i32, %c0_i32_0 : i32, i32
  }
  func.func @transform_6(%arg0: i32) -> (i32, i32) {
    %c0_i32 = arith.constant 0 : i32
    %c0_i32_0 = arith.constant 0 : i32
    %c0_i32_1 = arith.constant 0 : i32
    return %c0_i32, %c0_i32_0 : i32, i32
  }
  func.func @transform_7(%arg0: i32) -> (i32, i32) {
    %c0_i32 = arith.constant 0 : i32
    %c0_i32_0 = arith.constant 0 : i32
    %c0_i32_1 = arith.constant 0 : i32
    return %c0_i32, %c0_i32_0 : i32, i32
  }
  func.func @transform_8(%arg0: i32) -> (i32, i32) {
    %c0_i32 = arith.constant 0 : i32
    %c0_i32_0 = arith.constant 0 : i32
    %c0_i32_1 = arith.constant 0 : i32
    return %c0_i32, %c0_i32_0 : i32, i32
  }
  func.func @transform_9(%arg0: i32) -> (i32, i32) {
    %c0_i32 = arith.constant 0 : i32
    %c0_i32_0 = arith.constant 0 : i32
    %c0_i32_1 = arith.constant 0 : i32
    return %c0_i32, %c0_i32_0 : i32, i32
  }
  func.func @transform_10(%arg0: i32) -> (i32, i32) {
    %c0_i32 = arith.constant 0 : i32
    %c0_i32_0 = arith.constant 0 : i32
    %c0_i32_1 = arith.constant 0 : i32
    return %c0_i32, %c0_i32_0 : i32, i32
  }
  func.func @transform_11(%arg0: i32) -> (i32, i32) {
    %c0_i32 = arith.constant 0 : i32
    %c0_i32_0 = arith.constant 0 : i32
    %c0_i32_1 = arith.constant 0 : i32
    return %c0_i32, %c0_i32_0 : i32, i32
  }
  func.func @transform_12(%arg0: i32) -> (i32, i32) {
    %c0_i32 = arith.constant 0 : i32
    %c0_i32_0 = arith.constant 0 : i32
    %c0_i32_1 = arith.constant 0 : i32
    return %c0_i32, %c0_i32_0 : i32, i32
  }
  func.func @transform_13(%arg0: i32) -> (i32, i32) {
    %c0_i32 = arith.constant 0 : i32
    %c0_i32_0 = arith.constant 0 : i32
    %c0_i32_1 = arith.constant 0 : i32
    return %c0_i32, %c0_i32_0 : i32, i32
  }
  func.func @transform_14(%arg0: i32) -> (i32, i32) {
    %c0_i32 = arith.constant 0 : i32
    %c0_i32_0 = arith.constant 0 : i32
    %c0_i32_1 = arith.constant 0 : i32
    return %c0_i32, %c0_i32_0 : i32, i32
  }
  func.func @transform_15(%arg0: i32) -> (i32, i32) {
    %c0_i32 = arith.constant 0 : i32
    %c0_i32_0 = arith.constant 0 : i32
    %c0_i32_1 = arith.constant 0 : i32
    return %c0_i32, %c0_i32_0 : i32, i32
  }
  func.func @transform_16(%arg0: i32) -> (i32, i32) {
    %c0_i32 = arith.constant 0 : i32
    %c0_i32_0 = arith.constant 0 : i32
    %c0_i32_1 = arith.constant 0 : i32
    return %c0_i32, %c0_i32_0 : i32, i32
  }
  func.func @transform_17(%arg0: i32) -> (i32, i32) {
    %c0_i32 = arith.constant 0 : i32
    %c0_i32_0 = arith.constant 0 : i32
    %c0_i32_1 = arith.constant 0 : i32
    return %c0_i32, %c0_i32_0 : i32, i32
  }
  func.func @transform_18(%arg0: i32) -> (i32, i32) {
    %c0_i32 = arith.constant 0 : i32
    %c0_i32_0 = arith.constant 0 : i32
    %c0_i32_1 = arith.constant 0 : i32
    return %c0_i32, %c0_i32_0 : i32, i32
  }
  func.func @transform_19(%arg0: i32) -> (i32, i32) {
    %c0_i32 = arith.constant 0 : i32
    %c0_i32_0 = arith.constant 0 : i32
    %c0_i32_1 = arith.constant 0 : i32
    return %c0_i32, %c0_i32_0 : i32, i32
  }
  func.func @transform_20(%arg0: i32) -> (i32, i32) {
    %c0_i32 = arith.constant 0 : i32
    %c0_i32_0 = arith.constant 0 : i32
    %c0_i32_1 = arith.constant 0 : i32
    return %c0_i32, %c0_i32_0 : i32, i32
  }
  func.func @transform_21(%arg0: i32) -> (i32, i32) {
    %c0_i32 = arith.constant 0 : i32
    %c0_i32_0 = arith.constant 0 : i32
    %c0_i32_1 = arith.constant 0 : i32
    return %c0_i32, %c0_i32_0 : i32, i32
  }
  func.func @transform_22(%arg0: i32) -> (i32, i32) {
    %c0_i32 = arith.constant 0 : i32
    %c0_i32_0 = arith.constant 0 : i32
    %c0_i32_1 = arith.constant 0 : i32
    return %c0_i32, %c0_i32_0 : i32, i32
  }
  func.func @transform_23(%arg0: i32) -> (i32, i32) {
    %c0_i32 = arith.constant 0 : i32
    %c0_i32_0 = arith.constant 0 : i32
    return %arg0, %c0_i32 : i32, i32
  }
}

</mosaic_0001>

<llo_original>
// kernel: tpu_custom_call.1
$region0: #{tpu_custom_call.1}
  #allocation0 [shape = 'u32[]', space=smem, size = 0x4, offset = 0x4, fixed_abs, tag = 'smem constant byte address 0x4 - core index']
  #allocation1 [shape = 'u32[144,128]{1,0:T(1,128)}', space=vmem, size = 0x12000, scoped, tag = 'internal scratch']
  %s0 = inlined_call_operand.hbm [shape: bf16[16,64], index: 0, kind: input, shape index: {}]
  %s1 = inlined_call_operand.hbm [shape: bf16[64,64], index: 1, kind: input, shape index: {}]
  %s2 = inlined_call_operand.hbm [shape: bf16[64,768], index: 2, kind: input, shape index: {}]
  %s3 = inlined_call_operand.hbm [shape: bf16[64,768], index: 3, kind: input, shape index: {}]
  %s4 = inlined_call_operand.hbm [shape: bf16[64,128], index: 4, kind: input, shape index: {}]
  %s5 = inlined_call_operand.hbm [shape: f32[1,128], index: 5, kind: input, shape index: {}]
  %s6 = inlined_call_operand.hbm [shape: bf16[128,128], index: 6, kind: input, shape index: {}]
  %s7 = inlined_call_operand.hbm [shape: f32[1,128], index: 7, kind: input, shape index: {}]
  %s8 = inlined_call_operand.hbm [shape: bf16[128,128], index: 8, kind: input, shape index: {}]
  %s9 = inlined_call_operand.hbm [shape: f32[1,128], index: 9, kind: input, shape index: {}]
  %s10 = inlined_call_operand.hbm [shape: bf16[128,128], index: 10, kind: input, shape index: {}]
  %s11 = inlined_call_operand.hbm [shape: f32[1,128], index: 11, kind: input, shape index: {}]
  %s12 = inlined_call_operand.hbm [shape: bf16[256,1024], index: 12, kind: input, shape index: {}]
  %s13 = inlined_call_operand.hbm [shape: f32[1,1024], index: 13, kind: input, shape index: {}]
  %s14 = inlined_call_operand.hbm [shape: bf16[1024,1024], index: 14, kind: input, shape index: {}]
  %s15 = inlined_call_operand.hbm [shape: f32[1,1024], index: 15, kind: input, shape index: {}]
  %s16 = inlined_call_operand.hbm [shape: bf16[1024,1024], index: 16, kind: input, shape index: {}]
  %s17 = inlined_call_operand.hbm [shape: f32[1,1024], index: 17, kind: input, shape index: {}]
  %s18 = inlined_call_operand.hbm [shape: bf16[128,128], index: 18, kind: input, shape index: {}]
  %s19 = inlined_call_operand.hbm [shape: bf16[1024,128], index: 19, kind: input, shape index: {}]
  %s20 = inlined_call_operand.hbm [shape: f32[1,128], index: 20, kind: input, shape index: {}]
  %s21 = inlined_call_operand.hbm [shape: bf16[128,128], index: 21, kind: input, shape index: {}]
  %s22 = inlined_call_operand.hbm [shape: f32[1,128], index: 22, kind: input, shape index: {}]
  %s23 = inlined_call_operand.hbm [shape: f32[16,128], index: 23, kind: output, shape index: {}]
  %s24 = sld [smem:[#allocation0]]
  $region194: #{tpu_custom_call.1} parent=0
    _
  %s26 = ssub.s32 1, %s24
  %s27 = scalar_select 0, %s26, %s24
  $region1: #{tpu_custom_call.1} parent=0
    #allocation2 [shape = 'u8[4096]{0}', space=vmem, size = 0x1000, scoped, tag = 'input window, operand 0, single buffered']
    #allocation3 [shape = 's32[1]{0}', space=sflag, size = 0x4, scoped, tag = 'scoped memory for tpu_custom_call.1']
    #allocation4 [shape = 's32[1]{0}', space=sflag, size = 0x4, scoped, tag = 'scoped memory for tpu_custom_call.1']
    #allocation5 [shape = 'u8[16384]{0}', space=vmem, size = 0x4000, scoped, tag = 'input window, operand 1, single buffered']
    #allocation6 [shape = 's32[1]{0}', space=sflag, size = 0x4, scoped, tag = 'scoped memory for tpu_custom_call.1']
    #allocation7 [shape = 'u8[98304]{0}', space=vmem, size = 0x18000, scoped, tag = 'input window, operand 2, single buffered']
    #allocation8 [shape = 'u8[98304]{0}', space=vmem, size = 0x18000, scoped, tag = 'input window, operand 3, single buffered']
    #allocation9 [shape = 's32[1]{0}', space=sflag, size = 0x4, scoped, tag = 'scoped memory for tpu_custom_call.1']
    #allocation10 [shape = 'u8[16384]{0}', space=vmem, size = 0x4000, scoped, tag = 'input window, operand 4, single buffered']
    #allocation11 [shape = 'u8[512]{0}', space=vmem, size = 0x400, scoped, tag = 'input window, operand 5, single buffered']
    #allocation12 [shape = 's32[1]{0}', space=sflag, size = 0x4, scoped, tag = 'scoped memory for tpu_custom_call.1']
    #allocation13 [shape = 'u8[32768]{0}', space=vmem, size = 0x8000, scoped, tag = 'input window, operand 6, single buffered']
    #allocation14 [shape = 'u8[512]{0}', space=vmem, size = 0x400, scoped, tag = 'input window, operand 7, single buffered']
    #allocation15 [shape = 's32[1]{0}', space=sflag, size = 0x4, scoped, tag = 'scoped memory for tpu_custom_call.1']
    #allocation16 [shape = 'u8[32768]{0}', space=vmem, size = 0x8000, scoped, tag = 'input window, operand 8, single buffered']
    #allocation17 [shape = 'u8[512]{0}', space=vmem, size = 0x400, scoped, tag = 'input window, operand 9, single buffered']
    #allocation18 [shape = 's32[1]{0}', space=sflag, size = 0x4, scoped, tag = 'scoped memory for tpu_custom_call.1']
    #allocation19 [shape = 'u8[32768]{0}', space=vmem, size = 0x8000, scoped, tag = 'input window, operand 10, single buffered']
    #allocation20 [shape = 'u8[512]{0}', space=vmem, size = 0x400, scoped, tag = 'input window, operand 11, single buffered']
    #allocation21 [shape = 's32[1]{0}', space=sflag, size = 0x4, scoped, tag = 'scoped memory for tpu_custom_call.1']
    #allocation22 [shape = 'u8[524288]{0}', space=vmem, size = 0x80000, scoped, tag = 'input window, operand 12, single buffered']
    #allocation23 [shape = 'u8[4096]{0}', space=vmem, size = 0x1000, scoped, tag = 'input window, operand 13, single buffered']
    #allocation24 [shape = 's32[1]{0}', space=sflag, size = 0x4, scoped, tag = 'scoped memory for tpu_custom_call.1']
    #allocation25 [shape = 'u8[2097152]{0}', space=vmem, size = 0x200000, scoped, tag = 'input window, operand 14, single buffered']
    #allocation26 [shape = 'u8[4096]{0}', space=vmem, size = 0x1000, scoped, tag = 'input window, operand 15, single buffered']
    #allocation27 [shape = 's32[1]{0}', space=sflag, size = 0x4, scoped, tag = 'scoped memory for tpu_custom_call.1']
    #allocation28 [shape = 'u8[2097152]{0}', space=vmem, size = 0x200000, scoped, tag = 'input window, operand 16, single buffered']
    #allocation29 [shape = 'u8[4096]{0}', space=vmem, size = 0x1000, scoped, tag = 'input window, operand 17, single buffered']
    #allocation30 [shape = 's32[1]{0}', space=sflag, size = 0x4, scoped, tag = 'scoped memory for tpu_custom_call.1']
    #allocation31 [shape = 'u8[32768]{0}', space=vmem, size = 0x8000, scoped, tag = 'input window, operand 18, single buffered']
    #allocation32 [shape = 'u8[262144]{0}', space=vmem, size = 0x40000, scoped, tag = 'input window, operand 19, single buffered']
    #allocation33 [shape = 's32[1]{0}', space=sflag, size = 0x4, scoped, tag = 'scoped memory for tpu_custom_call.1']
    #allocation34 [shape = 'u8[512]{0}', space=vmem, size = 0x400, scoped, tag = 'input window, operand 20, single buffered']
    #allocation35 [shape = 'u8[32768]{0}', space=vmem, size = 0x8000, scoped, tag = 'input window, operand 21, single buffered']
    #allocation36 [shape = 's32[1]{0}', space=sflag, size = 0x4, scoped, tag = 'scoped memory for tpu_custom_call.1']
    #allocation37 [shape = 'u8[512]{0}', space=vmem, size = 0x400, scoped, tag = 'input window, operand 22, single buffered']
    #allocation38 [shape = 'u8[8192]{0}', space=vmem, size = 0x2000, scoped, tag = 'output window, operand 0, single buffered']
    %28 = vsyncpa [#allocation3], 0
    %29 = vsyncpa [#allocation6], 0
    %30 = vsyncpa [#allocation9], 0
    %31 = vsyncpa [#allocation12], 0
    %32 = vsyncpa [#allocation15], 0
    %33 = vsyncpa [#allocation18], 0
    %34 = vsyncpa [#allocation21], 0
    %35 = vsyncpa [#allocation24], 0
    %36 = vsyncpa [#allocation27], 0
    %37 = vsyncpa [#allocation30], 0
    %38 = vsyncpa [#allocation33], 0
    %39 = vsyncpa [#allocation36], 0
    %40 = vsyncpa [#allocation4], 0
    // Predicated region
    $region2: #{tpu_custom_call.1} parent=1 // pred_check
      _
    $region3: #{tpu_custom_call.1} parent=1 // pred_check_branch
      %42 = sbr.rel (0) target = $region5
    $region4: #{tpu_custom_call.1} parent=1 // pred_region
      %s44 = ssub.s32 128, 128
      %45 = vsyncadd [#allocation3], %s44
      %s46 = sshll.u32 [#allocation2], 4
      %s47 = int_to_ptr.vmem [resolvable:$true] %s46
      %52 = dma.hbm_to_vmem [thread:$0]  %s0, 128, %s47, [#allocation3], 64, 64, 4
    $region5: #{tpu_custom_call.1} parent=1 // pred_fallthru
      _
    // Predicated region
    $region6: #{tpu_custom_call.1} parent=1 // pred_check
      _
    $region7: #{tpu_custom_call.1} parent=1 // pred_check_branch
      %54 = sbr.rel (0) target = $region9
    $region8: #{tpu_custom_call.1} parent=1 // pred_region
      %s56 = ssub.s32 512, 512
      %57 = vsyncadd [#allocation6], %s56
      %s58 = sshll.u32 [#allocation5], 4
      %s59 = int_to_ptr.vmem [resolvable:$true] %s58
      %64 = dma.hbm_to_vmem [thread:$0]  %s1, 512, %s59, [#allocation6], 64, 64, 4
    $region9: #{tpu_custom_call.1} parent=1 // pred_fallthru
      _
    // Predicated region
    $region10: #{tpu_custom_call.1} parent=1 // pred_check
      _
    $region11: #{tpu_custom_call.1} parent=1 // pred_check_branch
      %66 = sbr.rel (0) target = $region13
    $region12: #{tpu_custom_call.1} parent=1 // pred_region
      %s68 = ssub.s32 3072, 3072
      %69 = vsyncadd [#allocation6], %s68
      %s70 = sshll.u32 [#allocation7], 4
      %s71 = int_to_ptr.vmem [resolvable:$true] %s70
      %76 = dma.hbm_to_vmem [thread:$0]  %s2, 3072, %s71, [#allocation6], 384, 384, 24
    $region13: #{tpu_custom_call.1} parent=1 // pred_fallthru
      _
    // Predicated region
    $region14: #{tpu_custom_call.1} parent=1 // pred_check
      _
    $region15: #{tpu_custom_call.1} parent=1 // pred_check_branch
      %78 = sbr.rel (0) target = $region17
    $region16: #{tpu_custom_call.1} parent=1 // pred_region
      %s80 = ssub.s32 3072, 3072
      %81 = vsyncadd [#allocation9], %s80
      %s82 = sshll.u32 [#allocation8], 4
      %s83 = int_to_ptr.vmem [resolvable:$true] %s82
      %88 = dma.hbm_to_vmem [thread:$0]  %s3, 3072, %s83, [#allocation9], 384, 384, 24
    $region17: #{tpu_custom_call.1} parent=1 // pred_fallthru
      _
    // Predicated region
    $region18: #{tpu_custom_call.1} parent=1 // pred_check
      _
    $region19: #{tpu_custom_call.1} parent=1 // pred_check_branch
      %90 = sbr.rel (0) target = $region21
    $region20: #{tpu_custom_call.1} parent=1 // pred_region
      %s92 = ssub.s32 512, 512
      %93 = vsyncadd [#allocation9], %s92
      %s94 = sshll.u32 [#allocation10], 4
      %s95 = int_to_ptr.vmem [resolvable:$true] %s94
      %100 = dma.hbm_to_vmem [thread:$0]  %s4, 512, %s95, [#allocation9], 64, 64, 4
    $region21: #{tpu_custom_call.1} parent=1 // pred_fallthru
      _
    // Predicated region
    $region22: #{tpu_custom_call.1} parent=1 // pred_check
      _
    $region23: #{tpu_custom_call.1} parent=1 // pred_check_branch
      %102 = sbr.rel (0) target = $region25
    $region24: #{tpu_custom_call.1} parent=1 // pred_region
      %s104 = ssub.s32 16, 16
      %105 = vsyncadd [#allocation12], %s104
      %s107 = sshll.u32 [#allocation11], 4
      %s108 = int_to_ptr.vmem [resolvable:$true] %s107
      %110 = dma.hbm_to_vmem [thread:$0]  %s5, 16, %s108, [#allocation12]
    $region25: #{tpu_custom_call.1} parent=1 // pred_fallthru
      _
    // Predicated region
    $region26: #{tpu_custom_call.1} parent=1 // pred_check
      _
    $region27: #{tpu_custom_call.1} parent=1 // pred_check_branch
      %112 = sbr.rel (0) target = $region29
    $region28: #{tpu_custom_call.1} parent=1 // pred_region
      %s114 = ssub.s32 1024, 1024
      %115 = vsyncadd [#allocation12], %s114
      %s116 = sshll.u32 [#allocation13], 4
      %s117 = int_to_ptr.vmem [resolvable:$true] %s116
      %122 = dma.hbm_to_vmem [thread:$0]  %s6, 1024, %s117, [#allocation12], 64, 64, 4
    $region29: #{tpu_custom_call.1} parent=1 // pred_fallthru
      _
    // Predicated region
    $region30: #{tpu_custom_call.1} parent=1 // pred_check
      _
    $region31: #{tpu_custom_call.1} parent=1 // pred_check_branch
      %124 = sbr.rel (0) target = $region33
    $region32: #{tpu_custom_call.1} parent=1 // pred_region
      %s126 = ssub.s32 16, 16
      %127 = vsyncadd [#allocation15], %s126
      %s129 = sshll.u32 [#allocation14], 4
      %s130 = int_to_ptr.vmem [resolvable:$true] %s129
      %132 = dma.hbm_to_vmem [thread:$0]  %s7, 16, %s130, [#allocation15]
    $region33: #{tpu_custom_call.1} parent=1 // pred_fallthru
      _
    // Predicated region
    $region34: #{tpu_custom_call.1} parent=1 // pred_check
      _
    $region35: #{tpu_custom_call.1} parent=1 // pred_check_branch
      %134 = sbr.rel (0) target = $region37
    $region36: #{tpu_custom_call.1} parent=1 // pred_region
      %s136 = ssub.s32 1024, 1024
      %137 = vsyncadd [#allocation15], %s136
      %s138 = sshll.u32 [#allocation16], 4
      %s139 = int_to_ptr.vmem [resolvable:$true] %s138
      %144 = dma.hbm_to_vmem [thread:$0]  %s8, 1024, %s139, [#allocation15], 64, 64, 4
    $region37: #{tpu_custom_call.1} parent=1 // pred_fallthru
      _
    // Predicated region
    $region38: #{tpu_custom_call.1} parent=1 // pred_check
      _
    $region39: #{tpu_custom_call.1} parent=1 // pred_check_branch
      %146 = sbr.rel (0) target = $region41
    $region40: #{tpu_custom_call.1} parent=1 // pred_region
      %s148 = ssub.s32 16, 16
      %149 = vsyncadd [#allocation18], %s148
      %s151 = sshll.u32 [#allocation17], 4
      %s152 = int_to_ptr.vmem [resolvable:$true] %s151
      %154 = dma.hbm_to_vmem [thread:$0]  %s9, 16, %s152, [#allocation18]
    $region41: #{tpu_custom_call.1} parent=1 // pred_fallthru
      _
    // Predicated region
    $region42: #{tpu_custom_call.1} parent=1 // pred_check
      _
    $region43: #{tpu_custom_call.1} parent=1 // pred_check_branch
      %156 = sbr.rel (0) target = $region45
    $region44: #{tpu_custom_call.1} parent=1 // pred_region
      %s158 = ssub.s32 1024, 1024
      %159 = vsyncadd [#allocation18], %s158
      %s160 = sshll.u32 [#allocation19], 4
      %s161 = int_to_ptr.vmem [resolvable:$true] %s160
      %166 = dma.hbm_to_vmem [thread:$0]  %s10, 1024, %s161, [#allocation18], 64, 64, 4
    $region45: #{tpu_custom_call.1} parent=1 // pred_fallthru
      _
    // Predicated region
    $region46: #{tpu_custom_call.1} parent=1 // pred_check
      _
    $region47: #{tpu_custom_call.1} parent=1 // pred_check_branch
      %168 = sbr.rel (0) target = $region49
    $region48: #{tpu_custom_call.1} parent=1 // pred_region
      %s170 = ssub.s32 16, 16
      %171 = vsyncadd [#allocation21], %s170
      %s173 = sshll.u32 [#allocation20], 4
      %s174 = int_to_ptr.vmem [resolvable:$true] %s173
      %176 = dma.hbm_to_vmem [thread:$0]  %s11, 16, %s174, [#allocation21]
    $region49: #{tpu_custom_call.1} parent=1 // pred_fallthru
      _
    // Predicated region
    $region50: #{tpu_custom_call.1} parent=1 // pred_check
      _
    $region51: #{tpu_custom_call.1} parent=1 // pred_check_branch
      %178 = sbr.rel (0) target = $region53
    $region52: #{tpu_custom_call.1} parent=1 // pred_region
      %s180 = ssub.s32 16384, 16384
      %181 = vsyncadd [#allocation21], %s180
      %s182 = sshll.u32 [#allocation22], 4
      %s183 = int_to_ptr.vmem [resolvable:$true] %s182
      %188 = dma.hbm_to_vmem [thread:$0]  %s12, 16384, %s183, [#allocation21], 512, 512, 32
    $region53: #{tpu_custom_call.1} parent=1 // pred_fallthru
      _
    // Predicated region
    $region54: #{tpu_custom_call.1} parent=1 // pred_check
      _
    $region55: #{tpu_custom_call.1} parent=1 // pred_check_branch
      %190 = sbr.rel (0) target = $region57
    $region56: #{tpu_custom_call.1} parent=1 // pred_region
      %s192 = ssub.s32 128, 128
      %193 = vsyncadd [#allocation24], %s192
      %s195 = sshll.u32 [#allocation23], 4
      %s196 = int_to_ptr.vmem [resolvable:$true] %s195
      %198 = dma.hbm_to_vmem [thread:$0]  %s13, 128, %s196, [#allocation24]
    $region57: #{tpu_custom_call.1} parent=1 // pred_fallthru
      _
    // Predicated region
    $region58: #{tpu_custom_call.1} parent=1 // pred_check
      _
    $region59: #{tpu_custom_call.1} parent=1 // pred_check_branch
      %200 = sbr.rel (0) target = $region61
    $region60: #{tpu_custom_call.1} parent=1 // pred_region
      %s202 = ssub.s32 65536, 65536
      %203 = vsyncadd [#allocation24], %s202
      %s204 = sshll.u32 [#allocation25], 4
      %s205 = int_to_ptr.vmem [resolvable:$true] %s204
      %210 = dma.hbm_to_vmem [thread:$0]  %s14, 65536, %s205, [#allocation24], 512, 512, 32
    $region61: #{tpu_custom_call.1} parent=1 // pred_fallthru
      _
    // Predicated region
    $region62: #{tpu_custom_call.1} parent=1 // pred_check
      _
    $region63: #{tpu_custom_call.1} parent=1 // pred_check_branch
      %212 = sbr.rel (0) target = $region65
    $region64: #{tpu_custom_call.1} parent=1 // pred_region
      %s214 = ssub.s32 128, 128
      %215 = vsyncadd [#allocation27], %s214
      %s217 = sshll.u32 [#allocation26], 4
      %s218 = int_to_ptr.vmem [resolvable:$true] %s217
      %220 = dma.hbm_to_vmem [thread:$0]  %s15, 128, %s218, [#allocation27]
    $region65: #{tpu_custom_call.1} parent=1 // pred_fallthru
      _
    // Predicated region
    $region66: #{tpu_custom_call.1} parent=1 // pred_check
      _
    $region67: #{tpu_custom_call.1} parent=1 // pred_check_branch
      %222 = sbr.rel (0) target = $region69
    $region68: #{tpu_custom_call.1} parent=1 // pred_region
      %s224 = ssub.s32 65536, 65536
      %225 = vsyncadd [#allocation27], %s224
      %s226 = sshll.u32 [#allocation28], 4
      %s227 = int_to_ptr.vmem [resolvable:$true] %s226
      %232 = dma.hbm_to_vmem [thread:$0]  %s16, 65536, %s227, [#allocation27], 512, 512, 32
    $region69: #{tpu_custom_call.1} parent=1 // pred_fallthru
      _
    // Predicated region
    $region70: #{tpu_custom_call.1} parent=1 // pred_check
      _
    $region71: #{tpu_custom_call.1} parent=1 // pred_check_branch
      %234 = sbr.rel (0) target = $region73
    $region72: #{tpu_custom_call.1} parent=1 // pred_region
      %s236 = ssub.s32 128, 128
      %237 = vsyncadd [#allocation30], %s236
      %s239 = sshll.u32 [#allocation29], 4
      %s240 = int_to_ptr.vmem [resolvable:$true] %s239
      %242 = dma.hbm_to_vmem [thread:$0]  %s17, 128, %s240, [#allocation30]
    $region73: #{tpu_custom_call.1} parent=1 // pred_fallthru
      _
    // Predicated region
    $region74: #{tpu_custom_call.1} parent=1 // pred_check
      _
    $region75: #{tpu_custom_call.1} parent=1 // pred_check_branch
      %244 = sbr.rel (0) target = $region77
    $region76: #{tpu_custom_call.1} parent=1 // pred_region
      %s246 = ssub.s32 1024, 1024
      %247 = vsyncadd [#allocation30], %s246
      %s248 = sshll.u32 [#allocation31], 4
      %s249 = int_to_ptr.vmem [resolvable:$true] %s248
      %254 = dma.hbm_to_vmem [thread:$0]  %s18, 1024, %s249, [#allocation30], 64, 64, 4
    $region77: #{tpu_custom_call.1} parent=1 // pred_fallthru
      _
    // Predicated region
    $region78: #{tpu_custom_call.1} parent=1 // pred_check
      _
    $region79: #{tpu_custom_call.1} parent=1 // pred_check_branch
      %256 = sbr.rel (0) target = $region81
    $region80: #{tpu_custom_call.1} parent=1 // pred_region
      %s258 = ssub.s32 8192, 8192
      %259 = vsyncadd [#allocation33], %s258
      %s260 = sshll.u32 [#allocation32], 4
      %s261 = int_to_ptr.vmem [resolvable:$true] %s260
      %266 = dma.hbm_to_vmem [thread:$0]  %s19, 8192, %s261, [#allocation33], 64, 64, 4
    $region81: #{tpu_custom_call.1} parent=1 // pred_fallthru
      _
    // Predicated region
    $region82: #{tpu_custom_call.1} parent=1 // pred_check
      _
    $region83: #{tpu_custom_call.1} parent=1 // pred_check_branch
      %268 = sbr.rel (0) target = $region85
    $region84: #{tpu_custom_call.1} parent=1 // pred_region
      %s270 = ssub.s32 16, 16
      %271 = vsyncadd [#allocation33], %s270
      %s273 = sshll.u32 [#allocation34], 4
      %s274 = int_to_ptr.vmem [resolvable:$true] %s273
      %276 = dma.hbm_to_vmem [thread:$0]  %s20, 16, %s274, [#allocation33]
    $region85: #{tpu_custom_call.1} parent=1 // pred_fallthru
      _
    // Predicated region
    $region86: #{tpu_custom_call.1} parent=1 // pred_check
      _
    $region87: #{tpu_custom_call.1} parent=1 // pred_check_branch
      %278 = sbr.rel (0) target = $region89
    $region88: #{tpu_custom_call.1} parent=1 // pred_region
      %s280 = ssub.s32 1024, 1024
      %281 = vsyncadd [#allocation36], %s280
      %s282 = sshll.u32 [#allocation35], 4
      %s283 = int_to_ptr.vmem [resolvable:$true] %s282
      %288 = dma.hbm_to_vmem [thread:$0]  %s21, 1024, %s283, [#allocation36], 64, 64, 4
    $region89: #{tpu_custom_call.1} parent=1 // pred_fallthru
      _
    // Predicated region
    $region90: #{tpu_custom_call.1} parent=1 // pred_check
      _
    $region91: #{tpu_custom_call.1} parent=1 // pred_check_branch
      %290 = sbr.rel (0) target = $region93
    $region92: #{tpu_custom_call.1} parent=1 // pred_region
      %s292 = ssub.s32 16, 16
      %293 = vsyncadd [#allocation36], %s292
      %s295 = sshll.u32 [#allocation37], 4
      %s296 = int_to_ptr.vmem [resolvable:$true] %s295
      %298 = dma.hbm_to_vmem [thread:$0]  %s22, 16, %s296, [#allocation36]
    $region93: #{tpu_custom_call.1} parent=1 // pred_fallthru
      _
    // Predicated region
    $region94: #{tpu_custom_call.1} parent=1 // pred_check
      _
    $region95: #{tpu_custom_call.1} parent=1 // pred_check_branch
      %300 = sbr.rel (0) target = $region97
    $region96: #{tpu_custom_call.1} parent=1 // pred_region
      %301 = dma.done [#allocation3], 128
    $region97: #{tpu_custom_call.1} parent=1 // pred_fallthru
      _
    // Predicated region
    $region98: #{tpu_custom_call.1} parent=1 // pred_check
      _
    $region99: #{tpu_custom_call.1} parent=1 // pred_check_branch
      %303 = sbr.rel (0) target = $region101
    $region100: #{tpu_custom_call.1} parent=1 // pred_region
      %304 = dma.done [#allocation6], 512
    $region101: #{tpu_custom_call.1} parent=1 // pred_fallthru
      _
    // Predicated region
    $region102: #{tpu_custom_call.1} parent=1 // pred_check
      _
    $region103: #{tpu_custom_call.1} parent=1 // pred_check_branch
      %306 = sbr.rel (0) target = $region105
    $region104: #{tpu_custom_call.1} parent=1 // pred_region
      %307 = dma.done [#allocation6], 3072
    $region105: #{tpu_custom_call.1} parent=1 // pred_fallthru
      _
    // Predicated region
    $region106: #{tpu_custom_call.1} parent=1 // pred_check
      _
    $region107: #{tpu_custom_call.1} parent=1 // pred_check_branch
      %309 = sbr.rel (0) target = $region109
    $region108: #{tpu_custom_call.1} parent=1 // pred_region
      %310 = dma.done [#allocation9], 3072
    $region109: #{tpu_custom_call.1} parent=1 // pred_fallthru
      _
    // Predicated region
    $region110: #{tpu_custom_call.1} parent=1 // pred_check
      _
    $region111: #{tpu_custom_call.1} parent=1 // pred_check_branch
      %312 = sbr.rel (0) target = $region113
    $region112: #{tpu_custom_call.1} parent=1 // pred_region
      %313 = dma.done [#allocation9], 512
    $region113: #{tpu_custom_call.1} parent=1 // pred_fallthru
      _
    // Predicated region
    $region114: #{tpu_custom_call.1} parent=1 // pred_check
      _
    $region115: #{tpu_custom_call.1} parent=1 // pred_check_branch
      %315 = sbr.rel (0) target = $region117
    $region116: #{tpu_custom_call.1} parent=1 // pred_region
      %316 = dma.done [#allocation12], 16
    $region117: #{tpu_custom_call.1} parent=1 // pred_fallthru
      _
    // Predicated region
    $region118: #{tpu_custom_call.1} parent=1 // pred_check
      _
    $region119: #{tpu_custom_call.1} parent=1 // pred_check_branch
      %318 = sbr.rel (0) target = $region121
    $region120: #{tpu_custom_call.1} parent=1 // pred_region
      %319 = dma.done [#allocation12], 1024
    $region121: #{tpu_custom_call.1} parent=1 // pred_fallthru
      _
    // Predicated region
    $region122: #{tpu_custom_call.1} parent=1 // pred_check
      _
    $region123: #{tpu_custom_call.1} parent=1 // pred_check_branch
      %321 = sbr.rel (0) target = $region125
    $region124: #{tpu_custom_call.1} parent=1 // pred_region
      %322 = dma.done [#allocation15], 16
    $region125: #{tpu_custom_call.1} parent=1 // pred_fallthru
      _
    // Predicated region
    $region126: #{tpu_custom_call.1} parent=1 // pred_check
      _
    $region127: #{tpu_custom_call.1} parent=1 // pred_check_branch
      %324 = sbr.rel (0) target = $region129
    $region128: #{tpu_custom_call.1} parent=1 // pred_region
      %325 = dma.done [#allocation15], 1024
    $region129: #{tpu_custom_call.1} parent=1 // pred_fallthru
      _
    // Predicated region
    $region130: #{tpu_custom_call.1} parent=1 // pred_check
      _
    $region131: #{tpu_custom_call.1} parent=1 // pred_check_branch
      %327 = sbr.rel (0) target = $region133
    $region132: #{tpu_custom_call.1} parent=1 // pred_region
      %328 = dma.done [#allocation18], 16
    $region133: #{tpu_custom_call.1} parent=1 // pred_fallthru
      _
    // Predicated region
    $region134: #{tpu_custom_call.1} parent=1 // pred_check
      _
    $region135: #{tpu_custom_call.1} parent=1 // pred_check_branch
      %330 = sbr.rel (0) target = $region137
    $region136: #{tpu_custom_call.1} parent=1 // pred_region
      %331 = dma.done [#allocation18], 1024
    $region137: #{tpu_custom_call.1} parent=1 // pred_fallthru
      _
    // Predicated region
    $region138: #{tpu_custom_call.1} parent=1 // pred_check
      _
    $region139: #{tpu_custom_call.1} parent=1 // pred_check_branch
      %333 = sbr.rel (0) target = $region141
    $region140: #{tpu_custom_call.1} parent=1 // pred_region
      %334 = dma.done [#allocation21], 16
    $region141: #{tpu_custom_call.1} parent=1 // pred_fallthru
      _
    // Predicated region
    $region142: #{tpu_custom_call.1} parent=1 // pred_check
      _
    $region143: #{tpu_custom_call.1} parent=1 // pred_check_branch
      %336 = sbr.rel (0) target = $region145
    $region144: #{tpu_custom_call.1} parent=1 // pred_region
      %337 = dma.done [#allocation21], 16384
    $region145: #{tpu_custom_call.1} parent=1 // pred_fallthru
      _
    // Predicated region
    $region146: #{tpu_custom_call.1} parent=1 // pred_check
      _
    $region147: #{tpu_custom_call.1} parent=1 // pred_check_branch
      %339 = sbr.rel (0) target = $region149
    $region148: #{tpu_custom_call.1} parent=1 // pred_region
      %340 = dma.done [#allocation24], 128
    $region149: #{tpu_custom_call.1} parent=1 // pred_fallthru
      _
    // Predicated region
    $region150: #{tpu_custom_call.1} parent=1 // pred_check
      _
    $region151: #{tpu_custom_call.1} parent=1 // pred_check_branch
      %342 = sbr.rel (0) target = $region153
    $region152: #{tpu_custom_call.1} parent=1 // pred_region
      %343 = dma.done [#allocation24], 65536
    $region153: #{tpu_custom_call.1} parent=1 // pred_fallthru
      _
    // Predicated region
    $region154: #{tpu_custom_call.1} parent=1 // pred_check
      _
    $region155: #{tpu_custom_call.1} parent=1 // pred_check_branch
      %345 = sbr.rel (0) target = $region157
    $region156: #{tpu_custom_call.1} parent=1 // pred_region
      %346 = dma.done [#allocation27], 128
    $region157: #{tpu_custom_call.1} parent=1 // pred_fallthru
      _
    // Predicated region
    $region158: #{tpu_custom_call.1} parent=1 // pred_check
      _
    $region159: #{tpu_custom_call.1} parent=1 // pred_check_branch
      %348 = sbr.rel (0) target = $region161
    $region160: #{tpu_custom_call.1} parent=1 // pred_region
      %349 = dma.done [#allocation27], 65536
    $region161: #{tpu_custom_call.1} parent=1 // pred_fallthru
      _
    // Predicated region
    $region162: #{tpu_custom_call.1} parent=1 // pred_check
      _
    $region163: #{tpu_custom_call.1} parent=1 // pred_check_branch
      %351 = sbr.rel (0) target = $region165
    $region164: #{tpu_custom_call.1} parent=1 // pred_region
      %352 = dma.done [#allocation30], 128
    $region165: #{tpu_custom_call.1} parent=1 // pred_fallthru
      _
    // Predicated region
    $region166: #{tpu_custom_call.1} parent=1 // pred_check
      _
    $region167: #{tpu_custom_call.1} parent=1 // pred_check_branch
      %354 = sbr.rel (0) target = $region169
    $region168: #{tpu_custom_call.1} parent=1 // pred_region
      %355 = dma.done [#allocation30], 1024
    $region169: #{tpu_custom_call.1} parent=1 // pred_fallthru
      _
    // Predicated region
    $region170: #{tpu_custom_call.1} parent=1 // pred_check
      _
    $region171: #{tpu_custom_call.1} parent=1 // pred_check_branch
      %357 = sbr.rel (0) target = $region173
    $region172: #{tpu_custom_call.1} parent=1 // pred_region
      %358 = dma.done [#allocation33], 8192
    $region173: #{tpu_custom_call.1} parent=1 // pred_fallthru
      _
    // Predicated region
    $region174: #{tpu_custom_call.1} parent=1 // pred_check
      _
    $region175: #{tpu_custom_call.1} parent=1 // pred_check_branch
      %360 = sbr.rel (0) target = $region177
    $region176: #{tpu_custom_call.1} parent=1 // pred_region
      %361 = dma.done [#allocation33], 16
    $region177: #{tpu_custom_call.1} parent=1 // pred_fallthru
      _
    // Predicated region
    $region178: #{tpu_custom_call.1} parent=1 // pred_check
      _
    $region179: #{tpu_custom_call.1} parent=1 // pred_check_branch
      %363 = sbr.rel (0) target = $region181
    $region180: #{tpu_custom_call.1} parent=1 // pred_region
      %364 = dma.done [#allocation36], 1024
    $region181: #{tpu_custom_call.1} parent=1 // pred_fallthru
      _
    // Predicated region
    $region182: #{tpu_custom_call.1} parent=1 // pred_check
      _
    $region183: #{tpu_custom_call.1} parent=1 // pred_check_branch
      %366 = sbr.rel (0) target = $region185
    $region184: #{tpu_custom_call.1} parent=1 // pred_region
      %367 = dma.done [#allocation36], 16
    $region185: #{tpu_custom_call.1} parent=1 // pred_fallthru
      _
    %v369 = vld [vmem:[#allocation2] sm:$0xf]
    %v370 = vld [vmem:[#allocation2 + $0x4] sm:$0xf]
    %v371 = vld [vmem:[#allocation10] sm:$0xf]
    %v372 = vld [vmem:[#allocation10 + $0x4] sm:$0xf]
    %v373 = vld [vmem:[#allocation10 + $0x8] sm:$0xf]
    %v374 = vld [vmem:[#allocation10 + $0xc] sm:$0xf]
    %v375 = vld [vmem:[#allocation10 + $0x10] sm:$0xf]
    %v376 = vld [vmem:[#allocation10 + $0x14] sm:$0xf]
    %v377 = vld [vmem:[#allocation10 + $0x18] sm:$0xf]
    %v378 = vld [vmem:[#allocation10 + $0x1c] sm:$0xf]
    %v379 = vld [vmem:[#allocation11] sm:$0x1]
    %v381 = vlaneseq
    %v382 = vshrl.u32 %v381, 7
    %v383 = vsub.s32 0, %v382
    %v384 = vrot.slane %v379, %v383
    %v388 = vunpack.c.l.b16 %v369
    %v389 = vunpack.c.l.b16 %v370
    %v390 = vpack.c.b16 %v389, %v388
    %v399 = vunpack.c.l.b16 %v371
    %v400 = vunpack.c.l.b16 %v372
    %v401 = vunpack.c.l.b16 %v373
    %v402 = vunpack.c.l.b16 %v374
    %v403 = vunpack.c.l.b16 %v375
    %v404 = vunpack.c.l.b16 %v376
    %v405 = vunpack.c.l.b16 %v377
    %v406 = vunpack.c.l.b16 %v378
    %v407 = vpack.c.b16 %v400, %v399
    %v408 = vpack.c.b16 %v402, %v401
    %v409 = vpack.c.b16 %v404, %v403
    %v410 = vpack.c.b16 %v406, %v405
    %vm415 = vcmask 523264
    %v417 = vsel %vm415, %v390, 0
    %419 = vmatprep.subr.bf16.mxu0 0
    %420 = vmatpush1.bf16.msra.mxu0 0
    %421 = vmatprep.subr.bf16.mxu0 0
    %422 = vmatpush1.bf16.msra.mxu0 0
    %423 = vmatprep.subr.bf16.mxu0 0
    %424 = vmatpush1.bf16.msra.mxu0 0
    %425 = vmatprep.subr.bf16.mxu0 0
    %426 = vmatpush1.bf16.msra.mxu0 0
    %427 = vmatprep.subr.bf16.mxu0 0
    %428 = vmatpush1.bf16.msra.mxu0 %v410
    %429 = vmatprep.subr.bf16.mxu0 0
    %430 = vmatpush1.bf16.msra.mxu0 %v409
    %431 = vmatprep.subr.bf16.mxu0 0
    %432 = vmatpush1.bf16.msra.mxu0 %v408
    %433 = vmatprep.subr.bf16.mxu0 0
    %434 = vmatpush1.bf16.msra.mxu0 %v407
    %435 = vmatprep.subr.bf16.mxu0 0
    %436 = vmatpush2.bf16.msra.mxu0 0
    %437 = vmatprep.subr.bf16.mxu0 0
    %438 = vmatpush2.bf16.msra.mxu0 0
    %439 = vmatprep.subr.bf16.mxu0 0
    %440 = vmatpush2.bf16.msra.mxu0 0
    %441 = vmatprep.subr.bf16.mxu0 0
    %442 = vmatpush2.bf16.msra.mxu0 0
    %443 = vmatprep.subr.bf16.mxu0 0
    %444 = vmatpush2.bf16.msra.mxu0 0
    %445 = vmatprep.subr.bf16.mxu0 0
    %446 = vmatpush2.bf16.msra.mxu0 0
    %447 = vmatprep.subr.bf16.mxu0 0
    %448 = vmatpush2.bf16.msra.mxu0 0
    %449 = vmatprep.subr.bf16.mxu0 0
    %450 = vmatpush2.bf16.msra.mxu0 0
    %451 = vmatprep.mubr.bf16.mxu0 0
    %452 = vmatmul.mubr.bf16.gmra.mxu0 %v417
    %v453 = vpop.f32.mrf.mxu0
    %v454 = vadd.f32 %v384, %v453
    %v455 = vpop.f32.mrf.mxu0
    %v456 = vpop.f32.mrf.mxu0
    %v457 = vadd.f32 %v384, %v456
    %v458 = vpop.f32.mrf.mxu0
    %459 = vdwg.mxu0
    %vm460 = vcmp.ge.f32.partialorder %v454, 0.0
    %vm461 = vcmp.ge.f32.partialorder %v457, 0.0
    %v462 = vmul.f32 %v454, 0.01
    %v463 = vmul.f32 %v457, 0.01
    %v464 = vsel %vm460, %v454, %v462
    %v465 = vsel %vm461, %v457, %v463
    %v466 = vpack.c.bf16 %v465, %v464
    %v467 = vld [vmem:[#allocation13] sm:$0xf]
    %v468 = vld [vmem:[#allocation13 + $0x4] sm:$0xf]
    %v469 = vld [vmem:[#allocation13 + $0x8] sm:$0xf]
    %v470 = vld [vmem:[#allocation13 + $0xc] sm:$0xf]
    %v471 = vld [vmem:[#allocation13 + $0x10] sm:$0xf]
    %v472 = vld [vmem:[#allocation13 + $0x14] sm:$0xf]
    %v473 = vld [vmem:[#allocation13 + $0x18] sm:$0xf]
    %v474 = vld [vmem:[#allocation13 + $0x1c] sm:$0xf]
    %v475 = vld [vmem:[#allocation13 + $0x20] sm:$0xf]
    %v476 = vld [vmem:[#allocation13 + $0x24] sm:$0xf]
    %v477 = vld [vmem:[#allocation13 + $0x28] sm:$0xf]
    %v478 = vld [vmem:[#allocation13 + $0x2c] sm:$0xf]
    %v479 = vld [vmem:[#allocation13 + $0x30] sm:$0xf]
    %v480 = vld [vmem:[#allocation13 + $0x34] sm:$0xf]
    %v481 = vld [vmem:[#allocation13 + $0x38] sm:$0xf]
    %v482 = vld [vmem:[#allocation13 + $0x3c] sm:$0xf]
    %v483 = vld [vmem:[#allocation14] sm:$0x1]
    %v485 = vlaneseq
    %v486 = vshrl.u32 %v485, 7
    %v487 = vsub.s32 0, %v486
    %v488 = vrot.slane %v483, %v487
    %v506 = vunpack.c.l.b16 %v467
    %v507 = vunpack.c.l.b16 %v468
    %v508 = vunpack.c.l.b16 %v469
    %v509 = vunpack.c.l.b16 %v470
    %v510 = vunpack.c.l.b16 %v471
    %v511 = vunpack.c.l.b16 %v472
    %v512 = vunpack.c.l.b16 %v473
    %v513 = vunpack.c.l.b16 %v474
    %v514 = vunpack.c.l.b16 %v475
    %v515 = vunpack.c.l.b16 %v476
    %v516 = vunpack.c.l.b16 %v477
    %v517 = vunpack.c.l.b16 %v478
    %v518 = vunpack.c.l.b16 %v479
    %v519 = vunpack.c.l.b16 %v480
    %v520 = vunpack.c.l.b16 %v481
    %v521 = vunpack.c.l.b16 %v482
    %v522 = vpack.c.b16 %v507, %v506
    %v523 = vpack.c.b16 %v509, %v508
    %v524 = vpack.c.b16 %v511, %v510
    %v525 = vpack.c.b16 %v513, %v512
    %v526 = vpack.c.b16 %v515, %v514
    %v527 = vpack.c.b16 %v517, %v516
    %v528 = vpack.c.b16 %v519, %v518
    %v529 = vpack.c.b16 %v521, %v520
    %538 = vmatprep.subr.bf16.mxu0 0
    %539 = vmatpush1.bf16.msra.mxu0 %v529
    %540 = vmatprep.subr.bf16.mxu0 0
    %541 = vmatpush1.bf16.msra.mxu0 %v528
    %542 = vmatprep.subr.bf16.mxu0 0
    %543 = vmatpush1.bf16.msra.mxu0 %v527
    %544 = vmatprep.subr.bf16.mxu0 0
    %545 = vmatpush1.bf16.msra.mxu0 %v526
    %546 = vmatprep.subr.bf16.mxu0 0
    %547 = vmatpush1.bf16.msra.mxu0 %v525
    %548 = vmatprep.subr.bf16.mxu0 0
    %549 = vmatpush1.bf16.msra.mxu0 %v524
    %550 = vmatprep.subr.bf16.mxu0 0
    %551 = vmatpush1.bf16.msra.mxu0 %v523
    %552 = vmatprep.subr.bf16.mxu0 0
    %553 = vmatpush1.bf16.msra.mxu0 %v522
    %554 = vmatprep.subr.bf16.mxu0 0
    %555 = vmatpush2.bf16.msra.mxu0 0
    %556 = vmatprep.subr.bf16.mxu0 0
    %557 = vmatpush2.bf16.msra.mxu0 0
    %558 = vmatprep.subr.bf16.mxu0 0
    %559 = vmatpush2.bf16.msra.mxu0 0
    %560 = vmatprep.subr.bf16.mxu0 0
    %561 = vmatpush2.bf16.msra.mxu0 0
    %562 = vmatprep.subr.bf16.mxu0 0
    %563 = vmatpush2.bf16.msra.mxu0 0
    %564 = vmatprep.subr.bf16.mxu0 0
    %565 = vmatpush2.bf16.msra.mxu0 0
    %566 = vmatprep.subr.bf16.mxu0 0
    %567 = vmatpush2.bf16.msra.mxu0 0
    %568 = vmatprep.subr.bf16.mxu0 0
    %569 = vmatpush2.bf16.msra.mxu0 0
    %570 = vmatprep.mubr.bf16.mxu0 0
    %571 = vmatmul.mubr.bf16.gmra.mxu0 %v466
    %v572 = vpop.f32.mrf.mxu0
    %v573 = vadd.f32 %v488, %v572
    %v574 = vpop.f32.mrf.mxu0
    %v575 = vpop.f32.mrf.mxu0
    %v576 = vadd.f32 %v488, %v575
    %v577 = vpop.f32.mrf.mxu0
    %578 = vdwg.mxu0
    %vm579 = vcmp.ge.f32.partialorder %v573, 0.0
    %vm580 = vcmp.ge.f32.partialorder %v576, 0.0
    %v581 = vmul.f32 %v573, 0.01
    %v582 = vmul.f32 %v576, 0.01
    %v583 = vsel %vm579, %v573, %v581
    %v584 = vsel %vm580, %v576, %v582
    %v585 = vpack.c.bf16 %v584, %v583
    %v586 = vld [vmem:[#allocation16] sm:$0xf]
    %v587 = vld [vmem:[#allocation16 + $0x4] sm:$0xf]
    %v588 = vld [vmem:[#allocation16 + $0x8] sm:$0xf]
    %v589 = vld [vmem:[#allocation16 + $0xc] sm:$0xf]
    %v590 = vld [vmem:[#allocation16 + $0x10] sm:$0xf]
    %v591 = vld [vmem:[#allocation16 + $0x14] sm:$0xf]
    %v592 = vld [vmem:[#allocation16 + $0x18] sm:$0xf]
    %v593 = vld [vmem:[#allocation16 + $0x1c] sm:$0xf]
    %v594 = vld [vmem:[#allocation16 + $0x20] sm:$0xf]
    %v595 = vld [vmem:[#allocation16 + $0x24] sm:$0xf]
    %v596 = vld [vmem:[#allocation16 + $0x28] sm:$0xf]
    %v597 = vld [vmem:[#allocation16 + $0x2c] sm:$0xf]
    %v598 = vld [vmem:[#allocation16 + $0x30] sm:$0xf]
    %v599 = vld [vmem:[#allocation16 + $0x34] sm:$0xf]
    %v600 = vld [vmem:[#allocation16 + $0x38] sm:$0xf]
    %v601 = vld [vmem:[#allocation16 + $0x3c] sm:$0xf]
    %v602 = vld [vmem:[#allocation17] sm:$0x1]
    %v604 = vlaneseq
    %v605 = vshrl.u32 %v604, 7
    %v606 = vsub.s32 0, %v605
    %v607 = vrot.slane %v602, %v606
    %v625 = vunpack.c.l.b16 %v586
    %v626 = vunpack.c.l.b16 %v587
    %v627 = vunpack.c.l.b16 %v588
    %v628 = vunpack.c.l.b16 %v589
    %v629 = vunpack.c.l.b16 %v590
    %v630 = vunpack.c.l.b16 %v591
    %v631 = vunpack.c.l.b16 %v592
    %v632 = vunpack.c.l.b16 %v593
    %v633 = vunpack.c.l.b16 %v594
    %v634 = vunpack.c.l.b16 %v595
    %v635 = vunpack.c.l.b16 %v596
    %v636 = vunpack.c.l.b16 %v597
    %v637 = vunpack.c.l.b16 %v598
    %v638 = vunpack.c.l.b16 %v599
    %v639 = vunpack.c.l.b16 %v600
    %v640 = vunpack.c.l.b16 %v601
    %v641 = vpack.c.b16 %v626, %v625
    %v642 = vpack.c.b16 %v628, %v627
    %v643 = vpack.c.b16 %v630, %v629
    %v644 = vpack.c.b16 %v632, %v631
    %v645 = vpack.c.b16 %v634, %v633
    %v646 = vpack.c.b16 %v636, %v635
    %v647 = vpack.c.b16 %v638, %v637
    %v648 = vpack.c.b16 %v640, %v639
    %657 = vmatprep.subr.bf16.mxu0 0
    %658 = vmatpush1.bf16.msra.mxu0 %v648
    %659 = vmatprep.subr.bf16.mxu0 0
    %660 = vmatpush1.bf16.msra.mxu0 %v647
    %661 = vmatprep.subr.bf16.mxu0 0
    %662 = vmatpush1.bf16.msra.mxu0 %v646
    %663 = vmatprep.subr.bf16.mxu0 0
    %664 = vmatpush1.bf16.msra.mxu0 %v645
    %665 = vmatprep.subr.bf16.mxu0 0
    %666 = vmatpush1.bf16.msra.mxu0 %v644
    %667 = vmatprep.subr.bf16.mxu0 0
    %668 = vmatpush1.bf16.msra.mxu0 %v643
    %669 = vmatprep.subr.bf16.mxu0 0
    %670 = vmatpush1.bf16.msra.mxu0 %v642
    %671 = vmatprep.subr.bf16.mxu0 0
    %672 = vmatpush1.bf16.msra.mxu0 %v641
    %673 = vmatprep.subr.bf16.mxu0 0
    %674 = vmatpush2.bf16.msra.mxu0 0
    %675 = vmatprep.subr.bf16.mxu0 0
    %676 = vmatpush2.bf16.msra.mxu0 0
    %677 = vmatprep.subr.bf16.mxu0 0
    %678 = vmatpush2.bf16.msra.mxu0 0
    %679 = vmatprep.subr.bf16.mxu0 0
    %680 = vmatpush2.bf16.msra.mxu0 0
    %681 = vmatprep.subr.bf16.mxu0 0
    %682 = vmatpush2.bf16.msra.mxu0 0
    %683 = vmatprep.subr.bf16.mxu0 0
    %684 = vmatpush2.bf16.msra.mxu0 0
    %685 = vmatprep.subr.bf16.mxu0 0
    %686 = vmatpush2.bf16.msra.mxu0 0
    %687 = vmatprep.subr.bf16.mxu0 0
    %688 = vmatpush2.bf16.msra.mxu0 0
    %689 = vmatprep.mubr.bf16.mxu0 0
    %690 = vmatmul.mubr.bf16.gmra.mxu0 %v585
    %v691 = vpop.f32.mrf.mxu0
    %v692 = vadd.f32 %v607, %v691
    %v693 = vpop.f32.mrf.mxu0
    %v694 = vpop.f32.mrf.mxu0
    %v695 = vadd.f32 %v607, %v694
    %v696 = vpop.f32.mrf.mxu0
    %697 = vdwg.mxu0
    %v698 = vadd.f32 %v692, %v464
    %v699 = vadd.f32 %v695, %v465
    %vm700 = vcmp.ge.f32.partialorder %v698, 0.0
    %vm701 = vcmp.ge.f32.partialorder %v699, 0.0
    %v702 = vmul.f32 %v698, 0.01
    %v703 = vmul.f32 %v699, 0.01
    %v704 = vsel %vm700, %v698, %v702
    %v705 = vsel %vm701, %v699, %v703
    %v706 = vpack.c.bf16 %v705, %v704
    %v707 = vld [vmem:[#allocation19] sm:$0xf]
    %v708 = vld [vmem:[#allocation19 + $0x4] sm:$0xf]
    %v709 = vld [vmem:[#allocation19 + $0x8] sm:$0xf]
    %v710 = vld [vmem:[#allocation19 + $0xc] sm:$0xf]
    %v711 = vld [vmem:[#allocation19 + $0x10] sm:$0xf]
    %v712 = vld [vmem:[#allocation19 + $0x14] sm:$0xf]
    %v713 = vld [vmem:[#allocation19 + $0x18] sm:$0xf]
    %v714 = vld [vmem:[#allocation19 + $0x1c] sm:$0xf]
    %v715 = vld [vmem:[#allocation19 + $0x20] sm:$0xf]
    %v716 = vld [vmem:[#allocation19 + $0x24] sm:$0xf]
    %v717 = vld [vmem:[#allocation19 + $0x28] sm:$0xf]
    %v718 = vld [vmem:[#allocation19 + $0x2c] sm:$0xf]
    %v719 = vld [vmem:[#allocation19 + $0x30] sm:$0xf]
    %v720 = vld [vmem:[#allocation19 + $0x34] sm:$0xf]
    %v721 = vld [vmem:[#allocation19 + $0x38] sm:$0xf]
    %v722 = vld [vmem:[#allocation19 + $0x3c] sm:$0xf]
    %v723 = vld [vmem:[#allocation20] sm:$0x1]
    %v725 = vlaneseq
    %v726 = vshrl.u32 %v725, 7
    %v727 = vsub.s32 0, %v726
    %v728 = vrot.slane %v723, %v727
    %v746 = vunpack.c.l.b16 %v707
    %v747 = vunpack.c.l.b16 %v708
    %v748 = vunpack.c.l.b16 %v709
    %v749 = vunpack.c.l.b16 %v710
    %v750 = vunpack.c.l.b16 %v711
    %v751 = vunpack.c.l.b16 %v712
    %v752 = vunpack.c.l.b16 %v713
    %v753 = vunpack.c.l.b16 %v714
    %v754 = vunpack.c.l.b16 %v715
    %v755 = vunpack.c.l.b16 %v716
    %v756 = vunpack.c.l.b16 %v717
    %v757 = vunpack.c.l.b16 %v718
    %v758 = vunpack.c.l.b16 %v719
    %v759 = vunpack.c.l.b16 %v720
    %v760 = vunpack.c.l.b16 %v721
    %v761 = vunpack.c.l.b16 %v722
    %v762 = vpack.c.b16 %v747, %v746
    %v763 = vpack.c.b16 %v749, %v748
    %v764 = vpack.c.b16 %v751, %v750
    %v765 = vpack.c.b16 %v753, %v752
    %v766 = vpack.c.b16 %v755, %v754
    %v767 = vpack.c.b16 %v757, %v756
    %v768 = vpack.c.b16 %v759, %v758
    %v769 = vpack.c.b16 %v761, %v760
    %778 = vmatprep.subr.bf16.mxu0 0
    %779 = vmatpush1.bf16.msra.mxu0 %v769
    %780 = vmatprep.subr.bf16.mxu0 0
    %781 = vmatpush1.bf16.msra.mxu0 %v768
    %782 = vmatprep.subr.bf16.mxu0 0
    %783 = vmatpush1.bf16.msra.mxu0 %v767
    %784 = vmatprep.subr.bf16.mxu0 0
    %785 = vmatpush1.bf16.msra.mxu0 %v766
    %786 = vmatprep.subr.bf16.mxu0 0
    %787 = vmatpush1.bf16.msra.mxu0 %v765
    %788 = vmatprep.subr.bf16.mxu0 0
    %789 = vmatpush1.bf16.msra.mxu0 %v764
    %790 = vmatprep.subr.bf16.mxu0 0
    %791 = vmatpush1.bf16.msra.mxu0 %v763
    %792 = vmatprep.subr.bf16.mxu0 0
    %793 = vmatpush1.bf16.msra.mxu0 %v762
    %794 = vmatprep.subr.bf16.mxu0 0
    %795 = vmatpush2.bf16.msra.mxu0 0
    %796 = vmatprep.subr.bf16.mxu0 0
    %797 = vmatpush2.bf16.msra.mxu0 0
    %798 = vmatprep.subr.bf16.mxu0 0
    %799 = vmatpush2.bf16.msra.mxu0 0
    %800 = vmatprep.subr.bf16.mxu0 0
    %801 = vmatpush2.bf16.msra.mxu0 0
    %802 = vmatprep.subr.bf16.mxu0 0
    %803 = vmatpush2.bf16.msra.mxu0 0
    %804 = vmatprep.subr.bf16.mxu0 0
    %805 = vmatpush2.bf16.msra.mxu0 0
    %806 = vmatprep.subr.bf16.mxu0 0
    %807 = vmatpush2.bf16.msra.mxu0 0
    %808 = vmatprep.subr.bf16.mxu0 0
    %809 = vmatpush2.bf16.msra.mxu0 0
    %810 = vmatprep.mubr.bf16.mxu0 0
    %811 = vmatmul.mubr.bf16.gmra.mxu0 %v706
    %v812 = vpop.f32.mrf.mxu0
    %v813 = vadd.f32 %v728, %v812
    %v814 = vpop.f32.mrf.mxu0
    %v815 = vpop.f32.mrf.mxu0
    %v816 = vadd.f32 %v728, %v815
    %v817 = vpop.f32.mrf.mxu0
    %818 = vdwg.mxu0
    %v819 = vld [vmem:[#allocation5] sm:$0xf]
    %v820 = vld [vmem:[#allocation5 + $0x4] sm:$0xf]
    %v821 = vld [vmem:[#allocation5 + $0x8] sm:$0xf]
    %v822 = vld [vmem:[#allocation5 + $0xc] sm:$0xf]
    %v823 = vld [vmem:[#allocation5 + $0x10] sm:$0xf]
    %v824 = vld [vmem:[#allocation5 + $0x14] sm:$0xf]
    %v825 = vld [vmem:[#allocation5 + $0x18] sm:$0xf]
    %v826 = vld [vmem:[#allocation5 + $0x1c] sm:$0xf]
    %v835 = vunpack.c.l.b16 %v819
    %v836 = vunpack.c.l.b16 %v820
    %v837 = vunpack.c.l.b16 %v821
    %v838 = vunpack.c.l.b16 %v822
    %v839 = vunpack.c.l.b16 %v823
    %v840 = vunpack.c.l.b16 %v824
    %v841 = vunpack.c.l.b16 %v825
    %v842 = vunpack.c.l.b16 %v826
    %v843 = vpack.c.b16 %v836, %v835
    %v844 = vpack.c.b16 %v838, %v837
    %v845 = vpack.c.b16 %v840, %v839
    %v846 = vpack.c.b16 %v842, %v841
    %851 = vmatprep.subr.bf16.mxu0 0
    %852 = vmatpush1.bf16.msra.mxu0 0
    %853 = vmatprep.subr.bf16.mxu0 0
    %854 = vmatpush1.bf16.msra.mxu0 0
    %855 = vmatprep.subr.bf16.mxu0 0
    %856 = vmatpush1.bf16.msra.mxu0 0
    %857 = vmatprep.subr.bf16.mxu0 0
    %858 = vmatpush1.bf16.msra.mxu0 0
    %859 = vmatprep.subr.bf16.mxu0 0
    %860 = vmatpush1.bf16.msra.mxu0 %v846
    %861 = vmatprep.subr.bf16.mxu0 0
    %862 = vmatpush1.bf16.msra.mxu0 %v845
    %863 = vmatprep.subr.bf16.mxu0 0
    %864 = vmatpush1.bf16.msra.mxu0 %v844
    %865 = vmatprep.subr.bf16.mxu0 0
    %866 = vmatpush1.bf16.msra.mxu0 %v843
    %867 = vmatprep.subr.bf16.mxu0 0
    %868 = vmatpush2.bf16.msra.mxu0 0
    %869 = vmatprep.subr.bf16.mxu0 0
    %870 = vmatpush2.bf16.msra.mxu0 0
    %871 = vmatprep.subr.bf16.mxu0 0
    %872 = vmatpush2.bf16.msra.mxu0 0
    %873 = vmatprep.subr.bf16.mxu0 0
    %874 = vmatpush2.bf16.msra.mxu0 0
    %875 = vmatprep.subr.bf16.mxu0 0
    %876 = vmatpush2.bf16.msra.mxu0 0
    %877 = vmatprep.subr.bf16.mxu0 0
    %878 = vmatpush2.bf16.msra.mxu0 0
    %879 = vmatprep.subr.bf16.mxu0 0
    %880 = vmatpush2.bf16.msra.mxu0 0
    %881 = vmatprep.subr.bf16.mxu0 0
    %882 = vmatpush2.bf16.msra.mxu0 0
    %883 = vmatprep.mubr.bf16.mxu0 0
    %884 = vmatmul.mubr.bf16.gmra.mxu0 %v417
    %v885 = vpop.f32.mrf.mxu0
    %v886 = vadd.f32 0.0, %v885
    %v887 = vpop.f32.mrf.mxu0
    %v888 = vpop.f32.mrf.mxu0
    %v889 = vadd.f32 0.0, %v888
    %v890 = vpop.f32.mrf.mxu0
    %891 = vdwg.mxu0
    %v892 = vpack.c.bf16 %v889, %v886
    %v893 = vld [vmem:[#allocation7] sm:$0xff]
    %v894 = vld [vmem:[#allocation7 + $0x8] sm:$0xff]
    %v895 = vld [vmem:[#allocation7 + $0x10] sm:$0xff]
    %v896 = vld [vmem:[#allocation7 + $0x18] sm:$0xff]
    %v897 = vld [vmem:[#allocation7 + $0x20] sm:$0xff]
    %v898 = vld [vmem:[#allocation7 + $0x28] sm:$0xff]
    %v899 = vld [vmem:[#allocation7 + $0x30] sm:$0xff]
    %v900 = vld [vmem:[#allocation7 + $0x38] sm:$0xff]
    %v901 = vld [vmem:[#allocation7 + $0x40] sm:$0xff]
    %v902 = vld [vmem:[#allocation7 + $0x48] sm:$0xff]
    %v903 = vld [vmem:[#allocation7 + $0x50] sm:$0xff]
    %v904 = vld [vmem:[#allocation7 + $0x58] sm:$0xff]
    %v905 = vld [vmem:[#allocation7 + $0x60] sm:$0xff]
    %v906 = vld [vmem:[#allocation7 + $0x68] sm:$0xff]
    %v907 = vld [vmem:[#allocation7 + $0x70] sm:$0xff]
    %v908 = vld [vmem:[#allocation7 + $0x78] sm:$0xff]
    %v909 = vld [vmem:[#allocation7 + $0x80] sm:$0xff]
    %v910 = vld [vmem:[#allocation7 + $0x88] sm:$0xff]
    %v911 = vld [vmem:[#allocation7 + $0x90] sm:$0xff]
    %v912 = vld [vmem:[#allocation7 + $0x98] sm:$0xff]
    %v913 = vld [vmem:[#allocation7 + $0xa0] sm:$0xff]
    %v914 = vld [vmem:[#allocation7 + $0xa8] sm:$0xff]
    %v915 = vld [vmem:[#allocation7 + $0xb0] sm:$0xff]
    %v916 = vld [vmem:[#allocation7 + $0xb8] sm:$0xff]
    %v941 = vunpack.c.l.b16 %v893
    %v942 = vunpack.c.h.b16 %v893
    %v943 = vunpack.c.l.b16 %v894
    %v944 = vunpack.c.h.b16 %v894
    %v945 = vunpack.c.l.b16 %v895
    %v946 = vunpack.c.h.b16 %v895
    %v947 = vunpack.c.l.b16 %v896
    %v948 = vunpack.c.h.b16 %v896
    %v949 = vunpack.c.l.b16 %v897
    %v950 = vunpack.c.h.b16 %v897
    %v951 = vunpack.c.l.b16 %v898
    %v952 = vunpack.c.h.b16 %v898
    %v953 = vunpack.c.l.b16 %v899
    %v954 = vunpack.c.h.b16 %v899
    %v955 = vunpack.c.l.b16 %v900
    %v956 = vunpack.c.h.b16 %v900
    %v957 = vunpack.c.l.b16 %v901
    %v958 = vunpack.c.h.b16 %v901
    %v959 = vunpack.c.l.b16 %v902
    %v960 = vunpack.c.h.b16 %v902
    %v961 = vunpack.c.l.b16 %v903
    %v962 = vunpack.c.h.b16 %v903
    %v963 = vunpack.c.l.b16 %v904
    %v964 = vunpack.c.h.b16 %v904
    %v965 = vunpack.c.l.b16 %v905
    %v966 = vunpack.c.h.b16 %v905
    %v967 = vunpack.c.l.b16 %v906
    %v968 = vunpack.c.h.b16 %v906
    %v969 = vunpack.c.l.b16 %v907
    %v970 = vunpack.c.h.b16 %v907
    %v971 = vunpack.c.l.b16 %v908
    %v972 = vunpack.c.h.b16 %v908
    %v973 = vunpack.c.l.b16 %v909
    %v974 = vunpack.c.h.b16 %v909
    %v975 = vunpack.c.l.b16 %v910
    %v976 = vunpack.c.h.b16 %v910
    %v977 = vunpack.c.l.b16 %v911
    %v978 = vunpack.c.h.b16 %v911
    %v979 = vunpack.c.l.b16 %v912
    %v980 = vunpack.c.h.b16 %v912
    %v981 = vunpack.c.l.b16 %v913
    %v982 = vunpack.c.h.b16 %v913
    %v983 = vunpack.c.l.b16 %v914
    %v984 = vunpack.c.h.b16 %v914
    %v985 = vunpack.c.l.b16 %v915
    %v986 = vunpack.c.h.b16 %v915
    %v987 = vunpack.c.l.b16 %v916
    %v988 = vunpack.c.h.b16 %v916
    %v989 = vpack.c.b16 %v947, %v941
    %v990 = vpack.c.b16 %v948, %v942
    %v991 = vpack.c.b16 %v949, %v943
    %v992 = vpack.c.b16 %v950, %v944
    %v993 = vpack.c.b16 %v951, %v945
    %v994 = vpack.c.b16 %v952, %v946
    %v995 = vpack.c.b16 %v959, %v953
    %v996 = vpack.c.b16 %v960, %v954
    %v997 = vpack.c.b16 %v961, %v955
    %v998 = vpack.c.b16 %v962, %v956
    %v999 = vpack.c.b16 %v963, %v957
    %v1000 = vpack.c.b16 %v964, %v958
    %v1001 = vpack.c.b16 %v971, %v965
    %v1002 = vpack.c.b16 %v972, %v966
    %v1003 = vpack.c.b16 %v973, %v967
    %v1004 = vpack.c.b16 %v974, %v968
    %v1005 = vpack.c.b16 %v975, %v969
    %v1006 = vpack.c.b16 %v976, %v970
    %v1007 = vpack.c.b16 %v983, %v977
    %v1008 = vpack.c.b16 %v984, %v978
    %v1009 = vpack.c.b16 %v985, %v979
    %v1010 = vpack.c.b16 %v986, %v980
    %v1011 = vpack.c.b16 %v987, %v981
    %v1012 = vpack.c.b16 %v988, %v982
    %v1038 = vsel %vm415, %v892, 0
    %1040 = vmatprep.subr.bf16.mxu0 0
    %1041 = vmatpush1.bf16.msra.mxu0 0
    %1042 = vmatprep.subr.bf16.mxu0 0
    %1043 = vmatpush1.bf16.msra.mxu0 0
    %1044 = vmatprep.subr.bf16.mxu0 0
    %1045 = vmatpush1.bf16.msra.mxu0 0
    %1046 = vmatprep.subr.bf16.mxu0 0
    %1047 = vmatpush1.bf16.msra.mxu0 0
    %1048 = vmatprep.subr.bf16.mxu0 %v1008
    %1049 = vmatpush1.bf16.msra.mxu0 %v1007
    %1050 = vmatprep.subr.bf16.mxu0 %v1002
    %1051 = vmatpush1.bf16.msra.mxu0 %v1001
    %1052 = vmatprep.subr.bf16.mxu0 %v996
    %1053 = vmatpush1.bf16.msra.mxu0 %v995
    %1054 = vmatprep.subr.bf16.mxu0 %v990
    %1055 = vmatpush1.bf16.msra.mxu0 %v989
    %1056 = vmatprep.subr.bf16.mxu0 0
    %1057 = vmatpush2.bf16.msra.mxu0 0
    %1058 = vmatprep.subr.bf16.mxu0 0
    %1059 = vmatpush2.bf16.msra.mxu0 0
    %1060 = vmatprep.subr.bf16.mxu0 0
    %1061 = vmatpush2.bf16.msra.mxu0 0
    %1062 = vmatprep.subr.bf16.mxu0 0
    %1063 = vmatpush2.bf16.msra.mxu0 0
    %1064 = vmatprep.subr.bf16.mxu0 0
    %1065 = vmatpush2.bf16.msra.mxu0 0
    %1066 = vmatprep.subr.bf16.mxu0 0
    %1067 = vmatpush2.bf16.msra.mxu0 0
    %1068 = vmatprep.subr.bf16.mxu0 0
    %1069 = vmatpush2.bf16.msra.mxu0 0
    %1070 = vmatprep.subr.bf16.mxu0 0
    %1071 = vmatpush2.bf16.msra.mxu0 0
    %1072 = vmatprep.mubr.bf16.mxu0 0
    %1073 = vmatmul.mubr.bf16.gmra.mxu0 %v1038
    %v1074 = vpop.f32.mrf.mxu0
    %v1075 = vadd.f32 0.0, %v1074
    %v1076 = vpop.f32.mrf.mxu0
    %v1077 = vadd.f32 0.0, %v1076
    %v1078 = vpop.f32.mrf.mxu0
    %v1079 = vadd.f32 0.0, %v1078
    %v1080 = vpop.f32.mrf.mxu0
    %v1081 = vadd.f32 0.0, %v1080
    %1082 = vdwg.mxu0
    %1083 = vmatprep.subr.bf16.mxu0 0
    %1084 = vmatpush1.bf16.msra.mxu0 0
    %1085 = vmatprep.subr.bf16.mxu0 0
    %1086 = vmatpush1.bf16.msra.mxu0 0
    %1087 = vmatprep.subr.bf16.mxu0 0
    %1088 = vmatpush1.bf16.msra.mxu0 0
    %1089 = vmatprep.subr.bf16.mxu0 0
    %1090 = vmatpush1.bf16.msra.mxu0 0
    %1091 = vmatprep.subr.bf16.mxu0 %v1010
    %1092 = vmatpush1.bf16.msra.mxu0 %v1009
    %1093 = vmatprep.subr.bf16.mxu0 %v1004
    %1094 = vmatpush1.bf16.msra.mxu0 %v1003
    %1095 = vmatprep.subr.bf16.mxu0 %v998
    %1096 = vmatpush1.bf16.msra.mxu0 %v997
    %1097 = vmatprep.subr.bf16.mxu0 %v992
    %1098 = vmatpush1.bf16.msra.mxu0 %v991
    %1099 = vmatprep.subr.bf16.mxu0 0
    %1100 = vmatpush2.bf16.msra.mxu0 0
    %1101 = vmatprep.subr.bf16.mxu0 0
    %1102 = vmatpush2.bf16.msra.mxu0 0
    %1103 = vmatprep.subr.bf16.mxu0 0
    %1104 = vmatpush2.bf16.msra.mxu0 0
    %1105 = vmatprep.subr.bf16.mxu0 0
    %1106 = vmatpush2.bf16.msra.mxu0 0
    %1107 = vmatprep.subr.bf16.mxu0 0
    %1108 = vmatpush2.bf16.msra.mxu0 0
    %1109 = vmatprep.subr.bf16.mxu0 0
    %1110 = vmatpush2.bf16.msra.mxu0 0
    %1111 = vmatprep.subr.bf16.mxu0 0
    %1112 = vmatpush2.bf16.msra.mxu0 0
    %1113 = vmatprep.subr.bf16.mxu0 0
    %1114 = vmatpush2.bf16.msra.mxu0 0
    %1115 = vmatprep.mubr.bf16.mxu0 0
    %1116 = vmatmul.mubr.bf16.gmra.mxu0 %v1038
    %v1117 = vpop.f32.mrf.mxu0
    %v1118 = vadd.f32 0.0, %v1117
    %v1119 = vpop.f32.mrf.mxu0
    %v1120 = vadd.f32 0.0, %v1119
    %v1121 = vpop.f32.mrf.mxu0
    %v1122 = vadd.f32 0.0, %v1121
    %v1123 = vpop.f32.mrf.mxu0
    %v1124 = vadd.f32 0.0, %v1123
    %1125 = vdwg.mxu0
    %1126 = vmatprep.subr.bf16.mxu0 0
    %1127 = vmatpush1.bf16.msra.mxu0 0
    %1128 = vmatprep.subr.bf16.mxu0 0
    %1129 = vmatpush1.bf16.msra.mxu0 0
    %1130 = vmatprep.subr.bf16.mxu0 0
    %1131 = vmatpush1.bf16.msra.mxu0 0
    %1132 = vmatprep.subr.bf16.mxu0 0
    %1133 = vmatpush1.bf16.msra.mxu0 0
    %1134 = vmatprep.subr.bf16.mxu0 %v1012
    %1135 = vmatpush1.bf16.msra.mxu0 %v1011
    %1136 = vmatprep.subr.bf16.mxu0 %v1006
    %1137 = vmatpush1.bf16.msra.mxu0 %v1005
    %1138 = vmatprep.subr.bf16.mxu0 %v1000
    %1139 = vmatpush1.bf16.msra.mxu0 %v999
    %1140 = vmatprep.subr.bf16.mxu0 %v994
    %1141 = vmatpush1.bf16.msra.mxu0 %v993
    %1142 = vmatprep.subr.bf16.mxu0 0
    %1143 = vmatpush2.bf16.msra.mxu0 0
    %1144 = vmatprep.subr.bf16.mxu0 0
    %1145 = vmatpush2.bf16.msra.mxu0 0
    %1146 = vmatprep.subr.bf16.mxu0 0
    %1147 = vmatpush2.bf16.msra.mxu0 0
    %1148 = vmatprep.subr.bf16.mxu0 0
    %1149 = vmatpush2.bf16.msra.mxu0 0
    %1150 = vmatprep.subr.bf16.mxu0 0
    %1151 = vmatpush2.bf16.msra.mxu0 0
    %1152 = vmatprep.subr.bf16.mxu0 0
    %1153 = vmatpush2.bf16.msra.mxu0 0
    %1154 = vmatprep.subr.bf16.mxu0 0
    %1155 = vmatpush2.bf16.msra.mxu0 0
    %1156 = vmatprep.subr.bf16.mxu0 0
    %1157 = vmatpush2.bf16.msra.mxu0 0
    %1158 = vmatprep.mubr.bf16.mxu0 0
    %1159 = vmatmul.mubr.bf16.gmra.mxu0 %v1038
    %v1160 = vpop.f32.mrf.mxu0
    %v1161 = vadd.f32 0.0, %v1160
    %v1162 = vpop.f32.mrf.mxu0
    %v1163 = vadd.f32 0.0, %v1162
    %v1164 = vpop.f32.mrf.mxu0
    %v1165 = vadd.f32 0.0, %v1164
    %v1166 = vpop.f32.mrf.mxu0
    %v1167 = vadd.f32 0.0, %v1166
    %1168 = vdwg.mxu0
    %v1169 = vld [vmem:[#allocation8] sm:$0xff]
    %v1170 = vld [vmem:[#allocation8 + $0x8] sm:$0xff]
    %v1171 = vld [vmem:[#allocation8 + $0x10] sm:$0xff]
    %v1172 = vld [vmem:[#allocation8 + $0x18] sm:$0xff]
    %v1173 = vld [vmem:[#allocation8 + $0x20] sm:$0xff]
    %v1174 = vld [vmem:[#allocation8 + $0x28] sm:$0xff]
    %v1175 = vld [vmem:[#allocation8 + $0x30] sm:$0xff]
    %v1176 = vld [vmem:[#allocation8 + $0x38] sm:$0xff]
    %v1177 = vld [vmem:[#allocation8 + $0x40] sm:$0xff]
    %v1178 = vld [vmem:[#allocation8 + $0x48] sm:$0xff]
    %v1179 = vld [vmem:[#allocation8 + $0x50] sm:$0xff]
    %v1180 = vld [vmem:[#allocation8 + $0x58] sm:$0xff]
    %v1181 = vld [vmem:[#allocation8 + $0x60] sm:$0xff]
    %v1182 = vld [vmem:[#allocation8 + $0x68] sm:$0xff]
    %v1183 = vld [vmem:[#allocation8 + $0x70] sm:$0xff]
    %v1184 = vld [vmem:[#allocation8 + $0x78] sm:$0xff]
    %v1185 = vld [vmem:[#allocation8 + $0x80] sm:$0xff]
    %v1186 = vld [vmem:[#allocation8 + $0x88] sm:$0xff]
    %v1187 = vld [vmem:[#allocation8 + $0x90] sm:$0xff]
    %v1188 = vld [vmem:[#allocation8 + $0x98] sm:$0xff]
    %v1189 = vld [vmem:[#allocation8 + $0xa0] sm:$0xff]
    %v1190 = vld [vmem:[#allocation8 + $0xa8] sm:$0xff]
    %v1191 = vld [vmem:[#allocation8 + $0xb0] sm:$0xff]
    %v1192 = vld [vmem:[#allocation8 + $0xb8] sm:$0xff]
    %v1217 = vunpack.c.l.b16 %v1169
    %v1218 = vunpack.c.h.b16 %v1169
    %v1219 = vunpack.c.l.b16 %v1170
    %v1220 = vunpack.c.h.b16 %v1170
    %v1221 = vunpack.c.l.b16 %v1171
    %v1222 = vunpack.c.h.b16 %v1171
    %v1223 = vunpack.c.l.b16 %v1172
    %v1224 = vunpack.c.h.b16 %v1172
    %v1225 = vunpack.c.l.b16 %v1173
    %v1226 = vunpack.c.h.b16 %v1173
    %v1227 = vunpack.c.l.b16 %v1174
    %v1228 = vunpack.c.h.b16 %v1174
    %v1229 = vunpack.c.l.b16 %v1175
    %v1230 = vunpack.c.h.b16 %v1175
    %v1231 = vunpack.c.l.b16 %v1176
    %v1232 = vunpack.c.h.b16 %v1176
    %v1233 = vunpack.c.l.b16 %v1177
    %v1234 = vunpack.c.h.b16 %v1177
    %v1235 = vunpack.c.l.b16 %v1178
    %v1236 = vunpack.c.h.b16 %v1178
    %v1237 = vunpack.c.l.b16 %v1179
    %v1238 = vunpack.c.h.b16 %v1179
    %v1239 = vunpack.c.l.b16 %v1180
    %v1240 = vunpack.c.h.b16 %v1180
    %v1241 = vunpack.c.l.b16 %v1181
    %v1242 = vunpack.c.h.b16 %v1181
    %v1243 = vunpack.c.l.b16 %v1182
    %v1244 = vunpack.c.h.b16 %v1182
    %v1245 = vunpack.c.l.b16 %v1183
    %v1246 = vunpack.c.h.b16 %v1183
    %v1247 = vunpack.c.l.b16 %v1184
    %v1248 = vunpack.c.h.b16 %v1184
    %v1249 = vunpack.c.l.b16 %v1185
    %v1250 = vunpack.c.h.b16 %v1185
    %v1251 = vunpack.c.l.b16 %v1186
    %v1252 = vunpack.c.h.b16 %v1186
    %v1253 = vunpack.c.l.b16 %v1187
    %v1254 = vunpack.c.h.b16 %v1187
    %v1255 = vunpack.c.l.b16 %v1188
    %v1256 = vunpack.c.h.b16 %v1188
    %v1257 = vunpack.c.l.b16 %v1189
    %v1258 = vunpack.c.h.b16 %v1189
    %v1259 = vunpack.c.l.b16 %v1190
    %v1260 = vunpack.c.h.b16 %v1190
    %v1261 = vunpack.c.l.b16 %v1191
    %v1262 = vunpack.c.h.b16 %v1191
    %v1263 = vunpack.c.l.b16 %v1192
    %v1264 = vunpack.c.h.b16 %v1192
    %v1265 = vpack.c.b16 %v1223, %v1217
    %v1266 = vpack.c.b16 %v1224, %v1218
    %v1267 = vpack.c.b16 %v1225, %v1219
    %v1268 = vpack.c.b16 %v1226, %v1220
    %v1269 = vpack.c.b16 %v1227, %v1221
    %v1270 = vpack.c.b16 %v1228, %v1222
    %v1271 = vpack.c.b16 %v1235, %v1229
    %v1272 = vpack.c.b16 %v1236, %v1230
    %v1273 = vpack.c.b16 %v1237, %v1231
    %v1274 = vpack.c.b16 %v1238, %v1232
    %v1275 = vpack.c.b16 %v1239, %v1233
    %v1276 = vpack.c.b16 %v1240, %v1234
    %v1277 = vpack.c.b16 %v1247, %v1241
    %v1278 = vpack.c.b16 %v1248, %v1242
    %v1279 = vpack.c.b16 %v1249, %v1243
    %v1280 = vpack.c.b16 %v1250, %v1244
    %v1281 = vpack.c.b16 %v1251, %v1245
    %v1282 = vpack.c.b16 %v1252, %v1246
    %v1283 = vpack.c.b16 %v1259, %v1253
    %v1284 = vpack.c.b16 %v1260, %v1254
    %v1285 = vpack.c.b16 %v1261, %v1255
    %v1286 = vpack.c.b16 %v1262, %v1256
    %v1287 = vpack.c.b16 %v1263, %v1257
    %v1288 = vpack.c.b16 %v1264, %v1258
    %1313 = vmatprep.subr.bf16.mxu0 0
    %1314 = vmatpush1.bf16.msra.mxu0 0
    %1315 = vmatprep.subr.bf16.mxu0 0
    %1316 = vmatpush1.bf16.msra.mxu0 0
    %1317 = vmatprep.subr.bf16.mxu0 0
    %1318 = vmatpush1.bf16.msra.mxu0 0
    %1319 = vmatprep.subr.bf16.mxu0 0
    %1320 = vmatpush1.bf16.msra.mxu0 0
    %1321 = vmatprep.subr.bf16.mxu0 %v1284
    %1322 = vmatpush1.bf16.msra.mxu0 %v1283
    %1323 = vmatprep.subr.bf16.mxu0 %v1278
    %1324 = vmatpush1.bf16.msra.mxu0 %v1277
    %1325 = vmatprep.subr.bf16.mxu0 %v1272
    %1326 = vmatpush1.bf16.msra.mxu0 %v1271
    %1327 = vmatprep.subr.bf16.mxu0 %v1266
    %1328 = vmatpush1.bf16.msra.mxu0 %v1265
    %1329 = vmatprep.subr.bf16.mxu0 0
    %1330 = vmatpush2.bf16.msra.mxu0 0
    %1331 = vmatprep.subr.bf16.mxu0 0
    %1332 = vmatpush2.bf16.msra.mxu0 0
    %1333 = vmatprep.subr.bf16.mxu0 0
    %1334 = vmatpush2.bf16.msra.mxu0 0
    %1335 = vmatprep.subr.bf16.mxu0 0
    %1336 = vmatpush2.bf16.msra.mxu0 0
    %1337 = vmatprep.subr.bf16.mxu0 0
    %1338 = vmatpush2.bf16.msra.mxu0 0
    %1339 = vmatprep.subr.bf16.mxu0 0
    %1340 = vmatpush2.bf16.msra.mxu0 0
    %1341 = vmatprep.subr.bf16.mxu0 0
    %1342 = vmatpush2.bf16.msra.mxu0 0
    %1343 = vmatprep.subr.bf16.mxu0 0
    %1344 = vmatpush2.bf16.msra.mxu0 0
    %1345 = vmatprep.mubr.bf16.mxu0 0
    %1346 = vmatmul.mubr.bf16.gmra.mxu0 %v1038
    %v1347 = vpop.f32.mrf.mxu0
    %v1348 = vadd.f32 0.0, %v1347
    %v1349 = vpop.f32.mrf.mxu0
    %v1350 = vadd.f32 0.0, %v1349
    %v1351 = vpop.f32.mrf.mxu0
    %v1352 = vadd.f32 0.0, %v1351
    %v1353 = vpop.f32.mrf.mxu0
    %v1354 = vadd.f32 0.0, %v1353
    %1355 = vdwg.mxu0
    %1356 = vmatprep.subr.bf16.mxu0 0
    %1357 = vmatpush1.bf16.msra.mxu0 0
    %1358 = vmatprep.subr.bf16.mxu0 0
    %1359 = vmatpush1.bf16.msra.mxu0 0
    %1360 = vmatprep.subr.bf16.mxu0 0
    %1361 = vmatpush1.bf16.msra.mxu0 0
    %1362 = vmatprep.subr.bf16.mxu0 0
    %1363 = vmatpush1.bf16.msra.mxu0 0
    %1364 = vmatprep.subr.bf16.mxu0 %v1286
    %1365 = vmatpush1.bf16.msra.mxu0 %v1285
    %1366 = vmatprep.subr.bf16.mxu0 %v1280
    %1367 = vmatpush1.bf16.msra.mxu0 %v1279
    %1368 = vmatprep.subr.bf16.mxu0 %v1274
    %1369 = vmatpush1.bf16.msra.mxu0 %v1273
    %1370 = vmatprep.subr.bf16.mxu0 %v1268
    %1371 = vmatpush1.bf16.msra.mxu0 %v1267
    %1372 = vmatprep.subr.bf16.mxu0 0
    %1373 = vmatpush2.bf16.msra.mxu0 0
    %1374 = vmatprep.subr.bf16.mxu0 0
    %1375 = vmatpush2.bf16.msra.mxu0 0
    %1376 = vmatprep.subr.bf16.mxu0 0
    %1377 = vmatpush2.bf16.msra.mxu0 0
    %1378 = vmatprep.subr.bf16.mxu0 0
    %1379 = vmatpush2.bf16.msra.mxu0 0
    %1380 = vmatprep.subr.bf16.mxu0 0
    %1381 = vmatpush2.bf16.msra.mxu0 0
    %1382 = vmatprep.subr.bf16.mxu0 0
    %1383 = vmatpush2.bf16.msra.mxu0 0
    %1384 = vmatprep.subr.bf16.mxu0 0
    %1385 = vmatpush2.bf16.msra.mxu0 0
    %1386 = vmatprep.subr.bf16.mxu0 0
    %1387 = vmatpush2.bf16.msra.mxu0 0
    %1388 = vmatprep.mubr.bf16.mxu0 0
    %1389 = vmatmul.mubr.bf16.gmra.mxu0 %v1038
    %v1390 = vpop.f32.mrf.mxu0
    %v1391 = vadd.f32 0.0, %v1390
    %v1392 = vpop.f32.mrf.mxu0
    %v1393 = vadd.f32 0.0, %v1392
    %v1394 = vpop.f32.mrf.mxu0
    %v1395 = vadd.f32 0.0, %v1394
    %v1396 = vpop.f32.mrf.mxu0
    %v1397 = vadd.f32 0.0, %v1396
    %1398 = vdwg.mxu0
    %1399 = vmatprep.subr.bf16.mxu0 0
    %1400 = vmatpush1.bf16.msra.mxu0 0
    %1401 = vmatprep.subr.bf16.mxu0 0
    %1402 = vmatpush1.bf16.msra.mxu0 0
    %1403 = vmatprep.subr.bf16.mxu0 0
    %1404 = vmatpush1.bf16.msra.mxu0 0
    %1405 = vmatprep.subr.bf16.mxu0 0
    %1406 = vmatpush1.bf16.msra.mxu0 0
    %1407 = vmatprep.subr.bf16.mxu0 %v1288
    %1408 = vmatpush1.bf16.msra.mxu0 %v1287
    %1409 = vmatprep.subr.bf16.mxu0 %v1282
    %1410 = vmatpush1.bf16.msra.mxu0 %v1281
    %1411 = vmatprep.subr.bf16.mxu0 %v1276
    %1412 = vmatpush1.bf16.msra.mxu0 %v1275
    %1413 = vmatprep.subr.bf16.mxu0 %v1270
    %1414 = vmatpush1.bf16.msra.mxu0 %v1269
    %1415 = vmatprep.subr.bf16.mxu0 0
    %1416 = vmatpush2.bf16.msra.mxu0 0
    %1417 = vmatprep.subr.bf16.mxu0 0
    %1418 = vmatpush2.bf16.msra.mxu0 0
    %1419 = vmatprep.subr.bf16.mxu0 0
    %1420 = vmatpush2.bf16.msra.mxu0 0
    %1421 = vmatprep.subr.bf16.mxu0 0
    %1422 = vmatpush2.bf16.msra.mxu0 0
    %1423 = vmatprep.subr.bf16.mxu0 0
    %1424 = vmatpush2.bf16.msra.mxu0 0
    %1425 = vmatprep.subr.bf16.mxu0 0
    %1426 = vmatpush2.bf16.msra.mxu0 0
    %1427 = vmatprep.subr.bf16.mxu0 0
    %1428 = vmatpush2.bf16.msra.mxu0 0
    %1429 = vmatprep.subr.bf16.mxu0 0
    %1430 = vmatpush2.bf16.msra.mxu0 0
    %1431 = vmatprep.mubr.bf16.mxu0 0
    %1432 = vmatmul.mubr.bf16.gmra.mxu0 %v1038
    %v1433 = vpop.f32.mrf.mxu0
    %v1434 = vadd.f32 0.0, %v1433
    %v1435 = vpop.f32.mrf.mxu0
    %v1436 = vadd.f32 0.0, %v1435
    %v1437 = vpop.f32.mrf.mxu0
    %v1438 = vadd.f32 0.0, %v1437
    %v1439 = vpop.f32.mrf.mxu0
    %v1440 = vadd.f32 0.0, %v1439
    %1441 = vdwg.mxu0
    %v1442 = vmul.f32 %v1075, %v1348
    %v1443 = vmul.f32 %v1077, %v1350
    %v1444 = vmul.f32 %v1118, %v1391
    %v1445 = vmul.f32 %v1120, %v1393
    %v1446 = vmul.f32 %v1161, %v1434
    %v1447 = vmul.f32 %v1163, %v1436
    %v1448 = vmul.f32 %v1079, %v1352
    %v1449 = vmul.f32 %v1081, %v1354
    %v1450 = vmul.f32 %v1122, %v1395
    %v1451 = vmul.f32 %v1124, %v1397
    %v1452 = vmul.f32 %v1165, %v1438
    %v1453 = vmul.f32 %v1167, %v1440
    %v1454 = vadd.f32 %v1442, %v1444
    %v1455 = vadd.f32 %v1443, %v1445
    %v1456 = vadd.f32 %v1448, %v1450
    %v1457 = vadd.f32 %v1449, %v1451
    %v1458 = vadd.f32 %v1454, %v1446
    %v1459 = vadd.f32 %v1455, %v1447
    %v1460 = vadd.f32 %v1456, %v1452
    %v1461 = vadd.f32 %v1457, %v1453
    %v1462 = vpack.c.bf16 %v1460, %v1458
    %v1463 = vpack.c.bf16 %v1461, %v1459
    %v1464 = vld [vmem:[#allocation22] sm:$0xff]
    %v1465 = vld [vmem:[#allocation22 + $0x8] sm:$0xff]
    %v1466 = vld [vmem:[#allocation22 + $0x10] sm:$0xff]
    %v1467 = vld [vmem:[#allocation22 + $0x18] sm:$0xff]
    %v1468 = vld [vmem:[#allocation22 + $0x20] sm:$0xff]
    %v1469 = vld [vmem:[#allocation22 + $0x28] sm:$0xff]
    %v1470 = vld [vmem:[#allocation22 + $0x30] sm:$0xff]
    %v1471 = vld [vmem:[#allocation22 + $0x38] sm:$0xff]
    %v1472 = vld [vmem:[#allocation22 + $0x40] sm:$0xff]
    %v1473 = vld [vmem:[#allocation22 + $0x48] sm:$0xff]
    %v1474 = vld [vmem:[#allocation22 + $0x50] sm:$0xff]
    %v1475 = vld [vmem:[#allocation22 + $0x58] sm:$0xff]
    %v1476 = vld [vmem:[#allocation22 + $0x60] sm:$0xff]
    %v1477 = vld [vmem:[#allocation22 + $0x68] sm:$0xff]
    %v1478 = vld [vmem:[#allocation22 + $0x70] sm:$0xff]
    %v1479 = vld [vmem:[#allocation22 + $0x78] sm:$0xff]
    %v1480 = vld [vmem:[#allocation22 + $0x80] sm:$0xff]
    %v1481 = vld [vmem:[#allocation22 + $0x88] sm:$0xff]
    %v1482 = vld [vmem:[#allocation22 + $0x90] sm:$0xff]
    %v1483 = vld [vmem:[#allocation22 + $0x98] sm:$0xff]
    %v1484 = vld [vmem:[#allocation22 + $0xa0] sm:$0xff]
    %v1485 = vld [vmem:[#allocation22 + $0xa8] sm:$0xff]
    %v1486 = vld [vmem:[#allocation22 + $0xb0] sm:$0xff]
    %v1487 = vld [vmem:[#allocation22 + $0xb8] sm:$0xff]
    %v1488 = vld [vmem:[#allocation22 + $0xc0] sm:$0xff]
    %v1489 = vld [vmem:[#allocation22 + $0xc8] sm:$0xff]
    %v1490 = vld [vmem:[#allocation22 + $0xd0] sm:$0xff]
    %v1491 = vld [vmem:[#allocation22 + $0xd8] sm:$0xff]
    %v1492 = vld [vmem:[#allocation22 + $0xe0] sm:$0xff]
    %v1493 = vld [vmem:[#allocation22 + $0xe8] sm:$0xff]
    %v1494 = vld [vmem:[#allocation22 + $0xf0] sm:$0xff]
    %v1495 = vld [vmem:[#allocation22 + $0xf8] sm:$0xff]
    %v1496 = vld [vmem:[#allocation22 + $0x100] sm:$0xff]
    %v1497 = vld [vmem:[#allocation22 + $0x108] sm:$0xff]
    %v1498 = vld [vmem:[#allocation22 + $0x110] sm:$0xff]
    %v1499 = vld [vmem:[#allocation22 + $0x118] sm:$0xff]
    %v1500 = vld [vmem:[#allocation22 + $0x120] sm:$0xff]
    %v1501 = vld [vmem:[#allocation22 + $0x128] sm:$0xff]
    %v1502 = vld [vmem:[#allocation22 + $0x130] sm:$0xff]
    %v1503 = vld [vmem:[#allocation22 + $0x138] sm:$0xff]
    %v1504 = vld [vmem:[#allocation22 + $0x140] sm:$0xff]
    %v1505 = vld [vmem:[#allocation22 + $0x148] sm:$0xff]
    %v1506 = vld [vmem:[#allocation22 + $0x150] sm:$0xff]
    %v1507 = vld [vmem:[#allocation22 + $0x158] sm:$0xff]
    %v1508 = vld [vmem:[#allocation22 + $0x160] sm:$0xff]
    %v1509 = vld [vmem:[#allocation22 + $0x168] sm:$0xff]
    %v1510 = vld [vmem:[#allocation22 + $0x170] sm:$0xff]
    %v1511 = vld [vmem:[#allocation22 + $0x178] sm:$0xff]
    %v1512 = vld [vmem:[#allocation22 + $0x180] sm:$0xff]
    %v1513 = vld [vmem:[#allocation22 + $0x188] sm:$0xff]
    %v1514 = vld [vmem:[#allocation22 + $0x190] sm:$0xff]
    %v1515 = vld [vmem:[#allocation22 + $0x198] sm:$0xff]
    %v1516 = vld [vmem:[#allocation22 + $0x1a0] sm:$0xff]
    %v1517 = vld [vmem:[#allocation22 + $0x1a8] sm:$0xff]
    %v1518 = vld [vmem:[#allocation22 + $0x1b0] sm:$0xff]
    %v1519 = vld [vmem:[#allocation22 + $0x1b8] sm:$0xff]
    %v1520 = vld [vmem:[#allocation22 + $0x1c0] sm:$0xff]
    %v1521 = vld [vmem:[#allocation22 + $0x1c8] sm:$0xff]
    %v1522 = vld [vmem:[#allocation22 + $0x1d0] sm:$0xff]
    %v1523 = vld [vmem:[#allocation22 + $0x1d8] sm:$0xff]
    %v1524 = vld [vmem:[#allocation22 + $0x1e0] sm:$0xff]
    %v1525 = vld [vmem:[#allocation22 + $0x1e8] sm:$0xff]
    %v1526 = vld [vmem:[#allocation22 + $0x1f0] sm:$0xff]
    %v1527 = vld [vmem:[#allocation22 + $0x1f8] sm:$0xff]
    %v1528 = vld [vmem:[#allocation22 + $0x200] sm:$0xff]
    %v1529 = vld [vmem:[#allocation22 + $0x208] sm:$0xff]
    %v1530 = vld [vmem:[#allocation22 + $0x210] sm:$0xff]
    %v1531 = vld [vmem:[#allocation22 + $0x218] sm:$0xff]
    %v1532 = vld [vmem:[#allocation22 + $0x220] sm:$0xff]
    %v1533 = vld [vmem:[#allocation22 + $0x228] sm:$0xff]
    %v1534 = vld [vmem:[#allocation22 + $0x230] sm:$0xff]
    %v1535 = vld [vmem:[#allocation22 + $0x238] sm:$0xff]
    %v1536 = vld [vmem:[#allocation22 + $0x240] sm:$0xff]
    %v1537 = vld [vmem:[#allocation22 + $0x248] sm:$0xff]
    %v1538 = vld [vmem:[#allocation22 + $0x250] sm:$0xff]
    %v1539 = vld [vmem:[#allocation22 + $0x258] sm:$0xff]
    %v1540 = vld [vmem:[#allocation22 + $0x260] sm:$0xff]
    %v1541 = vld [vmem:[#allocation22 + $0x268] sm:$0xff]
    %v1542 = vld [vmem:[#allocation22 + $0x270] sm:$0xff]
    %v1543 = vld [vmem:[#allocation22 + $0x278] sm:$0xff]
    %v1544 = vld [vmem:[#allocation22 + $0x280] sm:$0xff]
    %v1545 = vld [vmem:[#allocation22 + $0x288] sm:$0xff]
    %v1546 = vld [vmem:[#allocation22 + $0x290] sm:$0xff]
    %v1547 = vld [vmem:[#allocation22 + $0x298] sm:$0xff]
    %v1548 = vld [vmem:[#allocation22 + $0x2a0] sm:$0xff]
    %v1549 = vld [vmem:[#allocation22 + $0x2a8] sm:$0xff]
    %v1550 = vld [vmem:[#allocation22 + $0x2b0] sm:$0xff]
    %v1551 = vld [vmem:[#allocation22 + $0x2b8] sm:$0xff]
    %v1552 = vld [vmem:[#allocation22 + $0x2c0] sm:$0xff]
    %v1553 = vld [vmem:[#allocation22 + $0x2c8] sm:$0xff]
    %v1554 = vld [vmem:[#allocation22 + $0x2d0] sm:$0xff]
    %v1555 = vld [vmem:[#allocation22 + $0x2d8] sm:$0xff]
    %v1556 = vld [vmem:[#allocation22 + $0x2e0] sm:$0xff]
    %v1557 = vld [vmem:[#allocation22 + $0x2e8] sm:$0xff]
    %v1558 = vld [vmem:[#allocation22 + $0x2f0] sm:$0xff]
    %v1559 = vld [vmem:[#allocation22 + $0x2f8] sm:$0xff]
    %v1560 = vld [vmem:[#allocation22 + $0x300] sm:$0xff]
    %v1561 = vld [vmem:[#allocation22 + $0x308] sm:$0xff]
    %v1562 = vld [vmem:[#allocation22 + $0x310] sm:$0xff]
    %v1563 = vld [vmem:[#allocation22 + $0x318] sm:$0xff]
    %v1564 = vld [vmem:[#allocation22 + $0x320] sm:$0xff]
    %v1565 = vld [vmem:[#allocation22 + $0x328] sm:$0xff]
    %v1566 = vld [vmem:[#allocation22 + $0x330] sm:$0xff]
    %v1567 = vld [vmem:[#allocation22 + $0x338] sm:$0xff]
    %v1568 = vld [vmem:[#allocation22 + $0x340] sm:$0xff]
    %v1569 = vld [vmem:[#allocation22 + $0x348] sm:$0xff]
    %v1570 = vld [vmem:[#allocation22 + $0x350] sm:$0xff]
    %v1571 = vld [vmem:[#allocation22 + $0x358] sm:$0xff]
    %v1572 = vld [vmem:[#allocation22 + $0x360] sm:$0xff]
    %v1573 = vld [vmem:[#allocation22 + $0x368] sm:$0xff]
    %v1574 = vld [vmem:[#allocation22 + $0x370] sm:$0xff]
    %v1575 = vld [vmem:[#allocation22 + $0x378] sm:$0xff]
    %v1576 = vld [vmem:[#allocation22 + $0x380] sm:$0xff]
    %v1577 = vld [vmem:[#allocation22 + $0x388] sm:$0xff]
    %v1578 = vld [vmem:[#allocation22 + $0x390] sm:$0xff]
    %v1579 = vld [vmem:[#allocation22 + $0x398] sm:$0xff]
    %v1580 = vld [vmem:[#allocation22 + $0x3a0] sm:$0xff]
    %v1581 = vld [vmem:[#allocation22 + $0x3a8] sm:$0xff]
    %v1582 = vld [vmem:[#allocation22 + $0x3b0] sm:$0xff]
    %v1583 = vld [vmem:[#allocation22 + $0x3b8] sm:$0xff]
    %v1584 = vld [vmem:[#allocation22 + $0x3c0] sm:$0xff]
    %v1585 = vld [vmem:[#allocation22 + $0x3c8] sm:$0xff]
    %v1586 = vld [vmem:[#allocation22 + $0x3d0] sm:$0xff]
    %v1587 = vld [vmem:[#allocation22 + $0x3d8] sm:$0xff]
    %v1588 = vld [vmem:[#allocation22 + $0x3e0] sm:$0xff]
    %v1589 = vld [vmem:[#allocation22 + $0x3e8] sm:$0xff]
    %v1590 = vld [vmem:[#allocation22 + $0x3f0] sm:$0xff]
    %v1591 = vld [vmem:[#allocation22 + $0x3f8] sm:$0xff]
    %v1592 = vld [vmem:[#allocation23] sm:$0xff]
    %v1594 = vlaneseq
    %v1595 = vshrl.u32 %v1594, 7
    %v1596 = vsub.s32 0, %v1595
    %v1597 = vrot.slane %v1592, %v1596
    %v1598 = vlaneseq
    %v1599 = vshrl.u32 %v1598, 7
    %v1600 = vsub.s32 1, %v1599
    %v1601 = vrot.slane %v1592, %v1600
    %v1602 = vlaneseq
    %v1603 = vshrl.u32 %v1602, 7
    %v1604 = vsub.s32 2, %v1603
    %v1605 = vrot.slane %v1592, %v1604
    %v1606 = vlaneseq
    %v1607 = vshrl.u32 %v1606, 7
    %v1608 = vsub.s32 3, %v1607
    %v1609 = vrot.slane %v1592, %v1608
    %v1610 = vlaneseq
    %v1611 = vshrl.u32 %v1610, 7
    %v1612 = vsub.s32 4, %v1611
    %v1613 = vrot.slane %v1592, %v1612
    %v1614 = vlaneseq
    %v1615 = vshrl.u32 %v1614, 7
    %v1616 = vsub.s32 5, %v1615
    %v1617 = vrot.slane %v1592, %v1616
    %v1618 = vlaneseq
    %v1619 = vshrl.u32 %v1618, 7
    %v1620 = vsub.s32 6, %v1619
    %v1621 = vrot.slane %v1592, %v1620
    %v1622 = vlaneseq
    %v1623 = vshrl.u32 %v1622, 7
    %v1624 = vsub.s32 7, %v1623
    %v1625 = vrot.slane %v1592, %v1624
    %v1762 = vunpack.c.l.b16 %v1464
    %v1763 = vunpack.c.h.b16 %v1464
    %v1764 = vunpack.c.l.b16 %v1465
    %v1765 = vunpack.c.h.b16 %v1465
    %v1766 = vunpack.c.l.b16 %v1466
    %v1767 = vunpack.c.h.b16 %v1466
    %v1768 = vunpack.c.l.b16 %v1467
    %v1769 = vunpack.c.h.b16 %v1467
    %v1770 = vunpack.c.l.b16 %v1468
    %v1771 = vunpack.c.h.b16 %v1468
    %v1772 = vunpack.c.l.b16 %v1469
    %v1773 = vunpack.c.h.b16 %v1469
    %v1774 = vunpack.c.l.b16 %v1470
    %v1775 = vunpack.c.h.b16 %v1470
    %v1776 = vunpack.c.l.b16 %v1471
    %v1777 = vunpack.c.h.b16 %v1471
    %v1778 = vunpack.c.l.b16 %v1472
    %v1779 = vunpack.c.h.b16 %v1472
    %v1780 = vunpack.c.l.b16 %v1473
    %v1781 = vunpack.c.h.b16 %v1473
    %v1782 = vunpack.c.l.b16 %v1474
    %v1783 = vunpack.c.h.b16 %v1474
    %v1784 = vunpack.c.l.b16 %v1475
    %v1785 = vunpack.c.h.b16 %v1475
    %v1786 = vunpack.c.l.b16 %v1476
    %v1787 = vunpack.c.h.b16 %v1476
    %v1788 = vunpack.c.l.b16 %v1477
    %v1789 = vunpack.c.h.b16 %v1477
    %v1790 = vunpack.c.l.b16 %v1478
    %v1791 = vunpack.c.h.b16 %v1478
    %v1792 = vunpack.c.l.b16 %v1479
    %v1793 = vunpack.c.h.b16 %v1479
    %v1794 = vunpack.c.l.b16 %v1480
    %v1795 = vunpack.c.h.b16 %v1480
    %v1796 = vunpack.c.l.b16 %v1481
    %v1797 = vunpack.c.h.b16 %v1481
    %v1798 = vunpack.c.l.b16 %v1482
    %v1799 = vunpack.c.h.b16 %v1482
    %v1800 = vunpack.c.l.b16 %v1483
    %v1801 = vunpack.c.h.b16 %v1483
    %v1802 = vunpack.c.l.b16 %v1484
    %v1803 = vunpack.c.h.b16 %v1484
    %v1804 = vunpack.c.l.b16 %v1485
    %v1805 = vunpack.c.h.b16 %v1485
    %v1806 = vunpack.c.l.b16 %v1486
    %v1807 = vunpack.c.h.b16 %v1486
    %v1808 = vunpack.c.l.b16 %v1487
    %v1809 = vunpack.c.h.b16 %v1487
    %v1810 = vunpack.c.l.b16 %v1488
    %v1811 = vunpack.c.h.b16 %v1488
    %v1812 = vunpack.c.l.b16 %v1489
    %v1813 = vunpack.c.h.b16 %v1489
    %v1814 = vunpack.c.l.b16 %v1490
    %v1815 = vunpack.c.h.b16 %v1490
    %v1816 = vunpack.c.l.b16 %v1491
    %v1817 = vunpack.c.h.b16 %v1491
    %v1818 = vunpack.c.l.b16 %v1492
    %v1819 = vunpack.c.h.b16 %v1492
    %v1820 = vunpack.c.l.b16 %v1493
    %v1821 = vunpack.c.h.b16 %v1493
    %v1822 = vunpack.c.l.b16 %v1494
    %v1823 = vunpack.c.h.b16 %v1494
    %v1824 = vunpack.c.l.b16 %v1495
    %v1825 = vunpack.c.h.b16 %v1495
    %v1826 = vunpack.c.l.b16 %v1496
    %v1827 = vunpack.c.h.b16 %v1496
    %v1828 = vunpack.c.l.b16 %v1497
    %v1829 = vunpack.c.h.b16 %v1497
    %v1830 = vunpack.c.l.b16 %v1498
    %v1831 = vunpack.c.h.b16 %v1498
    %v1832 = vunpack.c.l.b16 %v1499
    %v1833 = vunpack.c.h.b16 %v1499
    %v1834 = vunpack.c.l.b16 %v1500
    %v1835 = vunpack.c.h.b16 %v1500
    %v1836 = vunpack.c.l.b16 %v1501
    %v1837 = vunpack.c.h.b16 %v1501
    %v1838 = vunpack.c.l.b16 %v1502
    %v1839 = vunpack.c.h.b16 %v1502
    %v1840 = vunpack.c.l.b16 %v1503
    %v1841 = vunpack.c.h.b16 %v1503
    %v1842 = vunpack.c.l.b16 %v1504
    %v1843 = vunpack.c.h.b16 %v1504
    %v1844 = vunpack.c.l.b16 %v1505
    %v1845 = vunpack.c.h.b16 %v1505
    %v1846 = vunpack.c.l.b16 %v1506
    %v1847 = vunpack.c.h.b16 %v1506
    %v1848 = vunpack.c.l.b16 %v1507
    %v1849 = vunpack.c.h.b16 %v1507
    %v1850 = vunpack.c.l.b16 %v1508
    %v1851 = vunpack.c.h.b16 %v1508
    %v1852 = vunpack.c.l.b16 %v1509
    %v1853 = vunpack.c.h.b16 %v1509
    %v1854 = vunpack.c.l.b16 %v1510
    %v1855 = vunpack.c.h.b16 %v1510
    %v1856 = vunpack.c.l.b16 %v1511
    %v1857 = vunpack.c.h.b16 %v1511
    %v1858 = vunpack.c.l.b16 %v1512
    %v1859 = vunpack.c.h.b16 %v1512
    %v1860 = vunpack.c.l.b16 %v1513
    %v1861 = vunpack.c.h.b16 %v1513
    %v1862 = vunpack.c.l.b16 %v1514
    %v1863 = vunpack.c.h.b16 %v1514
    %v1864 = vunpack.c.l.b16 %v1515
    %v1865 = vunpack.c.h.b16 %v1515
    %v1866 = vunpack.c.l.b16 %v1516
    %v1867 = vunpack.c.h.b16 %v1516
    %v1868 = vunpack.c.l.b16 %v1517
    %v1869 = vunpack.c.h.b16 %v1517
    %v1870 = vunpack.c.l.b16 %v1518
    %v1871 = vunpack.c.h.b16 %v1518
    %v1872 = vunpack.c.l.b16 %v1519
    %v1873 = vunpack.c.h.b16 %v1519
    %v1874 = vunpack.c.l.b16 %v1520
    %v1875 = vunpack.c.h.b16 %v1520
    %v1876 = vunpack.c.l.b16 %v1521
    %v1877 = vunpack.c.h.b16 %v1521
    %v1878 = vunpack.c.l.b16 %v1522
    %v1879 = vunpack.c.h.b16 %v1522
    %v1880 = vunpack.c.l.b16 %v1523
    %v1881 = vunpack.c.h.b16 %v1523
    %v1882 = vunpack.c.l.b16 %v1524
    %v1883 = vunpack.c.h.b16 %v1524
    %v1884 = vunpack.c.l.b16 %v1525
    %v1885 = vunpack.c.h.b16 %v1525
    %v1886 = vunpack.c.l.b16 %v1526
    %v1887 = vunpack.c.h.b16 %v1526
    %v1888 = vunpack.c.l.b16 %v1527
    %v1889 = vunpack.c.h.b16 %v1527
    %v1890 = vunpack.c.l.b16 %v1528
    %v1891 = vunpack.c.h.b16 %v1528
    %v1892 = vunpack.c.l.b16 %v1529
    %v1893 = vunpack.c.h.b16 %v1529
    %v1894 = vunpack.c.l.b16 %v1530
    %v1895 = vunpack.c.h.b16 %v1530
    %v1896 = vunpack.c.l.b16 %v1531
    %v1897 = vunpack.c.h.b16 %v1531
    %v1898 = vunpack.c.l.b16 %v1532
    %v1899 = vunpack.c.h.b16 %v1532
    %v1900 = vunpack.c.l.b16 %v1533
    %v1901 = vunpack.c.h.b16 %v1533
    %v1902 = vunpack.c.l.b16 %v1534
    %v1903 = vunpack.c.h.b16 %v1534
    %v1904 = vunpack.c.l.b16 %v1535
    %v1905 = vunpack.c.h.b16 %v1535
    %v1906 = vunpack.c.l.b16 %v1536
    %v1907 = vunpack.c.h.b16 %v1536
    %v1908 = vunpack.c.l.b16 %v1537
    %v1909 = vunpack.c.h.b16 %v1537
    %v1910 = vunpack.c.l.b16 %v1538
    %v1911 = vunpack.c.h.b16 %v1538
    %v1912 = vunpack.c.l.b16 %v1539
    %v1913 = vunpack.c.h.b16 %v1539
    %v1914 = vunpack.c.l.b16 %v1540
    %v1915 = vunpack.c.h.b16 %v1540
    %v1916 = vunpack.c.l.b16 %v1541
    %v1917 = vunpack.c.h.b16 %v1541
    %v1918 = vunpack.c.l.b16 %v1542
    %v1919 = vunpack.c.h.b16 %v1542
    %v1920 = vunpack.c.l.b16 %v1543
    %v1921 = vunpack.c.h.b16 %v1543
    %v1922 = vunpack.c.l.b16 %v1544
    %v1923 = vunpack.c.h.b16 %v1544
    %v1924 = vunpack.c.l.b16 %v1545
    %v1925 = vunpack.c.h.b16 %v1545
    %v1926 = vunpack.c.l.b16 %v1546
    %v1927 = vunpack.c.h.b16 %v1546
    %v1928 = vunpack.c.l.b16 %v1547
    %v1929 = vunpack.c.h.b16 %v1547
    %v1930 = vunpack.c.l.b16 %v1548
    %v1931 = vunpack.c.h.b16 %v1548
    %v1932 = vunpack.c.l.b16 %v1549
    %v1933 = vunpack.c.h.b16 %v1549
    %v1934 = vunpack.c.l.b16 %v1550
    %v1935 = vunpack.c.h.b16 %v1550
    %v1936 = vunpack.c.l.b16 %v1551
    %v1937 = vunpack.c.h.b16 %v1551
    %v1938 = vunpack.c.l.b16 %v1552
    %v1939 = vunpack.c.h.b16 %v1552
    %v1940 = vunpack.c.l.b16 %v1553
    %v1941 = vunpack.c.h.b16 %v1553
    %v1942 = vunpack.c.l.b16 %v1554
    %v1943 = vunpack.c.h.b16 %v1554
    %v1944 = vunpack.c.l.b16 %v1555
    %v1945 = vunpack.c.h.b16 %v1555
    %v1946 = vunpack.c.l.b16 %v1556
    %v1947 = vunpack.c.h.b16 %v1556
    %v1948 = vunpack.c.l.b16 %v1557
    %v1949 = vunpack.c.h.b16 %v1557
    %v1950 = vunpack.c.l.b16 %v1558
    %v1951 = vunpack.c.h.b16 %v1558
    %v1952 = vunpack.c.l.b16 %v1559
    %v1953 = vunpack.c.h.b16 %v1559
    %v1954 = vunpack.c.l.b16 %v1560
    %v1955 = vunpack.c.h.b16 %v1560
    %v1956 = vunpack.c.l.b16 %v1561
    %v1957 = vunpack.c.h.b16 %v1561
    %v1958 = vunpack.c.l.b16 %v1562
    %v1959 = vunpack.c.h.b16 %v1562
    %v1960 = vunpack.c.l.b16 %v1563
    %v1961 = vunpack.c.h.b16 %v1563
    %v1962 = vunpack.c.l.b16 %v1564
    %v1963 = vunpack.c.h.b16 %v1564
    %v1964 = vunpack.c.l.b16 %v1565
    %v1965 = vunpack.c.h.b16 %v1565
    %v1966 = vunpack.c.l.b16 %v1566
    %v1967 = vunpack.c.h.b16 %v1566
    %v1968 = vunpack.c.l.b16 %v1567
    %v1969 = vunpack.c.h.b16 %v1567
    %v1970 = vunpack.c.l.b16 %v1568
    %v1971 = vunpack.c.h.b16 %v1568
    %v1972 = vunpack.c.l.b16 %v1569
    %v1973 = vunpack.c.h.b16 %v1569
    %v1974 = vunpack.c.l.b16 %v1570
    %v1975 = vunpack.c.h.b16 %v1570
    %v1976 = vunpack.c.l.b16 %v1571
    %v1977 = vunpack.c.h.b16 %v1571
    %v1978 = vunpack.c.l.b16 %v1572
    %v1979 = vunpack.c.h.b16 %v1572
    %v1980 = vunpack.c.l.b16 %v1573
    %v1981 = vunpack.c.h.b16 %v1573
    %v1982 = vunpack.c.l.b16 %v1574
    %v1983 = vunpack.c.h.b16 %v1574
    %v1984 = vunpack.c.l.b16 %v1575
    %v1985 = vunpack.c.h.b16 %v1575
    %v1986 = vunpack.c.l.b16 %v1576
    %v1987 = vunpack.c.h.b16 %v1576
    %v1988 = vunpack.c.l.b16 %v1577
    %v1989 = vunpack.c.h.b16 %v1577
    %v1990 = vunpack.c.l.b16 %v1578
    %v1991 = vunpack.c.h.b16 %v1578
    %v1992 = vunpack.c.l.b16 %v1579
    %v1993 = vunpack.c.h.b16 %v1579
    %v1994 = vunpack.c.l.b16 %v1580
    %v1995 = vunpack.c.h.b16 %v1580
    %v1996 = vunpack.c.l.b16 %v1581
    %v1997 = vunpack.c.h.b16 %v1581
    %v1998 = vunpack.c.l.b16 %v1582
    %v1999 = vunpack.c.h.b16 %v1582
    %v2000 = vunpack.c.l.b16 %v1583
    %v2001 = vunpack.c.h.b16 %v1583
    %v2002 = vunpack.c.l.b16 %v1584
    %v2003 = vunpack.c.h.b16 %v1584
    %v2004 = vunpack.c.l.b16 %v1585
    %v2005 = vunpack.c.h.b16 %v1585
    %v2006 = vunpack.c.l.b16 %v1586
    %v2007 = vunpack.c.h.b16 %v1586
    %v2008 = vunpack.c.l.b16 %v1587
    %v2009 = vunpack.c.h.b16 %v1587
    %v2010 = vunpack.c.l.b16 %v1588
    %v2011 = vunpack.c.h.b16 %v1588
    %v2012 = vunpack.c.l.b16 %v1589
    %v2013 = vunpack.c.h.b16 %v1589
    %v2014 = vunpack.c.l.b16 %v1590
    %v2015 = vunpack.c.h.b16 %v1590
    %v2016 = vunpack.c.l.b16 %v1591
    %v2017 = vunpack.c.h.b16 %v1591
    %v2018 = vpack.c.b16 %v1770, %v1762
    %v2019 = vpack.c.b16 %v1771, %v1763
    %v2020 = vpack.c.b16 %v1772, %v1764
    %v2021 = vpack.c.b16 %v1773, %v1765
    %v2022 = vpack.c.b16 %v1774, %v1766
    %v2023 = vpack.c.b16 %v1775, %v1767
    %v2024 = vpack.c.b16 %v1776, %v1768
    %v2025 = vpack.c.b16 %v1777, %v1769
    %v2026 = vpack.c.b16 %v1786, %v1778
    %v2027 = vpack.c.b16 %v1787, %v1779
    %v2028 = vpack.c.b16 %v1788, %v1780
    %v2029 = vpack.c.b16 %v1789, %v1781
    %v2030 = vpack.c.b16 %v1790, %v1782
    %v2031 = vpack.c.b16 %v1791, %v1783
    %v2032 = vpack.c.b16 %v1792, %v1784
    %v2033 = vpack.c.b16 %v1793, %v1785
    %v2034 = vpack.c.b16 %v1802, %v1794
    %v2035 = vpack.c.b16 %v1803, %v1795
    %v2036 = vpack.c.b16 %v1804, %v1796
    %v2037 = vpack.c.b16 %v1805, %v1797
    %v2038 = vpack.c.b16 %v1806, %v1798
    %v2039 = vpack.c.b16 %v1807, %v1799
    %v2040 = vpack.c.b16 %v1808, %v1800
    %v2041 = vpack.c.b16 %v1809, %v1801
    %v2042 = vpack.c.b16 %v1818, %v1810
    %v2043 = vpack.c.b16 %v1819, %v1811
    %v2044 = vpack.c.b16 %v1820, %v1812
    %v2045 = vpack.c.b16 %v1821, %v1813
    %v2046 = vpack.c.b16 %v1822, %v1814
    %v2047 = vpack.c.b16 %v1823, %v1815
    %v2048 = vpack.c.b16 %v1824, %v1816
    %v2049 = vpack.c.b16 %v1825, %v1817
    %v2050 = vpack.c.b16 %v1834, %v1826
    %v2051 = vpack.c.b16 %v1835, %v1827
    %v2052 = vpack.c.b16 %v1836, %v1828
    %v2053 = vpack.c.b16 %v1837, %v1829
    %v2054 = vpack.c.b16 %v1838, %v1830
    %v2055 = vpack.c.b16 %v1839, %v1831
    %v2056 = vpack.c.b16 %v1840, %v1832
    %v2057 = vpack.c.b16 %v1841, %v1833
    %v2058 = vpack.c.b16 %v1850, %v1842
    %v2059 = vpack.c.b16 %v1851, %v1843
    %v2060 = vpack.c.b16 %v1852, %v1844
    %v2061 = vpack.c.b16 %v1853, %v1845
    %v2062 = vpack.c.b16 %v1854, %v1846
    %v2063 = vpack.c.b16 %v1855, %v1847
    %v2064 = vpack.c.b16 %v1856, %v1848
    %v2065 = vpack.c.b16 %v1857, %v1849
    %v2066 = vpack.c.b16 %v1866, %v1858
    %v2067 = vpack.c.b16 %v1867, %v1859
    %v2068 = vpack.c.b16 %v1868, %v1860
    %v2069 = vpack.c.b16 %v1869, %v1861
    %v2070 = vpack.c.b16 %v1870, %v1862
    %v2071 = vpack.c.b16 %v1871, %v1863
    %v2072 = vpack.c.b16 %v1872, %v1864
    %v2073 = vpack.c.b16 %v1873, %v1865
    %v2074 = vpack.c.b16 %v1882, %v1874
    %v2075 = vpack.c.b16 %v1883, %v1875
    %v2076 = vpack.c.b16 %v1884, %v1876
    %v2077 = vpack.c.b16 %v1885, %v1877
    %v2078 = vpack.c.b16 %v1886, %v1878
    %v2079 = vpack.c.b16 %v1887, %v1879
    %v2080 = vpack.c.b16 %v1888, %v1880
    %v2081 = vpack.c.b16 %v1889, %v1881
    %v2082 = vpack.c.b16 %v1898, %v1890
    %v2083 = vpack.c.b16 %v1899, %v1891
    %v2084 = vpack.c.b16 %v1900, %v1892
    %v2085 = vpack.c.b16 %v1901, %v1893
    %v2086 = vpack.c.b16 %v1902, %v1894
    %v2087 = vpack.c.b16 %v1903, %v1895
    %v2088 = vpack.c.b16 %v1904, %v1896
    %v2089 = vpack.c.b16 %v1905, %v1897
    %v2090 = vpack.c.b16 %v1914, %v1906
    %v2091 = vpack.c.b16 %v1915, %v1907
    %v2092 = vpack.c.b16 %v1916, %v1908
    %v2093 = vpack.c.b16 %v1917, %v1909
    %v2094 = vpack.c.b16 %v1918, %v1910
    %v2095 = vpack.c.b16 %v1919, %v1911
    %v2096 = vpack.c.b16 %v1920, %v1912
    %v2097 = vpack.c.b16 %v1921, %v1913
    %v2098 = vpack.c.b16 %v1930, %v1922
    %v2099 = vpack.c.b16 %v1931, %v1923
    %v2100 = vpack.c.b16 %v1932, %v1924
    %v2101 = vpack.c.b16 %v1933, %v1925
    %v2102 = vpack.c.b16 %v1934, %v1926
    %v2103 = vpack.c.b16 %v1935, %v1927
    %v2104 = vpack.c.b16 %v1936, %v1928
    %v2105 = vpack.c.b16 %v1937, %v1929
    %v2106 = vpack.c.b16 %v1946, %v1938
    %v2107 = vpack.c.b16 %v1947, %v1939
    %v2108 = vpack.c.b16 %v1948, %v1940
    %v2109 = vpack.c.b16 %v1949, %v1941
    %v2110 = vpack.c.b16 %v1950, %v1942
    %v2111 = vpack.c.b16 %v1951, %v1943
    %v2112 = vpack.c.b16 %v1952, %v1944
    %v2113 = vpack.c.b16 %v1953, %v1945
    %v2114 = vpack.c.b16 %v1962, %v1954
    %v2115 = vpack.c.b16 %v1963, %v1955
    %v2116 = vpack.c.b16 %v1964, %v1956
    %v2117 = vpack.c.b16 %v1965, %v1957
    %v2118 = vpack.c.b16 %v1966, %v1958
    %v2119 = vpack.c.b16 %v1967, %v1959
    %v2120 = vpack.c.b16 %v1968, %v1960
    %v2121 = vpack.c.b16 %v1969, %v1961
    %v2122 = vpack.c.b16 %v1978, %v1970
    %v2123 = vpack.c.b16 %v1979, %v1971
    %v2124 = vpack.c.b16 %v1980, %v1972
    %v2125 = vpack.c.b16 %v1981, %v1973
    %v2126 = vpack.c.b16 %v1982, %v1974
    %v2127 = vpack.c.b16 %v1983, %v1975
    %v2128 = vpack.c.b16 %v1984, %v1976
    %v2129 = vpack.c.b16 %v1985, %v1977
    %v2130 = vpack.c.b16 %v1994, %v1986
    %v2131 = vpack.c.b16 %v1995, %v1987
    %v2132 = vpack.c.b16 %v1996, %v1988
    %v2133 = vpack.c.b16 %v1997, %v1989
    %v2134 = vpack.c.b16 %v1998, %v1990
    %v2135 = vpack.c.b16 %v1999, %v1991
    %v2136 = vpack.c.b16 %v2000, %v1992
    %v2137 = vpack.c.b16 %v2001, %v1993
    %v2138 = vpack.c.b16 %v2010, %v2002
    %v2139 = vpack.c.b16 %v2011, %v2003
    %v2140 = vpack.c.b16 %v2012, %v2004
    %v2141 = vpack.c.b16 %v2013, %v2005
    %v2142 = vpack.c.b16 %v2014, %v2006
    %v2143 = vpack.c.b16 %v2015, %v2007
    %v2144 = vpack.c.b16 %v2016, %v2008
    %v2145 = vpack.c.b16 %v2017, %v2009
    %2274 = vmatprep.subr.bf16.mxu0 %v2075
    %2275 = vmatpush1.bf16.msra.mxu0 %v2074
    %2276 = vmatprep.subr.bf16.mxu0 %v2067
    %2277 = vmatpush1.bf16.msra.mxu0 %v2066
    %2278 = vmatprep.subr.bf16.mxu0 %v2059
    %2279 = vmatpush1.bf16.msra.mxu0 %v2058
    %2280 = vmatprep.subr.bf16.mxu0 %v2051
    %2281 = vmatpush1.bf16.msra.mxu0 %v2050
    %2282 = vmatprep.subr.bf16.mxu0 %v2043
    %2283 = vmatpush1.bf16.msra.mxu0 %v2042
    %2284 = vmatprep.subr.bf16.mxu0 %v2035
    %2285 = vmatpush1.bf16.msra.mxu0 %v2034
    %2286 = vmatprep.subr.bf16.mxu0 %v2027
    %2287 = vmatpush1.bf16.msra.mxu0 %v2026
    %2288 = vmatprep.subr.bf16.mxu0 %v2019
    %2289 = vmatpush1.bf16.msra.mxu0 %v2018
    %2290 = vmatprep.subr.bf16.mxu0 %v2139
    %2291 = vmatpush2.bf16.msra.mxu0 %v2138
    %2292 = vmatprep.subr.bf16.mxu0 %v2131
    %2293 = vmatpush2.bf16.msra.mxu0 %v2130
    %2294 = vmatprep.subr.bf16.mxu0 %v2123
    %2295 = vmatpush2.bf16.msra.mxu0 %v2122
    %2296 = vmatprep.subr.bf16.mxu0 %v2115
    %2297 = vmatpush2.bf16.msra.mxu0 %v2114
    %2298 = vmatprep.subr.bf16.mxu0 %v2107
    %2299 = vmatpush2.bf16.msra.mxu0 %v2106
    %2300 = vmatprep.subr.bf16.mxu0 %v2099
    %2301 = vmatpush2.bf16.msra.mxu0 %v2098
    %2302 = vmatprep.subr.bf16.mxu0 %v2091
    %2303 = vmatpush2.bf16.msra.mxu0 %v2090
    %2304 = vmatprep.subr.bf16.mxu0 %v2083
    %2305 = vmatpush2.bf16.msra.mxu0 %v2082
    %2306 = vmatprep.mubr.bf16.mxu0 %v1463
    %2307 = vmatmul.mubr.bf16.gmra.mxu0 %v1462
    %v2308 = vpop.f32.mrf.mxu0
    %v2309 = vadd.f32 %v1597, %v2308
    %v2310 = vpop.f32.mrf.mxu0
    %v2311 = vadd.f32 %v1601, %v2310
    %v2312 = vpop.f32.mrf.mxu0
    %v2313 = vadd.f32 %v1597, %v2312
    %v2314 = vpop.f32.mrf.mxu0
    %v2315 = vadd.f32 %v1601, %v2314
    %2316 = vdwg.mxu0
    %2317 = vmatprep.subr.bf16.mxu0 %v2077
    %2318 = vmatpush1.bf16.msra.mxu0 %v2076
    %2319 = vmatprep.subr.bf16.mxu0 %v2069
    %2320 = vmatpush1.bf16.msra.mxu0 %v2068
    %2321 = vmatprep.subr.bf16.mxu0 %v2061
    %2322 = vmatpush1.bf16.msra.mxu0 %v2060
    %2323 = vmatprep.subr.bf16.mxu0 %v2053
    %2324 = vmatpush1.bf16.msra.mxu0 %v2052
    %2325 = vmatprep.subr.bf16.mxu0 %v2045
    %2326 = vmatpush1.bf16.msra.mxu0 %v2044
    %2327 = vmatprep.subr.bf16.mxu0 %v2037
    %2328 = vmatpush1.bf16.msra.mxu0 %v2036
    %2329 = vmatprep.subr.bf16.mxu0 %v2029
    %2330 = vmatpush1.bf16.msra.mxu0 %v2028
    %2331 = vmatprep.subr.bf16.mxu0 %v2021
    %2332 = vmatpush1.bf16.msra.mxu0 %v2020
    %2333 = vmatprep.subr.bf16.mxu0 %v2141
    %2334 = vmatpush2.bf16.msra.mxu0 %v2140
    %2335 = vmatprep.subr.bf16.mxu0 %v2133
    %2336 = vmatpush2.bf16.msra.mxu0 %v2132
    %2337 = vmatprep.subr.bf16.mxu0 %v2125
    %2338 = vmatpush2.bf16.msra.mxu0 %v2124
    %2339 = vmatprep.subr.bf16.mxu0 %v2117
    %2340 = vmatpush2.bf16.msra.mxu0 %v2116
    %2341 = vmatprep.subr.bf16.mxu0 %v2109
    %2342 = vmatpush2.bf16.msra.mxu0 %v2108
    %2343 = vmatprep.subr.bf16.mxu0 %v2101
    %2344 = vmatpush2.bf16.msra.mxu0 %v2100
    %2345 = vmatprep.subr.bf16.mxu0 %v2093
    %2346 = vmatpush2.bf16.msra.mxu0 %v2092
    %2347 = vmatprep.subr.bf16.mxu0 %v2085
    %2348 = vmatpush2.bf16.msra.mxu0 %v2084
    %2349 = vmatprep.mubr.bf16.mxu0 %v1463
    %2350 = vmatmul.mubr.bf16.gmra.mxu0 %v1462
    %v2351 = vpop.f32.mrf.mxu0
    %v2352 = vadd.f32 %v1605, %v2351
    %v2353 = vpop.f32.mrf.mxu0
    %v2354 = vadd.f32 %v1609, %v2353
    %v2355 = vpop.f32.mrf.mxu0
    %v2356 = vadd.f32 %v1605, %v2355
    %v2357 = vpop.f32.mrf.mxu0
    %v2358 = vadd.f32 %v1609, %v2357
    %2359 = vdwg.mxu0
    %2360 = vmatprep.subr.bf16.mxu0 %v2079
    %2361 = vmatpush1.bf16.msra.mxu0 %v2078
    %2362 = vmatprep.subr.bf16.mxu0 %v2071
    %2363 = vmatpush1.bf16.msra.mxu0 %v2070
    %2364 = vmatprep.subr.bf16.mxu0 %v2063
    %2365 = vmatpush1.bf16.msra.mxu0 %v2062
    %2366 = vmatprep.subr.bf16.mxu0 %v2055
    %2367 = vmatpush1.bf16.msra.mxu0 %v2054
    %2368 = vmatprep.subr.bf16.mxu0 %v2047
    %2369 = vmatpush1.bf16.msra.mxu0 %v2046
    %2370 = vmatprep.subr.bf16.mxu0 %v2039
    %2371 = vmatpush1.bf16.msra.mxu0 %v2038
    %2372 = vmatprep.subr.bf16.mxu0 %v2031
    %2373 = vmatpush1.bf16.msra.mxu0 %v2030
    %2374 = vmatprep.subr.bf16.mxu0 %v2023
    %2375 = vmatpush1.bf16.msra.mxu0 %v2022
    %2376 = vmatprep.subr.bf16.mxu0 %v2143
    %2377 = vmatpush2.bf16.msra.mxu0 %v2142
    %2378 = vmatprep.subr.bf16.mxu0 %v2135
    %2379 = vmatpush2.bf16.msra.mxu0 %v2134
    %2380 = vmatprep.subr.bf16.mxu0 %v2127
    %2381 = vmatpush2.bf16.msra.mxu0 %v2126
    %2382 = vmatprep.subr.bf16.mxu0 %v2119
    %2383 = vmatpush2.bf16.msra.mxu0 %v2118
    %2384 = vmatprep.subr.bf16.mxu0 %v2111
    %2385 = vmatpush2.bf16.msra.mxu0 %v2110
    %2386 = vmatprep.subr.bf16.mxu0 %v2103
    %2387 = vmatpush2.bf16.msra.mxu0 %v2102
    %2388 = vmatprep.subr.bf16.mxu0 %v2095
    %2389 = vmatpush2.bf16.msra.mxu0 %v2094
    %2390 = vmatprep.subr.bf16.mxu0 %v2087
    %2391 = vmatpush2.bf16.msra.mxu0 %v2086
    %2392 = vmatprep.mubr.bf16.mxu0 %v1463
    %2393 = vmatmul.mubr.bf16.gmra.mxu0 %v1462
    %v2394 = vpop.f32.mrf.mxu0
    %v2395 = vadd.f32 %v1613, %v2394
    %v2396 = vpop.f32.mrf.mxu0
    %v2397 = vadd.f32 %v1617, %v2396
    %v2398 = vpop.f32.mrf.mxu0
    %v2399 = vadd.f32 %v1613, %v2398
    %v2400 = vpop.f32.mrf.mxu0
    %v2401 = vadd.f32 %v1617, %v2400
    %2402 = vdwg.mxu0
    %2403 = vmatprep.subr.bf16.mxu0 %v2081
    %2404 = vmatpush1.bf16.msra.mxu0 %v2080
    %2405 = vmatprep.subr.bf16.mxu0 %v2073
    %2406 = vmatpush1.bf16.msra.mxu0 %v2072
    %2407 = vmatprep.subr.bf16.mxu0 %v2065
    %2408 = vmatpush1.bf16.msra.mxu0 %v2064
    %2409 = vmatprep.subr.bf16.mxu0 %v2057
    %2410 = vmatpush1.bf16.msra.mxu0 %v2056
    %2411 = vmatprep.subr.bf16.mxu0 %v2049
    %2412 = vmatpush1.bf16.msra.mxu0 %v2048
    %2413 = vmatprep.subr.bf16.mxu0 %v2041
    %2414 = vmatpush1.bf16.msra.mxu0 %v2040
    %2415 = vmatprep.subr.bf16.mxu0 %v2033
    %2416 = vmatpush1.bf16.msra.mxu0 %v2032
    %2417 = vmatprep.subr.bf16.mxu0 %v2025
    %2418 = vmatpush1.bf16.msra.mxu0 %v2024
    %2419 = vmatprep.subr.bf16.mxu0 %v2145
    %2420 = vmatpush2.bf16.msra.mxu0 %v2144
    %2421 = vmatprep.subr.bf16.mxu0 %v2137
    %2422 = vmatpush2.bf16.msra.mxu0 %v2136
    %2423 = vmatprep.subr.bf16.mxu0 %v2129
    %2424 = vmatpush2.bf16.msra.mxu0 %v2128
    %2425 = vmatprep.subr.bf16.mxu0 %v2121
    %2426 = vmatpush2.bf16.msra.mxu0 %v2120
    %2427 = vmatprep.subr.bf16.mxu0 %v2113
    %2428 = vmatpush2.bf16.msra.mxu0 %v2112
    %2429 = vmatprep.subr.bf16.mxu0 %v2105
    %2430 = vmatpush2.bf16.msra.mxu0 %v2104
    %2431 = vmatprep.subr.bf16.mxu0 %v2097
    %2432 = vmatpush2.bf16.msra.mxu0 %v2096
    %2433 = vmatprep.subr.bf16.mxu0 %v2089
    %2434 = vmatpush2.bf16.msra.mxu0 %v2088
    %2435 = vmatprep.mubr.bf16.mxu0 %v1463
    %2436 = vmatmul.mubr.bf16.gmra.mxu0 %v1462
    %v2437 = vpop.f32.mrf.mxu0
    %v2438 = vadd.f32 %v1621, %v2437
    %v2439 = vpop.f32.mrf.mxu0
    %v2440 = vadd.f32 %v1625, %v2439
    %v2441 = vpop.f32.mrf.mxu0
    %v2442 = vadd.f32 %v1621, %v2441
    %v2443 = vpop.f32.mrf.mxu0
    %v2444 = vadd.f32 %v1625, %v2443
    %2445 = vdwg.mxu0
    %vm2446 = vcmp.ge.f32.partialorder %v2309, 0.0
    %vm2447 = vcmp.ge.f32.partialorder %v2311, 0.0
    %vm2448 = vcmp.ge.f32.partialorder %v2352, 0.0
    %vm2449 = vcmp.ge.f32.partialorder %v2354, 0.0
    %vm2450 = vcmp.ge.f32.partialorder %v2395, 0.0
    %vm2451 = vcmp.ge.f32.partialorder %v2397, 0.0
    %vm2452 = vcmp.ge.f32.partialorder %v2438, 0.0
    %vm2453 = vcmp.ge.f32.partialorder %v2440, 0.0
    %vm2454 = vcmp.ge.f32.partialorder %v2313, 0.0
    %vm2455 = vcmp.ge.f32.partialorder %v2315, 0.0
    %vm2456 = vcmp.ge.f32.partialorder %v2356, 0.0
    %vm2457 = vcmp.ge.f32.partialorder %v2358, 0.0
    %vm2458 = vcmp.ge.f32.partialorder %v2399, 0.0
    %vm2459 = vcmp.ge.f32.partialorder %v2401, 0.0
    %vm2460 = vcmp.ge.f32.partialorder %v2442, 0.0
    %vm2461 = vcmp.ge.f32.partialorder %v2444, 0.0
    %v2462 = vmul.f32 %v2309, 0.01
    %v2463 = vmul.f32 %v2311, 0.01
    %v2464 = vmul.f32 %v2352, 0.01
    %v2465 = vmul.f32 %v2354, 0.01
    %v2466 = vmul.f32 %v2395, 0.01
    %v2467 = vmul.f32 %v2397, 0.01
    %v2468 = vmul.f32 %v2438, 0.01
    %v2469 = vmul.f32 %v2440, 0.01
    %v2470 = vmul.f32 %v2313, 0.01
    %v2471 = vmul.f32 %v2315, 0.01
    %v2472 = vmul.f32 %v2356, 0.01
    %v2473 = vmul.f32 %v2358, 0.01
    %v2474 = vmul.f32 %v2399, 0.01
    %v2475 = vmul.f32 %v2401, 0.01
    %v2476 = vmul.f32 %v2442, 0.01
    %v2477 = vmul.f32 %v2444, 0.01
    %v2478 = vsel %vm2446, %v2309, %v2462
    %v2479 = vsel %vm2447, %v2311, %v2463
    %v2480 = vsel %vm2448, %v2352, %v2464
    %v2481 = vsel %vm2449, %v2354, %v2465
    %v2482 = vsel %vm2450, %v2395, %v2466
    %v2483 = vsel %vm2451, %v2397, %v2467
    %v2484 = vsel %vm2452, %v2438, %v2468
    %v2485 = vsel %vm2453, %v2440, %v2469
    %v2486 = vsel %vm2454, %v2313, %v2470
    %v2487 = vsel %vm2455, %v2315, %v2471
    %v2488 = vsel %vm2456, %v2356, %v2472
    %v2489 = vsel %vm2457, %v2358, %v2473
    %v2490 = vsel %vm2458, %v2399, %v2474
    %v2491 = vsel %vm2459, %v2401, %v2475
    %v2492 = vsel %vm2460, %v2442, %v2476
    %v2493 = vsel %vm2461, %v2444, %v2477
    %v2494 = vpack.c.bf16 %v2486, %v2478
    %v2495 = vpack.c.bf16 %v2487, %v2479
    %v2496 = vpack.c.bf16 %v2488, %v2480
    %v2497 = vpack.c.bf16 %v2489, %v2481
    %v2498 = vpack.c.bf16 %v2490, %v2482
    %v2499 = vpack.c.bf16 %v2491, %v2483
    %v2500 = vpack.c.bf16 %v2492, %v2484
    %v2501 = vpack.c.bf16 %v2493, %v2485
    %v2502 = vld [vmem:[#allocation25] sm:$0xff]
    %v2503 = vld [vmem:[#allocation25 + $0x8] sm:$0xff]
    %v2504 = vld [vmem:[#allocation25 + $0x10] sm:$0xff]
    %v2505 = vld [vmem:[#allocation25 + $0x18] sm:$0xff]
    %v2506 = vld [vmem:[#allocation25 + $0x20] sm:$0xff]
    %v2507 = vld [vmem:[#allocation25 + $0x28] sm:$0xff]
    %v2508 = vld [vmem:[#allocation25 + $0x30] sm:$0xff]
    %v2509 = vld [vmem:[#allocation25 + $0x38] sm:$0xff]
    %v2510 = vld [vmem:[#allocation25 + $0x40] sm:$0xff]
    %v2511 = vld [vmem:[#allocation25 + $0x48] sm:$0xff]
    %v2512 = vld [vmem:[#allocation25 + $0x50] sm:$0xff]
    %v2513 = vld [vmem:[#allocation25 + $0x58] sm:$0xff]
    %v2514 = vld [vmem:[#allocation25 + $0x60] sm:$0xff]
    %v2515 = vld [vmem:[#allocation25 + $0x68] sm:$0xff]
    %v2516 = vld [vmem:[#allocation25 + $0x70] sm:$0xff]
    %v2517 = vld [vmem:[#allocation25 + $0x78] sm:$0xff]
    %v2518 = vld [vmem:[#allocation25 + $0x80] sm:$0xff]
    %v2519 = vld [vmem:[#allocation25 + $0x88] sm:$0xff]
    %v2520 = vld [vmem:[#allocation25 + $0x90] sm:$0xff]
    %v2521 = vld [vmem:[#allocation25 + $0x98] sm:$0xff]
    %v2522 = vld [vmem:[#allocation25 + $0xa0] sm:$0xff]
    %v2523 = vld [vmem:[#allocation25 + $0xa8] sm:$0xff]
    %v2524 = vld [vmem:[#allocation25 + $0xb0] sm:$0xff]
    %v2525 = vld [vmem:[#allocation25 + $0xb8] sm:$0xff]
    %v2526 = vld [vmem:[#allocation25 + $0xc0] sm:$0xff]
    %v2527 = vld [vmem:[#allocation25 + $0xc8] sm:$0xff]
    %v2528 = vld [vmem:[#allocation25 + $0xd0] sm:$0xff]
    %v2529 = vld [vmem:[#allocation25 + $0xd8] sm:$0xff]
    %v2530 = vld [vmem:[#allocation25 + $0xe0] sm:$0xff]
    %v2531 = vld [vmem:[#allocation25 + $0xe8] sm:$0xff]
    %v2532 = vld [vmem:[#allocation25 + $0xf0] sm:$0xff]
    %v2533 = vld [vmem:[#allocation25 + $0xf8] sm:$0xff]
    %v2534 = vld [vmem:[#allocation25 + $0x100] sm:$0xff]
    %v2535 = vld [vmem:[#allocation25 + $0x108] sm:$0xff]
    %v2536 = vld [vmem:[#allocation25 + $0x110] sm:$0xff]
    %v2537 = vld [vmem:[#allocation25 + $0x118] sm:$0xff]
    %v2538 = vld [vmem:[#allocation25 + $0x120] sm:$0xff]
    %v2539 = vld [vmem:[#allocation25 + $0x128] sm:$0xff]
    %v2540 = vld [vmem:[#allocation25 + $0x130] sm:$0xff]
    %v2541 = vld [vmem:[#allocation25 + $0x138] sm:$0xff]
    %v2542 = vld [vmem:[#allocation25 + $0x140] sm:$0xff]
    %v2543 = vld [vmem:[#allocation25 + $0x148] sm:$0xff]
    %v2544 = vld [vmem:[#allocation25 + $0x150] sm:$0xff]
    %v2545 = vld [vmem:[#allocation25 + $0x158] sm:$0xff]
    %v2546 = vld [vmem:[#allocation25 + $0x160] sm:$0xff]
    %v2547 = vld [vmem:[#allocation25 + $0x168] sm:$0xff]
    %v2548 = vld [vmem:[#allocation25 + $0x170] sm:$0xff]
    %v2549 = vld [vmem:[#allocation25 + $0x178] sm:$0xff]
    %v2550 = vld [vmem:[#allocation25 + $0x180] sm:$0xff]
    %v2551 = vld [vmem:[#allocation25 + $0x188] sm:$0xff]
    %v2552 = vld [vmem:[#allocation25 + $0x190] sm:$0xff]
    %v2553 = vld [vmem:[#allocation25 + $0x198] sm:$0xff]
    %v2554 = vld [vmem:[#allocation25 + $0x1a0] sm:$0xff]
    %v2555 = vld [vmem:[#allocation25 + $0x1a8] sm:$0xff]
    %v2556 = vld [vmem:[#allocation25 + $0x1b0] sm:$0xff]
    %v2557 = vld [vmem:[#allocation25 + $0x1b8] sm:$0xff]
    %v2558 = vld [vmem:[#allocation25 + $0x1c0] sm:$0xff]
    %v2559 = vld [vmem:[#allocation25 + $0x1c8] sm:$0xff]
    %v2560 = vld [vmem:[#allocation25 + $0x1d0] sm:$0xff]
    %v2561 = vld [vmem:[#allocation25 + $0x1d8] sm:$0xff]
    %v2562 = vld [vmem:[#allocation25 + $0x1e0] sm:$0xff]
    %v2563 = vld [vmem:[#allocation25 + $0x1e8] sm:$0xff]
    %v2564 = vld [vmem:[#allocation25 + $0x1f0] sm:$0xff]
    %v2565 = vld [vmem:[#allocation25 + $0x1f8] sm:$0xff]
    %v2566 = vld [vmem:[#allocation25 + $0x200] sm:$0xff]
    %v2567 = vld [vmem:[#allocation25 + $0x208] sm:$0xff]
    %v2568 = vld [vmem:[#allocation25 + $0x210] sm:$0xff]
    %v2569 = vld [vmem:[#allocation25 + $0x218] sm:$0xff]
    %v2570 = vld [vmem:[#allocation25 + $0x220] sm:$0xff]
    %v2571 = vld [vmem:[#allocation25 + $0x228] sm:$0xff]
    %v2572 = vld [vmem:[#allocation25 + $0x230] sm:$0xff]
    %v2573 = vld [vmem:[#allocation25 + $0x238] sm:$0xff]
    %v2574 = vld [vmem:[#allocation25 + $0x240] sm:$0xff]
    %v2575 = vld [vmem:[#allocation25 + $0x248] sm:$0xff]
    %v2576 = vld [vmem:[#allocation25 + $0x250] sm:$0xff]
    %v2577 = vld [vmem:[#allocation25 + $0x258] sm:$0xff]
    %v2578 = vld [vmem:[#allocation25 + $0x260] sm:$0xff]
    %v2579 = vld [vmem:[#allocation25 + $0x268] sm:$0xff]
    %v2580 = vld [vmem:[#allocation25 + $0x270] sm:$0xff]
    %v2581 = vld [vmem:[#allocation25 + $0x278] sm:$0xff]
    %v2582 = vld [vmem:[#allocation25 + $0x280] sm:$0xff]
    %v2583 = vld [vmem:[#allocation25 + $0x288] sm:$0xff]
    %v2584 = vld [vmem:[#allocation25 + $0x290] sm:$0xff]
    %v2585 = vld [vmem:[#allocation25 + $0x298] sm:$0xff]
    %v2586 = vld [vmem:[#allocation25 + $0x2a0] sm:$0xff]
    %v2587 = vld [vmem:[#allocation25 + $0x2a8] sm:$0xff]
    %v2588 = vld [vmem:[#allocation25 + $0x2b0] sm:$0xff]
    %v2589 = vld [vmem:[#allocation25 + $0x2b8] sm:$0xff]
    %v2590 = vld [vmem:[#allocation25 + $0x2c0] sm:$0xff]
    %v2591 = vld [vmem:[#allocation25 + $0x2c8] sm:$0xff]
    %v2592 = vld [vmem:[#allocation25 + $0x2d0] sm:$0xff]
    %v2593 = vld [vmem:[#allocation25 + $0x2d8] sm:$0xff]
    %v2594 = vld [vmem:[#allocation25 + $0x2e0] sm:$0xff]
    %v2595 = vld [vmem:[#allocation25 + $0x2e8] sm:$0xff]
    %v2596 = vld [vmem:[#allocation25 + $0x2f0] sm:$0xff]
    %v2597 = vld [vmem:[#allocation25 + $0x2f8] sm:$0xff]
    %v2598 = vld [vmem:[#allocation25 + $0x300] sm:$0xff]
    %v2599 = vld [vmem:[#allocation25 + $0x308] sm:$0xff]
    %v2600 = vld [vmem:[#allocation25 + $0x310] sm:$0xff]
    %v2601 = vld [vmem:[#allocation25 + $0x318] sm:$0xff]
    %v2602 = vld [vmem:[#allocation25 + $0x320] sm:$0xff]
    %v2603 = vld [vmem:[#allocation25 + $0x328] sm:$0xff]
    %v2604 = vld [vmem:[#allocation25 + $0x330] sm:$0xff]
    %v2605 = vld [vmem:[#allocation25 + $0x338] sm:$0xff]
    %v2606 = vld [vmem:[#allocation25 + $0x340] sm:$0xff]
    %v2607 = vld [vmem:[#allocation25 + $0x348] sm:$0xff]
    %v2608 = vld [vmem:[#allocation25 + $0x350] sm:$0xff]
    %v2609 = vld [vmem:[#allocation25 + $0x358] sm:$0xff]
    %v2610 = vld [vmem:[#allocation25 + $0x360] sm:$0xff]
    %v2611 = vld [vmem:[#allocation25 + $0x368] sm:$0xff]
    %v2612 = vld [vmem:[#allocation25 + $0x370] sm:$0xff]
    %v2613 = vld [vmem:[#allocation25 + $0x378] sm:$0xff]
    %v2614 = vld [vmem:[#allocation25 + $0x380] sm:$0xff]
    %v2615 = vld [vmem:[#allocation25 + $0x388] sm:$0xff]
    %v2616 = vld [vmem:[#allocation25 + $0x390] sm:$0xff]
    %v2617 = vld [vmem:[#allocation25 + $0x398] sm:$0xff]
    %v2618 = vld [vmem:[#allocation25 + $0x3a0] sm:$0xff]
    %v2619 = vld [vmem:[#allocation25 + $0x3a8] sm:$0xff]
    %v2620 = vld [vmem:[#allocation25 + $0x3b0] sm:$0xff]
    %v2621 = vld [vmem:[#allocation25 + $0x3b8] sm:$0xff]
    %v2622 = vld [vmem:[#allocation25 + $0x3c0] sm:$0xff]
    %v2623 = vld [vmem:[#allocation25 + $0x3c8] sm:$0xff]
    %v2624 = vld [vmem:[#allocation25 + $0x3d0] sm:$0xff]
    %v2625 = vld [vmem:[#allocation25 + $0x3d8] sm:$0xff]
    %v2626 = vld [vmem:[#allocation25 + $0x3e0] sm:$0xff]
    %v2627 = vld [vmem:[#allocation25 + $0x3e8] sm:$0xff]
    %v2628 = vld [vmem:[#allocation25 + $0x3f0] sm:$0xff]
    %v2629 = vld [vmem:[#allocation25 + $0x3f8] sm:$0xff]
    %v2630 = vld [vmem:[#allocation25 + $0x400] sm:$0xff]
    %v2631 = vld [vmem:[#allocation25 + $0x408] sm:$0xff]
    %v2632 = vld [vmem:[#allocation25 + $0x410] sm:$0xff]
    %v2633 = vld [vmem:[#allocation25 + $0x418] sm:$0xff]
    %v2634 = vld [vmem:[#allocation25 + $0x420] sm:$0xff]
    %v2635 = vld [vmem:[#allocation25 + $0x428] sm:$0xff]
    %v2636 = vld [vmem:[#allocation25 + $0x430] sm:$0xff]
    %v2637 = vld [vmem:[#allocation25 + $0x438] sm:$0xff]
    %v2638 = vld [vmem:[#allocation25 + $0x440] sm:$0xff]
    %v2639 = vld [vmem:[#allocation25 + $0x448] sm:$0xff]
    %v2640 = vld [vmem:[#allocation25 + $0x450] sm:$0xff]
    %v2641 = vld [vmem:[#allocation25 + $0x458] sm:$0xff]
    %v2642 = vld [vmem:[#allocation25 + $0x460] sm:$0xff]
    %v2643 = vld [vmem:[#allocation25 + $0x468] sm:$0xff]
    %v2644 = vld [vmem:[#allocation25 + $0x470] sm:$0xff]
    %v2645 = vld [vmem:[#allocation25 + $0x478] sm:$0xff]
    %v2646 = vld [vmem:[#allocation25 + $0x480] sm:$0xff]
    %v2647 = vld [vmem:[#allocation25 + $0x488] sm:$0xff]
    %v2648 = vld [vmem:[#allocation25 + $0x490] sm:$0xff]
    %v2649 = vld [vmem:[#allocation25 + $0x498] sm:$0xff]
    %v2650 = vld [vmem:[#allocation25 + $0x4a0] sm:$0xff]
    %v2651 = vld [vmem:[#allocation25 + $0x4a8] sm:$0xff]
    %v2652 = vld [vmem:[#allocation25 + $0x4b0] sm:$0xff]
    %v2653 = vld [vmem:[#allocation25 + $0x4b8] sm:$0xff]
    %v2654 = vld [vmem:[#allocation25 + $0x4c0] sm:$0xff]
    %v2655 = vld [vmem:[#allocation25 + $0x4c8] sm:$0xff]
    %v2656 = vld [vmem:[#allocation25 + $0x4d0] sm:$0xff]
    %v2657 = vld [vmem:[#allocation25 + $0x4d8] sm:$0xff]
    %v2658 = vld [vmem:[#allocation25 + $0x4e0] sm:$0xff]
    %v2659 = vld [vmem:[#allocation25 + $0x4e8] sm:$0xff]
    %v2660 = vld [vmem:[#allocation25 + $0x4f0] sm:$0xff]
    %v2661 = vld [vmem:[#allocation25 + $0x4f8] sm:$0xff]
    %v2662 = vld [vmem:[#allocation25 + $0x500] sm:$0xff]
    %v2663 = vld [vmem:[#allocation25 + $0x508] sm:$0xff]
    %v2664 = vld [vmem:[#allocation25 + $0x510] sm:$0xff]
    %v2665 = vld [vmem:[#allocation25 + $0x518] sm:$0xff]
    %v2666 = vld [vmem:[#allocation25 + $0x520] sm:$0xff]
    %v2667 = vld [vmem:[#allocation25 + $0x528] sm:$0xff]
    %v2668 = vld [vmem:[#allocation25 + $0x530] sm:$0xff]
    %v2669 = vld [vmem:[#allocation25 + $0x538] sm:$0xff]
    %v2670 = vld [vmem:[#allocation25 + $0x540] sm:$0xff]
    %v2671 = vld [vmem:[#allocation25 + $0x548] sm:$0xff]
    %v2672 = vld [vmem:[#allocation25 + $0x550] sm:$0xff]
    %v2673 = vld [vmem:[#allocation25 + $0x558] sm:$0xff]
    %v2674 = vld [vmem:[#allocation25 + $0x560] sm:$0xff]
    %v2675 = vld [vmem:[#allocation25 + $0x568] sm:$0xff]
    %v2676 = vld [vmem:[#allocation25 + $0x570] sm:$0xff]
    %v2677 = vld [vmem:[#allocation25 + $0x578] sm:$0xff]
    %v2678 = vld [vmem:[#allocation25 + $0x580] sm:$0xff]
    %v2679 = vld [vmem:[#allocation25 + $0x588] sm:$0xff]
    %v2680 = vld [vmem:[#allocation25 + $0x590] sm:$0xff]
    %v2681 = vld [vmem:[#allocation25 + $0x598] sm:$0xff]
    %v2682 = vld [vmem:[#allocation25 + $0x5a0] sm:$0xff]
    %v2683 = vld [vmem:[#allocation25 + $0x5a8] sm:$0xff]
    %v2684 = vld [vmem:[#allocation25 + $0x5b0] sm:$0xff]
    %v2685 = vld [vmem:[#allocation25 + $0x5b8] sm:$0xff]
    %v2686 = vld [vmem:[#allocation25 + $0x5c0] sm:$0xff]
    %v2687 = vld [vmem:[#allocation25 + $0x5c8] sm:$0xff]
    %v2688 = vld [vmem:[#allocation25 + $0x5d0] sm:$0xff]
    %v2689 = vld [vmem:[#allocation25 + $0x5d8] sm:$0xff]
    %v2690 = vld [vmem:[#allocation25 + $0x5e0] sm:$0xff]
    %v2691 = vld [vmem:[#allocation25 + $0x5e8] sm:$0xff]
    %v2692 = vld [vmem:[#allocation25 + $0x5f0] sm:$0xff]
    %v2693 = vld [vmem:[#allocation25 + $0x5f8] sm:$0xff]
    %v2694 = vld [vmem:[#allocation25 + $0x600] sm:$0xff]
    %v2695 = vld [vmem:[#allocation25 + $0x608] sm:$0xff]
    %v2696 = vld [vmem:[#allocation25 + $0x610] sm:$0xff]
    %v2697 = vld [vmem:[#allocation25 + $0x618] sm:$0xff]
    %v2698 = vld [vmem:[#allocation25 + $0x620] sm:$0xff]
    %v2699 = vld [vmem:[#allocation25 + $0x628] sm:$0xff]
    %v2700 = vld [vmem:[#allocation25 + $0x630] sm:$0xff]
    %v2701 = vld [vmem:[#allocation25 + $0x638] sm:$0xff]
    %v2702 = vld [vmem:[#allocation25 + $0x640] sm:$0xff]
    %v2703 = vld [vmem:[#allocation25 + $0x648] sm:$0xff]
    %v2704 = vld [vmem:[#allocation25 + $0x650] sm:$0xff]
    %v2705 = vld [vmem:[#allocation25 + $0x658] sm:$0xff]
    %v2706 = vld [vmem:[#allocation25 + $0x660] sm:$0xff]
    %v2707 = vld [vmem:[#allocation25 + $0x668] sm:$0xff]
    %v2708 = vld [vmem:[#allocation25 + $0x670] sm:$0xff]
    %v2709 = vld [vmem:[#allocation25 + $0x678] sm:$0xff]
    %v2710 = vld [vmem:[#allocation25 + $0x680] sm:$0xff]
    %v2711 = vld [vmem:[#allocation25 + $0x688] sm:$0xff]
    %v2712 = vld [vmem:[#allocation25 + $0x690] sm:$0xff]
    %v2713 = vld [vmem:[#allocation25 + $0x698] sm:$0xff]
    %v2714 = vld [vmem:[#allocation25 + $0x6a0] sm:$0xff]
    %v2715 = vld [vmem:[#allocation25 + $0x6a8] sm:$0xff]
    %v2716 = vld [vmem:[#allocation25 + $0x6b0] sm:$0xff]
    %v2717 = vld [vmem:[#allocation25 + $0x6b8] sm:$0xff]
    %v2718 = vld [vmem:[#allocation25 + $0x6c0] sm:$0xff]
    %v2719 = vld [vmem:[#allocation25 + $0x6c8] sm:$0xff]
    %v2720 = vld [vmem:[#allocation25 + $0x6d0] sm:$0xff]
    %v2721 = vld [vmem:[#allocation25 + $0x6d8] sm:$0xff]
    %v2722 = vld [vmem:[#allocation25 + $0x6e0] sm:$0xff]
    %v2723 = vld [vmem:[#allocation25 + $0x6e8] sm:$0xff]
    %v2724 = vld [vmem:[#allocation25 + $0x6f0] sm:$0xff]
    %v2725 = vld [vmem:[#allocation25 + $0x6f8] sm:$0xff]
    %v2726 = vld [vmem:[#allocation25 + $0x700] sm:$0xff]
    %v2727 = vld [vmem:[#allocation25 + $0x708] sm:$0xff]
    %v2728 = vld [vmem:[#allocation25 + $0x710] sm:$0xff]
    %v2729 = vld [vmem:[#allocation25 + $0x718] sm:$0xff]
    %v2730 = vld [vmem:[#allocation25 + $0x720] sm:$0xff]
    %v2731 = vld [vmem:[#allocation25 + $0x728] sm:$0xff]
    %v2732 = vld [vmem:[#allocation25 + $0x730] sm:$0xff]
    %v2733 = vld [vmem:[#allocation25 + $0x738] sm:$0xff]
    %v2734 = vld [vmem:[#allocation25 + $0x740] sm:$0xff]
    %v2735 = vld [vmem:[#allocation25 + $0x748] sm:$0xff]
    %v2736 = vld [vmem:[#allocation25 + $0x750] sm:$0xff]
    %v2737 = vld [vmem:[#allocation25 + $0x758] sm:$0xff]
    %v2738 = vld [vmem:[#allocation25 + $0x760] sm:$0xff]
    %v2739 = vld [vmem:[#allocation25 + $0x768] sm:$0xff]
    %v2740 = vld [vmem:[#allocation25 + $0x770] sm:$0xff]
    %v2741 = vld [vmem:[#allocation25 + $0x778] sm:$0xff]
    %v2742 = vld [vmem:[#allocation25 + $0x780] sm:$0xff]
    %v2743 = vld [vmem:[#allocation25 + $0x788] sm:$0xff]
    %v2744 = vld [vmem:[#allocation25 + $0x790] sm:$0xff]
    %v2745 = vld [vmem:[#allocation25 + $0x798] sm:$0xff]
    %v2746 = vld [vmem:[#allocation25 + $0x7a0] sm:$0xff]
    %v2747 = vld [vmem:[#allocation25 + $0x7a8] sm:$0xff]
    %v2748 = vld [vmem:[#allocation25 + $0x7b0] sm:$0xff]
    %v2749 = vld [vmem:[#allocation25 + $0x7b8] sm:$0xff]
    %v2750 = vld [vmem:[#allocation25 + $0x7c0] sm:$0xff]
    %v2751 = vld [vmem:[#allocation25 + $0x7c8] sm:$0xff]
    %v2752 = vld [vmem:[#allocation25 + $0x7d0] sm:$0xff]
    %v2753 = vld [vmem:[#allocation25 + $0x7d8] sm:$0xff]
    %v2754 = vld [vmem:[#allocation25 + $0x7e0] sm:$0xff]
    %v2755 = vld [vmem:[#allocation25 + $0x7e8] sm:$0xff]
    %v2756 = vld [vmem:[#allocation25 + $0x7f0] sm:$0xff]
    %v2757 = vld [vmem:[#allocation25 + $0x7f8] sm:$0xff]
    %v2758 = vld [vmem:[#allocation25 + $0x800] sm:$0xff]
    %v2759 = vld [vmem:[#allocation25 + $0x808] sm:$0xff]
    %v2760 = vld [vmem:[#allocation25 + $0x810] sm:$0xff]
    %v2761 = vld [vmem:[#allocation25 + $0x818] sm:$0xff]
    %v2762 = vld [vmem:[#allocation25 + $0x820] sm:$0xff]
    %v2763 = vld [vmem:[#allocation25 + $0x828] sm:$0xff]
    %v2764 = vld [vmem:[#allocation25 + $0x830] sm:$0xff]
    %v2765 = vld [vmem:[#allocation25 + $0x838] sm:$0xff]
    %v2766 = vld [vmem:[#allocation25 + $0x840] sm:$0xff]
    %v2767 = vld [vmem:[#allocation25 + $0x848] sm:$0xff]
    %v2768 = vld [vmem:[#allocation25 + $0x850] sm:$0xff]
    %v2769 = vld [vmem:[#allocation25 + $0x858] sm:$0xff]
    %v2770 = vld [vmem:[#allocation25 + $0x860] sm:$0xff]
    %v2771 = vld [vmem:[#allocation25 + $0x868] sm:$0xff]
    %v2772 = vld [vmem:[#allocation25 + $0x870] sm:$0xff]
    %v2773 = vld [vmem:[#allocation25 + $0x878] sm:$0xff]
    %v2774 = vld [vmem:[#allocation25 + $0x880] sm:$0xff]
    %v2775 = vld [vmem:[#allocation25 + $0x888] sm:$0xff]
    %v2776 = vld [vmem:[#allocation25 + $0x890] sm:$0xff]
    %v2777 = vld [vmem:[#allocation25 + $0x898] sm:$0xff]
    %v2778 = vld [vmem:[#allocation25 + $0x8a0] sm:$0xff]
    %v2779 = vld [vmem:[#allocation25 + $0x8a8] sm:$0xff]
    %v2780 = vld [vmem:[#allocation25 + $0x8b0] sm:$0xff]
    %v2781 = vld [vmem:[#allocation25 + $0x8b8] sm:$0xff]
    %v2782 = vld [vmem:[#allocation25 + $0x8c0] sm:$0xff]
    %v2783 = vld [vmem:[#allocation25 + $0x8c8] sm:$0xff]
    %v2784 = vld [vmem:[#allocation25 + $0x8d0] sm:$0xff]
    %v2785 = vld [vmem:[#allocation25 + $0x8d8] sm:$0xff]
    %v2786 = vld [vmem:[#allocation25 + $0x8e0] sm:$0xff]
    %v2787 = vld [vmem:[#allocation25 + $0x8e8] sm:$0xff]
    %v2788 = vld [vmem:[#allocation25 + $0x8f0] sm:$0xff]
    %v2789 = vld [vmem:[#allocation25 + $0x8f8] sm:$0xff]
    %v2790 = vld [vmem:[#allocation25 + $0x900] sm:$0xff]
    %v2791 = vld [vmem:[#allocation25 + $0x908] sm:$0xff]
    %v2792 = vld [vmem:[#allocation25 + $0x910] sm:$0xff]
    %v2793 = vld [vmem:[#allocation25 + $0x918] sm:$0xff]
    %v2794 = vld [vmem:[#allocation25 + $0x920] sm:$0xff]
    %v2795 = vld [vmem:[#allocation25 + $0x928] sm:$0xff]
    %v2796 = vld [vmem:[#allocation25 + $0x930] sm:$0xff]
    %v2797 = vld [vmem:[#allocation25 + $0x938] sm:$0xff]
    %v2798 = vld [vmem:[#allocation25 + $0x940] sm:$0xff]
    %v2799 = vld [vmem:[#allocation25 + $0x948] sm:$0xff]
    %v2800 = vld [vmem:[#allocation25 + $0x950] sm:$0xff]
    %v2801 = vld [vmem:[#allocation25 + $0x958] sm:$0xff]
    %v2802 = vld [vmem:[#allocation25 + $0x960] sm:$0xff]
    %v2803 = vld [vmem:[#allocation25 + $0x968] sm:$0xff]
    %v2804 = vld [vmem:[#allocation25 + $0x970] sm:$0xff]
    %v2805 = vld [vmem:[#allocation25 + $0x978] sm:$0xff]
    %v2806 = vld [vmem:[#allocation25 + $0x980] sm:$0xff]
    %v2807 = vld [vmem:[#allocation25 + $0x988] sm:$0xff]
    %v2808 = vld [vmem:[#allocation25 + $0x990] sm:$0xff]
    %v2809 = vld [vmem:[#allocation25 + $0x998] sm:$0xff]
    %v2810 = vld [vmem:[#allocation25 + $0x9a0] sm:$0xff]
    %v2811 = vld [vmem:[#allocation25 + $0x9a8] sm:$0xff]
    %v2812 = vld [vmem:[#allocation25 + $0x9b0] sm:$0xff]
    %v2813 = vld [vmem:[#allocation25 + $0x9b8] sm:$0xff]
    %v2814 = vld [vmem:[#allocation25 + $0x9c0] sm:$0xff]
    %v2815 = vld [vmem:[#allocation25 + $0x9c8] sm:$0xff]
    %v2816 = vld [vmem:[#allocation25 + $0x9d0] sm:$0xff]
    %v2817 = vld [vmem:[#allocation25 + $0x9d8] sm:$0xff]
    %v2818 = vld [vmem:[#allocation25 + $0x9e0] sm:$0xff]
    %v2819 = vld [vmem:[#allocation25 + $0x9e8] sm:$0xff]
    %v2820 = vld [vmem:[#allocation25 + $0x9f0] sm:$0xff]
    %v2821 = vld [vmem:[#allocation25 + $0x9f8] sm:$0xff]
    %v2822 = vld [vmem:[#allocation25 + $0xa00] sm:$0xff]
    %v2823 = vld [vmem:[#allocation25 + $0xa08] sm:$0xff]
    %v2824 = vld [vmem:[#allocation25 + $0xa10] sm:$0xff]
    %v2825 = vld [vmem:[#allocation25 + $0xa18] sm:$0xff]
    %v2826 = vld [vmem:[#allocation25 + $0xa20] sm:$0xff]
    %v2827 = vld [vmem:[#allocation25 + $0xa28] sm:$0xff]
    %v2828 = vld [vmem:[#allocation25 + $0xa30] sm:$0xff]
    %v2829 = vld [vmem:[#allocation25 + $0xa38] sm:$0xff]
    %v2830 = vld [vmem:[#allocation25 + $0xa40] sm:$0xff]
    %v2831 = vld [vmem:[#allocation25 + $0xa48] sm:$0xff]
    %v2832 = vld [vmem:[#allocation25 + $0xa50] sm:$0xff]
    %v2833 = vld [vmem:[#allocation25 + $0xa58] sm:$0xff]
    %v2834 = vld [vmem:[#allocation25 + $0xa60] sm:$0xff]
    %v2835 = vld [vmem:[#allocation25 + $0xa68] sm:$0xff]
    %v2836 = vld [vmem:[#allocation25 + $0xa70] sm:$0xff]
    %v2837 = vld [vmem:[#allocation25 + $0xa78] sm:$0xff]
    %v2838 = vld [vmem:[#allocation25 + $0xa80] sm:$0xff]
    %v2839 = vld [vmem:[#allocation25 + $0xa88] sm:$0xff]
    %v2840 = vld [vmem:[#allocation25 + $0xa90] sm:$0xff]
    %v2841 = vld [vmem:[#allocation25 + $0xa98] sm:$0xff]
    %v2842 = vld [vmem:[#allocation25 + $0xaa0] sm:$0xff]
    %v2843 = vld [vmem:[#allocation25 + $0xaa8] sm:$0xff]
    %v2844 = vld [vmem:[#allocation25 + $0xab0] sm:$0xff]
    %v2845 = vld [vmem:[#allocation25 + $0xab8] sm:$0xff]
    %v2846 = vld [vmem:[#allocation25 + $0xac0] sm:$0xff]
    %v2847 = vld [vmem:[#allocation25 + $0xac8] sm:$0xff]
    %v2848 = vld [vmem:[#allocation25 + $0xad0] sm:$0xff]
    %v2849 = vld [vmem:[#allocation25 + $0xad8] sm:$0xff]
    %v2850 = vld [vmem:[#allocation25 + $0xae0] sm:$0xff]
    %v2851 = vld [vmem:[#allocation25 + $0xae8] sm:$0xff]
    %v2852 = vld [vmem:[#allocation25 + $0xaf0] sm:$0xff]
    %v2853 = vld [vmem:[#allocation25 + $0xaf8] sm:$0xff]
    %v2854 = vld [vmem:[#allocation25 + $0xb00] sm:$0xff]
    %v2855 = vld [vmem:[#allocation25 + $0xb08] sm:$0xff]
    %v2856 = vld [vmem:[#allocation25 + $0xb10] sm:$0xff]
    %v2857 = vld [vmem:[#allocation25 + $0xb18] sm:$0xff]
    %v2858 = vld [vmem:[#allocation25 + $0xb20] sm:$0xff]
    %v2859 = vld [vmem:[#allocation25 + $0xb28] sm:$0xff]
    %v2860 = vld [vmem:[#allocation25 + $0xb30] sm:$0xff]
    %v2861 = vld [vmem:[#allocation25 + $0xb38] sm:$0xff]
    %v2862 = vld [vmem:[#allocation25 + $0xb40] sm:$0xff]
    %v2863 = vld [vmem:[#allocation25 + $0xb48] sm:$0xff]
    %v2864 = vld [vmem:[#allocation25 + $0xb50] sm:$0xff]
    %v2865 = vld [vmem:[#allocation25 + $0xb58] sm:$0xff]
    %v2866 = vld [vmem:[#allocation25 + $0xb60] sm:$0xff]
    %v2867 = vld [vmem:[#allocation25 + $0xb68] sm:$0xff]
    %v2868 = vld [vmem:[#allocation25 + $0xb70] sm:$0xff]
    %v2869 = vld [vmem:[#allocation25 + $0xb78] sm:$0xff]
    %v2870 = vld [vmem:[#allocation25 + $0xb80] sm:$0xff]
    %v2871 = vld [vmem:[#allocation25 + $0xb88] sm:$0xff]
    %v2872 = vld [vmem:[#allocation25 + $0xb90] sm:$0xff]
    %v2873 = vld [vmem:[#allocation25 + $0xb98] sm:$0xff]
    %v2874 = vld [vmem:[#allocation25 + $0xba0] sm:$0xff]
    %v2875 = vld [vmem:[#allocation25 + $0xba8] sm:$0xff]
    %v2876 = vld [vmem:[#allocation25 + $0xbb0] sm:$0xff]
    %v2877 = vld [vmem:[#allocation25 + $0xbb8] sm:$0xff]
    %v2878 = vld [vmem:[#allocation25 + $0xbc0] sm:$0xff]
    %v2879 = vld [vmem:[#allocation25 + $0xbc8] sm:$0xff]
    %v2880 = vld [vmem:[#allocation25 + $0xbd0] sm:$0xff]
    %v2881 = vld [vmem:[#allocation25 + $0xbd8] sm:$0xff]
    %v2882 = vld [vmem:[#allocation25 + $0xbe0] sm:$0xff]
    %v2883 = vld [vmem:[#allocation25 + $0xbe8] sm:$0xff]
    %v2884 = vld [vmem:[#allocation25 + $0xbf0] sm:$0xff]
    %v2885 = vld [vmem:[#allocation25 + $0xbf8] sm:$0xff]
    %v2886 = vld [vmem:[#allocation25 + $0xc00] sm:$0xff]
    %v2887 = vld [vmem:[#allocation25 + $0xc08] sm:$0xff]
    %v2888 = vld [vmem:[#allocation25 + $0xc10] sm:$0xff]
    %v2889 = vld [vmem:[#allocation25 + $0xc18] sm:$0xff]
    %v2890 = vld [vmem:[#allocation25 + $0xc20] sm:$0xff]
    %v2891 = vld [vmem:[#allocation25 + $0xc28] sm:$0xff]
    %v2892 = vld [vmem:[#allocation25 + $0xc30] sm:$0xff]
    %v2893 = vld [vmem:[#allocation25 + $0xc38] sm:$0xff]
    %v2894 = vld [vmem:[#allocation25 + $0xc40] sm:$0xff]
    %v2895 = vld [vmem:[#allocation25 + $0xc48] sm:$0xff]
    %v2896 = vld [vmem:[#allocation25 + $0xc50] sm:$0xff]
    %v2897 = vld [vmem:[#allocation25 + $0xc58] sm:$0xff]
    %v2898 = vld [vmem:[#allocation25 + $0xc60] sm:$0xff]
    %v2899 = vld [vmem:[#allocation25 + $0xc68] sm:$0xff]
    %v2900 = vld [vmem:[#allocation25 + $0xc70] sm:$0xff]
    %v2901 = vld [vmem:[#allocation25 + $0xc78] sm:$0xff]
    %v2902 = vld [vmem:[#allocation25 + $0xc80] sm:$0xff]
    %v2903 = vld [vmem:[#allocation25 + $0xc88] sm:$0xff]
    %v2904 = vld [vmem:[#allocation25 + $0xc90] sm:$0xff]
    %v2905 = vld [vmem:[#allocation25 + $0xc98] sm:$0xff]
    %v2906 = vld [vmem:[#allocation25 + $0xca0] sm:$0xff]
    %v2907 = vld [vmem:[#allocation25 + $0xca8] sm:$0xff]
    %v2908 = vld [vmem:[#allocation25 + $0xcb0] sm:$0xff]
    %v2909 = vld [vmem:[#allocation25 + $0xcb8] sm:$0xff]
    %v2910 = vld [vmem:[#allocation25 + $0xcc0] sm:$0xff]
    %v2911 = vld [vmem:[#allocation25 + $0xcc8] sm:$0xff]
    %v2912 = vld [vmem:[#allocation25 + $0xcd0] sm:$0xff]
    %v2913 = vld [vmem:[#allocation25 + $0xcd8] sm:$0xff]
    %v2914 = vld [vmem:[#allocation25 + $0xce0] sm:$0xff]
    %v2915 = vld [vmem:[#allocation25 + $0xce8] sm:$0xff]
    %v2916 = vld [vmem:[#allocation25 + $0xcf0] sm:$0xff]
    %v2917 = vld [vmem:[#allocation25 + $0xcf8] sm:$0xff]
    %v2918 = vld [vmem:[#allocation25 + $0xd00] sm:$0xff]
    %v2919 = vld [vmem:[#allocation25 + $0xd08] sm:$0xff]
    %v2920 = vld [vmem:[#allocation25 + $0xd10] sm:$0xff]
    %v2921 = vld [vmem:[#allocation25 + $0xd18] sm:$0xff]
    %v2922 = vld [vmem:[#allocation25 + $0xd20] sm:$0xff]
    %v2923 = vld [vmem:[#allocation25 + $0xd28] sm:$0xff]
    %v2924 = vld [vmem:[#allocation25 + $0xd30] sm:$0xff]
    %v2925 = vld [vmem:[#allocation25 + $0xd38] sm:$0xff]
    %v2926 = vld [vmem:[#allocation25 + $0xd40] sm:$0xff]
    %v2927 = vld [vmem:[#allocation25 + $0xd48] sm:$0xff]
    %v2928 = vld [vmem:[#allocation25 + $0xd50] sm:$0xff]
    %v2929 = vld [vmem:[#allocation25 + $0xd58] sm:$0xff]
    %v2930 = vld [vmem:[#allocation25 + $0xd60] sm:$0xff]
    %v2931 = vld [vmem:[#allocation25 + $0xd68] sm:$0xff]
    %v2932 = vld [vmem:[#allocation25 + $0xd70] sm:$0xff]
    %v2933 = vld [vmem:[#allocation25 + $0xd78] sm:$0xff]
    %v2934 = vld [vmem:[#allocation25 + $0xd80] sm:$0xff]
    %v2935 = vld [vmem:[#allocation25 + $0xd88] sm:$0xff]
    %v2936 = vld [vmem:[#allocation25 + $0xd90] sm:$0xff]
    %v2937 = vld [vmem:[#allocation25 + $0xd98] sm:$0xff]
    %v2938 = vld [vmem:[#allocation25 + $0xda0] sm:$0xff]
    %v2939 = vld [vmem:[#allocation25 + $0xda8] sm:$0xff]
    %v2940 = vld [vmem:[#allocation25 + $0xdb0] sm:$0xff]
    %v2941 = vld [vmem:[#allocation25 + $0xdb8] sm:$0xff]
    %v2942 = vld [vmem:[#allocation25 + $0xdc0] sm:$0xff]
    %v2943 = vld [vmem:[#allocation25 + $0xdc8] sm:$0xff]
    %v2944 = vld [vmem:[#allocation25 + $0xdd0] sm:$0xff]
    %v2945 = vld [vmem:[#allocation25 + $0xdd8] sm:$0xff]
    %v2946 = vld [vmem:[#allocation25 + $0xde0] sm:$0xff]
    %v2947 = vld [vmem:[#allocation25 + $0xde8] sm:$0xff]
    %v2948 = vld [vmem:[#allocation25 + $0xdf0] sm:$0xff]
    %v2949 = vld [vmem:[#allocation25 + $0xdf8] sm:$0xff]
    %v2950 = vld [vmem:[#allocation25 + $0xe00] sm:$0xff]
    %v2951 = vld [vmem:[#allocation25 + $0xe08] sm:$0xff]
    %v2952 = vld [vmem:[#allocation25 + $0xe10] sm:$0xff]
    %v2953 = vld [vmem:[#allocation25 + $0xe18] sm:$0xff]
    %v2954 = vld [vmem:[#allocation25 + $0xe20] sm:$0xff]
    %v2955 = vld [vmem:[#allocation25 + $0xe28] sm:$0xff]
    %v2956 = vld [vmem:[#allocation25 + $0xe30] sm:$0xff]
    %v2957 = vld [vmem:[#allocation25 + $0xe38] sm:$0xff]
    %v2958 = vld [vmem:[#allocation25 + $0xe40] sm:$0xff]
    %v2959 = vld [vmem:[#allocation25 + $0xe48] sm:$0xff]
    %v2960 = vld [vmem:[#allocation25 + $0xe50] sm:$0xff]
    %v2961 = vld [vmem:[#allocation25 + $0xe58] sm:$0xff]
    %v2962 = vld [vmem:[#allocation25 + $0xe60] sm:$0xff]
    %v2963 = vld [vmem:[#allocation25 + $0xe68] sm:$0xff]
    %v2964 = vld [vmem:[#allocation25 + $0xe70] sm:$0xff]
    %v2965 = vld [vmem:[#allocation25 + $0xe78] sm:$0xff]
    %v2966 = vld [vmem:[#allocation25 + $0xe80] sm:$0xff]
    %v2967 = vld [vmem:[#allocation25 + $0xe88] sm:$0xff]
    %v2968 = vld [vmem:[#allocation25 + $0xe90] sm:$0xff]
    %v2969 = vld [vmem:[#allocation25 + $0xe98] sm:$0xff]
    %v2970 = vld [vmem:[#allocation25 + $0xea0] sm:$0xff]
    %v2971 = vld [vmem:[#allocation25 + $0xea8] sm:$0xff]
    %v2972 = vld [vmem:[#allocation25 + $0xeb0] sm:$0xff]
    %v2973 = vld [vmem:[#allocation25 + $0xeb8] sm:$0xff]
    %v2974 = vld [vmem:[#allocation25 + $0xec0] sm:$0xff]
    %v2975 = vld [vmem:[#allocation25 + $0xec8] sm:$0xff]
    %v2976 = vld [vmem:[#allocation25 + $0xed0] sm:$0xff]
    %v2977 = vld [vmem:[#allocation25 + $0xed8] sm:$0xff]
    %v2978 = vld [vmem:[#allocation25 + $0xee0] sm:$0xff]
    %v2979 = vld [vmem:[#allocation25 + $0xee8] sm:$0xff]
    %v2980 = vld [vmem:[#allocation25 + $0xef0] sm:$0xff]
    %v2981 = vld [vmem:[#allocation25 + $0xef8] sm:$0xff]
    %v2982 = vld [vmem:[#allocation25 + $0xf00] sm:$0xff]
    %v2983 = vld [vmem:[#allocation25 + $0xf08] sm:$0xff]
    %v2984 = vld [vmem:[#allocation25 + $0xf10] sm:$0xff]
    %v2985 = vld [vmem:[#allocation25 + $0xf18] sm:$0xff]
    %v2986 = vld [vmem:[#allocation25 + $0xf20] sm:$0xff]
    %v2987 = vld [vmem:[#allocation25 + $0xf28] sm:$0xff]
    %v2988 = vld [vmem:[#allocation25 + $0xf30] sm:$0xff]
    %v2989 = vld [vmem:[#allocation25 + $0xf38] sm:$0xff]
    %v2990 = vld [vmem:[#allocation25 + $0xf40] sm:$0xff]
    %v2991 = vld [vmem:[#allocation25 + $0xf48] sm:$0xff]
    %v2992 = vld [vmem:[#allocation25 + $0xf50] sm:$0xff]
    %v2993 = vld [vmem:[#allocation25 + $0xf58] sm:$0xff]
    %v2994 = vld [vmem:[#allocation25 + $0xf60] sm:$0xff]
    %v2995 = vld [vmem:[#allocation25 + $0xf68] sm:$0xff]
    %v2996 = vld [vmem:[#allocation25 + $0xf70] sm:$0xff]
    %v2997 = vld [vmem:[#allocation25 + $0xf78] sm:$0xff]
    %v2998 = vld [vmem:[#allocation25 + $0xf80] sm:$0xff]
    %v2999 = vld [vmem:[#allocation25 + $0xf88] sm:$0xff]
    %v3000 = vld [vmem:[#allocation25 + $0xf90] sm:$0xff]
    %v3001 = vld [vmem:[#allocation25 + $0xf98] sm:$0xff]
    %v3002 = vld [vmem:[#allocation25 + $0xfa0] sm:$0xff]
    %v3003 = vld [vmem:[#allocation25 + $0xfa8] sm:$0xff]
    %v3004 = vld [vmem:[#allocation25 + $0xfb0] sm:$0xff]
    %v3005 = vld [vmem:[#allocation25 + $0xfb8] sm:$0xff]
    %v3006 = vld [vmem:[#allocation25 + $0xfc0] sm:$0xff]
    %v3007 = vld [vmem:[#allocation25 + $0xfc8] sm:$0xff]
    %v3008 = vld [vmem:[#allocation25 + $0xfd0] sm:$0xff]
    %v3009 = vld [vmem:[#allocation25 + $0xfd8] sm:$0xff]
    %v3010 = vld [vmem:[#allocation25 + $0xfe0] sm:$0xff]
    %v3011 = vld [vmem:[#allocation25 + $0xfe8] sm:$0xff]
    %v3012 = vld [vmem:[#allocation25 + $0xff0] sm:$0xff]
    %v3013 = vld [vmem:[#allocation25 + $0xff8] sm:$0xff]
    %v3014 = vld [vmem:[#allocation26] sm:$0xff]
    %v3016 = vlaneseq
    %v3017 = vshrl.u32 %v3016, 7
    %v3018 = vsub.s32 0, %v3017
    %v3019 = vrot.slane %v3014, %v3018
    %v3020 = vlaneseq
    %v3021 = vshrl.u32 %v3020, 7
    %v3022 = vsub.s32 1, %v3021
    %v3023 = vrot.slane %v3014, %v3022
    %v3024 = vlaneseq
    %v3025 = vshrl.u32 %v3024, 7
    %v3026 = vsub.s32 2, %v3025
    %v3027 = vrot.slane %v3014, %v3026
    %v3028 = vlaneseq
    %v3029 = vshrl.u32 %v3028, 7
    %v3030 = vsub.s32 3, %v3029
    %v3031 = vrot.slane %v3014, %v3030
    %v3032 = vlaneseq
    %v3033 = vshrl.u32 %v3032, 7
    %v3034 = vsub.s32 4, %v3033
    %v3035 = vrot.slane %v3014, %v3034
    %v3036 = vlaneseq
    %v3037 = vshrl.u32 %v3036, 7
    %v3038 = vsub.s32 5, %v3037
    %v3039 = vrot.slane %v3014, %v3038
    %v3040 = vlaneseq
    %v3041 = vshrl.u32 %v3040, 7
    %v3042 = vsub.s32 6, %v3041
    %v3043 = vrot.slane %v3014, %v3042
    %v3044 = vlaneseq
    %v3045 = vshrl.u32 %v3044, 7
    %v3046 = vsub.s32 7, %v3045
    %v3047 = vrot.slane %v3014, %v3046
    %v3568 = vunpack.c.l.b16 %v2502
    %v3569 = vunpack.c.h.b16 %v2502
    %v3570 = vunpack.c.l.b16 %v2503
    %v3571 = vunpack.c.h.b16 %v2503
    %v3572 = vunpack.c.l.b16 %v2504
    %v3573 = vunpack.c.h.b16 %v2504
    %v3574 = vunpack.c.l.b16 %v2505
    %v3575 = vunpack.c.h.b16 %v2505
    %v3576 = vunpack.c.l.b16 %v2506
    %v3577 = vunpack.c.h.b16 %v2506
    %v3578 = vunpack.c.l.b16 %v2507
    %v3579 = vunpack.c.h.b16 %v2507
    %v3580 = vunpack.c.l.b16 %v2508
    %v3581 = vunpack.c.h.b16 %v2508
    %v3582 = vunpack.c.l.b16 %v2509
    %v3583 = vunpack.c.h.b16 %v2509
    %v3584 = vunpack.c.l.b16 %v2510
    %v3585 = vunpack.c.h.b16 %v2510
    %v3586 = vunpack.c.l.b16 %v2511
    %v3587 = vunpack.c.h.b16 %v2511
    %v3588 = vunpack.c.l.b16 %v2512
    %v3589 = vunpack.c.h.b16 %v2512
    %v3590 = vunpack.c.l.b16 %v2513
    %v3591 = vunpack.c.h.b16 %v2513
    %v3592 = vunpack.c.l.b16 %v2514
    %v3593 = vunpack.c.h.b16 %v2514
    %v3594 = vunpack.c.l.b16 %v2515
    %v3595 = vunpack.c.h.b16 %v2515
    %v3596 = vunpack.c.l.b16 %v2516
    %v3597 = vunpack.c.h.b16 %v2516
    %v3598 = vunpack.c.l.b16 %v2517
    %v3599 = vunpack.c.h.b16 %v2517
    %v3600 = vunpack.c.l.b16 %v2518
    %v3601 = vunpack.c.h.b16 %v2518
    %v3602 = vunpack.c.l.b16 %v2519
    %v3603 = vunpack.c.h.b16 %v2519
    %v3604 = vunpack.c.l.b16 %v2520
    %v3605 = vunpack.c.h.b16 %v2520
    %v3606 = vunpack.c.l.b16 %v2521
    %v3607 = vunpack.c.h.b16 %v2521
    %v3608 = vunpack.c.l.b16 %v2522
    %v3609 = vunpack.c.h.b16 %v2522
    %v3610 = vunpack.c.l.b16 %v2523
    %v3611 = vunpack.c.h.b16 %v2523
    %v3612 = vunpack.c.l.b16 %v2524
    %v3613 = vunpack.c.h.b16 %v2524
    %v3614 = vunpack.c.l.b16 %v2525
    %v3615 = vunpack.c.h.b16 %v2525
    %v3616 = vunpack.c.l.b16 %v2526
    %v3617 = vunpack.c.h.b16 %v2526
    %v3618 = vunpack.c.l.b16 %v2527
    %v3619 = vunpack.c.h.b16 %v2527
    %v3620 = vunpack.c.l.b16 %v2528
    %v3621 = vunpack.c.h.b16 %v2528
    %v3622 = vunpack.c.l.b16 %v2529
    %v3623 = vunpack.c.h.b16 %v2529
    %v3624 = vunpack.c.l.b16 %v2530
    %v3625 = vunpack.c.h.b16 %v2530
    %v3626 = vunpack.c.l.b16 %v2531
    %v3627 = vunpack.c.h.b16 %v2531
    %v3628 = vunpack.c.l.b16 %v2532
    %v3629 = vunpack.c.h.b16 %v2532
    %v3630 = vunpack.c.l.b16 %v2533
    %v3631 = vunpack.c.h.b16 %v2533
    %v3632 = vunpack.c.l.b16 %v2534
    %v3633 = vunpack.c.h.b16 %v2534
    %v3634 = vunpack.c.l.b16 %v2535
    %v3635 = vunpack.c.h.b16 %v2535
    %v3636 = vunpack.c.l.b16 %v2536
    %v3637 = vunpack.c.h.b16 %v2536
    %v3638 = vunpack.c.l.b16 %v2537
    %v3639 = vunpack.c.h.b16 %v2537
    %v3640 = vunpack.c.l.b16 %v2538
    %v3641 = vunpack.c.h.b16 %v2538
    %v3642 = vunpack.c.l.b16 %v2539
    %v3643 = vunpack.c.h.b16 %v2539
    %v3644 = vunpack.c.l.b16 %v2540
    %v3645 = vunpack.c.h.b16 %v2540
    %v3646 = vunpack.c.l.b16 %v2541
    %v3647 = vunpack.c.h.b16 %v2541
    %v3648 = vunpack.c.l.b16 %v2542
    %v3649 = vunpack.c.h.b16 %v2542
    %v3650 = vunpack.c.l.b16 %v2543
    %v3651 = vunpack.c.h.b16 %v2543
    %v3652 = vunpack.c.l.b16 %v2544
    %v3653 = vunpack.c.h.b16 %v2544
    %v3654 = vunpack.c.l.b16 %v2545
    %v3655 = vunpack.c.h.b16 %v2545
    %v3656 = vunpack.c.l.b16 %v2546
    %v3657 = vunpack.c.h.b16 %v2546
    %v3658 = vunpack.c.l.b16 %v2547
    %v3659 = vunpack.c.h.b16 %v2547
    %v3660 = vunpack.c.l.b16 %v2548
    %v3661 = vunpack.c.h.b16 %v2548
    %v3662 = vunpack.c.l.b16 %v2549
    %v3663 = vunpack.c.h.b16 %v2549
    %v3664 = vunpack.c.l.b16 %v2550
    %v3665 = vunpack.c.h.b16 %v2550
    %v3666 = vunpack.c.l.b16 %v2551
    %v3667 = vunpack.c.h.b16 %v2551
    %v3668 = vunpack.c.l.b16 %v2552
    %v3669 = vunpack.c.h.b16 %v2552
    %v3670 = vunpack.c.l.b16 %v2553
    %v3671 = vunpack.c.h.b16 %v2553
    %v3672 = vunpack.c.l.b16 %v2554
    %v3673 = vunpack.c.h.b16 %v2554
    %v3674 = vunpack.c.l.b16 %v2555
    %v3675 = vunpack.c.h.b16 %v2555
    %v3676 = vunpack.c.l.b16 %v2556
    %v3677 = vunpack.c.h.b16 %v2556
    %v3678 = vunpack.c.l.b16 %v2557
    %v3679 = vunpack.c.h.b16 %v2557
    %v3680 = vunpack.c.l.b16 %v2558
    %v3681 = vunpack.c.h.b16 %v2558
    %v3682 = vunpack.c.l.b16 %v2559
    %v3683 = vunpack.c.h.b16 %v2559
    %v3684 = vunpack.c.l.b16 %v2560
    %v3685 = vunpack.c.h.b16 %v2560
    %v3686 = vunpack.c.l.b16 %v2561
    %v3687 = vunpack.c.h.b16 %v2561
    %v3688 = vunpack.c.l.b16 %v2562
    %v3689 = vunpack.c.h.b16 %v2562
    %v3690 = vunpack.c.l.b16 %v2563
    %v3691 = vunpack.c.h.b16 %v2563
    %v3692 = vunpack.c.l.b16 %v2564
    %v3693 = vunpack.c.h.b16 %v2564
    %v3694 = vunpack.c.l.b16 %v2565
    %v3695 = vunpack.c.h.b16 %v2565
    %v3696 = vunpack.c.l.b16 %v2566
    %v3697 = vunpack.c.h.b16 %v2566
    %v3698 = vunpack.c.l.b16 %v2567
    %v3699 = vunpack.c.h.b16 %v2567
    %v3700 = vunpack.c.l.b16 %v2568
    %v3701 = vunpack.c.h.b16 %v2568
    %v3702 = vunpack.c.l.b16 %v2569
    %v3703 = vunpack.c.h.b16 %v2569
    %v3704 = vunpack.c.l.b16 %v2570
    %v3705 = vunpack.c.h.b16 %v2570
    %v3706 = vunpack.c.l.b16 %v2571
    %v3707 = vunpack.c.h.b16 %v2571
    %v3708 = vunpack.c.l.b16 %v2572
    %v3709 = vunpack.c.h.b16 %v2572
    %v3710 = vunpack.c.l.b16 %v2573
    %v3711 = vunpack.c.h.b16 %v2573
    %v3712 = vunpack.c.l.b16 %v2574
    %v3713 = vunpack.c.h.b16 %v2574
    %v3714 = vunpack.c.l.b16 %v2575
    %v3715 = vunpack.c.h.b16 %v2575
    %v3716 = vunpack.c.l.b16 %v2576
    %v3717 = vunpack.c.h.b16 %v2576
    %v3718 = vunpack.c.l.b16 %v2577
    %v3719 = vunpack.c.h.b16 %v2577
    %v3720 = vunpack.c.l.b16 %v2578
    %v3721 = vunpack.c.h.b16 %v2578
    %v3722 = vunpack.c.l.b16 %v2579
    %v3723 = vunpack.c.h.b16 %v2579
    %v3724 = vunpack.c.l.b16 %v2580
    %v3725 = vunpack.c.h.b16 %v2580
    %v3726 = vunpack.c.l.b16 %v2581
    %v3727 = vunpack.c.h.b16 %v2581
    %v3728 = vunpack.c.l.b16 %v2582
    %v3729 = vunpack.c.h.b16 %v2582
    %v3730 = vunpack.c.l.b16 %v2583
    %v3731 = vunpack.c.h.b16 %v2583
    %v3732 = vunpack.c.l.b16 %v2584
    %v3733 = vunpack.c.h.b16 %v2584
    %v3734 = vunpack.c.l.b16 %v2585
    %v3735 = vunpack.c.h.b16 %v2585
    %v3736 = vunpack.c.l.b16 %v2586
    %v3737 = vunpack.c.h.b16 %v2586
    %v3738 = vunpack.c.l.b16 %v2587
    %v3739 = vunpack.c.h.b16 %v2587
    %v3740 = vunpack.c.l.b16 %v2588
    %v3741 = vunpack.c.h.b16 %v2588
    %v3742 = vunpack.c.l.b16 %v2589
    %v3743 = vunpack.c.h.b16 %v2589
    %v3744 = vunpack.c.l.b16 %v2590
    %v3745 = vunpack.c.h.b16 %v2590
    %v3746 = vunpack.c.l.b16 %v2591
    %v3747 = vunpack.c.h.b16 %v2591
    %v3748 = vunpack.c.l.b16 %v2592
    %v3749 = vunpack.c.h.b16 %v2592
    %v3750 = vunpack.c.l.b16 %v2593
    %v3751 = vunpack.c.h.b16 %v2593
    %v3752 = vunpack.c.l.b16 %v2594
    %v3753 = vunpack.c.h.b16 %v2594
    %v3754 = vunpack.c.l.b16 %v2595
    %v3755 = vunpack.c.h.b16 %v2595
    %v3756 = vunpack.c.l.b16 %v2596
    %v3757 = vunpack.c.h.b16 %v2596
    %v3758 = vunpack.c.l.b16 %v2597
    %v3759 = vunpack.c.h.b16 %v2597
    %v3760 = vunpack.c.l.b16 %v2598
    %v3761 = vunpack.c.h.b16 %v2598
    %v3762 = vunpack.c.l.b16 %v2599
    %v3763 = vunpack.c.h.b16 %v2599
    %v3764 = vunpack.c.l.b16 %v2600
    %v3765 = vunpack.c.h.b16 %v2600
    %v3766 = vunpack.c.l.b16 %v2601
    %v3767 = vunpack.c.h.b16 %v2601
    %v3768 = vunpack.c.l.b16 %v2602
    %v3769 = vunpack.c.h.b16 %v2602
    %v3770 = vunpack.c.l.b16 %v2603
    %v3771 = vunpack.c.h.b16 %v2603
    %v3772 = vunpack.c.l.b16 %v2604
    %v3773 = vunpack.c.h.b16 %v2604
    %v3774 = vunpack.c.l.b16 %v2605
    %v3775 = vunpack.c.h.b16 %v2605
    %v3776 = vunpack.c.l.b16 %v2606
    %v3777 = vunpack.c.h.b16 %v2606
    %v3778 = vunpack.c.l.b16 %v2607
    %v3779 = vunpack.c.h.b16 %v2607
    %v3780 = vunpack.c.l.b16 %v2608
    %v3781 = vunpack.c.h.b16 %v2608
    %v3782 = vunpack.c.l.b16 %v2609
    %v3783 = vunpack.c.h.b16 %v2609
    %v3784 = vunpack.c.l.b16 %v2610
    %v3785 = vunpack.c.h.b16 %v2610
    %v3786 = vunpack.c.l.b16 %v2611
    %v3787 = vunpack.c.h.b16 %v2611
    %v3788 = vunpack.c.l.b16 %v2612
    %v3789 = vunpack.c.h.b16 %v2612
    %v3790 = vunpack.c.l.b16 %v2613
    %v3791 = vunpack.c.h.b16 %v2613
    %v3792 = vunpack.c.l.b16 %v2614
    %v3793 = vunpack.c.h.b16 %v2614
    %v3794 = vunpack.c.l.b16 %v2615
    %v3795 = vunpack.c.h.b16 %v2615
    %v3796 = vunpack.c.l.b16 %v2616
    %v3797 = vunpack.c.h.b16 %v2616
    %v3798 = vunpack.c.l.b16 %v2617
    %v3799 = vunpack.c.h.b16 %v2617
    %v3800 = vunpack.c.l.b16 %v2618
    %v3801 = vunpack.c.h.b16 %v2618
    %v3802 = vunpack.c.l.b16 %v2619
    %v3803 = vunpack.c.h.b16 %v2619
    %v3804 = vunpack.c.l.b16 %v2620
    %v3805 = vunpack.c.h.b16 %v2620
    %v3806 = vunpack.c.l.b16 %v2621
    %v3807 = vunpack.c.h.b16 %v2621
    %v3808 = vunpack.c.l.b16 %v2622
    %v3809 = vunpack.c.h.b16 %v2622
    %v3810 = vunpack.c.l.b16 %v2623
    %v3811 = vunpack.c.h.b16 %v2623
    %v3812 = vunpack.c.l.b16 %v2624
    %v3813 = vunpack.c.h.b16 %v2624
    %v3814 = vunpack.c.l.b16 %v2625
    %v3815 = vunpack.c.h.b16 %v2625
    %v3816 = vunpack.c.l.b16 %v2626
    %v3817 = vunpack.c.h.b16 %v2626
    %v3818 = vunpack.c.l.b16 %v2627
    %v3819 = vunpack.c.h.b16 %v2627
    %v3820 = vunpack.c.l.b16 %v2628
    %v3821 = vunpack.c.h.b16 %v2628
    %v3822 = vunpack.c.l.b16 %v2629
    %v3823 = vunpack.c.h.b16 %v2629
    %v3824 = vunpack.c.l.b16 %v2630
    %v3825 = vunpack.c.h.b16 %v2630
    %v3826 = vunpack.c.l.b16 %v2631
    %v3827 = vunpack.c.h.b16 %v2631
    %v3828 = vunpack.c.l.b16 %v2632
    %v3829 = vunpack.c.h.b16 %v2632
    %v3830 = vunpack.c.l.b16 %v2633
    %v3831 = vunpack.c.h.b16 %v2633
    %v3832 = vunpack.c.l.b16 %v2634
    %v3833 = vunpack.c.h.b16 %v2634
    %v3834 = vunpack.c.l.b16 %v2635
    %v3835 = vunpack.c.h.b16 %v2635
    %v3836 = vunpack.c.l.b16 %v2636
    %v3837 = vunpack.c.h.b16 %v2636
    %v3838 = vunpack.c.l.b16 %v2637
    %v3839 = vunpack.c.h.b16 %v2637
    %v3840 = vunpack.c.l.b16 %v2638
    %v3841 = vunpack.c.h.b16 %v2638
    %v3842 = vunpack.c.l.b16 %v2639
    %v3843 = vunpack.c.h.b16 %v2639
    %v3844 = vunpack.c.l.b16 %v2640
    %v3845 = vunpack.c.h.b16 %v2640
    %v3846 = vunpack.c.l.b16 %v2641
    %v3847 = vunpack.c.h.b16 %v2641
    %v3848 = vunpack.c.l.b16 %v2642
    %v3849 = vunpack.c.h.b16 %v2642
    %v3850 = vunpack.c.l.b16 %v2643
    %v3851 = vunpack.c.h.b16 %v2643
    %v3852 = vunpack.c.l.b16 %v2644
    %v3853 = vunpack.c.h.b16 %v2644
    %v3854 = vunpack.c.l.b16 %v2645
    %v3855 = vunpack.c.h.b16 %v2645
    %v3856 = vunpack.c.l.b16 %v2646
    %v3857 = vunpack.c.h.b16 %v2646
    %v3858 = vunpack.c.l.b16 %v2647
    %v3859 = vunpack.c.h.b16 %v2647
    %v3860 = vunpack.c.l.b16 %v2648
    %v3861 = vunpack.c.h.b16 %v2648
    %v3862 = vunpack.c.l.b16 %v2649
    %v3863 = vunpack.c.h.b16 %v2649
    %v3864 = vunpack.c.l.b16 %v2650
    %v3865 = vunpack.c.h.b16 %v2650
    %v3866 = vunpack.c.l.b16 %v2651
    %v3867 = vunpack.c.h.b16 %v2651
    %v3868 = vunpack.c.l.b16 %v2652
    %v3869 = vunpack.c.h.b16 %v2652
    %v3870 = vunpack.c.l.b16 %v2653
    %v3871 = vunpack.c.h.b16 %v2653
    %v3872 = vunpack.c.l.b16 %v2654
    %v3873 = vunpack.c.h.b16 %v2654
    %v3874 = vunpack.c.l.b16 %v2655
    %v3875 = vunpack.c.h.b16 %v2655
    %v3876 = vunpack.c.l.b16 %v2656
    %v3877 = vunpack.c.h.b16 %v2656
    %v3878 = vunpack.c.l.b16 %v2657
    %v3879 = vunpack.c.h.b16 %v2657
    %v3880 = vunpack.c.l.b16 %v2658
    %v3881 = vunpack.c.h.b16 %v2658
    %v3882 = vunpack.c.l.b16 %v2659
    %v3883 = vunpack.c.h.b16 %v2659
    %v3884 = vunpack.c.l.b16 %v2660
    %v3885 = vunpack.c.h.b16 %v2660
    %v3886 = vunpack.c.l.b16 %v2661
    %v3887 = vunpack.c.h.b16 %v2661
    %v3888 = vunpack.c.l.b16 %v2662
    %v3889 = vunpack.c.h.b16 %v2662
    %v3890 = vunpack.c.l.b16 %v2663
    %v3891 = vunpack.c.h.b16 %v2663
    %v3892 = vunpack.c.l.b16 %v2664
    %v3893 = vunpack.c.h.b16 %v2664
    %v3894 = vunpack.c.l.b16 %v2665
    %v3895 = vunpack.c.h.b16 %v2665
    %v3896 = vunpack.c.l.b16 %v2666
    %v3897 = vunpack.c.h.b16 %v2666
    %v3898 = vunpack.c.l.b16 %v2667
    %v3899 = vunpack.c.h.b16 %v2667
    %v3900 = vunpack.c.l.b16 %v2668
    %v3901 = vunpack.c.h.b16 %v2668
    %v3902 = vunpack.c.l.b16 %v2669
    %v3903 = vunpack.c.h.b16 %v2669
    %v3904 = vunpack.c.l.b16 %v2670
    %v3905 = vunpack.c.h.b16 %v2670
    %v3906 = vunpack.c.l.b16 %v2671
    %v3907 = vunpack.c.h.b16 %v2671
    %v3908 = vunpack.c.l.b16 %v2672
    %v3909 = vunpack.c.h.b16 %v2672
    %v3910 = vunpack.c.l.b16 %v2673
    %v3911 = vunpack.c.h.b16 %v2673
    %v3912 = vunpack.c.l.b16 %v2674
    %v3913 = vunpack.c.h.b16 %v2674
    %v3914 = vunpack.c.l.b16 %v2675
    %v3915 = vunpack.c.h.b16 %v2675
    %v3916 = vunpack.c.l.b16 %v2676
    %v3917 = vunpack.c.h.b16 %v2676
    %v3918 = vunpack.c.l.b16 %v2677
    %v3919 = vunpack.c.h.b16 %v2677
    %v3920 = vunpack.c.l.b16 %v2678
    %v3921 = vunpack.c.h.b16 %v2678
    %v3922 = vunpack.c.l.b16 %v2679
    %v3923 = vunpack.c.h.b16 %v2679
    %v3924 = vunpack.c.l.b16 %v2680
    %v3925 = vunpack.c.h.b16 %v2680
    %v3926 = vunpack.c.l.b16 %v2681
    %v3927 = vunpack.c.h.b16 %v2681
    %v3928 = vunpack.c.l.b16 %v2682
    %v3929 = vunpack.c.h.b16 %v2682
    %v3930 = vunpack.c.l.b16 %v2683
    %v3931 = vunpack.c.h.b16 %v2683
    %v3932 = vunpack.c.l.b16 %v2684
    %v3933 = vunpack.c.h.b16 %v2684
    %v3934 = vunpack.c.l.b16 %v2685
    %v3935 = vunpack.c.h.b16 %v2685
    %v3936 = vunpack.c.l.b16 %v2686
    %v3937 = vunpack.c.h.b16 %v2686
    %v3938 = vunpack.c.l.b16 %v2687
    %v3939 = vunpack.c.h.b16 %v2687
    %v3940 = vunpack.c.l.b16 %v2688
    %v3941 = vunpack.c.h.b16 %v2688
    %v3942 = vunpack.c.l.b16 %v2689
    %v3943 = vunpack.c.h.b16 %v2689
    %v3944 = vunpack.c.l.b16 %v2690
    %v3945 = vunpack.c.h.b16 %v2690
    %v3946 = vunpack.c.l.b16 %v2691
    %v3947 = vunpack.c.h.b16 %v2691
    %v3948 = vunpack.c.l.b16 %v2692
    %v3949 = vunpack.c.h.b16 %v2692
    %v3950 = vunpack.c.l.b16 %v2693
    %v3951 = vunpack.c.h.b16 %v2693
    %v3952 = vunpack.c.l.b16 %v2694
    %v3953 = vunpack.c.h.b16 %v2694
    %v3954 = vunpack.c.l.b16 %v2695
    %v3955 = vunpack.c.h.b16 %v2695
    %v3956 = vunpack.c.l.b16 %v2696
    %v3957 = vunpack.c.h.b16 %v2696
    %v3958 = vunpack.c.l.b16 %v2697
    %v3959 = vunpack.c.h.b16 %v2697
    %v3960 = vunpack.c.l.b16 %v2698
    %v3961 = vunpack.c.h.b16 %v2698
    %v3962 = vunpack.c.l.b16 %v2699
    %v3963 = vunpack.c.h.b16 %v2699
    %v3964 = vunpack.c.l.b16 %v2700
    %v3965 = vunpack.c.h.b16 %v2700
    %v3966 = vunpack.c.l.b16 %v2701
    %v3967 = vunpack.c.h.b16 %v2701
    %v3968 = vunpack.c.l.b16 %v2702
    %v3969 = vunpack.c.h.b16 %v2702
    %v3970 = vunpack.c.l.b16 %v2703
    %v3971 = vunpack.c.h.b16 %v2703
    %v3972 = vunpack.c.l.b16 %v2704
    %v3973 = vunpack.c.h.b16 %v2704
    %v3974 = vunpack.c.l.b16 %v2705
    %v3975 = vunpack.c.h.b16 %v2705
    %v3976 = vunpack.c.l.b16 %v2706
    %v3977 = vunpack.c.h.b16 %v2706
    %v3978 = vunpack.c.l.b16 %v2707
    %v3979 = vunpack.c.h.b16 %v2707
    %v3980 = vunpack.c.l.b16 %v2708
    %v3981 = vunpack.c.h.b16 %v2708
    %v3982 = vunpack.c.l.b16 %v2709
    %v3983 = vunpack.c.h.b16 %v2709
    %v3984 = vunpack.c.l.b16 %v2710
    %v3985 = vunpack.c.h.b16 %v2710
    %v3986 = vunpack.c.l.b16 %v2711
    %v3987 = vunpack.c.h.b16 %v2711
    %v3988 = vunpack.c.l.b16 %v2712
    %v3989 = vunpack.c.h.b16 %v2712
    %v3990 = vunpack.c.l.b16 %v2713
    %v3991 = vunpack.c.h.b16 %v2713
    %v3992 = vunpack.c.l.b16 %v2714
    %v3993 = vunpack.c.h.b16 %v2714
    %v3994 = vunpack.c.l.b16 %v2715
    %v3995 = vunpack.c.h.b16 %v2715
    %v3996 = vunpack.c.l.b16 %v2716
    %v3997 = vunpack.c.h.b16 %v2716
    %v3998 = vunpack.c.l.b16 %v2717
    %v3999 = vunpack.c.h.b16 %v2717
    %v4000 = vunpack.c.l.b16 %v2718
    %v4001 = vunpack.c.h.b16 %v2718
    %v4002 = vunpack.c.l.b16 %v2719
    %v4003 = vunpack.c.h.b16 %v2719
    %v4004 = vunpack.c.l.b16 %v2720
    %v4005 = vunpack.c.h.b16 %v2720
    %v4006 = vunpack.c.l.b16 %v2721
    %v4007 = vunpack.c.h.b16 %v2721
    %v4008 = vunpack.c.l.b16 %v2722
    %v4009 = vunpack.c.h.b16 %v2722
    %v4010 = vunpack.c.l.b16 %v2723
    %v4011 = vunpack.c.h.b16 %v2723
    %v4012 = vunpack.c.l.b16 %v2724
    %v4013 = vunpack.c.h.b16 %v2724
    %v4014 = vunpack.c.l.b16 %v2725
    %v4015 = vunpack.c.h.b16 %v2725
    %v4016 = vunpack.c.l.b16 %v2726
    %v4017 = vunpack.c.h.b16 %v2726
    %v4018 = vunpack.c.l.b16 %v2727
    %v4019 = vunpack.c.h.b16 %v2727
    %v4020 = vunpack.c.l.b16 %v2728
    %v4021 = vunpack.c.h.b16 %v2728
    %v4022 = vunpack.c.l.b16 %v2729
    %v4023 = vunpack.c.h.b16 %v2729
    %v4024 = vunpack.c.l.b16 %v2730
    %v4025 = vunpack.c.h.b16 %v2730
    %v4026 = vunpack.c.l.b16 %v2731
    %v4027 = vunpack.c.h.b16 %v2731
    %v4028 = vunpack.c.l.b16 %v2732
    %v4029 = vunpack.c.h.b16 %v2732
    %v4030 = vunpack.c.l.b16 %v2733
    %v4031 = vunpack.c.h.b16 %v2733
    %v4032 = vunpack.c.l.b16 %v2734
    %v4033 = vunpack.c.h.b16 %v2734
    %v4034 = vunpack.c.l.b16 %v2735
    %v4035 = vunpack.c.h.b16 %v2735
    %v4036 = vunpack.c.l.b16 %v2736
    %v4037 = vunpack.c.h.b16 %v2736
    %v4038 = vunpack.c.l.b16 %v2737
    %v4039 = vunpack.c.h.b16 %v2737
    %v4040 = vunpack.c.l.b16 %v2738
    %v4041 = vunpack.c.h.b16 %v2738
    %v4042 = vunpack.c.l.b16 %v2739
    %v4043 = vunpack.c.h.b16 %v2739
    %v4044 = vunpack.c.l.b16 %v2740
    %v4045 = vunpack.c.h.b16 %v2740
    %v4046 = vunpack.c.l.b16 %v2741
    %v4047 = vunpack.c.h.b16 %v2741
    %v4048 = vunpack.c.l.b16 %v2742
    %v4049 = vunpack.c.h.b16 %v2742
    %v4050 = vunpack.c.l.b16 %v2743
    %v4051 = vunpack.c.h.b16 %v2743
    %v4052 = vunpack.c.l.b16 %v2744
    %v4053 = vunpack.c.h.b16 %v2744
    %v4054 = vunpack.c.l.b16 %v2745
    %v4055 = vunpack.c.h.b16 %v2745
    %v4056 = vunpack.c.l.b16 %v2746
    %v4057 = vunpack.c.h.b16 %v2746
    %v4058 = vunpack.c.l.b16 %v2747
    %v4059 = vunpack.c.h.b16 %v2747
    %v4060 = vunpack.c.l.b16 %v2748
    %v4061 = vunpack.c.h.b16 %v2748
    %v4062 = vunpack.c.l.b16 %v2749
    %v4063 = vunpack.c.h.b16 %v2749
    %v4064 = vunpack.c.l.b16 %v2750
    %v4065 = vunpack.c.h.b16 %v2750
    %v4066 = vunpack.c.l.b16 %v2751
    %v4067 = vunpack.c.h.b16 %v2751
    %v4068 = vunpack.c.l.b16 %v2752
    %v4069 = vunpack.c.h.b16 %v2752
    %v4070 = vunpack.c.l.b16 %v2753
    %v4071 = vunpack.c.h.b16 %v2753
    %v4072 = vunpack.c.l.b16 %v2754
    %v4073 = vunpack.c.h.b16 %v2754
    %v4074 = vunpack.c.l.b16 %v2755
    %v4075 = vunpack.c.h.b16 %v2755
    %v4076 = vunpack.c.l.b16 %v2756
    %v4077 = vunpack.c.h.b16 %v2756
    %v4078 = vunpack.c.l.b16 %v2757
    %v4079 = vunpack.c.h.b16 %v2757
    %v4080 = vunpack.c.l.b16 %v2758
    %v4081 = vunpack.c.h.b16 %v2758
    %v4082 = vunpack.c.l.b16 %v2759
    %v4083 = vunpack.c.h.b16 %v2759
    %v4084 = vunpack.c.l.b16 %v2760
    %v4085 = vunpack.c.h.b16 %v2760
    %v4086 = vunpack.c.l.b16 %v2761
    %v4087 = vunpack.c.h.b16 %v2761
    %v4088 = vunpack.c.l.b16 %v2762
    %v4089 = vunpack.c.h.b16 %v2762
    %v4090 = vunpack.c.l.b16 %v2763
    %v4091 = vunpack.c.h.b16 %v2763
    %v4092 = vunpack.c.l.b16 %v2764
    %v4093 = vunpack.c.h.b16 %v2764
    %v4094 = vunpack.c.l.b16 %v2765
    %v4095 = vunpack.c.h.b16 %v2765
    %v4096 = vunpack.c.l.b16 %v2766
    %v4097 = vunpack.c.h.b16 %v2766
    %v4098 = vunpack.c.l.b16 %v2767
    %v4099 = vunpack.c.h.b16 %v2767
    %v4100 = vunpack.c.l.b16 %v2768
    %v4101 = vunpack.c.h.b16 %v2768
    %v4102 = vunpack.c.l.b16 %v2769
    %v4103 = vunpack.c.h.b16 %v2769
    %v4104 = vunpack.c.l.b16 %v2770
    %v4105 = vunpack.c.h.b16 %v2770
    %v4106 = vunpack.c.l.b16 %v2771
    %v4107 = vunpack.c.h.b16 %v2771
    %v4108 = vunpack.c.l.b16 %v2772
    %v4109 = vunpack.c.h.b16 %v2772
    %v4110 = vunpack.c.l.b16 %v2773
    %v4111 = vunpack.c.h.b16 %v2773
    %v4112 = vunpack.c.l.b16 %v2774
    %v4113 = vunpack.c.h.b16 %v2774
    %v4114 = vunpack.c.l.b16 %v2775
    %v4115 = vunpack.c.h.b16 %v2775
    %v4116 = vunpack.c.l.b16 %v2776
    %v4117 = vunpack.c.h.b16 %v2776
    %v4118 = vunpack.c.l.b16 %v2777
    %v4119 = vunpack.c.h.b16 %v2777
    %v4120 = vunpack.c.l.b16 %v2778
    %v4121 = vunpack.c.h.b16 %v2778
    %v4122 = vunpack.c.l.b16 %v2779
    %v4123 = vunpack.c.h.b16 %v2779
    %v4124 = vunpack.c.l.b16 %v2780
    %v4125 = vunpack.c.h.b16 %v2780
    %v4126 = vunpack.c.l.b16 %v2781
    %v4127 = vunpack.c.h.b16 %v2781
    %v4128 = vunpack.c.l.b16 %v2782
    %v4129 = vunpack.c.h.b16 %v2782
    %v4130 = vunpack.c.l.b16 %v2783
    %v4131 = vunpack.c.h.b16 %v2783
    %v4132 = vunpack.c.l.b16 %v2784
    %v4133 = vunpack.c.h.b16 %v2784
    %v4134 = vunpack.c.l.b16 %v2785
    %v4135 = vunpack.c.h.b16 %v2785
    %v4136 = vunpack.c.l.b16 %v2786
    %v4137 = vunpack.c.h.b16 %v2786
    %v4138 = vunpack.c.l.b16 %v2787
    %v4139 = vunpack.c.h.b16 %v2787
    %v4140 = vunpack.c.l.b16 %v2788
    %v4141 = vunpack.c.h.b16 %v2788
    %v4142 = vunpack.c.l.b16 %v2789
    %v4143 = vunpack.c.h.b16 %v2789
    %v4144 = vunpack.c.l.b16 %v2790
    %v4145 = vunpack.c.h.b16 %v2790
    %v4146 = vunpack.c.l.b16 %v2791
    %v4147 = vunpack.c.h.b16 %v2791
    %v4148 = vunpack.c.l.b16 %v2792
    %v4149 = vunpack.c.h.b16 %v2792
    %v4150 = vunpack.c.l.b16 %v2793
    %v4151 = vunpack.c.h.b16 %v2793
    %v4152 = vunpack.c.l.b16 %v2794
    %v4153 = vunpack.c.h.b16 %v2794
    %v4154 = vunpack.c.l.b16 %v2795
    %v4155 = vunpack.c.h.b16 %v2795
    %v4156 = vunpack.c.l.b16 %v2796
    %v4157 = vunpack.c.h.b16 %v2796
    %v4158 = vunpack.c.l.b16 %v2797
    %v4159 = vunpack.c.h.b16 %v2797
    %v4160 = vunpack.c.l.b16 %v2798
    %v4161 = vunpack.c.h.b16 %v2798
    %v4162 = vunpack.c.l.b16 %v2799
    %v4163 = vunpack.c.h.b16 %v2799
    %v4164 = vunpack.c.l.b16 %v2800
    %v4165 = vunpack.c.h.b16 %v2800
    %v4166 = vunpack.c.l.b16 %v2801
    %v4167 = vunpack.c.h.b16 %v2801
    %v4168 = vunpack.c.l.b16 %v2802
    %v4169 = vunpack.c.h.b16 %v2802
    %v4170 = vunpack.c.l.b16 %v2803
    %v4171 = vunpack.c.h.b16 %v2803
    %v4172 = vunpack.c.l.b16 %v2804
    %v4173 = vunpack.c.h.b16 %v2804
    %v4174 = vunpack.c.l.b16 %v2805
    %v4175 = vunpack.c.h.b16 %v2805
    %v4176 = vunpack.c.l.b16 %v2806
    %v4177 = vunpack.c.h.b16 %v2806
    %v4178 = vunpack.c.l.b16 %v2807
    %v4179 = vunpack.c.h.b16 %v2807
    %v4180 = vunpack.c.l.b16 %v2808
    %v4181 = vunpack.c.h.b16 %v2808
    %v4182 = vunpack.c.l.b16 %v2809
    %v4183 = vunpack.c.h.b16 %v2809
    %v4184 = vunpack.c.l.b16 %v2810
    %v4185 = vunpack.c.h.b16 %v2810
    %v4186 = vunpack.c.l.b16 %v2811
    %v4187 = vunpack.c.h.b16 %v2811
    %v4188 = vunpack.c.l.b16 %v2812
    %v4189 = vunpack.c.h.b16 %v2812
    %v4190 = vunpack.c.l.b16 %v2813
    %v4191 = vunpack.c.h.b16 %v2813
    %v4192 = vunpack.c.l.b16 %v2814
    %v4193 = vunpack.c.h.b16 %v2814
    %v4194 = vunpack.c.l.b16 %v2815
    %v4195 = vunpack.c.h.b16 %v2815
    %v4196 = vunpack.c.l.b16 %v2816
    %v4197 = vunpack.c.h.b16 %v2816
    %v4198 = vunpack.c.l.b16 %v2817
    %v4199 = vunpack.c.h.b16 %v2817
    %v4200 = vunpack.c.l.b16 %v2818
    %v4201 = vunpack.c.h.b16 %v2818
    %v4202 = vunpack.c.l.b16 %v2819
    %v4203 = vunpack.c.h.b16 %v2819
    %v4204 = vunpack.c.l.b16 %v2820
    %v4205 = vunpack.c.h.b16 %v2820
    %v4206 = vunpack.c.l.b16 %v2821
    %v4207 = vunpack.c.h.b16 %v2821
    %v4208 = vunpack.c.l.b16 %v2822
    %v4209 = vunpack.c.h.b16 %v2822
    %v4210 = vunpack.c.l.b16 %v2823
    %v4211 = vunpack.c.h.b16 %v2823
    %v4212 = vunpack.c.l.b16 %v2824
    %v4213 = vunpack.c.h.b16 %v2824
    %v4214 = vunpack.c.l.b16 %v2825
    %v4215 = vunpack.c.h.b16 %v2825
    %v4216 = vunpack.c.l.b16 %v2826
    %v4217 = vunpack.c.h.b16 %v2826
    %v4218 = vunpack.c.l.b16 %v2827
    %v4219 = vunpack.c.h.b16 %v2827
    %v4220 = vunpack.c.l.b16 %v2828
    %v4221 = vunpack.c.h.b16 %v2828
    %v4222 = vunpack.c.l.b16 %v2829
    %v4223 = vunpack.c.h.b16 %v2829
    %v4224 = vunpack.c.l.b16 %v2830
    %v4225 = vunpack.c.h.b16 %v2830
    %v4226 = vunpack.c.l.b16 %v2831
    %v4227 = vunpack.c.h.b16 %v2831
    %v4228 = vunpack.c.l.b16 %v2832
    %v4229 = vunpack.c.h.b16 %v2832
    %v4230 = vunpack.c.l.b16 %v2833
    %v4231 = vunpack.c.h.b16 %v2833
    %v4232 = vunpack.c.l.b16 %v2834
    %v4233 = vunpack.c.h.b16 %v2834
    %v4234 = vunpack.c.l.b16 %v2835
    %v4235 = vunpack.c.h.b16 %v2835
    %v4236 = vunpack.c.l.b16 %v2836
    %v4237 = vunpack.c.h.b16 %v2836
    %v4238 = vunpack.c.l.b16 %v2837
    %v4239 = vunpack.c.h.b16 %v2837
    %v4240 = vunpack.c.l.b16 %v2838
    %v4241 = vunpack.c.h.b16 %v2838
    %v4242 = vunpack.c.l.b16 %v2839
    %v4243 = vunpack.c.h.b16 %v2839
    %v4244 = vunpack.c.l.b16 %v2840
    %v4245 = vunpack.c.h.b16 %v2840
    %v4246 = vunpack.c.l.b16 %v2841
    %v4247 = vunpack.c.h.b16 %v2841
    %v4248 = vunpack.c.l.b16 %v2842
    %v4249 = vunpack.c.h.b16 %v2842
    %v4250 = vunpack.c.l.b16 %v2843
    %v4251 = vunpack.c.h.b16 %v2843
    %v4252 = vunpack.c.l.b16 %v2844
    %v4253 = vunpack.c.h.b16 %v2844
    %v4254 = vunpack.c.l.b16 %v2845
    %v4255 = vunpack.c.h.b16 %v2845
    %v4256 = vunpack.c.l.b16 %v2846
    %v4257 = vunpack.c.h.b16 %v2846
    %v4258 = vunpack.c.l.b16 %v2847
    %v4259 = vunpack.c.h.b16 %v2847
    %v4260 = vunpack.c.l.b16 %v2848
    %v4261 = vunpack.c.h.b16 %v2848
    %v4262 = vunpack.c.l.b16 %v2849
    %v4263 = vunpack.c.h.b16 %v2849
    %v4264 = vunpack.c.l.b16 %v2850
    %v4265 = vunpack.c.h.b16 %v2850
    %v4266 = vunpack.c.l.b16 %v2851
    %v4267 = vunpack.c.h.b16 %v2851
    %v4268 = vunpack.c.l.b16 %v2852
    %v4269 = vunpack.c.h.b16 %v2852
    %v4270 = vunpack.c.l.b16 %v2853
    %v4271 = vunpack.c.h.b16 %v2853
    %v4272 = vunpack.c.l.b16 %v2854
    %v4273 = vunpack.c.h.b16 %v2854
    %v4274 = vunpack.c.l.b16 %v2855
    %v4275 = vunpack.c.h.b16 %v2855
    %v4276 = vunpack.c.l.b16 %v2856
    %v4277 = vunpack.c.h.b16 %v2856
    %v4278 = vunpack.c.l.b16 %v2857
    %v4279 = vunpack.c.h.b16 %v2857
    %v4280 = vunpack.c.l.b16 %v2858
    %v4281 = vunpack.c.h.b16 %v2858
    %v4282 = vunpack.c.l.b16 %v2859
    %v4283 = vunpack.c.h.b16 %v2859
    %v4284 = vunpack.c.l.b16 %v2860
    %v4285 = vunpack.c.h.b16 %v2860
    %v4286 = vunpack.c.l.b16 %v2861
    %v4287 = vunpack.c.h.b16 %v2861
    %v4288 = vunpack.c.l.b16 %v2862
    %v4289 = vunpack.c.h.b16 %v2862
    %v4290 = vunpack.c.l.b16 %v2863
    %v4291 = vunpack.c.h.b16 %v2863
    %v4292 = vunpack.c.l.b16 %v2864
    %v4293 = vunpack.c.h.b16 %v2864
    %v4294 = vunpack.c.l.b16 %v2865
    %v4295 = vunpack.c.h.b16 %v2865
    %v4296 = vunpack.c.l.b16 %v2866
    %v4297 = vunpack.c.h.b16 %v2866
    %v4298 = vunpack.c.l.b16 %v2867
    %v4299 = vunpack.c.h.b16 %v2867
    %v4300 = vunpack.c.l.b16 %v2868
    %v4301 = vunpack.c.h.b16 %v2868
    %v4302 = vunpack.c.l.b16 %v2869
    %v4303 = vunpack.c.h.b16 %v2869
    %v4304 = vunpack.c.l.b16 %v2870
    %v4305 = vunpack.c.h.b16 %v2870
    %v4306 = vunpack.c.l.b16 %v2871
    %v4307 = vunpack.c.h.b16 %v2871
    %v4308 = vunpack.c.l.b16 %v2872
    %v4309 = vunpack.c.h.b16 %v2872
    %v4310 = vunpack.c.l.b16 %v2873
    %v4311 = vunpack.c.h.b16 %v2873
    %v4312 = vunpack.c.l.b16 %v2874
    %v4313 = vunpack.c.h.b16 %v2874
    %v4314 = vunpack.c.l.b16 %v2875
    %v4315 = vunpack.c.h.b16 %v2875
    %v4316 = vunpack.c.l.b16 %v2876
    %v4317 = vunpack.c.h.b16 %v2876
    %v4318 = vunpack.c.l.b16 %v2877
    %v4319 = vunpack.c.h.b16 %v2877
    %v4320 = vunpack.c.l.b16 %v2878
    %v4321 = vunpack.c.h.b16 %v2878
    %v4322 = vunpack.c.l.b16 %v2879
    %v4323 = vunpack.c.h.b16 %v2879
    %v4324 = vunpack.c.l.b16 %v2880
    %v4325 = vunpack.c.h.b16 %v2880
    %v4326 = vunpack.c.l.b16 %v2881
    %v4327 = vunpack.c.h.b16 %v2881
    %v4328 = vunpack.c.l.b16 %v2882
    %v4329 = vunpack.c.h.b16 %v2882
    %v4330 = vunpack.c.l.b16 %v2883
    %v4331 = vunpack.c.h.b16 %v2883
    %v4332 = vunpack.c.l.b16 %v2884
    %v4333 = vunpack.c.h.b16 %v2884
    %v4334 = vunpack.c.l.b16 %v2885
    %v4335 = vunpack.c.h.b16 %v2885
    %v4336 = vunpack.c.l.b16 %v2886
    %v4337 = vunpack.c.h.b16 %v2886
    %v4338 = vunpack.c.l.b16 %v2887
    %v4339 = vunpack.c.h.b16 %v2887
    %v4340 = vunpack.c.l.b16 %v2888
    %v4341 = vunpack.c.h.b16 %v2888
    %v4342 = vunpack.c.l.b16 %v2889
    %v4343 = vunpack.c.h.b16 %v2889
    %v4344 = vunpack.c.l.b16 %v2890
    %v4345 = vunpack.c.h.b16 %v2890
    %v4346 = vunpack.c.l.b16 %v2891
    %v4347 = vunpack.c.h.b16 %v2891
    %v4348 = vunpack.c.l.b16 %v2892
    %v4349 = vunpack.c.h.b16 %v2892
    %v4350 = vunpack.c.l.b16 %v2893
    %v4351 = vunpack.c.h.b16 %v2893
    %v4352 = vunpack.c.l.b16 %v2894
    %v4353 = vunpack.c.h.b16 %v2894
    %v4354 = vunpack.c.l.b16 %v2895
    %v4355 = vunpack.c.h.b16 %v2895
    %v4356 = vunpack.c.l.b16 %v2896
    %v4357 = vunpack.c.h.b16 %v2896
    %v4358 = vunpack.c.l.b16 %v2897
    %v4359 = vunpack.c.h.b16 %v2897
    %v4360 = vunpack.c.l.b16 %v2898
    %v4361 = vunpack.c.h.b16 %v2898
    %v4362 = vunpack.c.l.b16 %v2899
    %v4363 = vunpack.c.h.b16 %v2899
    %v4364 = vunpack.c.l.b16 %v2900
    %v4365 = vunpack.c.h.b16 %v2900
    %v4366 = vunpack.c.l.b16 %v2901
    %v4367 = vunpack.c.h.b16 %v2901
    %v4368 = vunpack.c.l.b16 %v2902
    %v4369 = vunpack.c.h.b16 %v2902
    %v4370 = vunpack.c.l.b16 %v2903
    %v4371 = vunpack.c.h.b16 %v2903
    %v4372 = vunpack.c.l.b16 %v2904
    %v4373 = vunpack.c.h.b16 %v2904
    %v4374 = vunpack.c.l.b16 %v2905
    %v4375 = vunpack.c.h.b16 %v2905
    %v4376 = vunpack.c.l.b16 %v2906
    %v4377 = vunpack.c.h.b16 %v2906
    %v4378 = vunpack.c.l.b16 %v2907
    %v4379 = vunpack.c.h.b16 %v2907
    %v4380 = vunpack.c.l.b16 %v2908
    %v4381 = vunpack.c.h.b16 %v2908
    %v4382 = vunpack.c.l.b16 %v2909
    %v4383 = vunpack.c.h.b16 %v2909
    %v4384 = vunpack.c.l.b16 %v2910
    %v4385 = vunpack.c.h.b16 %v2910
    %v4386 = vunpack.c.l.b16 %v2911
    %v4387 = vunpack.c.h.b16 %v2911
    %v4388 = vunpack.c.l.b16 %v2912
    %v4389 = vunpack.c.h.b16 %v2912
    %v4390 = vunpack.c.l.b16 %v2913
    %v4391 = vunpack.c.h.b16 %v2913
    %v4392 = vunpack.c.l.b16 %v2914
    %v4393 = vunpack.c.h.b16 %v2914
    %v4394 = vunpack.c.l.b16 %v2915
    %v4395 = vunpack.c.h.b16 %v2915
    %v4396 = vunpack.c.l.b16 %v2916
    %v4397 = vunpack.c.h.b16 %v2916
    %v4398 = vunpack.c.l.b16 %v2917
    %v4399 = vunpack.c.h.b16 %v2917
    %v4400 = vunpack.c.l.b16 %v2918
    %v4401 = vunpack.c.h.b16 %v2918
    %v4402 = vunpack.c.l.b16 %v2919
    %v4403 = vunpack.c.h.b16 %v2919
    %v4404 = vunpack.c.l.b16 %v2920
    %v4405 = vunpack.c.h.b16 %v2920
    %v4406 = vunpack.c.l.b16 %v2921
    %v4407 = vunpack.c.h.b16 %v2921
    %v4408 = vunpack.c.l.b16 %v2922
    %v4409 = vunpack.c.h.b16 %v2922
    %v4410 = vunpack.c.l.b16 %v2923
    %v4411 = vunpack.c.h.b16 %v2923
    %v4412 = vunpack.c.l.b16 %v2924
    %v4413 = vunpack.c.h.b16 %v2924
    %v4414 = vunpack.c.l.b16 %v2925
    %v4415 = vunpack.c.h.b16 %v2925
    %v4416 = vunpack.c.l.b16 %v2926
    %v4417 = vunpack.c.h.b16 %v2926
    %v4418 = vunpack.c.l.b16 %v2927
    %v4419 = vunpack.c.h.b16 %v2927
    %v4420 = vunpack.c.l.b16 %v2928
    %v4421 = vunpack.c.h.b16 %v2928
    %v4422 = vunpack.c.l.b16 %v2929
    %v4423 = vunpack.c.h.b16 %v2929
    %v4424 = vunpack.c.l.b16 %v2930
    %v4425 = vunpack.c.h.b16 %v2930
    %v4426 = vunpack.c.l.b16 %v2931
    %v4427 = vunpack.c.h.b16 %v2931
    %v4428 = vunpack.c.l.b16 %v2932
    %v4429 = vunpack.c.h.b16 %v2932
    %v4430 = vunpack.c.l.b16 %v2933
    %v4431 = vunpack.c.h.b16 %v2933
    %v4432 = vunpack.c.l.b16 %v2934
    %v4433 = vunpack.c.h.b16 %v2934
    %v4434 = vunpack.c.l.b16 %v2935
    %v4435 = vunpack.c.h.b16 %v2935
    %v4436 = vunpack.c.l.b16 %v2936
    %v4437 = vunpack.c.h.b16 %v2936
    %v4438 = vunpack.c.l.b16 %v2937
    %v4439 = vunpack.c.h.b16 %v2937
    %v4440 = vunpack.c.l.b16 %v2938
    %v4441 = vunpack.c.h.b16 %v2938
    %v4442 = vunpack.c.l.b16 %v2939
    %v4443 = vunpack.c.h.b16 %v2939
    %v4444 = vunpack.c.l.b16 %v2940
    %v4445 = vunpack.c.h.b16 %v2940
    %v4446 = vunpack.c.l.b16 %v2941
    %v4447 = vunpack.c.h.b16 %v2941
    %v4448 = vunpack.c.l.b16 %v2942
    %v4449 = vunpack.c.h.b16 %v2942
    %v4450 = vunpack.c.l.b16 %v2943
    %v4451 = vunpack.c.h.b16 %v2943
    %v4452 = vunpack.c.l.b16 %v2944
    %v4453 = vunpack.c.h.b16 %v2944
    %v4454 = vunpack.c.l.b16 %v2945
    %v4455 = vunpack.c.h.b16 %v2945
    %v4456 = vunpack.c.l.b16 %v2946
    %v4457 = vunpack.c.h.b16 %v2946
    %v4458 = vunpack.c.l.b16 %v2947
    %v4459 = vunpack.c.h.b16 %v2947
    %v4460 = vunpack.c.l.b16 %v2948
    %v4461 = vunpack.c.h.b16 %v2948
    %v4462 = vunpack.c.l.b16 %v2949
    %v4463 = vunpack.c.h.b16 %v2949
    %v4464 = vunpack.c.l.b16 %v2950
    %v4465 = vunpack.c.h.b16 %v2950
    %v4466 = vunpack.c.l.b16 %v2951
    %v4467 = vunpack.c.h.b16 %v2951
    %v4468 = vunpack.c.l.b16 %v2952
    %v4469 = vunpack.c.h.b16 %v2952
    %v4470 = vunpack.c.l.b16 %v2953
    %v4471 = vunpack.c.h.b16 %v2953
    %v4472 = vunpack.c.l.b16 %v2954
    %v4473 = vunpack.c.h.b16 %v2954
    %v4474 = vunpack.c.l.b16 %v2955
    %v4475 = vunpack.c.h.b16 %v2955
    %v4476 = vunpack.c.l.b16 %v2956
    %v4477 = vunpack.c.h.b16 %v2956
    %v4478 = vunpack.c.l.b16 %v2957
    %v4479 = vunpack.c.h.b16 %v2957
    %v4480 = vunpack.c.l.b16 %v2958
    %v4481 = vunpack.c.h.b16 %v2958
    %v4482 = vunpack.c.l.b16 %v2959
    %v4483 = vunpack.c.h.b16 %v2959
    %v4484 = vunpack.c.l.b16 %v2960
    %v4485 = vunpack.c.h.b16 %v2960
    %v4486 = vunpack.c.l.b16 %v2961
    %v4487 = vunpack.c.h.b16 %v2961
    %v4488 = vunpack.c.l.b16 %v2962
    %v4489 = vunpack.c.h.b16 %v2962
    %v4490 = vunpack.c.l.b16 %v2963
    %v4491 = vunpack.c.h.b16 %v2963
    %v4492 = vunpack.c.l.b16 %v2964
    %v4493 = vunpack.c.h.b16 %v2964
    %v4494 = vunpack.c.l.b16 %v2965
    %v4495 = vunpack.c.h.b16 %v2965
    %v4496 = vunpack.c.l.b16 %v2966
    %v4497 = vunpack.c.h.b16 %v2966
    %v4498 = vunpack.c.l.b16 %v2967
    %v4499 = vunpack.c.h.b16 %v2967
    %v4500 = vunpack.c.l.b16 %v2968
    %v4501 = vunpack.c.h.b16 %v2968
    %v4502 = vunpack.c.l.b16 %v2969
    %v4503 = vunpack.c.h.b16 %v2969
    %v4504 = vunpack.c.l.b16 %v2970
    %v4505 = vunpack.c.h.b16 %v2970
    %v4506 = vunpack.c.l.b16 %v2971
    %v4507 = vunpack.c.h.b16 %v2971
    %v4508 = vunpack.c.l.b16 %v2972
    %v4509 = vunpack.c.h.b16 %v2972
    %v4510 = vunpack.c.l.b16 %v2973
    %v4511 = vunpack.c.h.b16 %v2973
    %v4512 = vunpack.c.l.b16 %v2974
    %v4513 = vunpack.c.h.b16 %v2974
    %v4514 = vunpack.c.l.b16 %v2975
    %v4515 = vunpack.c.h.b16 %v2975
    %v4516 = vunpack.c.l.b16 %v2976
    %v4517 = vunpack.c.h.b16 %v2976
    %v4518 = vunpack.c.l.b16 %v2977
    %v4519 = vunpack.c.h.b16 %v2977
    %v4520 = vunpack.c.l.b16 %v2978
    %v4521 = vunpack.c.h.b16 %v2978
    %v4522 = vunpack.c.l.b16 %v2979
    %v4523 = vunpack.c.h.b16 %v2979
    %v4524 = vunpack.c.l.b16 %v2980
    %v4525 = vunpack.c.h.b16 %v2980
    %v4526 = vunpack.c.l.b16 %v2981
    %v4527 = vunpack.c.h.b16 %v2981
    %v4528 = vunpack.c.l.b16 %v2982
    %v4529 = vunpack.c.h.b16 %v2982
    %v4530 = vunpack.c.l.b16 %v2983
    %v4531 = vunpack.c.h.b16 %v2983
    %v4532 = vunpack.c.l.b16 %v2984
    %v4533 = vunpack.c.h.b16 %v2984
    %v4534 = vunpack.c.l.b16 %v2985
    %v4535 = vunpack.c.h.b16 %v2985
    %v4536 = vunpack.c.l.b16 %v2986
    %v4537 = vunpack.c.h.b16 %v2986
    %v4538 = vunpack.c.l.b16 %v2987
    %v4539 = vunpack.c.h.b16 %v2987
    %v4540 = vunpack.c.l.b16 %v2988
    %v4541 = vunpack.c.h.b16 %v2988
    %v4542 = vunpack.c.l.b16 %v2989
    %v4543 = vunpack.c.h.b16 %v2989
    %v4544 = vunpack.c.l.b16 %v2990
    %v4545 = vunpack.c.h.b16 %v2990
    %v4546 = vunpack.c.l.b16 %v2991
    %v4547 = vunpack.c.h.b16 %v2991
    %v4548 = vunpack.c.l.b16 %v2992
    %v4549 = vunpack.c.h.b16 %v2992
    %v4550 = vunpack.c.l.b16 %v2993
    %v4551 = vunpack.c.h.b16 %v2993
    %v4552 = vunpack.c.l.b16 %v2994
    %v4553 = vunpack.c.h.b16 %v2994
    %v4554 = vunpack.c.l.b16 %v2995
    %v4555 = vunpack.c.h.b16 %v2995
    %v4556 = vunpack.c.l.b16 %v2996
    %v4557 = vunpack.c.h.b16 %v2996
    %v4558 = vunpack.c.l.b16 %v2997
    %v4559 = vunpack.c.h.b16 %v2997
    %v4560 = vunpack.c.l.b16 %v2998
    %v4561 = vunpack.c.h.b16 %v2998
    %v4562 = vunpack.c.l.b16 %v2999
    %v4563 = vunpack.c.h.b16 %v2999
    %v4564 = vunpack.c.l.b16 %v3000
    %v4565 = vunpack.c.h.b16 %v3000
    %v4566 = vunpack.c.l.b16 %v3001
    %v4567 = vunpack.c.h.b16 %v3001
    %v4568 = vunpack.c.l.b16 %v3002
    %v4569 = vunpack.c.h.b16 %v3002
    %v4570 = vunpack.c.l.b16 %v3003
    %v4571 = vunpack.c.h.b16 %v3003
    %v4572 = vunpack.c.l.b16 %v3004
    %v4573 = vunpack.c.h.b16 %v3004
    %v4574 = vunpack.c.l.b16 %v3005
    %v4575 = vunpack.c.h.b16 %v3005
    %v4576 = vunpack.c.l.b16 %v3006
    %v4577 = vunpack.c.h.b16 %v3006
    %v4578 = vunpack.c.l.b16 %v3007
    %v4579 = vunpack.c.h.b16 %v3007
    %v4580 = vunpack.c.l.b16 %v3008
    %v4581 = vunpack.c.h.b16 %v3008
    %v4582 = vunpack.c.l.b16 %v3009
    %v4583 = vunpack.c.h.b16 %v3009
    %v4584 = vunpack.c.l.b16 %v3010
    %v4585 = vunpack.c.h.b16 %v3010
    %v4586 = vunpack.c.l.b16 %v3011
    %v4587 = vunpack.c.h.b16 %v3011
    %v4588 = vunpack.c.l.b16 %v3012
    %v4589 = vunpack.c.h.b16 %v3012
    %v4590 = vunpack.c.l.b16 %v3013
    %v4591 = vunpack.c.h.b16 %v3013
    %v4592 = vpack.c.b16 %v3576, %v3568
    %v4593 = vpack.c.b16 %v3577, %v3569
    %v4594 = vpack.c.b16 %v3578, %v3570
    %v4595 = vpack.c.b16 %v3579, %v3571
    %v4596 = vpack.c.b16 %v3580, %v3572
    %v4597 = vpack.c.b16 %v3581, %v3573
    %v4598 = vpack.c.b16 %v3582, %v3574
    %v4599 = vpack.c.b16 %v3583, %v3575
    %v4600 = vpack.c.b16 %v3592, %v3584
    %v4601 = vpack.c.b16 %v3593, %v3585
    %v4602 = vpack.c.b16 %v3594, %v3586
    %v4603 = vpack.c.b16 %v3595, %v3587
    %v4604 = vpack.c.b16 %v3596, %v3588
    %v4605 = vpack.c.b16 %v3597, %v3589
    %v4606 = vpack.c.b16 %v3598, %v3590
    %v4607 = vpack.c.b16 %v3599, %v3591
    %v4608 = vpack.c.b16 %v3608, %v3600
    %v4609 = vpack.c.b16 %v3609, %v3601
    %v4610 = vpack.c.b16 %v3610, %v3602
    %v4611 = vpack.c.b16 %v3611, %v3603
    %v4612 = vpack.c.b16 %v3612, %v3604
    %v4613 = vpack.c.b16 %v3613, %v3605
    %v4614 = vpack.c.b16 %v3614, %v3606
    %v4615 = vpack.c.b16 %v3615, %v3607
    %v4616 = vpack.c.b16 %v3624, %v3616
    %v4617 = vpack.c.b16 %v3625, %v3617
    %v4618 = vpack.c.b16 %v3626, %v3618
    %v4619 = vpack.c.b16 %v3627, %v3619
    %v4620 = vpack.c.b16 %v3628, %v3620
    %v4621 = vpack.c.b16 %v3629, %v3621
    %v4622 = vpack.c.b16 %v3630, %v3622
    %v4623 = vpack.c.b16 %v3631, %v3623
    %v4624 = vpack.c.b16 %v3640, %v3632
    %v4625 = vpack.c.b16 %v3641, %v3633
    %v4626 = vpack.c.b16 %v3642, %v3634
    %v4627 = vpack.c.b16 %v3643, %v3635
    %v4628 = vpack.c.b16 %v3644, %v3636
    %v4629 = vpack.c.b16 %v3645, %v3637
    %v4630 = vpack.c.b16 %v3646, %v3638
    %v4631 = vpack.c.b16 %v3647, %v3639
    %v4632 = vpack.c.b16 %v3656, %v3648
    %v4633 = vpack.c.b16 %v3657, %v3649
    %v4634 = vpack.c.b16 %v3658, %v3650
    %v4635 = vpack.c.b16 %v3659, %v3651
    %v4636 = vpack.c.b16 %v3660, %v3652
    %v4637 = vpack.c.b16 %v3661, %v3653
    %v4638 = vpack.c.b16 %v3662, %v3654
    %v4639 = vpack.c.b16 %v3663, %v3655
    %v4640 = vpack.c.b16 %v3672, %v3664
    %v4641 = vpack.c.b16 %v3673, %v3665
    %v4642 = vpack.c.b16 %v3674, %v3666
    %v4643 = vpack.c.b16 %v3675, %v3667
    %v4644 = vpack.c.b16 %v3676, %v3668
    %v4645 = vpack.c.b16 %v3677, %v3669
    %v4646 = vpack.c.b16 %v3678, %v3670
    %v4647 = vpack.c.b16 %v3679, %v3671
    %v4648 = vpack.c.b16 %v3688, %v3680
    %v4649 = vpack.c.b16 %v3689, %v3681
    %v4650 = vpack.c.b16 %v3690, %v3682
    %v4651 = vpack.c.b16 %v3691, %v3683
    %v4652 = vpack.c.b16 %v3692, %v3684
    %v4653 = vpack.c.b16 %v3693, %v3685
    %v4654 = vpack.c.b16 %v3694, %v3686
    %v4655 = vpack.c.b16 %v3695, %v3687
    %v4656 = vpack.c.b16 %v3704, %v3696
    %v4657 = vpack.c.b16 %v3705, %v3697
    %v4658 = vpack.c.b16 %v3706, %v3698
    %v4659 = vpack.c.b16 %v3707, %v3699
    %v4660 = vpack.c.b16 %v3708, %v3700
    %v4661 = vpack.c.b16 %v3709, %v3701
    %v4662 = vpack.c.b16 %v3710, %v3702
    %v4663 = vpack.c.b16 %v3711, %v3703
    %v4664 = vpack.c.b16 %v3720, %v3712
    %v4665 = vpack.c.b16 %v3721, %v3713
    %v4666 = vpack.c.b16 %v3722, %v3714
    %v4667 = vpack.c.b16 %v3723, %v3715
    %v4668 = vpack.c.b16 %v3724, %v3716
    %v4669 = vpack.c.b16 %v3725, %v3717
    %v4670 = vpack.c.b16 %v3726, %v3718
    %v4671 = vpack.c.b16 %v3727, %v3719
    %v4672 = vpack.c.b16 %v3736, %v3728
    %v4673 = vpack.c.b16 %v3737, %v3729
    %v4674 = vpack.c.b16 %v3738, %v3730
    %v4675 = vpack.c.b16 %v3739, %v3731
    %v4676 = vpack.c.b16 %v3740, %v3732
    %v4677 = vpack.c.b16 %v3741, %v3733
    %v4678 = vpack.c.b16 %v3742, %v3734
    %v4679 = vpack.c.b16 %v3743, %v3735
    %v4680 = vpack.c.b16 %v3752, %v3744
    %v4681 = vpack.c.b16 %v3753, %v3745
    %v4682 = vpack.c.b16 %v3754, %v3746
    %v4683 = vpack.c.b16 %v3755, %v3747
    %v4684 = vpack.c.b16 %v3756, %v3748
    %v4685 = vpack.c.b16 %v3757, %v3749
    %v4686 = vpack.c.b16 %v3758, %v3750
    %v4687 = vpack.c.b16 %v3759, %v3751
    %v4688 = vpack.c.b16 %v3768, %v3760
    %v4689 = vpack.c.b16 %v3769, %v3761
    %v4690 = vpack.c.b16 %v3770, %v3762
    %v4691 = vpack.c.b16 %v3771, %v3763
    %v4692 = vpack.c.b16 %v3772, %v3764
    %v4693 = vpack.c.b16 %v3773, %v3765
    %v4694 = vpack.c.b16 %v3774, %v3766
    %v4695 = vpack.c.b16 %v3775, %v3767
    %v4696 = vpack.c.b16 %v3784, %v3776
    %v4697 = vpack.c.b16 %v3785, %v3777
    %v4698 = vpack.c.b16 %v3786, %v3778
    %v4699 = vpack.c.b16 %v3787, %v3779
    %v4700 = vpack.c.b16 %v3788, %v3780
    %v4701 = vpack.c.b16 %v3789, %v3781
    %v4702 = vpack.c.b16 %v3790, %v3782
    %v4703 = vpack.c.b16 %v3791, %v3783
    %v4704 = vpack.c.b16 %v3800, %v3792
    %v4705 = vpack.c.b16 %v3801, %v3793
    %v4706 = vpack.c.b16 %v3802, %v3794
    %v4707 = vpack.c.b16 %v3803, %v3795
    %v4708 = vpack.c.b16 %v3804, %v3796
    %v4709 = vpack.c.b16 %v3805, %v3797
    %v4710 = vpack.c.b16 %v3806, %v3798
    %v4711 = vpack.c.b16 %v3807, %v3799
    %v4712 = vpack.c.b16 %v3816, %v3808
    %v4713 = vpack.c.b16 %v3817, %v3809
    %v4714 = vpack.c.b16 %v3818, %v3810
    %v4715 = vpack.c.b16 %v3819, %v3811
    %v4716 = vpack.c.b16 %v3820, %v3812
    %v4717 = vpack.c.b16 %v3821, %v3813
    %v4718 = vpack.c.b16 %v3822, %v3814
    %v4719 = vpack.c.b16 %v3823, %v3815
    %v4720 = vpack.c.b16 %v3832, %v3824
    %v4721 = vpack.c.b16 %v3833, %v3825
    %v4722 = vpack.c.b16 %v3834, %v3826
    %v4723 = vpack.c.b16 %v3835, %v3827
    %v4724 = vpack.c.b16 %v3836, %v3828
    %v4725 = vpack.c.b16 %v3837, %v3829
    %v4726 = vpack.c.b16 %v3838, %v3830
    %v4727 = vpack.c.b16 %v3839, %v3831
    %v4728 = vpack.c.b16 %v3848, %v3840
    %v4729 = vpack.c.b16 %v3849, %v3841
    %v4730 = vpack.c.b16 %v3850, %v3842
    %v4731 = vpack.c.b16 %v3851, %v3843
    %v4732 = vpack.c.b16 %v3852, %v3844
    %v4733 = vpack.c.b16 %v3853, %v3845
    %v4734 = vpack.c.b16 %v3854, %v3846
    %v4735 = vpack.c.b16 %v3855, %v3847
    %v4736 = vpack.c.b16 %v3864, %v3856
    %v4737 = vpack.c.b16 %v3865, %v3857
    %v4738 = vpack.c.b16 %v3866, %v3858
    %v4739 = vpack.c.b16 %v3867, %v3859
    %v4740 = vpack.c.b16 %v3868, %v3860
    %v4741 = vpack.c.b16 %v3869, %v3861
    %v4742 = vpack.c.b16 %v3870, %v3862
    %v4743 = vpack.c.b16 %v3871, %v3863
    %v4744 = vpack.c.b16 %v3880, %v3872
    %v4745 = vpack.c.b16 %v3881, %v3873
    %v4746 = vpack.c.b16 %v3882, %v3874
    %v4747 = vpack.c.b16 %v3883, %v3875
    %v4748 = vpack.c.b16 %v3884, %v3876
    %v4749 = vpack.c.b16 %v3885, %v3877
    %v4750 = vpack.c.b16 %v3886, %v3878
    %v4751 = vpack.c.b16 %v3887, %v3879
    %v4752 = vpack.c.b16 %v3896, %v3888
    %v4753 = vpack.c.b16 %v3897, %v3889
    %v4754 = vpack.c.b16 %v3898, %v3890
    %v4755 = vpack.c.b16 %v3899, %v3891
    %v4756 = vpack.c.b16 %v3900, %v3892
    %v4757 = vpack.c.b16 %v3901, %v3893
    %v4758 = vpack.c.b16 %v3902, %v3894
    %v4759 = vpack.c.b16 %v3903, %v3895
    %v4760 = vpack.c.b16 %v3912, %v3904
    %v4761 = vpack.c.b16 %v3913, %v3905
    %v4762 = vpack.c.b16 %v3914, %v3906
    %v4763 = vpack.c.b16 %v3915, %v3907
    %v4764 = vpack.c.b16 %v3916, %v3908
    %v4765 = vpack.c.b16 %v3917, %v3909
    %v4766 = vpack.c.b16 %v3918, %v3910
    %v4767 = vpack.c.b16 %v3919, %v3911
    %v4768 = vpack.c.b16 %v3928, %v3920
    %v4769 = vpack.c.b16 %v3929, %v3921
    %v4770 = vpack.c.b16 %v3930, %v3922
    %v4771 = vpack.c.b16 %v3931, %v3923
    %v4772 = vpack.c.b16 %v3932, %v3924
    %v4773 = vpack.c.b16 %v3933, %v3925
    %v4774 = vpack.c.b16 %v3934, %v3926
    %v4775 = vpack.c.b16 %v3935, %v3927
    %v4776 = vpack.c.b16 %v3944, %v3936
    %v4777 = vpack.c.b16 %v3945, %v3937
    %v4778 = vpack.c.b16 %v3946, %v3938
    %v4779 = vpack.c.b16 %v3947, %v3939
    %v4780 = vpack.c.b16 %v3948, %v3940
    %v4781 = vpack.c.b16 %v3949, %v3941
    %v4782 = vpack.c.b16 %v3950, %v3942
    %v4783 = vpack.c.b16 %v3951, %v3943
    %v4784 = vpack.c.b16 %v3960, %v3952
    %v4785 = vpack.c.b16 %v3961, %v3953
    %v4786 = vpack.c.b16 %v3962, %v3954
    %v4787 = vpack.c.b16 %v3963, %v3955
    %v4788 = vpack.c.b16 %v3964, %v3956
    %v4789 = vpack.c.b16 %v3965, %v3957
    %v4790 = vpack.c.b16 %v3966, %v3958
    %v4791 = vpack.c.b16 %v3967, %v3959
    %v4792 = vpack.c.b16 %v3976, %v3968
    %v4793 = vpack.c.b16 %v3977, %v3969
    %v4794 = vpack.c.b16 %v3978, %v3970
    %v4795 = vpack.c.b16 %v3979, %v3971
    %v4796 = vpack.c.b16 %v3980, %v3972
    %v4797 = vpack.c.b16 %v3981, %v3973
    %v4798 = vpack.c.b16 %v3982, %v3974
    %v4799 = vpack.c.b16 %v3983, %v3975
    %v4800 = vpack.c.b16 %v3992, %v3984
    %v4801 = vpack.c.b16 %v3993, %v3985
    %v4802 = vpack.c.b16 %v3994, %v3986
    %v4803 = vpack.c.b16 %v3995, %v3987
    %v4804 = vpack.c.b16 %v3996, %v3988
    %v4805 = vpack.c.b16 %v3997, %v3989
    %v4806 = vpack.c.b16 %v3998, %v3990
    %v4807 = vpack.c.b16 %v3999, %v3991
    %v4808 = vpack.c.b16 %v4008, %v4000
    %v4809 = vpack.c.b16 %v4009, %v4001
    %v4810 = vpack.c.b16 %v4010, %v4002
    %v4811 = vpack.c.b16 %v4011, %v4003
    %v4812 = vpack.c.b16 %v4012, %v4004
    %v4813 = vpack.c.b16 %v4013, %v4005
    %v4814 = vpack.c.b16 %v4014, %v4006
    %v4815 = vpack.c.b16 %v4015, %v4007
    %v4816 = vpack.c.b16 %v4024, %v4016
    %v4817 = vpack.c.b16 %v4025, %v4017
    %v4818 = vpack.c.b16 %v4026, %v4018
    %v4819 = vpack.c.b16 %v4027, %v4019
    %v4820 = vpack.c.b16 %v4028, %v4020
    %v4821 = vpack.c.b16 %v4029, %v4021
    %v4822 = vpack.c.b16 %v4030, %v4022
    %v4823 = vpack.c.b16 %v4031, %v4023
    %v4824 = vpack.c.b16 %v4040, %v4032
    %v4825 = vpack.c.b16 %v4041, %v4033
    %v4826 = vpack.c.b16 %v4042, %v4034
    %v4827 = vpack.c.b16 %v4043, %v4035
    %v4828 = vpack.c.b16 %v4044, %v4036
    %v4829 = vpack.c.b16 %v4045, %v4037
    %v4830 = vpack.c.b16 %v4046, %v4038
    %v4831 = vpack.c.b16 %v4047, %v4039
    %v4832 = vpack.c.b16 %v4056, %v4048
    %v4833 = vpack.c.b16 %v4057, %v4049
    %v4834 = vpack.c.b16 %v4058, %v4050
    %v4835 = vpack.c.b16 %v4059, %v4051
    %v4836 = vpack.c.b16 %v4060, %v4052
    %v4837 = vpack.c.b16 %v4061, %v4053
    %v4838 = vpack.c.b16 %v4062, %v4054
    %v4839 = vpack.c.b16 %v4063, %v4055
    %v4840 = vpack.c.b16 %v4072, %v4064
    %v4841 = vpack.c.b16 %v4073, %v4065
    %v4842 = vpack.c.b16 %v4074, %v4066
    %v4843 = vpack.c.b16 %v4075, %v4067
    %v4844 = vpack.c.b16 %v4076, %v4068
    %v4845 = vpack.c.b16 %v4077, %v4069
    %v4846 = vpack.c.b16 %v4078, %v4070
    %v4847 = vpack.c.b16 %v4079, %v4071
    %v4848 = vpack.c.b16 %v4088, %v4080
    %v4849 = vpack.c.b16 %v4089, %v4081
    %v4850 = vpack.c.b16 %v4090, %v4082
    %v4851 = vpack.c.b16 %v4091, %v4083
    %v4852 = vpack.c.b16 %v4092, %v4084
    %v4853 = vpack.c.b16 %v4093, %v4085
    %v4854 = vpack.c.b16 %v4094, %v4086
    %v4855 = vpack.c.b16 %v4095, %v4087
    %v4856 = vpack.c.b16 %v4104, %v4096
    %v4857 = vpack.c.b16 %v4105, %v4097
    %v4858 = vpack.c.b16 %v4106, %v4098
    %v4859 = vpack.c.b16 %v4107, %v4099
    %v4860 = vpack.c.b16 %v4108, %v4100
    %v4861 = vpack.c.b16 %v4109, %v4101
    %v4862 = vpack.c.b16 %v4110, %v4102
    %v4863 = vpack.c.b16 %v4111, %v4103
    %v4864 = vpack.c.b16 %v4120, %v4112
    %v4865 = vpack.c.b16 %v4121, %v4113
    %v4866 = vpack.c.b16 %v4122, %v4114
    %v4867 = vpack.c.b16 %v4123, %v4115
    %v4868 = vpack.c.b16 %v4124, %v4116
    %v4869 = vpack.c.b16 %v4125, %v4117
    %v4870 = vpack.c.b16 %v4126, %v4118
    %v4871 = vpack.c.b16 %v4127, %v4119
    %v4872 = vpack.c.b16 %v4136, %v4128
    %v4873 = vpack.c.b16 %v4137, %v4129
    %v4874 = vpack.c.b16 %v4138, %v4130
    %v4875 = vpack.c.b16 %v4139, %v4131
    %v4876 = vpack.c.b16 %v4140, %v4132
    %v4877 = vpack.c.b16 %v4141, %v4133
    %v4878 = vpack.c.b16 %v4142, %v4134
    %v4879 = vpack.c.b16 %v4143, %v4135
    %v4880 = vpack.c.b16 %v4152, %v4144
    %v4881 = vpack.c.b16 %v4153, %v4145
    %v4882 = vpack.c.b16 %v4154, %v4146
    %v4883 = vpack.c.b16 %v4155, %v4147
    %v4884 = vpack.c.b16 %v4156, %v4148
    %v4885 = vpack.c.b16 %v4157, %v4149
    %v4886 = vpack.c.b16 %v4158, %v4150
    %v4887 = vpack.c.b16 %v4159, %v4151
    %v4888 = vpack.c.b16 %v4168, %v4160
    %v4889 = vpack.c.b16 %v4169, %v4161
    %v4890 = vpack.c.b16 %v4170, %v4162
    %v4891 = vpack.c.b16 %v4171, %v4163
    %v4892 = vpack.c.b16 %v4172, %v4164
    %v4893 = vpack.c.b16 %v4173, %v4165
    %v4894 = vpack.c.b16 %v4174, %v4166
    %v4895 = vpack.c.b16 %v4175, %v4167
    %v4896 = vpack.c.b16 %v4184, %v4176
    %v4897 = vpack.c.b16 %v4185, %v4177
    %v4898 = vpack.c.b16 %v4186, %v4178
    %v4899 = vpack.c.b16 %v4187, %v4179
    %v4900 = vpack.c.b16 %v4188, %v4180
    %v4901 = vpack.c.b16 %v4189, %v4181
    %v4902 = vpack.c.b16 %v4190, %v4182
    %v4903 = vpack.c.b16 %v4191, %v4183
    %v4904 = vpack.c.b16 %v4200, %v4192
    %v4905 = vpack.c.b16 %v4201, %v4193
    %v4906 = vpack.c.b16 %v4202, %v4194
    %v4907 = vpack.c.b16 %v4203, %v4195
    %v4908 = vpack.c.b16 %v4204, %v4196
    %v4909 = vpack.c.b16 %v4205, %v4197
    %v4910 = vpack.c.b16 %v4206, %v4198
    %v4911 = vpack.c.b16 %v4207, %v4199
    %v4912 = vpack.c.b16 %v4216, %v4208
    %v4913 = vpack.c.b16 %v4217, %v4209
    %v4914 = vpack.c.b16 %v4218, %v4210
    %v4915 = vpack.c.b16 %v4219, %v4211
    %v4916 = vpack.c.b16 %v4220, %v4212
    %v4917 = vpack.c.b16 %v4221, %v4213
    %v4918 = vpack.c.b16 %v4222, %v4214
    %v4919 = vpack.c.b16 %v4223, %v4215
    %v4920 = vpack.c.b16 %v4232, %v4224
    %v4921 = vpack.c.b16 %v4233, %v4225
    %v4922 = vpack.c.b16 %v4234, %v4226
    %v4923 = vpack.c.b16 %v4235, %v4227
    %v4924 = vpack.c.b16 %v4236, %v4228
    %v4925 = vpack.c.b16 %v4237, %v4229
    %v4926 = vpack.c.b16 %v4238, %v4230
    %v4927 = vpack.c.b16 %v4239, %v4231
    %v4928 = vpack.c.b16 %v4248, %v4240
    %v4929 = vpack.c.b16 %v4249, %v4241
    %v4930 = vpack.c.b16 %v4250, %v4242
    %v4931 = vpack.c.b16 %v4251, %v4243
    %v4932 = vpack.c.b16 %v4252, %v4244
    %v4933 = vpack.c.b16 %v4253, %v4245
    %v4934 = vpack.c.b16 %v4254, %v4246
    %v4935 = vpack.c.b16 %v4255, %v4247
    %v4936 = vpack.c.b16 %v4264, %v4256
    %v4937 = vpack.c.b16 %v4265, %v4257
    %v4938 = vpack.c.b16 %v4266, %v4258
    %v4939 = vpack.c.b16 %v4267, %v4259
    %v4940 = vpack.c.b16 %v4268, %v4260
    %v4941 = vpack.c.b16 %v4269, %v4261
    %v4942 = vpack.c.b16 %v4270, %v4262
    %v4943 = vpack.c.b16 %v4271, %v4263
    %v4944 = vpack.c.b16 %v4280, %v4272
    %v4945 = vpack.c.b16 %v4281, %v4273
    %v4946 = vpack.c.b16 %v4282, %v4274
    %v4947 = vpack.c.b16 %v4283, %v4275
    %v4948 = vpack.c.b16 %v4284, %v4276
    %v4949 = vpack.c.b16 %v4285, %v4277
    %v4950 = vpack.c.b16 %v4286, %v4278
    %v4951 = vpack.c.b16 %v4287, %v4279
    %v4952 = vpack.c.b16 %v4296, %v4288
    %v4953 = vpack.c.b16 %v4297, %v4289
    %v4954 = vpack.c.b16 %v4298, %v4290
    %v4955 = vpack.c.b16 %v4299, %v4291
    %v4956 = vpack.c.b16 %v4300, %v4292
    %v4957 = vpack.c.b16 %v4301, %v4293
    %v4958 = vpack.c.b16 %v4302, %v4294
    %v4959 = vpack.c.b16 %v4303, %v4295
    %v4960 = vpack.c.b16 %v4312, %v4304
    %v4961 = vpack.c.b16 %v4313, %v4305
    %v4962 = vpack.c.b16 %v4314, %v4306
    %v4963 = vpack.c.b16 %v4315, %v4307
    %v4964 = vpack.c.b16 %v4316, %v4308
    %v4965 = vpack.c.b16 %v4317, %v4309
    %v4966 = vpack.c.b16 %v4318, %v4310
    %v4967 = vpack.c.b16 %v4319, %v4311
    %v4968 = vpack.c.b16 %v4328, %v4320
    %v4969 = vpack.c.b16 %v4329, %v4321
    %v4970 = vpack.c.b16 %v4330, %v4322
    %v4971 = vpack.c.b16 %v4331, %v4323
    %v4972 = vpack.c.b16 %v4332, %v4324
    %v4973 = vpack.c.b16 %v4333, %v4325
    %v4974 = vpack.c.b16 %v4334, %v4326
    %v4975 = vpack.c.b16 %v4335, %v4327
    %v4976 = vpack.c.b16 %v4344, %v4336
    %v4977 = vpack.c.b16 %v4345, %v4337
    %v4978 = vpack.c.b16 %v4346, %v4338
    %v4979 = vpack.c.b16 %v4347, %v4339
    %v4980 = vpack.c.b16 %v4348, %v4340
    %v4981 = vpack.c.b16 %v4349, %v4341
    %v4982 = vpack.c.b16 %v4350, %v4342
    %v4983 = vpack.c.b16 %v4351, %v4343
    %v4984 = vpack.c.b16 %v4360, %v4352
    %v4985 = vpack.c.b16 %v4361, %v4353
    %v4986 = vpack.c.b16 %v4362, %v4354
    %v4987 = vpack.c.b16 %v4363, %v4355
    %v4988 = vpack.c.b16 %v4364, %v4356
    %v4989 = vpack.c.b16 %v4365, %v4357
    %v4990 = vpack.c.b16 %v4366, %v4358
    %v4991 = vpack.c.b16 %v4367, %v4359
    %v4992 = vpack.c.b16 %v4376, %v4368
    %v4993 = vpack.c.b16 %v4377, %v4369
    %v4994 = vpack.c.b16 %v4378, %v4370
    %v4995 = vpack.c.b16 %v4379, %v4371
    %v4996 = vpack.c.b16 %v4380, %v4372
    %v4997 = vpack.c.b16 %v4381, %v4373
    %v4998 = vpack.c.b16 %v4382, %v4374
    %v4999 = vpack.c.b16 %v4383, %v4375
    %v5000 = vpack.c.b16 %v4392, %v4384
    %v5001 = vpack.c.b16 %v4393, %v4385
    %v5002 = vpack.c.b16 %v4394, %v4386
    %v5003 = vpack.c.b16 %v4395, %v4387
    %v5004 = vpack.c.b16 %v4396, %v4388
    %v5005 = vpack.c.b16 %v4397, %v4389
    %v5006 = vpack.c.b16 %v4398, %v4390
    %v5007 = vpack.c.b16 %v4399, %v4391
    %v5008 = vpack.c.b16 %v4408, %v4400
    %v5009 = vpack.c.b16 %v4409, %v4401
    %v5010 = vpack.c.b16 %v4410, %v4402
    %v5011 = vpack.c.b16 %v4411, %v4403
    %v5012 = vpack.c.b16 %v4412, %v4404
    %v5013 = vpack.c.b16 %v4413, %v4405
    %v5014 = vpack.c.b16 %v4414, %v4406
    %v5015 = vpack.c.b16 %v4415, %v4407
    %v5016 = vpack.c.b16 %v4424, %v4416
    %v5017 = vpack.c.b16 %v4425, %v4417
    %v5018 = vpack.c.b16 %v4426, %v4418
    %v5019 = vpack.c.b16 %v4427, %v4419
    %v5020 = vpack.c.b16 %v4428, %v4420
    %v5021 = vpack.c.b16 %v4429, %v4421
    %v5022 = vpack.c.b16 %v4430, %v4422
    %v5023 = vpack.c.b16 %v4431, %v4423
    %v5024 = vpack.c.b16 %v4440, %v4432
    %v5025 = vpack.c.b16 %v4441, %v4433
    %v5026 = vpack.c.b16 %v4442, %v4434
    %v5027 = vpack.c.b16 %v4443, %v4435
    %v5028 = vpack.c.b16 %v4444, %v4436
    %v5029 = vpack.c.b16 %v4445, %v4437
    %v5030 = vpack.c.b16 %v4446, %v4438
    %v5031 = vpack.c.b16 %v4447, %v4439
    %v5032 = vpack.c.b16 %v4456, %v4448
    %v5033 = vpack.c.b16 %v4457, %v4449
    %v5034 = vpack.c.b16 %v4458, %v4450
    %v5035 = vpack.c.b16 %v4459, %v4451
    %v5036 = vpack.c.b16 %v4460, %v4452
    %v5037 = vpack.c.b16 %v4461, %v4453
    %v5038 = vpack.c.b16 %v4462, %v4454
    %v5039 = vpack.c.b16 %v4463, %v4455
    %v5040 = vpack.c.b16 %v4472, %v4464
    %v5041 = vpack.c.b16 %v4473, %v4465
    %v5042 = vpack.c.b16 %v4474, %v4466
    %v5043 = vpack.c.b16 %v4475, %v4467
    %v5044 = vpack.c.b16 %v4476, %v4468
    %v5045 = vpack.c.b16 %v4477, %v4469
    %v5046 = vpack.c.b16 %v4478, %v4470
    %v5047 = vpack.c.b16 %v4479, %v4471
    %v5048 = vpack.c.b16 %v4488, %v4480
    %v5049 = vpack.c.b16 %v4489, %v4481
    %v5050 = vpack.c.b16 %v4490, %v4482
    %v5051 = vpack.c.b16 %v4491, %v4483
    %v5052 = vpack.c.b16 %v4492, %v4484
    %v5053 = vpack.c.b16 %v4493, %v4485
    %v5054 = vpack.c.b16 %v4494, %v4486
    %v5055 = vpack.c.b16 %v4495, %v4487
    %v5056 = vpack.c.b16 %v4504, %v4496
    %v5057 = vpack.c.b16 %v4505, %v4497
    %v5058 = vpack.c.b16 %v4506, %v4498
    %v5059 = vpack.c.b16 %v4507, %v4499
    %v5060 = vpack.c.b16 %v4508, %v4500
    %v5061 = vpack.c.b16 %v4509, %v4501
    %v5062 = vpack.c.b16 %v4510, %v4502
    %v5063 = vpack.c.b16 %v4511, %v4503
    %v5064 = vpack.c.b16 %v4520, %v4512
    %v5065 = vpack.c.b16 %v4521, %v4513
    %v5066 = vpack.c.b16 %v4522, %v4514
    %v5067 = vpack.c.b16 %v4523, %v4515
    %v5068 = vpack.c.b16 %v4524, %v4516
    %v5069 = vpack.c.b16 %v4525, %v4517
    %v5070 = vpack.c.b16 %v4526, %v4518
    %v5071 = vpack.c.b16 %v4527, %v4519
    %v5072 = vpack.c.b16 %v4536, %v4528
    %v5073 = vpack.c.b16 %v4537, %v4529
    %v5074 = vpack.c.b16 %v4538, %v4530
    %v5075 = vpack.c.b16 %v4539, %v4531
    %v5076 = vpack.c.b16 %v4540, %v4532
    %v5077 = vpack.c.b16 %v4541, %v4533
    %v5078 = vpack.c.b16 %v4542, %v4534
    %v5079 = vpack.c.b16 %v4543, %v4535
    %v5080 = vpack.c.b16 %v4552, %v4544
    %v5081 = vpack.c.b16 %v4553, %v4545
    %v5082 = vpack.c.b16 %v4554, %v4546
    %v5083 = vpack.c.b16 %v4555, %v4547
    %v5084 = vpack.c.b16 %v4556, %v4548
    %v5085 = vpack.c.b16 %v4557, %v4549
    %v5086 = vpack.c.b16 %v4558, %v4550
    %v5087 = vpack.c.b16 %v4559, %v4551
    %v5088 = vpack.c.b16 %v4568, %v4560
    %v5089 = vpack.c.b16 %v4569, %v4561
    %v5090 = vpack.c.b16 %v4570, %v4562
    %v5091 = vpack.c.b16 %v4571, %v4563
    %v5092 = vpack.c.b16 %v4572, %v4564
    %v5093 = vpack.c.b16 %v4573, %v4565
    %v5094 = vpack.c.b16 %v4574, %v4566
    %v5095 = vpack.c.b16 %v4575, %v4567
    %v5096 = vpack.c.b16 %v4584, %v4576
    %v5097 = vpack.c.b16 %v4585, %v4577
    %v5098 = vpack.c.b16 %v4586, %v4578
    %v5099 = vpack.c.b16 %v4587, %v4579
    %v5100 = vpack.c.b16 %v4588, %v4580
    %v5101 = vpack.c.b16 %v4589, %v4581
    %v5102 = vpack.c.b16 %v4590, %v4582
    %v5103 = vpack.c.b16 %v4591, %v4583
    %5616 = vmatprep.subr.bf16.mxu0 %v4649
    %5617 = vmatpush1.bf16.msra.mxu0 %v4648
    %5618 = vmatprep.subr.bf16.mxu0 %v4641
    %5619 = vmatpush1.bf16.msra.mxu0 %v4640
    %5620 = vmatprep.subr.bf16.mxu0 %v4633
    %5621 = vmatpush1.bf16.msra.mxu0 %v4632
    %5622 = vmatprep.subr.bf16.mxu0 %v4625
    %5623 = vmatpush1.bf16.msra.mxu0 %v4624
    %5624 = vmatprep.subr.bf16.mxu0 %v4617
    %5625 = vmatpush1.bf16.msra.mxu0 %v4616
    %5626 = vmatprep.subr.bf16.mxu0 %v4609
    %5627 = vmatpush1.bf16.msra.mxu0 %v4608
    %5628 = vmatprep.subr.bf16.mxu0 %v4601
    %5629 = vmatpush1.bf16.msra.mxu0 %v4600
    %5630 = vmatprep.subr.bf16.mxu0 %v4593
    %5631 = vmatpush1.bf16.msra.mxu0 %v4592
    %5632 = vmatprep.subr.bf16.mxu0 %v4713
    %5633 = vmatpush2.bf16.msra.mxu0 %v4712
    %5634 = vmatprep.subr.bf16.mxu0 %v4705
    %5635 = vmatpush2.bf16.msra.mxu0 %v4704
    %5636 = vmatprep.subr.bf16.mxu0 %v4697
    %5637 = vmatpush2.bf16.msra.mxu0 %v4696
    %5638 = vmatprep.subr.bf16.mxu0 %v4689
    %5639 = vmatpush2.bf16.msra.mxu0 %v4688
    %5640 = vmatprep.subr.bf16.mxu0 %v4681
    %5641 = vmatpush2.bf16.msra.mxu0 %v4680
    %5642 = vmatprep.subr.bf16.mxu0 %v4673
    %5643 = vmatpush2.bf16.msra.mxu0 %v4672
    %5644 = vmatprep.subr.bf16.mxu0 %v4665
    %5645 = vmatpush2.bf16.msra.mxu0 %v4664
    %5646 = vmatprep.subr.bf16.mxu0 %v4657
    %5647 = vmatpush2.bf16.msra.mxu0 %v4656
    %5648 = vmatprep.mubr.bf16.mxu0 %v2495
    %5649 = vmatmul.mubr.bf16.gmra.mxu0 %v2494
    %v5650 = vpop.f32.mrf.mxu0
    %v5651 = vadd.f32 %v3019, %v5650
    %v5652 = vpop.f32.mrf.mxu0
    %v5653 = vadd.f32 %v3023, %v5652
    %v5654 = vpop.f32.mrf.mxu0
    %v5655 = vadd.f32 %v3019, %v5654
    %v5656 = vpop.f32.mrf.mxu0
    %v5657 = vadd.f32 %v3023, %v5656
    %5658 = vdwg.mxu0
    %5659 = vmatprep.subr.bf16.mxu0 %v4777
    %5660 = vmatpush1.bf16.msra.mxu0 %v4776
    %5661 = vmatprep.subr.bf16.mxu0 %v4769
    %5662 = vmatpush1.bf16.msra.mxu0 %v4768
    %5663 = vmatprep.subr.bf16.mxu0 %v4761
    %5664 = vmatpush1.bf16.msra.mxu0 %v4760
    %5665 = vmatprep.subr.bf16.mxu0 %v4753
    %5666 = vmatpush1.bf16.msra.mxu0 %v4752
    %5667 = vmatprep.subr.bf16.mxu0 %v4745
    %5668 = vmatpush1.bf16.msra.mxu0 %v4744
    %5669 = vmatprep.subr.bf16.mxu0 %v4737
    %5670 = vmatpush1.bf16.msra.mxu0 %v4736
    %5671 = vmatprep.subr.bf16.mxu0 %v4729
    %5672 = vmatpush1.bf16.msra.mxu0 %v4728
    %5673 = vmatprep.subr.bf16.mxu0 %v4721
    %5674 = vmatpush1.bf16.msra.mxu0 %v4720
    %5675 = vmatprep.subr.bf16.mxu0 %v4841
    %5676 = vmatpush2.bf16.msra.mxu0 %v4840
    %5677 = vmatprep.subr.bf16.mxu0 %v4833
    %5678 = vmatpush2.bf16.msra.mxu0 %v4832
    %5679 = vmatprep.subr.bf16.mxu0 %v4825
    %5680 = vmatpush2.bf16.msra.mxu0 %v4824
    %5681 = vmatprep.subr.bf16.mxu0 %v4817
    %5682 = vmatpush2.bf16.msra.mxu0 %v4816
    %5683 = vmatprep.subr.bf16.mxu0 %v4809
    %5684 = vmatpush2.bf16.msra.mxu0 %v4808
    %5685 = vmatprep.subr.bf16.mxu0 %v4801
    %5686 = vmatpush2.bf16.msra.mxu0 %v4800
    %5687 = vmatprep.subr.bf16.mxu0 %v4793
    %5688 = vmatpush2.bf16.msra.mxu0 %v4792
    %5689 = vmatprep.subr.bf16.mxu0 %v4785
    %5690 = vmatpush2.bf16.msra.mxu0 %v4784
    %5691 = vmatprep.mubr.bf16.mxu0 %v2497
    %5692 = vmatmul.mubr.bf16.gmra.mxu0 %v2496
    %v5693 = vpop.f32.mrf.mxu0
    %v5694 = vadd.f32 %v5651, %v5693
    %v5695 = vpop.f32.mrf.mxu0
    %v5696 = vadd.f32 %v5653, %v5695
    %v5697 = vpop.f32.mrf.mxu0
    %v5698 = vadd.f32 %v5655, %v5697
    %v5699 = vpop.f32.mrf.mxu0
    %v5700 = vadd.f32 %v5657, %v5699
    %5701 = vdwg.mxu0
    %5702 = vmatprep.subr.bf16.mxu0 %v4905
    %5703 = vmatpush1.bf16.msra.mxu0 %v4904
    %5704 = vmatprep.subr.bf16.mxu0 %v4897
    %5705 = vmatpush1.bf16.msra.mxu0 %v4896
    %5706 = vmatprep.subr.bf16.mxu0 %v4889
    %5707 = vmatpush1.bf16.msra.mxu0 %v4888
    %5708 = vmatprep.subr.bf16.mxu0 %v4881
    %5709 = vmatpush1.bf16.msra.mxu0 %v4880
    %5710 = vmatprep.subr.bf16.mxu0 %v4873
    %5711 = vmatpush1.bf16.msra.mxu0 %v4872
    %5712 = vmatprep.subr.bf16.mxu0 %v4865
    %5713 = vmatpush1.bf16.msra.mxu0 %v4864
    %5714 = vmatprep.subr.bf16.mxu0 %v4857
    %5715 = vmatpush1.bf16.msra.mxu0 %v4856
    %5716 = vmatprep.subr.bf16.mxu0 %v4849
    %5717 = vmatpush1.bf16.msra.mxu0 %v4848
    %5718 = vmatprep.subr.bf16.mxu0 %v4969
    %5719 = vmatpush2.bf16.msra.mxu0 %v4968
    %5720 = vmatprep.subr.bf16.mxu0 %v4961
    %5721 = vmatpush2.bf16.msra.mxu0 %v4960
    %5722 = vmatprep.subr.bf16.mxu0 %v4953
    %5723 = vmatpush2.bf16.msra.mxu0 %v4952
    %5724 = vmatprep.subr.bf16.mxu0 %v4945
    %5725 = vmatpush2.bf16.msra.mxu0 %v4944
    %5726 = vmatprep.subr.bf16.mxu0 %v4937
    %5727 = vmatpush2.bf16.msra.mxu0 %v4936
    %5728 = vmatprep.subr.bf16.mxu0 %v4929
    %5729 = vmatpush2.bf16.msra.mxu0 %v4928
    %5730 = vmatprep.subr.bf16.mxu0 %v4921
    %5731 = vmatpush2.bf16.msra.mxu0 %v4920
    %5732 = vmatprep.subr.bf16.mxu0 %v4913
    %5733 = vmatpush2.bf16.msra.mxu0 %v4912
    %5734 = vmatprep.mubr.bf16.mxu0 %v2499
    %5735 = vmatmul.mubr.bf16.gmra.mxu0 %v2498
    %v5736 = vpop.f32.mrf.mxu0
    %v5737 = vadd.f32 %v5694, %v5736
    %v5738 = vpop.f32.mrf.mxu0
    %v5739 = vadd.f32 %v5696, %v5738
    %v5740 = vpop.f32.mrf.mxu0
    %v5741 = vadd.f32 %v5698, %v5740
    %v5742 = vpop.f32.mrf.mxu0
    %v5743 = vadd.f32 %v5700, %v5742
    %5744 = vdwg.mxu0
    %5745 = vmatprep.subr.bf16.mxu0 %v5033
    %5746 = vmatpush1.bf16.msra.mxu0 %v5032
    %5747 = vmatprep.subr.bf16.mxu0 %v5025
    %5748 = vmatpush1.bf16.msra.mxu0 %v5024
    %5749 = vmatprep.subr.bf16.mxu0 %v5017
    %5750 = vmatpush1.bf16.msra.mxu0 %v5016
    %5751 = vmatprep.subr.bf16.mxu0 %v5009
    %5752 = vmatpush1.bf16.msra.mxu0 %v5008
    %5753 = vmatprep.subr.bf16.mxu0 %v5001
    %5754 = vmatpush1.bf16.msra.mxu0 %v5000
    %5755 = vmatprep.subr.bf16.mxu0 %v4993
    %5756 = vmatpush1.bf16.msra.mxu0 %v4992
    %5757 = vmatprep.subr.bf16.mxu0 %v4985
    %5758 = vmatpush1.bf16.msra.mxu0 %v4984
    %5759 = vmatprep.subr.bf16.mxu0 %v4977
    %5760 = vmatpush1.bf16.msra.mxu0 %v4976
    %5761 = vmatprep.subr.bf16.mxu0 %v5097
    %5762 = vmatpush2.bf16.msra.mxu0 %v5096
    %5763 = vmatprep.subr.bf16.mxu0 %v5089
    %5764 = vmatpush2.bf16.msra.mxu0 %v5088
    %5765 = vmatprep.subr.bf16.mxu0 %v5081
    %5766 = vmatpush2.bf16.msra.mxu0 %v5080
    %5767 = vmatprep.subr.bf16.mxu0 %v5073
    %5768 = vmatpush2.bf16.msra.mxu0 %v5072
    %5769 = vmatprep.subr.bf16.mxu0 %v5065
    %5770 = vmatpush2.bf16.msra.mxu0 %v5064
    %5771 = vmatprep.subr.bf16.mxu0 %v5057
    %5772 = vmatpush2.bf16.msra.mxu0 %v5056
    %5773 = vmatprep.subr.bf16.mxu0 %v5049
    %5774 = vmatpush2.bf16.msra.mxu0 %v5048
    %5775 = vmatprep.subr.bf16.mxu0 %v5041
    %5776 = vmatpush2.bf16.msra.mxu0 %v5040
    %5777 = vmatprep.mubr.bf16.mxu0 %v2501
    %5778 = vmatmul.mubr.bf16.gmra.mxu0 %v2500
    %v5779 = vpop.f32.mrf.mxu0
    %v5780 = vadd.f32 %v5737, %v5779
    %v5781 = vpop.f32.mrf.mxu0
    %v5782 = vadd.f32 %v5739, %v5781
    %v5783 = vpop.f32.mrf.mxu0
    %v5784 = vadd.f32 %v5741, %v5783
    %v5785 = vpop.f32.mrf.mxu0
    %v5786 = vadd.f32 %v5743, %v5785
    %5787 = vdwg.mxu0
    %5788 = vmatprep.subr.bf16.mxu0 %v4651
    %5789 = vmatpush1.bf16.msra.mxu0 %v4650
    %5790 = vmatprep.subr.bf16.mxu0 %v4643
    %5791 = vmatpush1.bf16.msra.mxu0 %v4642
    %5792 = vmatprep.subr.bf16.mxu0 %v4635
    %5793 = vmatpush1.bf16.msra.mxu0 %v4634
    %5794 = vmatprep.subr.bf16.mxu0 %v4627
    %5795 = vmatpush1.bf16.msra.mxu0 %v4626
    %5796 = vmatprep.subr.bf16.mxu0 %v4619
    %5797 = vmatpush1.bf16.msra.mxu0 %v4618
    %5798 = vmatprep.subr.bf16.mxu0 %v4611
    %5799 = vmatpush1.bf16.msra.mxu0 %v4610
    %5800 = vmatprep.subr.bf16.mxu0 %v4603
    %5801 = vmatpush1.bf16.msra.mxu0 %v4602
    %5802 = vmatprep.subr.bf16.mxu0 %v4595
    %5803 = vmatpush1.bf16.msra.mxu0 %v4594
    %5804 = vmatprep.subr.bf16.mxu0 %v4715
    %5805 = vmatpush2.bf16.msra.mxu0 %v4714
    %5806 = vmatprep.subr.bf16.mxu0 %v4707
    %5807 = vmatpush2.bf16.msra.mxu0 %v4706
    %5808 = vmatprep.subr.bf16.mxu0 %v4699
    %5809 = vmatpush2.bf16.msra.mxu0 %v4698
    %5810 = vmatprep.subr.bf16.mxu0 %v4691
    %5811 = vmatpush2.bf16.msra.mxu0 %v4690
    %5812 = vmatprep.subr.bf16.mxu0 %v4683
    %5813 = vmatpush2.bf16.msra.mxu0 %v4682
    %5814 = vmatprep.subr.bf16.mxu0 %v4675
    %5815 = vmatpush2.bf16.msra.mxu0 %v4674
    %5816 = vmatprep.subr.bf16.mxu0 %v4667
    %5817 = vmatpush2.bf16.msra.mxu0 %v4666
    %5818 = vmatprep.subr.bf16.mxu0 %v4659
    %5819 = vmatpush2.bf16.msra.mxu0 %v4658
    %5820 = vmatprep.mubr.bf16.mxu0 %v2495
    %5821 = vmatmul.mubr.bf16.gmra.mxu0 %v2494
    %v5822 = vpop.f32.mrf.mxu0
    %v5823 = vadd.f32 %v3027, %v5822
    %v5824 = vpop.f32.mrf.mxu0
    %v5825 = vadd.f32 %v3031, %v5824
    %v5826 = vpop.f32.mrf.mxu0
    %v5827 = vadd.f32 %v3027, %v5826
    %v5828 = vpop.f32.mrf.mxu0
    %v5829 = vadd.f32 %v3031, %v5828
    %5830 = vdwg.mxu0
    %5831 = vmatprep.subr.bf16.mxu0 %v4779
    %5832 = vmatpush1.bf16.msra.mxu0 %v4778
    %5833 = vmatprep.subr.bf16.mxu0 %v4771
    %5834 = vmatpush1.bf16.msra.mxu0 %v4770
    %5835 = vmatprep.subr.bf16.mxu0 %v4763
    %5836 = vmatpush1.bf16.msra.mxu0 %v4762
    %5837 = vmatprep.subr.bf16.mxu0 %v4755
    %5838 = vmatpush1.bf16.msra.mxu0 %v4754
    %5839 = vmatprep.subr.bf16.mxu0 %v4747
    %5840 = vmatpush1.bf16.msra.mxu0 %v4746
    %5841 = vmatprep.subr.bf16.mxu0 %v4739
    %5842 = vmatpush1.bf16.msra.mxu0 %v4738
    %5843 = vmatprep.subr.bf16.mxu0 %v4731
    %5844 = vmatpush1.bf16.msra.mxu0 %v4730
    %5845 = vmatprep.subr.bf16.mxu0 %v4723
    %5846 = vmatpush1.bf16.msra.mxu0 %v4722
    %5847 = vmatprep.subr.bf16.mxu0 %v4843
    %5848 = vmatpush2.bf16.msra.mxu0 %v4842
    %5849 = vmatprep.subr.bf16.mxu0 %v4835
    %5850 = vmatpush2.bf16.msra.mxu0 %v4834
    %5851 = vmatprep.subr.bf16.mxu0 %v4827
    %5852 = vmatpush2.bf16.msra.mxu0 %v4826
    %5853 = vmatprep.subr.bf16.mxu0 %v4819
    %5854 = vmatpush2.bf16.msra.mxu0 %v4818
    %5855 = vmatprep.subr.bf16.mxu0 %v4811
    %5856 = vmatpush2.bf16.msra.mxu0 %v4810
    %5857 = vmatprep.subr.bf16.mxu0 %v4803
    %5858 = vmatpush2.bf16.msra.mxu0 %v4802
    %5859 = vmatprep.subr.bf16.mxu0 %v4795
    %5860 = vmatpush2.bf16.msra.mxu0 %v4794
    %5861 = vmatprep.subr.bf16.mxu0 %v4787
    %5862 = vmatpush2.bf16.msra.mxu0 %v4786
    %5863 = vmatprep.mubr.bf16.mxu0 %v2497
    %5864 = vmatmul.mubr.bf16.gmra.mxu0 %v2496
    %v5865 = vpop.f32.mrf.mxu0
    %v5866 = vadd.f32 %v5823, %v5865
    %v5867 = vpop.f32.mrf.mxu0
    %v5868 = vadd.f32 %v5825, %v5867
    %v5869 = vpop.f32.mrf.mxu0
    %v5870 = vadd.f32 %v5827, %v5869
    %v5871 = vpop.f32.mrf.mxu0
    %v5872 = vadd.f32 %v5829, %v5871
    %5873 = vdwg.mxu0
    %5874 = vmatprep.subr.bf16.mxu0 %v4907
    %5875 = vmatpush1.bf16.msra.mxu0 %v4906
    %5876 = vmatprep.subr.bf16.mxu0 %v4899
    %5877 = vmatpush1.bf16.msra.mxu0 %v4898
    %5878 = vmatprep.subr.bf16.mxu0 %v4891
    %5879 = vmatpush1.bf16.msra.mxu0 %v4890
    %5880 = vmatprep.subr.bf16.mxu0 %v4883
    %5881 = vmatpush1.bf16.msra.mxu0 %v4882
    %5882 = vmatprep.subr.bf16.mxu0 %v4875
    %5883 = vmatpush1.bf16.msra.mxu0 %v4874
    %5884 = vmatprep.subr.bf16.mxu0 %v4867
    %5885 = vmatpush1.bf16.msra.mxu0 %v4866
    %5886 = vmatprep.subr.bf16.mxu0 %v4859
    %5887 = vmatpush1.bf16.msra.mxu0 %v4858
    %5888 = vmatprep.subr.bf16.mxu0 %v4851
    %5889 = vmatpush1.bf16.msra.mxu0 %v4850
    %5890 = vmatprep.subr.bf16.mxu0 %v4971
    %5891 = vmatpush2.bf16.msra.mxu0 %v4970
    %5892 = vmatprep.subr.bf16.mxu0 %v4963
    %5893 = vmatpush2.bf16.msra.mxu0 %v4962
    %5894 = vmatprep.subr.bf16.mxu0 %v4955
    %5895 = vmatpush2.bf16.msra.mxu0 %v4954
    %5896 = vmatprep.subr.bf16.mxu0 %v4947
    %5897 = vmatpush2.bf16.msra.mxu0 %v4946
    %5898 = vmatprep.subr.bf16.mxu0 %v4939
    %5899 = vmatpush2.bf16.msra.mxu0 %v4938
    %5900 = vmatprep.subr.bf16.mxu0 %v4931
    %5901 = vmatpush2.bf16.msra.mxu0 %v4930
    %5902 = vmatprep.subr.bf16.mxu0 %v4923
    %5903 = vmatpush2.bf16.msra.mxu0 %v4922
    %5904 = vmatprep.subr.bf16.mxu0 %v4915
    %5905 = vmatpush2.bf16.msra.mxu0 %v4914
    %5906 = vmatprep.mubr.bf16.mxu0 %v2499
    %5907 = vmatmul.mubr.bf16.gmra.mxu0 %v2498
    %v5908 = vpop.f32.mrf.mxu0
    %v5909 = vadd.f32 %v5866, %v5908
    %v5910 = vpop.f32.mrf.mxu0
    %v5911 = vadd.f32 %v5868, %v5910
    %v5912 = vpop.f32.mrf.mxu0
    %v5913 = vadd.f32 %v5870, %v5912
    %v5914 = vpop.f32.mrf.mxu0
    %v5915 = vadd.f32 %v5872, %v5914
    %5916 = vdwg.mxu0
    %5917 = vmatprep.subr.bf16.mxu0 %v5035
    %5918 = vmatpush1.bf16.msra.mxu0 %v5034
    %5919 = vmatprep.subr.bf16.mxu0 %v5027
    %5920 = vmatpush1.bf16.msra.mxu0 %v5026
    %5921 = vmatprep.subr.bf16.mxu0 %v5019
    %5922 = vmatpush1.bf16.msra.mxu0 %v5018
    %5923 = vmatprep.subr.bf16.mxu0 %v5011
    %5924 = vmatpush1.bf16.msra.mxu0 %v5010
    %5925 = vmatprep.subr.bf16.mxu0 %v5003
    %5926 = vmatpush1.bf16.msra.mxu0 %v5002
    %5927 = vmatprep.subr.bf16.mxu0 %v4995
    %5928 = vmatpush1.bf16.msra.mxu0 %v4994
    %5929 = vmatprep.subr.bf16.mxu0 %v4987
    %5930 = vmatpush1.bf16.msra.mxu0 %v4986
    %5931 = vmatprep.subr.bf16.mxu0 %v4979
    %5932 = vmatpush1.bf16.msra.mxu0 %v4978
    %5933 = vmatprep.subr.bf16.mxu0 %v5099
    %5934 = vmatpush2.bf16.msra.mxu0 %v5098
    %5935 = vmatprep.subr.bf16.mxu0 %v5091
    %5936 = vmatpush2.bf16.msra.mxu0 %v5090
    %5937 = vmatprep.subr.bf16.mxu0 %v5083
    %5938 = vmatpush2.bf16.msra.mxu0 %v5082
    %5939 = vmatprep.subr.bf16.mxu0 %v5075
    %5940 = vmatpush2.bf16.msra.mxu0 %v5074
    %5941 = vmatprep.subr.bf16.mxu0 %v5067
    %5942 = vmatpush2.bf16.msra.mxu0 %v5066
    %5943 = vmatprep.subr.bf16.mxu0 %v5059
    %5944 = vmatpush2.bf16.msra.mxu0 %v5058
    %5945 = vmatprep.subr.bf16.mxu0 %v5051
    %5946 = vmatpush2.bf16.msra.mxu0 %v5050
    %5947 = vmatprep.subr.bf16.mxu0 %v5043
    %5948 = vmatpush2.bf16.msra.mxu0 %v5042
    %5949 = vmatprep.mubr.bf16.mxu0 %v2501
    %5950 = vmatmul.mubr.bf16.gmra.mxu0 %v2500
    %v5951 = vpop.f32.mrf.mxu0
    %v5952 = vadd.f32 %v5909, %v5951
    %v5953 = vpop.f32.mrf.mxu0
    %v5954 = vadd.f32 %v5911, %v5953
    %v5955 = vpop.f32.mrf.mxu0
    %v5956 = vadd.f32 %v5913, %v5955
    %v5957 = vpop.f32.mrf.mxu0
    %v5958 = vadd.f32 %v5915, %v5957
    %5959 = vdwg.mxu0
    %5960 = vmatprep.subr.bf16.mxu0 %v4653
    %5961 = vmatpush1.bf16.msra.mxu0 %v4652
    %5962 = vmatprep.subr.bf16.mxu0 %v4645
    %5963 = vmatpush1.bf16.msra.mxu0 %v4644
    %5964 = vmatprep.subr.bf16.mxu0 %v4637
    %5965 = vmatpush1.bf16.msra.mxu0 %v4636
    %5966 = vmatprep.subr.bf16.mxu0 %v4629
    %5967 = vmatpush1.bf16.msra.mxu0 %v4628
    %5968 = vmatprep.subr.bf16.mxu0 %v4621
    %5969 = vmatpush1.bf16.msra.mxu0 %v4620
    %5970 = vmatprep.subr.bf16.mxu0 %v4613
    %5971 = vmatpush1.bf16.msra.mxu0 %v4612
    %5972 = vmatprep.subr.bf16.mxu0 %v4605
    %5973 = vmatpush1.bf16.msra.mxu0 %v4604
    %5974 = vmatprep.subr.bf16.mxu0 %v4597
    %5975 = vmatpush1.bf16.msra.mxu0 %v4596
    %5976 = vmatprep.subr.bf16.mxu0 %v4717
    %5977 = vmatpush2.bf16.msra.mxu0 %v4716
    %5978 = vmatprep.subr.bf16.mxu0 %v4709
    %5979 = vmatpush2.bf16.msra.mxu0 %v4708
    %5980 = vmatprep.subr.bf16.mxu0 %v4701
    %5981 = vmatpush2.bf16.msra.mxu0 %v4700
    %5982 = vmatprep.subr.bf16.mxu0 %v4693
    %5983 = vmatpush2.bf16.msra.mxu0 %v4692
    %5984 = vmatprep.subr.bf16.mxu0 %v4685
    %5985 = vmatpush2.bf16.msra.mxu0 %v4684
    %5986 = vmatprep.subr.bf16.mxu0 %v4677
    %5987 = vmatpush2.bf16.msra.mxu0 %v4676
    %5988 = vmatprep.subr.bf16.mxu0 %v4669
    %5989 = vmatpush2.bf16.msra.mxu0 %v4668
    %5990 = vmatprep.subr.bf16.mxu0 %v4661
    %5991 = vmatpush2.bf16.msra.mxu0 %v4660
    %5992 = vmatprep.mubr.bf16.mxu0 %v2495
    %5993 = vmatmul.mubr.bf16.gmra.mxu0 %v2494
    %v5994 = vpop.f32.mrf.mxu0
    %v5995 = vadd.f32 %v3035, %v5994
    %v5996 = vpop.f32.mrf.mxu0
    %v5997 = vadd.f32 %v3039, %v5996
    %v5998 = vpop.f32.mrf.mxu0
    %v5999 = vadd.f32 %v3035, %v5998
    %v6000 = vpop.f32.mrf.mxu0
    %v6001 = vadd.f32 %v3039, %v6000
    %6002 = vdwg.mxu0
    %6003 = vmatprep.subr.bf16.mxu0 %v4781
    %6004 = vmatpush1.bf16.msra.mxu0 %v4780
    %6005 = vmatprep.subr.bf16.mxu0 %v4773
    %6006 = vmatpush1.bf16.msra.mxu0 %v4772
    %6007 = vmatprep.subr.bf16.mxu0 %v4765
    %6008 = vmatpush1.bf16.msra.mxu0 %v4764
    %6009 = vmatprep.subr.bf16.mxu0 %v4757
    %6010 = vmatpush1.bf16.msra.mxu0 %v4756
    %6011 = vmatprep.subr.bf16.mxu0 %v4749
    %6012 = vmatpush1.bf16.msra.mxu0 %v4748
    %6013 = vmatprep.subr.bf16.mxu0 %v4741
    %6014 = vmatpush1.bf16.msra.mxu0 %v4740
    %6015 = vmatprep.subr.bf16.mxu0 %v4733
    %6016 = vmatpush1.bf16.msra.mxu0 %v4732
    %6017 = vmatprep.subr.bf16.mxu0 %v4725
    %6018 = vmatpush1.bf16.msra.mxu0 %v4724
    %6019 = vmatprep.subr.bf16.mxu0 %v4845
    %6020 = vmatpush2.bf16.msra.mxu0 %v4844
    %6021 = vmatprep.subr.bf16.mxu0 %v4837
    %6022 = vmatpush2.bf16.msra.mxu0 %v4836
    %6023 = vmatprep.subr.bf16.mxu0 %v4829
    %6024 = vmatpush2.bf16.msra.mxu0 %v4828
    %6025 = vmatprep.subr.bf16.mxu0 %v4821
    %6026 = vmatpush2.bf16.msra.mxu0 %v4820
    %6027 = vmatprep.subr.bf16.mxu0 %v4813
    %6028 = vmatpush2.bf16.msra.mxu0 %v4812
    %6029 = vmatprep.subr.bf16.mxu0 %v4805
    %6030 = vmatpush2.bf16.msra.mxu0 %v4804
    %6031 = vmatprep.subr.bf16.mxu0 %v4797
    %6032 = vmatpush2.bf16.msra.mxu0 %v4796
    %6033 = vmatprep.subr.bf16.mxu0 %v4789
    %6034 = vmatpush2.bf16.msra.mxu0 %v4788
    %6035 = vmatprep.mubr.bf16.mxu0 %v2497
    %6036 = vmatmul.mubr.bf16.gmra.mxu0 %v2496
    %v6037 = vpop.f32.mrf.mxu0
    %v6038 = vadd.f32 %v5995, %v6037
    %v6039 = vpop.f32.mrf.mxu0
    %v6040 = vadd.f32 %v5997, %v6039
    %v6041 = vpop.f32.mrf.mxu0
    %v6042 = vadd.f32 %v5999, %v6041
    %v6043 = vpop.f32.mrf.mxu0
    %v6044 = vadd.f32 %v6001, %v6043
    %6045 = vdwg.mxu0
    %6046 = vmatprep.subr.bf16.mxu0 %v4909
    %6047 = vmatpush1.bf16.msra.mxu0 %v4908
    %6048 = vmatprep.subr.bf16.mxu0 %v4901
    %6049 = vmatpush1.bf16.msra.mxu0 %v4900
    %6050 = vmatprep.subr.bf16.mxu0 %v4893
    %6051 = vmatpush1.bf16.msra.mxu0 %v4892
    %6052 = vmatprep.subr.bf16.mxu0 %v4885
    %6053 = vmatpush1.bf16.msra.mxu0 %v4884
    %6054 = vmatprep.subr.bf16.mxu0 %v4877
    %6055 = vmatpush1.bf16.msra.mxu0 %v4876
    %6056 = vmatprep.subr.bf16.mxu0 %v4869
    %6057 = vmatpush1.bf16.msra.mxu0 %v4868
    %6058 = vmatprep.subr.bf16.mxu0 %v4861
    %6059 = vmatpush1.bf16.msra.mxu0 %v4860
    %6060 = vmatprep.subr.bf16.mxu0 %v4853
    %6061 = vmatpush1.bf16.msra.mxu0 %v4852
    %6062 = vmatprep.subr.bf16.mxu0 %v4973
    %6063 = vmatpush2.bf16.msra.mxu0 %v4972
    %6064 = vmatprep.subr.bf16.mxu0 %v4965
    %6065 = vmatpush2.bf16.msra.mxu0 %v4964
    %6066 = vmatprep.subr.bf16.mxu0 %v4957
    %6067 = vmatpush2.bf16.msra.mxu0 %v4956
    %6068 = vmatprep.subr.bf16.mxu0 %v4949
    %6069 = vmatpush2.bf16.msra.mxu0 %v4948
    %6070 = vmatprep.subr.bf16.mxu0 %v4941
    %6071 = vmatpush2.bf16.msra.mxu0 %v4940
    %6072 = vmatprep.subr.bf16.mxu0 %v4933
    %6073 = vmatpush2.bf16.msra.mxu0 %v4932
    %6074 = vmatprep.subr.bf16.mxu0 %v4925
    %6075 = vmatpush2.bf16.msra.mxu0 %v4924
    %6076 = vmatprep.subr.bf16.mxu0 %v4917
    %6077 = vmatpush2.bf16.msra.mxu0 %v4916
    %6078 = vmatprep.mubr.bf16.mxu0 %v2499
    %6079 = vmatmul.mubr.bf16.gmra.mxu0 %v2498
    %v6080 = vpop.f32.mrf.mxu0
    %v6081 = vadd.f32 %v6038, %v6080
    %v6082 = vpop.f32.mrf.mxu0
    %v6083 = vadd.f32 %v6040, %v6082
    %v6084 = vpop.f32.mrf.mxu0
    %v6085 = vadd.f32 %v6042, %v6084
    %v6086 = vpop.f32.mrf.mxu0
    %v6087 = vadd.f32 %v6044, %v6086
    %6088 = vdwg.mxu0
    %6089 = vmatprep.subr.bf16.mxu0 %v5037
    %6090 = vmatpush1.bf16.msra.mxu0 %v5036
    %6091 = vmatprep.subr.bf16.mxu0 %v5029
    %6092 = vmatpush1.bf16.msra.mxu0 %v5028
    %6093 = vmatprep.subr.bf16.mxu0 %v5021
    %6094 = vmatpush1.bf16.msra.mxu0 %v5020
    %6095 = vmatprep.subr.bf16.mxu0 %v5013
    %6096 = vmatpush1.bf16.msra.mxu0 %v5012
    %6097 = vmatprep.subr.bf16.mxu0 %v5005
    %6098 = vmatpush1.bf16.msra.mxu0 %v5004
    %6099 = vmatprep.subr.bf16.mxu0 %v4997
    %6100 = vmatpush1.bf16.msra.mxu0 %v4996
    %6101 = vmatprep.subr.bf16.mxu0 %v4989
    %6102 = vmatpush1.bf16.msra.mxu0 %v4988
    %6103 = vmatprep.subr.bf16.mxu0 %v4981
    %6104 = vmatpush1.bf16.msra.mxu0 %v4980
    %6105 = vmatprep.subr.bf16.mxu0 %v5101
    %6106 = vmatpush2.bf16.msra.mxu0 %v5100
    %6107 = vmatprep.subr.bf16.mxu0 %v5093
    %6108 = vmatpush2.bf16.msra.mxu0 %v5092
    %6109 = vmatprep.subr.bf16.mxu0 %v5085
    %6110 = vmatpush2.bf16.msra.mxu0 %v5084
    %6111 = vmatprep.subr.bf16.mxu0 %v5077
    %6112 = vmatpush2.bf16.msra.mxu0 %v5076
    %6113 = vmatprep.subr.bf16.mxu0 %v5069
    %6114 = vmatpush2.bf16.msra.mxu0 %v5068
    %6115 = vmatprep.subr.bf16.mxu0 %v5061
    %6116 = vmatpush2.bf16.msra.mxu0 %v5060
    %6117 = vmatprep.subr.bf16.mxu0 %v5053
    %6118 = vmatpush2.bf16.msra.mxu0 %v5052
    %6119 = vmatprep.subr.bf16.mxu0 %v5045
    %6120 = vmatpush2.bf16.msra.mxu0 %v5044
    %6121 = vmatprep.mubr.bf16.mxu0 %v2501
    %6122 = vmatmul.mubr.bf16.gmra.mxu0 %v2500
    %v6123 = vpop.f32.mrf.mxu0
    %v6124 = vadd.f32 %v6081, %v6123
    %v6125 = vpop.f32.mrf.mxu0
    %v6126 = vadd.f32 %v6083, %v6125
    %v6127 = vpop.f32.mrf.mxu0
    %v6128 = vadd.f32 %v6085, %v6127
    %v6129 = vpop.f32.mrf.mxu0
    %v6130 = vadd.f32 %v6087, %v6129
    %6131 = vdwg.mxu0
    %6132 = vmatprep.subr.bf16.mxu0 %v4655
    %6133 = vmatpush1.bf16.msra.mxu0 %v4654
    %6134 = vmatprep.subr.bf16.mxu0 %v4647
    %6135 = vmatpush1.bf16.msra.mxu0 %v4646
    %6136 = vmatprep.subr.bf16.mxu0 %v4639
    %6137 = vmatpush1.bf16.msra.mxu0 %v4638
    %6138 = vmatprep.subr.bf16.mxu0 %v4631
    %6139 = vmatpush1.bf16.msra.mxu0 %v4630
    %6140 = vmatprep.subr.bf16.mxu0 %v4623
    %6141 = vmatpush1.bf16.msra.mxu0 %v4622
    %6142 = vmatprep.subr.bf16.mxu0 %v4615
    %6143 = vmatpush1.bf16.msra.mxu0 %v4614
    %6144 = vmatprep.subr.bf16.mxu0 %v4607
    %6145 = vmatpush1.bf16.msra.mxu0 %v4606
    %6146 = vmatprep.subr.bf16.mxu0 %v4599
    %6147 = vmatpush1.bf16.msra.mxu0 %v4598
    %6148 = vmatprep.subr.bf16.mxu0 %v4719
    %6149 = vmatpush2.bf16.msra.mxu0 %v4718
    %6150 = vmatprep.subr.bf16.mxu0 %v4711
    %6151 = vmatpush2.bf16.msra.mxu0 %v4710
    %6152 = vmatprep.subr.bf16.mxu0 %v4703
    %6153 = vmatpush2.bf16.msra.mxu0 %v4702
    %6154 = vmatprep.subr.bf16.mxu0 %v4695
    %6155 = vmatpush2.bf16.msra.mxu0 %v4694
    %6156 = vmatprep.subr.bf16.mxu0 %v4687
    %6157 = vmatpush2.bf16.msra.mxu0 %v4686
    %6158 = vmatprep.subr.bf16.mxu0 %v4679
    %6159 = vmatpush2.bf16.msra.mxu0 %v4678
    %6160 = vmatprep.subr.bf16.mxu0 %v4671
    %6161 = vmatpush2.bf16.msra.mxu0 %v4670
    %6162 = vmatprep.subr.bf16.mxu0 %v4663
    %6163 = vmatpush2.bf16.msra.mxu0 %v4662
    %6164 = vmatprep.mubr.bf16.mxu0 %v2495
    %6165 = vmatmul.mubr.bf16.gmra.mxu0 %v2494
    %v6166 = vpop.f32.mrf.mxu0
    %v6167 = vadd.f32 %v3043, %v6166
    %v6168 = vpop.f32.mrf.mxu0
    %v6169 = vadd.f32 %v3047, %v6168
    %v6170 = vpop.f32.mrf.mxu0
    %v6171 = vadd.f32 %v3043, %v6170
    %v6172 = vpop.f32.mrf.mxu0
    %v6173 = vadd.f32 %v3047, %v6172
    %6174 = vdwg.mxu0
    %6175 = vmatprep.subr.bf16.mxu0 %v4783
    %6176 = vmatpush1.bf16.msra.mxu0 %v4782
    %6177 = vmatprep.subr.bf16.mxu0 %v4775
    %6178 = vmatpush1.bf16.msra.mxu0 %v4774
    %6179 = vmatprep.subr.bf16.mxu0 %v4767
    %6180 = vmatpush1.bf16.msra.mxu0 %v4766
    %6181 = vmatprep.subr.bf16.mxu0 %v4759
    %6182 = vmatpush1.bf16.msra.mxu0 %v4758
    %6183 = vmatprep.subr.bf16.mxu0 %v4751
    %6184 = vmatpush1.bf16.msra.mxu0 %v4750
    %6185 = vmatprep.subr.bf16.mxu0 %v4743
    %6186 = vmatpush1.bf16.msra.mxu0 %v4742
    %6187 = vmatprep.subr.bf16.mxu0 %v4735
    %6188 = vmatpush1.bf16.msra.mxu0 %v4734
    %6189 = vmatprep.subr.bf16.mxu0 %v4727
    %6190 = vmatpush1.bf16.msra.mxu0 %v4726
    %6191 = vmatprep.subr.bf16.mxu0 %v4847
    %6192 = vmatpush2.bf16.msra.mxu0 %v4846
    %6193 = vmatprep.subr.bf16.mxu0 %v4839
    %6194 = vmatpush2.bf16.msra.mxu0 %v4838
    %6195 = vmatprep.subr.bf16.mxu0 %v4831
    %6196 = vmatpush2.bf16.msra.mxu0 %v4830
    %6197 = vmatprep.subr.bf16.mxu0 %v4823
    %6198 = vmatpush2.bf16.msra.mxu0 %v4822
    %6199 = vmatprep.subr.bf16.mxu0 %v4815
    %6200 = vmatpush2.bf16.msra.mxu0 %v4814
    %6201 = vmatprep.subr.bf16.mxu0 %v4807
    %6202 = vmatpush2.bf16.msra.mxu0 %v4806
    %6203 = vmatprep.subr.bf16.mxu0 %v4799
    %6204 = vmatpush2.bf16.msra.mxu0 %v4798
    %6205 = vmatprep.subr.bf16.mxu0 %v4791
    %6206 = vmatpush2.bf16.msra.mxu0 %v4790
    %6207 = vmatprep.mubr.bf16.mxu0 %v2497
    %6208 = vmatmul.mubr.bf16.gmra.mxu0 %v2496
    %v6209 = vpop.f32.mrf.mxu0
    %v6210 = vadd.f32 %v6167, %v6209
    %v6211 = vpop.f32.mrf.mxu0
    %v6212 = vadd.f32 %v6169, %v6211
    %v6213 = vpop.f32.mrf.mxu0
    %v6214 = vadd.f32 %v6171, %v6213
    %v6215 = vpop.f32.mrf.mxu0
    %v6216 = vadd.f32 %v6173, %v6215
    %6217 = vdwg.mxu0
    %6218 = vmatprep.subr.bf16.mxu0 %v4911
    %6219 = vmatpush1.bf16.msra.mxu0 %v4910
    %6220 = vmatprep.subr.bf16.mxu0 %v4903
    %6221 = vmatpush1.bf16.msra.mxu0 %v4902
    %6222 = vmatprep.subr.bf16.mxu0 %v4895
    %6223 = vmatpush1.bf16.msra.mxu0 %v4894
    %6224 = vmatprep.subr.bf16.mxu0 %v4887
    %6225 = vmatpush1.bf16.msra.mxu0 %v4886
    %6226 = vmatprep.subr.bf16.mxu0 %v4879
    %6227 = vmatpush1.bf16.msra.mxu0 %v4878
    %6228 = vmatprep.subr.bf16.mxu0 %v4871
    %6229 = vmatpush1.bf16.msra.mxu0 %v4870
    %6230 = vmatprep.subr.bf16.mxu0 %v4863
    %6231 = vmatpush1.bf16.msra.mxu0 %v4862
    %6232 = vmatprep.subr.bf16.mxu0 %v4855
    %6233 = vmatpush1.bf16.msra.mxu0 %v4854
    %6234 = vmatprep.subr.bf16.mxu0 %v4975
    %6235 = vmatpush2.bf16.msra.mxu0 %v4974
    %6236 = vmatprep.subr.bf16.mxu0 %v4967
    %6237 = vmatpush2.bf16.msra.mxu0 %v4966
    %6238 = vmatprep.subr.bf16.mxu0 %v4959
    %6239 = vmatpush2.bf16.msra.mxu0 %v4958
    %6240 = vmatprep.subr.bf16.mxu0 %v4951
    %6241 = vmatpush2.bf16.msra.mxu0 %v4950
    %6242 = vmatprep.subr.bf16.mxu0 %v4943
    %6243 = vmatpush2.bf16.msra.mxu0 %v4942
    %6244 = vmatprep.subr.bf16.mxu0 %v4935
    %6245 = vmatpush2.bf16.msra.mxu0 %v4934
    %6246 = vmatprep.subr.bf16.mxu0 %v4927
    %6247 = vmatpush2.bf16.msra.mxu0 %v4926
    %6248 = vmatprep.subr.bf16.mxu0 %v4919
    %6249 = vmatpush2.bf16.msra.mxu0 %v4918
    %6250 = vmatprep.mubr.bf16.mxu0 %v2499
    %6251 = vmatmul.mubr.bf16.gmra.mxu0 %v2498
    %v6252 = vpop.f32.mrf.mxu0
    %v6253 = vadd.f32 %v6210, %v6252
    %v6254 = vpop.f32.mrf.mxu0
    %v6255 = vadd.f32 %v6212, %v6254
    %v6256 = vpop.f32.mrf.mxu0
    %v6257 = vadd.f32 %v6214, %v6256
    %v6258 = vpop.f32.mrf.mxu0
    %v6259 = vadd.f32 %v6216, %v6258
    %6260 = vdwg.mxu0
    %6261 = vmatprep.subr.bf16.mxu0 %v5039
    %6262 = vmatpush1.bf16.msra.mxu0 %v5038
    %6263 = vmatprep.subr.bf16.mxu0 %v5031
    %6264 = vmatpush1.bf16.msra.mxu0 %v5030
    %6265 = vmatprep.subr.bf16.mxu0 %v5023
    %6266 = vmatpush1.bf16.msra.mxu0 %v5022
    %6267 = vmatprep.subr.bf16.mxu0 %v5015
    %6268 = vmatpush1.bf16.msra.mxu0 %v5014
    %6269 = vmatprep.subr.bf16.mxu0 %v5007
    %6270 = vmatpush1.bf16.msra.mxu0 %v5006
    %6271 = vmatprep.subr.bf16.mxu0 %v4999
    %6272 = vmatpush1.bf16.msra.mxu0 %v4998
    %6273 = vmatprep.subr.bf16.mxu0 %v4991
    %6274 = vmatpush1.bf16.msra.mxu0 %v4990
    %6275 = vmatprep.subr.bf16.mxu0 %v4983
    %6276 = vmatpush1.bf16.msra.mxu0 %v4982
    %6277 = vmatprep.subr.bf16.mxu0 %v5103
    %6278 = vmatpush2.bf16.msra.mxu0 %v5102
    %6279 = vmatprep.subr.bf16.mxu0 %v5095
    %6280 = vmatpush2.bf16.msra.mxu0 %v5094
    %6281 = vmatprep.subr.bf16.mxu0 %v5087
    %6282 = vmatpush2.bf16.msra.mxu0 %v5086
    %6283 = vmatprep.subr.bf16.mxu0 %v5079
    %6284 = vmatpush2.bf16.msra.mxu0 %v5078
    %6285 = vmatprep.subr.bf16.mxu0 %v5071
    %6286 = vmatpush2.bf16.msra.mxu0 %v5070
    %6287 = vmatprep.subr.bf16.mxu0 %v5063
    %6288 = vmatpush2.bf16.msra.mxu0 %v5062
    %6289 = vmatprep.subr.bf16.mxu0 %v5055
    %6290 = vmatpush2.bf16.msra.mxu0 %v5054
    %6291 = vmatprep.subr.bf16.mxu0 %v5047
    %6292 = vmatpush2.bf16.msra.mxu0 %v5046
    %6293 = vmatprep.mubr.bf16.mxu0 %v2501
    %6294 = vmatmul.mubr.bf16.gmra.mxu0 %v2500
    %v6295 = vpop.f32.mrf.mxu0
    %v6296 = vadd.f32 %v6253, %v6295
    %v6297 = vpop.f32.mrf.mxu0
    %v6298 = vadd.f32 %v6255, %v6297
    %v6299 = vpop.f32.mrf.mxu0
    %v6300 = vadd.f32 %v6257, %v6299
    %v6301 = vpop.f32.mrf.mxu0
    %v6302 = vadd.f32 %v6259, %v6301
    %6303 = vdwg.mxu0
    %vm6304 = vcmp.ge.f32.partialorder %v5780, 0.0
    %vm6305 = vcmp.ge.f32.partialorder %v5782, 0.0
    %vm6306 = vcmp.ge.f32.partialorder %v5952, 0.0
    %vm6307 = vcmp.ge.f32.partialorder %v5954, 0.0
    %vm6308 = vcmp.ge.f32.partialorder %v6124, 0.0
    %vm6309 = vcmp.ge.f32.partialorder %v6126, 0.0
    %vm6310 = vcmp.ge.f32.partialorder %v6296, 0.0
    %vm6311 = vcmp.ge.f32.partialorder %v6298, 0.0
    %vm6312 = vcmp.ge.f32.partialorder %v5784, 0.0
    %vm6313 = vcmp.ge.f32.partialorder %v5786, 0.0
    %vm6314 = vcmp.ge.f32.partialorder %v5956, 0.0
    %vm6315 = vcmp.ge.f32.partialorder %v5958, 0.0
    %vm6316 = vcmp.ge.f32.partialorder %v6128, 0.0
    %vm6317 = vcmp.ge.f32.partialorder %v6130, 0.0
    %vm6318 = vcmp.ge.f32.partialorder %v6300, 0.0
    %vm6319 = vcmp.ge.f32.partialorder %v6302, 0.0
    %v6320 = vmul.f32 %v5780, 0.01
    %v6321 = vmul.f32 %v5782, 0.01
    %v6322 = vmul.f32 %v5952, 0.01
    %v6323 = vmul.f32 %v5954, 0.01
    %v6324 = vmul.f32 %v6124, 0.01
    %v6325 = vmul.f32 %v6126, 0.01
    %v6326 = vmul.f32 %v6296, 0.01
    %v6327 = vmul.f32 %v6298, 0.01
    %v6328 = vmul.f32 %v5784, 0.01
    %v6329 = vmul.f32 %v5786, 0.01
    %v6330 = vmul.f32 %v5956, 0.01
    %v6331 = vmul.f32 %v5958, 0.01
    %v6332 = vmul.f32 %v6128, 0.01
    %v6333 = vmul.f32 %v6130, 0.01
    %v6334 = vmul.f32 %v6300, 0.01
    %v6335 = vmul.f32 %v6302, 0.01
    %v6336 = vsel %vm6304, %v5780, %v6320
    %v6337 = vsel %vm6305, %v5782, %v6321
    %v6338 = vsel %vm6306, %v5952, %v6322
    %v6339 = vsel %vm6307, %v5954, %v6323
    %v6340 = vsel %vm6308, %v6124, %v6324
    %v6341 = vsel %vm6309, %v6126, %v6325
    %v6342 = vsel %vm6310, %v6296, %v6326
    %v6343 = vsel %vm6311, %v6298, %v6327
    %v6344 = vsel %vm6312, %v5784, %v6328
    %v6345 = vsel %vm6313, %v5786, %v6329
    %v6346 = vsel %vm6314, %v5956, %v6330
    %v6347 = vsel %vm6315, %v5958, %v6331
    %v6348 = vsel %vm6316, %v6128, %v6332
    %v6349 = vsel %vm6317, %v6130, %v6333
    %v6350 = vsel %vm6318, %v6300, %v6334
    %v6351 = vsel %vm6319, %v6302, %v6335
    %v6352 = vpack.c.bf16 %v6344, %v6336
    %v6353 = vpack.c.bf16 %v6345, %v6337
    %v6354 = vpack.c.bf16 %v6346, %v6338
    %v6355 = vpack.c.bf16 %v6347, %v6339
    %v6356 = vpack.c.bf16 %v6348, %v6340
    %v6357 = vpack.c.bf16 %v6349, %v6341
    %v6358 = vpack.c.bf16 %v6350, %v6342
    %v6359 = vpack.c.bf16 %v6351, %v6343
    %v6360 = vld [vmem:[#allocation28] sm:$0xff]
    %v6361 = vld [vmem:[#allocation28 + $0x8] sm:$0xff]
    %v6362 = vld [vmem:[#allocation28 + $0x10] sm:$0xff]
    %v6363 = vld [vmem:[#allocation28 + $0x18] sm:$0xff]
    %v6364 = vld [vmem:[#allocation28 + $0x20] sm:$0xff]
    %v6365 = vld [vmem:[#allocation28 + $0x28] sm:$0xff]
    %v6366 = vld [vmem:[#allocation28 + $0x30] sm:$0xff]
    %v6367 = vld [vmem:[#allocation28 + $0x38] sm:$0xff]
    %v6368 = vld [vmem:[#allocation28 + $0x40] sm:$0xff]
    %v6369 = vld [vmem:[#allocation28 + $0x48] sm:$0xff]
    %v6370 = vld [vmem:[#allocation28 + $0x50] sm:$0xff]
    %v6371 = vld [vmem:[#allocation28 + $0x58] sm:$0xff]
    %v6372 = vld [vmem:[#allocation28 + $0x60] sm:$0xff]
    %v6373 = vld [vmem:[#allocation28 + $0x68] sm:$0xff]
    %v6374 = vld [vmem:[#allocation28 + $0x70] sm:$0xff]
    %v6375 = vld [vmem:[#allocation28 + $0x78] sm:$0xff]
    %v6376 = vld [vmem:[#allocation28 + $0x80] sm:$0xff]
    %v6377 = vld [vmem:[#allocation28 + $0x88] sm:$0xff]
    %v6378 = vld [vmem:[#allocation28 + $0x90] sm:$0xff]
    %v6379 = vld [vmem:[#allocation28 + $0x98] sm:$0xff]
    %v6380 = vld [vmem:[#allocation28 + $0xa0] sm:$0xff]
    %v6381 = vld [vmem:[#allocation28 + $0xa8] sm:$0xff]
    %v6382 = vld [vmem:[#allocation28 + $0xb0] sm:$0xff]
    %v6383 = vld [vmem:[#allocation28 + $0xb8] sm:$0xff]
    %v6384 = vld [vmem:[#allocation28 + $0xc0] sm:$0xff]
    %v6385 = vld [vmem:[#allocation28 + $0xc8] sm:$0xff]
    %v6386 = vld [vmem:[#allocation28 + $0xd0] sm:$0xff]
    %v6387 = vld [vmem:[#allocation28 + $0xd8] sm:$0xff]
    %v6388 = vld [vmem:[#allocation28 + $0xe0] sm:$0xff]
    %v6389 = vld [vmem:[#allocation28 + $0xe8] sm:$0xff]
    %v6390 = vld [vmem:[#allocation28 + $0xf0] sm:$0xff]
    %v6391 = vld [vmem:[#allocation28 + $0xf8] sm:$0xff]
    %v6392 = vld [vmem:[#allocation28 + $0x100] sm:$0xff]
    %v6393 = vld [vmem:[#allocation28 + $0x108] sm:$0xff]
    %v6394 = vld [vmem:[#allocation28 + $0x110] sm:$0xff]
    %v6395 = vld [vmem:[#allocation28 + $0x118] sm:$0xff]
    %v6396 = vld [vmem:[#allocation28 + $0x120] sm:$0xff]
    %v6397 = vld [vmem:[#allocation28 + $0x128] sm:$0xff]
    %v6398 = vld [vmem:[#allocation28 + $0x130] sm:$0xff]
    %v6399 = vld [vmem:[#allocation28 + $0x138] sm:$0xff]
    %v6400 = vld [vmem:[#allocation28 + $0x140] sm:$0xff]
    %v6401 = vld [vmem:[#allocation28 + $0x148] sm:$0xff]
    %v6402 = vld [vmem:[#allocation28 + $0x150] sm:$0xff]
    %v6403 = vld [vmem:[#allocation28 + $0x158] sm:$0xff]
    %v6404 = vld [vmem:[#allocation28 + $0x160] sm:$0xff]
    %v6405 = vld [vmem:[#allocation28 + $0x168] sm:$0xff]
    %v6406 = vld [vmem:[#allocation28 + $0x170] sm:$0xff]
    %v6407 = vld [vmem:[#allocation28 + $0x178] sm:$0xff]
    %v6408 = vld [vmem:[#allocation28 + $0x180] sm:$0xff]
    %v6409 = vld [vmem:[#allocation28 + $0x188] sm:$0xff]
    %v6410 = vld [vmem:[#allocation28 + $0x190] sm:$0xff]
    %v6411 = vld [vmem:[#allocation28 + $0x198] sm:$0xff]
    %v6412 = vld [vmem:[#allocation28 + $0x1a0] sm:$0xff]
    %v6413 = vld [vmem:[#allocation28 + $0x1a8] sm:$0xff]
    %v6414 = vld [vmem:[#allocation28 + $0x1b0] sm:$0xff]
    %v6415 = vld [vmem:[#allocation28 + $0x1b8] sm:$0xff]
    %v6416 = vld [vmem:[#allocation28 + $0x1c0] sm:$0xff]
    %v6417 = vld [vmem:[#allocation28 + $0x1c8] sm:$0xff]
    %v6418 = vld [vmem:[#allocation28 + $0x1d0] sm:$0xff]
    %v6419 = vld [vmem:[#allocation28 + $0x1d8] sm:$0xff]
    %v6420 = vld [vmem:[#allocation28 + $0x1e0] sm:$0xff]
    %v6421 = vld [vmem:[#allocation28 + $0x1e8] sm:$0xff]
    %v6422 = vld [vmem:[#allocation28 + $0x1f0] sm:$0xff]
    %v6423 = vld [vmem:[#allocation28 + $0x1f8] sm:$0xff]
    %v6424 = vld [vmem:[#allocation28 + $0x200] sm:$0xff]
    %v6425 = vld [vmem:[#allocation28 + $0x208] sm:$0xff]
    %v6426 = vld [vmem:[#allocation28 + $0x210] sm:$0xff]
    %v6427 = vld [vmem:[#allocation28 + $0x218] sm:$0xff]
    %v6428 = vld [vmem:[#allocation28 + $0x220] sm:$0xff]
    %v6429 = vld [vmem:[#allocation28 + $0x228] sm:$0xff]
    %v6430 = vld [vmem:[#allocation28 + $0x230] sm:$0xff]
    %v6431 = vld [vmem:[#allocation28 + $0x238] sm:$0xff]
    %v6432 = vld [vmem:[#allocation28 + $0x240] sm:$0xff]
    %v6433 = vld [vmem:[#allocation28 + $0x248] sm:$0xff]
    %v6434 = vld [vmem:[#allocation28 + $0x250] sm:$0xff]
    %v6435 = vld [vmem:[#allocation28 + $0x258] sm:$0xff]
    %v6436 = vld [vmem:[#allocation28 + $0x260] sm:$0xff]
    %v6437 = vld [vmem:[#allocation28 + $0x268] sm:$0xff]
    %v6438 = vld [vmem:[#allocation28 + $0x270] sm:$0xff]
    %v6439 = vld [vmem:[#allocation28 + $0x278] sm:$0xff]
    %v6440 = vld [vmem:[#allocation28 + $0x280] sm:$0xff]
    %v6441 = vld [vmem:[#allocation28 + $0x288] sm:$0xff]
    %v6442 = vld [vmem:[#allocation28 + $0x290] sm:$0xff]
    %v6443 = vld [vmem:[#allocation28 + $0x298] sm:$0xff]
    %v6444 = vld [vmem:[#allocation28 + $0x2a0] sm:$0xff]
    %v6445 = vld [vmem:[#allocation28 + $0x2a8] sm:$0xff]
    %v6446 = vld [vmem:[#allocation28 + $0x2b0] sm:$0xff]
    %v6447 = vld [vmem:[#allocation28 + $0x2b8] sm:$0xff]
    %v6448 = vld [vmem:[#allocation28 + $0x2c0] sm:$0xff]
    %v6449 = vld [vmem:[#allocation28 + $0x2c8] sm:$0xff]
    %v6450 = vld [vmem:[#allocation28 + $0x2d0] sm:$0xff]
    %v6451 = vld [vmem:[#allocation28 + $0x2d8] sm:$0xff]
    %v6452 = vld [vmem:[#allocation28 + $0x2e0] sm:$0xff]
    %v6453 = vld [vmem:[#allocation28 + $0x2e8] sm:$0xff]
    %v6454 = vld [vmem:[#allocation28 + $0x2f0] sm:$0xff]
    %v6455 = vld [vmem:[#allocation28 + $0x2f8] sm:$0xff]
    %v6456 = vld [vmem:[#allocation28 + $0x300] sm:$0xff]
    %v6457 = vld [vmem:[#allocation28 + $0x308] sm:$0xff]
    %v6458 = vld [vmem:[#allocation28 + $0x310] sm:$0xff]
    %v6459 = vld [vmem:[#allocation28 + $0x318] sm:$0xff]
    %v6460 = vld [vmem:[#allocation28 + $0x320] sm:$0xff]
    %v6461 = vld [vmem:[#allocation28 + $0x328] sm:$0xff]
    %v6462 = vld [vmem:[#allocation28 + $0x330] sm:$0xff]
    %v6463 = vld [vmem:[#allocation28 + $0x338] sm:$0xff]
    %v6464 = vld [vmem:[#allocation28 + $0x340] sm:$0xff]
    %v6465 = vld [vmem:[#allocation28 + $0x348] sm:$0xff]
    %v6466 = vld [vmem:[#allocation28 + $0x350] sm:$0xff]
    %v6467 = vld [vmem:[#allocation28 + $0x358] sm:$0xff]
    %v6468 = vld [vmem:[#allocation28 + $0x360] sm:$0xff]
    %v6469 = vld [vmem:[#allocation28 + $0x368] sm:$0xff]
    %v6470 = vld [vmem:[#allocation28 + $0x370] sm:$0xff]
    %v6471 = vld [vmem:[#allocation28 + $0x378] sm:$0xff]
    %v6472 = vld [vmem:[#allocation28 + $0x380] sm:$0xff]
    %v6473 = vld [vmem:[#allocation28 + $0x388] sm:$0xff]
    %v6474 = vld [vmem:[#allocation28 + $0x390] sm:$0xff]
    %v6475 = vld [vmem:[#allocation28 + $0x398] sm:$0xff]
    %v6476 = vld [vmem:[#allocation28 + $0x3a0] sm:$0xff]
    %v6477 = vld [vmem:[#allocation28 + $0x3a8] sm:$0xff]
    %v6478 = vld [vmem:[#allocation28 + $0x3b0] sm:$0xff]
    %v6479 = vld [vmem:[#allocation28 + $0x3b8] sm:$0xff]
    %v6480 = vld [vmem:[#allocation28 + $0x3c0] sm:$0xff]
    %v6481 = vld [vmem:[#allocation28 + $0x3c8] sm:$0xff]
    %v6482 = vld [vmem:[#allocation28 + $0x3d0] sm:$0xff]
    %v6483 = vld [vmem:[#allocation28 + $0x3d8] sm:$0xff]
    %v6484 = vld [vmem:[#allocation28 + $0x3e0] sm:$0xff]
    %v6485 = vld [vmem:[#allocation28 + $0x3e8] sm:$0xff]
    %v6486 = vld [vmem:[#allocation28 + $0x3f0] sm:$0xff]
    %v6487 = vld [vmem:[#allocation28 + $0x3f8] sm:$0xff]
    %v6488 = vld [vmem:[#allocation28 + $0x400] sm:$0xff]
    %v6489 = vld [vmem:[#allocation28 + $0x408] sm:$0xff]
    %v6490 = vld [vmem:[#allocation28 + $0x410] sm:$0xff]
    %v6491 = vld [vmem:[#allocation28 + $0x418] sm:$0xff]
    %v6492 = vld [vmem:[#allocation28 + $0x420] sm:$0xff]
    %v6493 = vld [vmem:[#allocation28 + $0x428] sm:$0xff]
    %v6494 = vld [vmem:[#allocation28 + $0x430] sm:$0xff]
    %v6495 = vld [vmem:[#allocation28 + $0x438] sm:$0xff]
    %v6496 = vld [vmem:[#allocation28 + $0x440] sm:$0xff]
    %v6497 = vld [vmem:[#allocation28 + $0x448] sm:$0xff]
    %v6498 = vld [vmem:[#allocation28 + $0x450] sm:$0xff]
    %v6499 = vld [vmem:[#allocation28 + $0x458] sm:$0xff]
    %v6500 = vld [vmem:[#allocation28 + $0x460] sm:$0xff]
    %v6501 = vld [vmem:[#allocation28 + $0x468] sm:$0xff]
    %v6502 = vld [vmem:[#allocation28 + $0x470] sm:$0xff]
    %v6503 = vld [vmem:[#allocation28 + $0x478] sm:$0xff]
    %v6504 = vld [vmem:[#allocation28 + $0x480] sm:$0xff]
    %v6505 = vld [vmem:[#allocation28 + $0x488] sm:$0xff]
    %v6506 = vld [vmem:[#allocation28 + $0x490] sm:$0xff]
    %v6507 = vld [vmem:[#allocation28 + $0x498] sm:$0xff]
    %v6508 = vld [vmem:[#allocation28 + $0x4a0] sm:$0xff]
    %v6509 = vld [vmem:[#allocation28 + $0x4a8] sm:$0xff]
    %v6510 = vld [vmem:[#allocation28 + $0x4b0] sm:$0xff]
    %v6511 = vld [vmem:[#allocation28 + $0x4b8] sm:$0xff]
    %v6512 = vld [vmem:[#allocation28 + $0x4c0] sm:$0xff]
    %v6513 = vld [vmem:[#allocation28 + $0x4c8] sm:$0xff]
    %v6514 = vld [vmem:[#allocation28 + $0x4d0] sm:$0xff]
    %v6515 = vld [vmem:[#allocation28 + $0x4d8] sm:$0xff]
    %v6516 = vld [vmem:[#allocation28 + $0x4e0] sm:$0xff]
    %v6517 = vld [vmem:[#allocation28 + $0x4e8] sm:$0xff]
    %v6518 = vld [vmem:[#allocation28 + $0x4f0] sm:$0xff]
    %v6519 = vld [vmem:[#allocation28 + $0x4f8] sm:$0xff]
    %v6520 = vld [vmem:[#allocation28 + $0x500] sm:$0xff]
    %v6521 = vld [vmem:[#allocation28 + $0x508] sm:$0xff]
    %v6522 = vld [vmem:[#allocation28 + $0x510] sm:$0xff]
    %v6523 = vld [vmem:[#allocation28 + $0x518] sm:$0xff]
    %v6524 = vld [vmem:[#allocation28 + $0x520] sm:$0xff]
    %v6525 = vld [vmem:[#allocation28 + $0x528] sm:$0xff]
    %v6526 = vld [vmem:[#allocation28 + $0x530] sm:$0xff]
    %v6527 = vld [vmem:[#allocation28 + $0x538] sm:$0xff]
    %v6528 = vld [vmem:[#allocation28 + $0x540] sm:$0xff]
    %v6529 = vld [vmem:[#allocation28 + $0x548] sm:$0xff]
    %v6530 = vld [vmem:[#allocation28 + $0x550] sm:$0xff]
    %v6531 = vld [vmem:[#allocation28 + $0x558] sm:$0xff]
    %v6532 = vld [vmem:[#allocation28 + $0x560] sm:$0xff]
    %v6533 = vld [vmem:[#allocation28 + $0x568] sm:$0xff]
    %v6534 = vld [vmem:[#allocation28 + $0x570] sm:$0xff]
    %v6535 = vld [vmem:[#allocation28 + $0x578] sm:$0xff]
    %v6536 = vld [vmem:[#allocation28 + $0x580] sm:$0xff]
    %v6537 = vld [vmem:[#allocation28 + $0x588] sm:$0xff]
    %v6538 = vld [vmem:[#allocation28 + $0x590] sm:$0xff]
    %v6539 = vld [vmem:[#allocation28 + $0x598] sm:$0xff]
    %v6540 = vld [vmem:[#allocation28 + $0x5a0] sm:$0xff]
    %v6541 = vld [vmem:[#allocation28 + $0x5a8] sm:$0xff]
    %v6542 = vld [vmem:[#allocation28 + $0x5b0] sm:$0xff]
    %v6543 = vld [vmem:[#allocation28 + $0x5b8] sm:$0xff]
    %v6544 = vld [vmem:[#allocation28 + $0x5c0] sm:$0xff]
    %v6545 = vld [vmem:[#allocation28 + $0x5c8] sm:$0xff]
    %v6546 = vld [vmem:[#allocation28 + $0x5d0] sm:$0xff]
    %v6547 = vld [vmem:[#allocation28 + $0x5d8] sm:$0xff]
    %v6548 = vld [vmem:[#allocation28 + $0x5e0] sm:$0xff]
    %v6549 = vld [vmem:[#allocation28 + $0x5e8] sm:$0xff]
    %v6550 = vld [vmem:[#allocation28 + $0x5f0] sm:$0xff]
    %v6551 = vld [vmem:[#allocation28 + $0x5f8] sm:$0xff]
    %v6552 = vld [vmem:[#allocation28 + $0x600] sm:$0xff]
    %v6553 = vld [vmem:[#allocation28 + $0x608] sm:$0xff]
    %v6554 = vld [vmem:[#allocation28 + $0x610] sm:$0xff]
    %v6555 = vld [vmem:[#allocation28 + $0x618] sm:$0xff]
    %v6556 = vld [vmem:[#allocation28 + $0x620] sm:$0xff]
    %v6557 = vld [vmem:[#allocation28 + $0x628] sm:$0xff]
    %v6558 = vld [vmem:[#allocation28 + $0x630] sm:$0xff]
    %v6559 = vld [vmem:[#allocation28 + $0x638] sm:$0xff]
    %v6560 = vld [vmem:[#allocation28 + $0x640] sm:$0xff]
    %v6561 = vld [vmem:[#allocation28 + $0x648] sm:$0xff]
    %v6562 = vld [vmem:[#allocation28 + $0x650] sm:$0xff]
    %v6563 = vld [vmem:[#allocation28 + $0x658] sm:$0xff]
    %v6564 = vld [vmem:[#allocation28 + $0x660] sm:$0xff]
    %v6565 = vld [vmem:[#allocation28 + $0x668] sm:$0xff]
    %v6566 = vld [vmem:[#allocation28 + $0x670] sm:$0xff]
    %v6567 = vld [vmem:[#allocation28 + $0x678] sm:$0xff]
    %v6568 = vld [vmem:[#allocation28 + $0x680] sm:$0xff]
    %v6569 = vld [vmem:[#allocation28 + $0x688] sm:$0xff]
    %v6570 = vld [vmem:[#allocation28 + $0x690] sm:$0xff]
    %v6571 = vld [vmem:[#allocation28 + $0x698] sm:$0xff]
    %v6572 = vld [vmem:[#allocation28 + $0x6a0] sm:$0xff]
    %v6573 = vld [vmem:[#allocation28 + $0x6a8] sm:$0xff]
    %v6574 = vld [vmem:[#allocation28 + $0x6b0] sm:$0xff]
    %v6575 = vld [vmem:[#allocation28 + $0x6b8] sm:$0xff]
    %v6576 = vld [vmem:[#allocation28 + $0x6c0] sm:$0xff]
    %v6577 = vld [vmem:[#allocation28 + $0x6c8] sm:$0xff]
    %v6578 = vld [vmem:[#allocation28 + $0x6d0] sm:$0xff]
    %v6579 = vld [vmem:[#allocation28 + $0x6d8] sm:$0xff]
    %v6580 = vld [vmem:[#allocation28 + $0x6e0] sm:$0xff]
    %v6581 = vld [vmem:[#allocation28 + $0x6e8] sm:$0xff]
    %v6582 = vld [vmem:[#allocation28 + $0x6f0] sm:$0xff]
    %v6583 = vld [vmem:[#allocation28 + $0x6f8] sm:$0xff]
    %v6584 = vld [vmem:[#allocation28 + $0x700] sm:$0xff]
    %v6585 = vld [vmem:[#allocation28 + $0x708] sm:$0xff]
    %v6586 = vld [vmem:[#allocation28 + $0x710] sm:$0xff]
    %v6587 = vld [vmem:[#allocation28 + $0x718] sm:$0xff]
    %v6588 = vld [vmem:[#allocation28 + $0x720] sm:$0xff]
    %v6589 = vld [vmem:[#allocation28 + $0x728] sm:$0xff]
    %v6590 = vld [vmem:[#allocation28 + $0x730] sm:$0xff]
    %v6591 = vld [vmem:[#allocation28 + $0x738] sm:$0xff]
    %v6592 = vld [vmem:[#allocation28 + $0x740] sm:$0xff]
    %v6593 = vld [vmem:[#allocation28 + $0x748] sm:$0xff]
    %v6594 = vld [vmem:[#allocation28 + $0x750] sm:$0xff]
    %v6595 = vld [vmem:[#allocation28 + $0x758] sm:$0xff]
    %v6596 = vld [vmem:[#allocation28 + $0x760] sm:$0xff]
    %v6597 = vld [vmem:[#allocation28 + $0x768] sm:$0xff]
    %v6598 = vld [vmem:[#allocation28 + $0x770] sm:$0xff]
    %v6599 = vld [vmem:[#allocation28 + $0x778] sm:$0xff]
    %v6600 = vld [vmem:[#allocation28 + $0x780] sm:$0xff]
    %v6601 = vld [vmem:[#allocation28 + $0x788] sm:$0xff]
    %v6602 = vld [vmem:[#allocation28 + $0x790] sm:$0xff]
    %v6603 = vld [vmem:[#allocation28 + $0x798] sm:$0xff]
    %v6604 = vld [vmem:[#allocation28 + $0x7a0] sm:$0xff]
    %v6605 = vld [vmem:[#allocation28 + $0x7a8] sm:$0xff]
    %v6606 = vld [vmem:[#allocation28 + $0x7b0] sm:$0xff]
    %v6607 = vld [vmem:[#allocation28 + $0x7b8] sm:$0xff]
    %v6608 = vld [vmem:[#allocation28 + $0x7c0] sm:$0xff]
    %v6609 = vld [vmem:[#allocation28 + $0x7c8] sm:$0xff]
    %v6610 = vld [vmem:[#allocation28 + $0x7d0] sm:$0xff]
    %v6611 = vld [vmem:[#allocation28 + $0x7d8] sm:$0xff]
    %v6612 = vld [vmem:[#allocation28 + $0x7e0] sm:$0xff]
    %v6613 = vld [vmem:[#allocation28 + $0x7e8] sm:$0xff]
    %v6614 = vld [vmem:[#allocation28 + $0x7f0] sm:$0xff]
    %v6615 = vld [vmem:[#allocation28 + $0x7f8] sm:$0xff]
    %v6616 = vld [vmem:[#allocation28 + $0x800] sm:$0xff]
    %v6617 = vld [vmem:[#allocation28 + $0x808] sm:$0xff]
    %v6618 = vld [vmem:[#allocation28 + $0x810] sm:$0xff]
    %v6619 = vld [vmem:[#allocation28 + $0x818] sm:$0xff]
    %v6620 = vld [vmem:[#allocation28 + $0x820] sm:$0xff]
    %v6621 = vld [vmem:[#allocation28 + $0x828] sm:$0xff]
    %v6622 = vld [vmem:[#allocation28 + $0x830] sm:$0xff]
    %v6623 = vld [vmem:[#allocation28 + $0x838] sm:$0xff]
    %v6624 = vld [vmem:[#allocation28 + $0x840] sm:$0xff]
    %v6625 = vld [vmem:[#allocation28 + $0x848] sm:$0xff]
    %v6626 = vld [vmem:[#allocation28 + $0x850] sm:$0xff]
    %v6627 = vld [vmem:[#allocation28 + $0x858] sm:$0xff]
    %v6628 = vld [vmem:[#allocation28 + $0x860] sm:$0xff]
    %v6629 = vld [vmem:[#allocation28 + $0x868] sm:$0xff]
    %v6630 = vld [vmem:[#allocation28 + $0x870] sm:$0xff]
    %v6631 = vld [vmem:[#allocation28 + $0x878] sm:$0xff]
    %v6632 = vld [vmem:[#allocation28 + $0x880] sm:$0xff]
    %v6633 = vld [vmem:[#allocation28 + $0x888] sm:$0xff]
    %v6634 = vld [vmem:[#allocation28 + $0x890] sm:$0xff]
    %v6635 = vld [vmem:[#allocation28 + $0x898] sm:$0xff]
    %v6636 = vld [vmem:[#allocation28 + $0x8a0] sm:$0xff]
    %v6637 = vld [vmem:[#allocation28 + $0x8a8] sm:$0xff]
    %v6638 = vld [vmem:[#allocation28 + $0x8b0] sm:$0xff]
    %v6639 = vld [vmem:[#allocation28 + $0x8b8] sm:$0xff]
    %v6640 = vld [vmem:[#allocation28 + $0x8c0] sm:$0xff]
    %v6641 = vld [vmem:[#allocation28 + $0x8c8] sm:$0xff]
    %v6642 = vld [vmem:[#allocation28 + $0x8d0] sm:$0xff]
    %v6643 = vld [vmem:[#allocation28 + $0x8d8] sm:$0xff]
    %v6644 = vld [vmem:[#allocation28 + $0x8e0] sm:$0xff]
    %v6645 = vld [vmem:[#allocation28 + $0x8e8] sm:$0xff]
    %v6646 = vld [vmem:[#allocation28 + $0x8f0] sm:$0xff]
    %v6647 = vld [vmem:[#allocation28 + $0x8f8] sm:$0xff]
    %v6648 = vld [vmem:[#allocation28 + $0x900] sm:$0xff]
    %v6649 = vld [vmem:[#allocation28 + $0x908] sm:$0xff]
    %v6650 = vld [vmem:[#allocation28 + $0x910] sm:$0xff]
    %v6651 = vld [vmem:[#allocation28 + $0x918] sm:$0xff]
    %v6652 = vld [vmem:[#allocation28 + $0x920] sm:$0xff]
    %v6653 = vld [vmem:[#allocation28 + $0x928] sm:$0xff]
    %v6654 = vld [vmem:[#allocation28 + $0x930] sm:$0xff]
    %v6655 = vld [vmem:[#allocation28 + $0x938] sm:$0xff]
    %v6656 = vld [vmem:[#allocation28 + $0x940] sm:$0xff]
    %v6657 = vld [vmem:[#allocation28 + $0x948] sm:$0xff]
    %v6658 = vld [vmem:[#allocation28 + $0x950] sm:$0xff]
    %v6659 = vld [vmem:[#allocation28 + $0x958] sm:$0xff]
    %v6660 = vld [vmem:[#allocation28 + $0x960] sm:$0xff]
    %v6661 = vld [vmem:[#allocation28 + $0x968] sm:$0xff]
    %v6662 = vld [vmem:[#allocation28 + $0x970] sm:$0xff]
    %v6663 = vld [vmem:[#allocation28 + $0x978] sm:$0xff]
    %v6664 = vld [vmem:[#allocation28 + $0x980] sm:$0xff]
    %v6665 = vld [vmem:[#allocation28 + $0x988] sm:$0xff]
    %v6666 = vld [vmem:[#allocation28 + $0x990] sm:$0xff]
    %v6667 = vld [vmem:[#allocation28 + $0x998] sm:$0xff]
    %v6668 = vld [vmem:[#allocation28 + $0x9a0] sm:$0xff]
    %v6669 = vld [vmem:[#allocation28 + $0x9a8] sm:$0xff]
    %v6670 = vld [vmem:[#allocation28 + $0x9b0] sm:$0xff]
    %v6671 = vld [vmem:[#allocation28 + $0x9b8] sm:$0xff]
    %v6672 = vld [vmem:[#allocation28 + $0x9c0] sm:$0xff]
    %v6673 = vld [vmem:[#allocation28 + $0x9c8] sm:$0xff]
    %v6674 = vld [vmem:[#allocation28 + $0x9d0] sm:$0xff]
    %v6675 = vld [vmem:[#allocation28 + $0x9d8] sm:$0xff]
    %v6676 = vld [vmem:[#allocation28 + $0x9e0] sm:$0xff]
    %v6677 = vld [vmem:[#allocation28 + $0x9e8] sm:$0xff]
    %v6678 = vld [vmem:[#allocation28 + $0x9f0] sm:$0xff]
    %v6679 = vld [vmem:[#allocation28 + $0x9f8] sm:$0xff]
    %v6680 = vld [vmem:[#allocation28 + $0xa00] sm:$0xff]
    %v6681 = vld [vmem:[#allocation28 + $0xa08] sm:$0xff]
    %v6682 = vld [vmem:[#allocation28 + $0xa10] sm:$0xff]
    %v6683 = vld [vmem:[#allocation28 + $0xa18] sm:$0xff]
    %v6684 = vld [vmem:[#allocation28 + $0xa20] sm:$0xff]
    %v6685 = vld [vmem:[#allocation28 + $0xa28] sm:$0xff]
    %v6686 = vld [vmem:[#allocation28 + $0xa30] sm:$0xff]
    %v6687 = vld [vmem:[#allocation28 + $0xa38] sm:$0xff]
    %v6688 = vld [vmem:[#allocation28 + $0xa40] sm:$0xff]
    %v6689 = vld [vmem:[#allocation28 + $0xa48] sm:$0xff]
    %v6690 = vld [vmem:[#allocation28 + $0xa50] sm:$0xff]
    %v6691 = vld [vmem:[#allocation28 + $0xa58] sm:$0xff]
    %v6692 = vld [vmem:[#allocation28 + $0xa60] sm:$0xff]
    %v6693 = vld [vmem:[#allocation28 + $0xa68] sm:$0xff]
    %v6694 = vld [vmem:[#allocation28 + $0xa70] sm:$0xff]
    %v6695 = vld [vmem:[#allocation28 + $0xa78] sm:$0xff]
    %v6696 = vld [vmem:[#allocation28 + $0xa80] sm:$0xff]
    %v6697 = vld [vmem:[#allocation28 + $0xa88] sm:$0xff]
    %v6698 = vld [vmem:[#allocation28 + $0xa90] sm:$0xff]
    %v6699 = vld [vmem:[#allocation28 + $0xa98] sm:$0xff]
    %v6700 = vld [vmem:[#allocation28 + $0xaa0] sm:$0xff]
    %v6701 = vld [vmem:[#allocation28 + $0xaa8] sm:$0xff]
    %v6702 = vld [vmem:[#allocation28 + $0xab0] sm:$0xff]
    %v6703 = vld [vmem:[#allocation28 + $0xab8] sm:$0xff]
    %v6704 = vld [vmem:[#allocation28 + $0xac0] sm:$0xff]
    %v6705 = vld [vmem:[#allocation28 + $0xac8] sm:$0xff]
    %v6706 = vld [vmem:[#allocation28 + $0xad0] sm:$0xff]
    %v6707 = vld [vmem:[#allocation28 + $0xad8] sm:$0xff]
    %v6708 = vld [vmem:[#allocation28 + $0xae0] sm:$0xff]
    %v6709 = vld [vmem:[#allocation28 + $0xae8] sm:$0xff]
    %v6710 = vld [vmem:[#allocation28 + $0xaf0] sm:$0xff]
    %v6711 = vld [vmem:[#allocation28 + $0xaf8] sm:$0xff]
    %v6712 = vld [vmem:[#allocation28 + $0xb00] sm:$0xff]
    %v6713 = vld [vmem:[#allocation28 + $0xb08] sm:$0xff]
    %v6714 = vld [vmem:[#allocation28 + $0xb10] sm:$0xff]
    %v6715 = vld [vmem:[#allocation28 + $0xb18] sm:$0xff]
    %v6716 = vld [vmem:[#allocation28 + $0xb20] sm:$0xff]
    %v6717 = vld [vmem:[#allocation28 + $0xb28] sm:$0xff]
    %v6718 = vld [vmem:[#allocation28 + $0xb30] sm:$0xff]
    %v6719 = vld [vmem:[#allocation28 + $0xb38] sm:$0xff]
    %v6720 = vld [vmem:[#allocation28 + $0xb40] sm:$0xff]
    %v6721 = vld [vmem:[#allocation28 + $0xb48] sm:$0xff]
    %v6722 = vld [vmem:[#allocation28 + $0xb50] sm:$0xff]
    %v6723 = vld [vmem:[#allocation28 + $0xb58] sm:$0xff]
    %v6724 = vld [vmem:[#allocation28 + $0xb60] sm:$0xff]
    %v6725 = vld [vmem:[#allocation28 + $0xb68] sm:$0xff]
    %v6726 = vld [vmem:[#allocation28 + $0xb70] sm:$0xff]
    %v6727 = vld [vmem:[#allocation28 + $0xb78] sm:$0xff]
    %v6728 = vld [vmem:[#allocation28 + $0xb80] sm:$0xff]
    %v6729 = vld [vmem:[#allocation28 + $0xb88] sm:$0xff]
    %v6730 = vld [vmem:[#allocation28 + $0xb90] sm:$0xff]
    %v6731 = vld [vmem:[#allocation28 + $0xb98] sm:$0xff]
    %v6732 = vld [vmem:[#allocation28 + $0xba0] sm:$0xff]
    %v6733 = vld [vmem:[#allocation28 + $0xba8] sm:$0xff]
    %v6734 = vld [vmem:[#allocation28 + $0xbb0] sm:$0xff]
    %v6735 = vld [vmem:[#allocation28 + $0xbb8] sm:$0xff]
    %v6736 = vld [vmem:[#allocation28 + $0xbc0] sm:$0xff]
    %v6737 = vld [vmem:[#allocation28 + $0xbc8] sm:$0xff]
    %v6738 = vld [vmem:[#allocation28 + $0xbd0] sm:$0xff]
    %v6739 = vld [vmem:[#allocation28 + $0xbd8] sm:$0xff]
    %v6740 = vld [vmem:[#allocation28 + $0xbe0] sm:$0xff]
    %v6741 = vld [vmem:[#allocation28 + $0xbe8] sm:$0xff]
    %v6742 = vld [vmem:[#allocation28 + $0xbf0] sm:$0xff]
    %v6743 = vld [vmem:[#allocation28 + $0xbf8] sm:$0xff]
    %v6744 = vld [vmem:[#allocation28 + $0xc00] sm:$0xff]
    %v6745 = vld [vmem:[#allocation28 + $0xc08] sm:$0xff]
    %v6746 = vld [vmem:[#allocation28 + $0xc10] sm:$0xff]
    %v6747 = vld [vmem:[#allocation28 + $0xc18] sm:$0xff]
    %v6748 = vld [vmem:[#allocation28 + $0xc20] sm:$0xff]
    %v6749 = vld [vmem:[#allocation28 + $0xc28] sm:$0xff]
    %v6750 = vld [vmem:[#allocation28 + $0xc30] sm:$0xff]
    %v6751 = vld [vmem:[#allocation28 + $0xc38] sm:$0xff]
    %v6752 = vld [vmem:[#allocation28 + $0xc40] sm:$0xff]
    %v6753 = vld [vmem:[#allocation28 + $0xc48] sm:$0xff]
    %v6754 = vld [vmem:[#allocation28 + $0xc50] sm:$0xff]
    %v6755 = vld [vmem:[#allocation28 + $0xc58] sm:$0xff]
    %v6756 = vld [vmem:[#allocation28 + $0xc60] sm:$0xff]
    %v6757 = vld [vmem:[#allocation28 + $0xc68] sm:$0xff]
    %v6758 = vld [vmem:[#allocation28 + $0xc70] sm:$0xff]
    %v6759 = vld [vmem:[#allocation28 + $0xc78] sm:$0xff]
    %v6760 = vld [vmem:[#allocation28 + $0xc80] sm:$0xff]
    %v6761 = vld [vmem:[#allocation28 + $0xc88] sm:$0xff]
    %v6762 = vld [vmem:[#allocation28 + $0xc90] sm:$0xff]
    %v6763 = vld [vmem:[#allocation28 + $0xc98] sm:$0xff]
    %v6764 = vld [vmem:[#allocation28 + $0xca0] sm:$0xff]
    %v6765 = vld [vmem:[#allocation28 + $0xca8] sm:$0xff]
    %v6766 = vld [vmem:[#allocation28 + $0xcb0] sm:$0xff]
    %v6767 = vld [vmem:[#allocation28 + $0xcb8] sm:$0xff]
    %v6768 = vld [vmem:[#allocation28 + $0xcc0] sm:$0xff]
    %v6769 = vld [vmem:[#allocation28 + $0xcc8] sm:$0xff]
    %v6770 = vld [vmem:[#allocation28 + $0xcd0] sm:$0xff]
    %v6771 = vld [vmem:[#allocation28 + $0xcd8] sm:$0xff]
    %v6772 = vld [vmem:[#allocation28 + $0xce0] sm:$0xff]
    %v6773 = vld [vmem:[#allocation28 + $0xce8] sm:$0xff]
    %v6774 = vld [vmem:[#allocation28 + $0xcf0] sm:$0xff]
    %v6775 = vld [vmem:[#allocation28 + $0xcf8] sm:$0xff]
    %v6776 = vld [vmem:[#allocation28 + $0xd00] sm:$0xff]
    %v6777 = vld [vmem:[#allocation28 + $0xd08] sm:$0xff]
    %v6778 = vld [vmem:[#allocation28 + $0xd10] sm:$0xff]
    %v6779 = vld [vmem:[#allocation28 + $0xd18] sm:$0xff]
    %v6780 = vld [vmem:[#allocation28 + $0xd20] sm:$0xff]
    %v6781 = vld [vmem:[#allocation28 + $0xd28] sm:$0xff]
    %v6782 = vld [vmem:[#allocation28 + $0xd30] sm:$0xff]
    %v6783 = vld [vmem:[#allocation28 + $0xd38] sm:$0xff]
    %v6784 = vld [vmem:[#allocation28 + $0xd40] sm:$0xff]
    %v6785 = vld [vmem:[#allocation28 + $0xd48] sm:$0xff]
    %v6786 = vld [vmem:[#allocation28 + $0xd50] sm:$0xff]
    %v6787 = vld [vmem:[#allocation28 + $0xd58] sm:$0xff]
    %v6788 = vld [vmem:[#allocation28 + $0xd60] sm:$0xff]
    %v6789 = vld [vmem:[#allocation28 + $0xd68] sm:$0xff]
    %v6790 = vld [vmem:[#allocation28 + $0xd70] sm:$0xff]
    %v6791 = vld [vmem:[#allocation28 + $0xd78] sm:$0xff]
    %v6792 = vld [vmem:[#allocation28 + $0xd80] sm:$0xff]
    %v6793 = vld [vmem:[#allocation28 + $0xd88] sm:$0xff]
    %v6794 = vld [vmem:[#allocation28 + $0xd90] sm:$0xff]
    %v6795 = vld [vmem:[#allocation28 + $0xd98] sm:$0xff]
    %v6796 = vld [vmem:[#allocation28 + $0xda0] sm:$0xff]
    %v6797 = vld [vmem:[#allocation28 + $0xda8] sm:$0xff]
    %v6798 = vld [vmem:[#allocation28 + $0xdb0] sm:$0xff]
    %v6799 = vld [vmem:[#allocation28 + $0xdb8] sm:$0xff]
    %v6800 = vld [vmem:[#allocation28 + $0xdc0] sm:$0xff]
    %v6801 = vld [vmem:[#allocation28 + $0xdc8] sm:$0xff]
    %v6802 = vld [vmem:[#allocation28 + $0xdd0] sm:$0xff]
    %v6803 = vld [vmem:[#allocation28 + $0xdd8] sm:$0xff]
    %v6804 = vld [vmem:[#allocation28 + $0xde0] sm:$0xff]
    %v6805 = vld [vmem:[#allocation28 + $0xde8] sm:$0xff]
    %v6806 = vld [vmem:[#allocation28 + $0xdf0] sm:$0xff]
    %v6807 = vld [vmem:[#allocation28 + $0xdf8] sm:$0xff]
    %v6808 = vld [vmem:[#allocation28 + $0xe00] sm:$0xff]
    %v6809 = vld [vmem:[#allocation28 + $0xe08] sm:$0xff]
    %v6810 = vld [vmem:[#allocation28 + $0xe10] sm:$0xff]
    %v6811 = vld [vmem:[#allocation28 + $0xe18] sm:$0xff]
    %v6812 = vld [vmem:[#allocation28 + $0xe20] sm:$0xff]
    %v6813 = vld [vmem:[#allocation28 + $0xe28] sm:$0xff]
    %v6814 = vld [vmem:[#allocation28 + $0xe30] sm:$0xff]
    %v6815 = vld [vmem:[#allocation28 + $0xe38] sm:$0xff]
    %v6816 = vld [vmem:[#allocation28 + $0xe40] sm:$0xff]
    %v6817 = vld [vmem:[#allocation28 + $0xe48] sm:$0xff]
    %v6818 = vld [vmem:[#allocation28 + $0xe50] sm:$0xff]
    %v6819 = vld [vmem:[#allocation28 + $0xe58] sm:$0xff]
    %v6820 = vld [vmem:[#allocation28 + $0xe60] sm:$0xff]
    %v6821 = vld [vmem:[#allocation28 + $0xe68] sm:$0xff]
    %v6822 = vld [vmem:[#allocation28 + $0xe70] sm:$0xff]
    %v6823 = vld [vmem:[#allocation28 + $0xe78] sm:$0xff]
    %v6824 = vld [vmem:[#allocation28 + $0xe80] sm:$0xff]
    %v6825 = vld [vmem:[#allocation28 + $0xe88] sm:$0xff]
    %v6826 = vld [vmem:[#allocation28 + $0xe90] sm:$0xff]
    %v6827 = vld [vmem:[#allocation28 + $0xe98] sm:$0xff]
    %v6828 = vld [vmem:[#allocation28 + $0xea0] sm:$0xff]
    %v6829 = vld [vmem:[#allocation28 + $0xea8] sm:$0xff]
    %v6830 = vld [vmem:[#allocation28 + $0xeb0] sm:$0xff]
    %v6831 = vld [vmem:[#allocation28 + $0xeb8] sm:$0xff]
    %v6832 = vld [vmem:[#allocation28 + $0xec0] sm:$0xff]
    %v6833 = vld [vmem:[#allocation28 + $0xec8] sm:$0xff]
    %v6834 = vld [vmem:[#allocation28 + $0xed0] sm:$0xff]
    %v6835 = vld [vmem:[#allocation28 + $0xed8] sm:$0xff]
    %v6836 = vld [vmem:[#allocation28 + $0xee0] sm:$0xff]
    %v6837 = vld [vmem:[#allocation28 + $0xee8] sm:$0xff]
    %v6838 = vld [vmem:[#allocation28 + $0xef0] sm:$0xff]
    %v6839 = vld [vmem:[#allocation28 + $0xef8] sm:$0xff]
    %v6840 = vld [vmem:[#allocation28 + $0xf00] sm:$0xff]
    %v6841 = vld [vmem:[#allocation28 + $0xf08] sm:$0xff]
    %v6842 = vld [vmem:[#allocation28 + $0xf10] sm:$0xff]
    %v6843 = vld [vmem:[#allocation28 + $0xf18] sm:$0xff]
    %v6844 = vld [vmem:[#allocation28 + $0xf20] sm:$0xff]
    %v6845 = vld [vmem:[#allocation28 + $0xf28] sm:$0xff]
    %v6846 = vld [vmem:[#allocation28 + $0xf30] sm:$0xff]
    %v6847 = vld [vmem:[#allocation28 + $0xf38] sm:$0xff]
    %v6848 = vld [vmem:[#allocation28 + $0xf40] sm:$0xff]
    %v6849 = vld [vmem:[#allocation28 + $0xf48] sm:$0xff]
    %v6850 = vld [vmem:[#allocation28 + $0xf50] sm:$0xff]
    %v6851 = vld [vmem:[#allocation28 + $0xf58] sm:$0xff]
    %v6852 = vld [vmem:[#allocation28 + $0xf60] sm:$0xff]
    %v6853 = vld [vmem:[#allocation28 + $0xf68] sm:$0xff]
    %v6854 = vld [vmem:[#allocation28 + $0xf70] sm:$0xff]
    %v6855 = vld [vmem:[#allocation28 + $0xf78] sm:$0xff]
    %v6856 = vld [vmem:[#allocation28 + $0xf80] sm:$0xff]
    %v6857 = vld [vmem:[#allocation28 + $0xf88] sm:$0xff]
    %v6858 = vld [vmem:[#allocation28 + $0xf90] sm:$0xff]
    %v6859 = vld [vmem:[#allocation28 + $0xf98] sm:$0xff]
    %v6860 = vld [vmem:[#allocation28 + $0xfa0] sm:$0xff]
    %v6861 = vld [vmem:[#allocation28 + $0xfa8] sm:$0xff]
    %v6862 = vld [vmem:[#allocation28 + $0xfb0] sm:$0xff]
    %v6863 = vld [vmem:[#allocation28 + $0xfb8] sm:$0xff]
    %v6864 = vld [vmem:[#allocation28 + $0xfc0] sm:$0xff]
    %v6865 = vld [vmem:[#allocation28 + $0xfc8] sm:$0xff]
    %v6866 = vld [vmem:[#allocation28 + $0xfd0] sm:$0xff]
    %v6867 = vld [vmem:[#allocation28 + $0xfd8] sm:$0xff]
    %v6868 = vld [vmem:[#allocation28 + $0xfe0] sm:$0xff]
    %v6869 = vld [vmem:[#allocation28 + $0xfe8] sm:$0xff]
    %v6870 = vld [vmem:[#allocation28 + $0xff0] sm:$0xff]
    %v6871 = vld [vmem:[#allocation28 + $0xff8] sm:$0xff]
    %v6872 = vld [vmem:[#allocation29] sm:$0xff]
    %v6874 = vlaneseq
    %v6875 = vshrl.u32 %v6874, 7
    %v6876 = vsub.s32 0, %v6875
    %v6877 = vrot.slane %v6872, %v6876
    %v6878 = vlaneseq
    %v6879 = vshrl.u32 %v6878, 7
    %v6880 = vsub.s32 1, %v6879
    %v6881 = vrot.slane %v6872, %v6880
    %v6882 = vlaneseq
    %v6883 = vshrl.u32 %v6882, 7
    %v6884 = vsub.s32 2, %v6883
    %v6885 = vrot.slane %v6872, %v6884
    %v6886 = vlaneseq
    %v6887 = vshrl.u32 %v6886, 7
    %v6888 = vsub.s32 3, %v6887
    %v6889 = vrot.slane %v6872, %v6888
    %v6890 = vlaneseq
    %v6891 = vshrl.u32 %v6890, 7
    %v6892 = vsub.s32 4, %v6891
    %v6893 = vrot.slane %v6872, %v6892
    %v6894 = vlaneseq
    %v6895 = vshrl.u32 %v6894, 7
    %v6896 = vsub.s32 5, %v6895
    %v6897 = vrot.slane %v6872, %v6896
    %v6898 = vlaneseq
    %v6899 = vshrl.u32 %v6898, 7
    %v6900 = vsub.s32 6, %v6899
    %v6901 = vrot.slane %v6872, %v6900
    %v6902 = vlaneseq
    %v6903 = vshrl.u32 %v6902, 7
    %v6904 = vsub.s32 7, %v6903
    %v6905 = vrot.slane %v6872, %v6904
    %v7426 = vunpack.c.l.b16 %v6360
    %v7427 = vunpack.c.h.b16 %v6360
    %v7428 = vunpack.c.l.b16 %v6361
    %v7429 = vunpack.c.h.b16 %v6361
    %v7430 = vunpack.c.l.b16 %v6362
    %v7431 = vunpack.c.h.b16 %v6362
    %v7432 = vunpack.c.l.b16 %v6363
    %v7433 = vunpack.c.h.b16 %v6363
    %v7434 = vunpack.c.l.b16 %v6364
    %v7435 = vunpack.c.h.b16 %v6364
    %v7436 = vunpack.c.l.b16 %v6365
    %v7437 = vunpack.c.h.b16 %v6365
    %v7438 = vunpack.c.l.b16 %v6366
    %v7439 = vunpack.c.h.b16 %v6366
    %v7440 = vunpack.c.l.b16 %v6367
    %v7441 = vunpack.c.h.b16 %v6367
    %v7442 = vunpack.c.l.b16 %v6368
    %v7443 = vunpack.c.h.b16 %v6368
    %v7444 = vunpack.c.l.b16 %v6369
    %v7445 = vunpack.c.h.b16 %v6369
    %v7446 = vunpack.c.l.b16 %v6370
    %v7447 = vunpack.c.h.b16 %v6370
    %v7448 = vunpack.c.l.b16 %v6371
    %v7449 = vunpack.c.h.b16 %v6371
    %v7450 = vunpack.c.l.b16 %v6372
    %v7451 = vunpack.c.h.b16 %v6372
    %v7452 = vunpack.c.l.b16 %v6373
    %v7453 = vunpack.c.h.b16 %v6373
    %v7454 = vunpack.c.l.b16 %v6374
    %v7455 = vunpack.c.h.b16 %v6374
    %v7456 = vunpack.c.l.b16 %v6375
    %v7457 = vunpack.c.h.b16 %v6375
    %v7458 = vunpack.c.l.b16 %v6376
    %v7459 = vunpack.c.h.b16 %v6376
    %v7460 = vunpack.c.l.b16 %v6377
    %v7461 = vunpack.c.h.b16 %v6377
    %v7462 = vunpack.c.l.b16 %v6378
    %v7463 = vunpack.c.h.b16 %v6378
    %v7464 = vunpack.c.l.b16 %v6379
    %v7465 = vunpack.c.h.b16 %v6379
    %v7466 = vunpack.c.l.b16 %v6380
    %v7467 = vunpack.c.h.b16 %v6380
    %v7468 = vunpack.c.l.b16 %v6381
    %v7469 = vunpack.c.h.b16 %v6381
    %v7470 = vunpack.c.l.b16 %v6382
    %v7471 = vunpack.c.h.b16 %v6382
    %v7472 = vunpack.c.l.b16 %v6383
    %v7473 = vunpack.c.h.b16 %v6383
    %v7474 = vunpack.c.l.b16 %v6384
    %v7475 = vunpack.c.h.b16 %v6384
    %v7476 = vunpack.c.l.b16 %v6385
    %v7477 = vunpack.c.h.b16 %v6385
    %v7478 = vunpack.c.l.b16 %v6386
    %v7479 = vunpack.c.h.b16 %v6386
    %v7480 = vunpack.c.l.b16 %v6387
    %v7481 = vunpack.c.h.b16 %v6387
    %v7482 = vunpack.c.l.b16 %v6388
    %v7483 = vunpack.c.h.b16 %v6388
    %v7484 = vunpack.c.l.b16 %v6389
    %v7485 = vunpack.c.h.b16 %v6389
    %v7486 = vunpack.c.l.b16 %v6390
    %v7487 = vunpack.c.h.b16 %v6390
    %v7488 = vunpack.c.l.b16 %v6391
    %v7489 = vunpack.c.h.b16 %v6391
    %v7490 = vunpack.c.l.b16 %v6392
    %v7491 = vunpack.c.h.b16 %v6392
    %v7492 = vunpack.c.l.b16 %v6393
    %v7493 = vunpack.c.h.b16 %v6393
    %v7494 = vunpack.c.l.b16 %v6394
    %v7495 = vunpack.c.h.b16 %v6394
    %v7496 = vunpack.c.l.b16 %v6395
    %v7497 = vunpack.c.h.b16 %v6395
    %v7498 = vunpack.c.l.b16 %v6396
    %v7499 = vunpack.c.h.b16 %v6396
    %v7500 = vunpack.c.l.b16 %v6397
    %v7501 = vunpack.c.h.b16 %v6397
    %v7502 = vunpack.c.l.b16 %v6398
    %v7503 = vunpack.c.h.b16 %v6398
    %v7504 = vunpack.c.l.b16 %v6399
    %v7505 = vunpack.c.h.b16 %v6399
    %v7506 = vunpack.c.l.b16 %v6400
    %v7507 = vunpack.c.h.b16 %v6400
    %v7508 = vunpack.c.l.b16 %v6401
    %v7509 = vunpack.c.h.b16 %v6401
    %v7510 = vunpack.c.l.b16 %v6402
    %v7511 = vunpack.c.h.b16 %v6402
    %v7512 = vunpack.c.l.b16 %v6403
    %v7513 = vunpack.c.h.b16 %v6403
    %v7514 = vunpack.c.l.b16 %v6404
    %v7515 = vunpack.c.h.b16 %v6404
    %v7516 = vunpack.c.l.b16 %v6405
    %v7517 = vunpack.c.h.b16 %v6405
    %v7518 = vunpack.c.l.b16 %v6406
    %v7519 = vunpack.c.h.b16 %v6406
    %v7520 = vunpack.c.l.b16 %v6407
    %v7521 = vunpack.c.h.b16 %v6407
    %v7522 = vunpack.c.l.b16 %v6408
    %v7523 = vunpack.c.h.b16 %v6408
    %v7524 = vunpack.c.l.b16 %v6409
    %v7525 = vunpack.c.h.b16 %v6409
    %v7526 = vunpack.c.l.b16 %v6410
    %v7527 = vunpack.c.h.b16 %v6410
    %v7528 = vunpack.c.l.b16 %v6411
    %v7529 = vunpack.c.h.b16 %v6411
    %v7530 = vunpack.c.l.b16 %v6412
    %v7531 = vunpack.c.h.b16 %v6412
    %v7532 = vunpack.c.l.b16 %v6413
    %v7533 = vunpack.c.h.b16 %v6413
    %v7534 = vunpack.c.l.b16 %v6414
    %v7535 = vunpack.c.h.b16 %v6414
    %v7536 = vunpack.c.l.b16 %v6415
    %v7537 = vunpack.c.h.b16 %v6415
    %v7538 = vunpack.c.l.b16 %v6416
    %v7539 = vunpack.c.h.b16 %v6416
    %v7540 = vunpack.c.l.b16 %v6417
    %v7541 = vunpack.c.h.b16 %v6417
    %v7542 = vunpack.c.l.b16 %v6418
    %v7543 = vunpack.c.h.b16 %v6418
    %v7544 = vunpack.c.l.b16 %v6419
    %v7545 = vunpack.c.h.b16 %v6419
    %v7546 = vunpack.c.l.b16 %v6420
    %v7547 = vunpack.c.h.b16 %v6420
    %v7548 = vunpack.c.l.b16 %v6421
    %v7549 = vunpack.c.h.b16 %v6421
    %v7550 = vunpack.c.l.b16 %v6422
    %v7551 = vunpack.c.h.b16 %v6422
    %v7552 = vunpack.c.l.b16 %v6423
    %v7553 = vunpack.c.h.b16 %v6423
    %v7554 = vunpack.c.l.b16 %v6424
    %v7555 = vunpack.c.h.b16 %v6424
    %v7556 = vunpack.c.l.b16 %v6425
    %v7557 = vunpack.c.h.b16 %v6425
    %v7558 = vunpack.c.l.b16 %v6426
    %v7559 = vunpack.c.h.b16 %v6426
    %v7560 = vunpack.c.l.b16 %v6427
    %v7561 = vunpack.c.h.b16 %v6427
    %v7562 = vunpack.c.l.b16 %v6428
    %v7563 = vunpack.c.h.b16 %v6428
    %v7564 = vunpack.c.l.b16 %v6429
    %v7565 = vunpack.c.h.b16 %v6429
    %v7566 = vunpack.c.l.b16 %v6430
    %v7567 = vunpack.c.h.b16 %v6430
    %v7568 = vunpack.c.l.b16 %v6431
    %v7569 = vunpack.c.h.b16 %v6431
    %v7570 = vunpack.c.l.b16 %v6432
    %v7571 = vunpack.c.h.b16 %v6432
    %v7572 = vunpack.c.l.b16 %v6433
    %v7573 = vunpack.c.h.b16 %v6433
    %v7574 = vunpack.c.l.b16 %v6434
    %v7575 = vunpack.c.h.b16 %v6434
    %v7576 = vunpack.c.l.b16 %v6435
    %v7577 = vunpack.c.h.b16 %v6435
    %v7578 = vunpack.c.l.b16 %v6436
    %v7579 = vunpack.c.h.b16 %v6436
    %v7580 = vunpack.c.l.b16 %v6437
    %v7581 = vunpack.c.h.b16 %v6437
    %v7582 = vunpack.c.l.b16 %v6438
    %v7583 = vunpack.c.h.b16 %v6438
    %v7584 = vunpack.c.l.b16 %v6439
    %v7585 = vunpack.c.h.b16 %v6439
    %v7586 = vunpack.c.l.b16 %v6440
    %v7587 = vunpack.c.h.b16 %v6440
    %v7588 = vunpack.c.l.b16 %v6441
    %v7589 = vunpack.c.h.b16 %v6441
    %v7590 = vunpack.c.l.b16 %v6442
    %v7591 = vunpack.c.h.b16 %v6442
    %v7592 = vunpack.c.l.b16 %v6443
    %v7593 = vunpack.c.h.b16 %v6443
    %v7594 = vunpack.c.l.b16 %v6444
    %v7595 = vunpack.c.h.b16 %v6444
    %v7596 = vunpack.c.l.b16 %v6445
    %v7597 = vunpack.c.h.b16 %v6445
    %v7598 = vunpack.c.l.b16 %v6446
    %v7599 = vunpack.c.h.b16 %v6446
    %v7600 = vunpack.c.l.b16 %v6447
    %v7601 = vunpack.c.h.b16 %v6447
    %v7602 = vunpack.c.l.b16 %v6448
    %v7603 = vunpack.c.h.b16 %v6448
    %v7604 = vunpack.c.l.b16 %v6449
    %v7605 = vunpack.c.h.b16 %v6449
    %v7606 = vunpack.c.l.b16 %v6450
    %v7607 = vunpack.c.h.b16 %v6450
    %v7608 = vunpack.c.l.b16 %v6451
    %v7609 = vunpack.c.h.b16 %v6451
    %v7610 = vunpack.c.l.b16 %v6452
    %v7611 = vunpack.c.h.b16 %v6452
    %v7612 = vunpack.c.l.b16 %v6453
    %v7613 = vunpack.c.h.b16 %v6453
    %v7614 = vunpack.c.l.b16 %v6454
    %v7615 = vunpack.c.h.b16 %v6454
    %v7616 = vunpack.c.l.b16 %v6455
    %v7617 = vunpack.c.h.b16 %v6455
    %v7618 = vunpack.c.l.b16 %v6456
    %v7619 = vunpack.c.h.b16 %v6456
    %v7620 = vunpack.c.l.b16 %v6457
    %v7621 = vunpack.c.h.b16 %v6457
    %v7622 = vunpack.c.l.b16 %v6458
    %v7623 = vunpack.c.h.b16 %v6458
    %v7624 = vunpack.c.l.b16 %v6459
    %v7625 = vunpack.c.h.b16 %v6459
    %v7626 = vunpack.c.l.b16 %v6460
    %v7627 = vunpack.c.h.b16 %v6460
    %v7628 = vunpack.c.l.b16 %v6461
    %v7629 = vunpack.c.h.b16 %v6461
    %v7630 = vunpack.c.l.b16 %v6462
    %v7631 = vunpack.c.h.b16 %v6462
    %v7632 = vunpack.c.l.b16 %v6463
    %v7633 = vunpack.c.h.b16 %v6463
    %v7634 = vunpack.c.l.b16 %v6464
    %v7635 = vunpack.c.h.b16 %v6464
    %v7636 = vunpack.c.l.b16 %v6465
    %v7637 = vunpack.c.h.b16 %v6465
    %v7638 = vunpack.c.l.b16 %v6466
    %v7639 = vunpack.c.h.b16 %v6466
    %v7640 = vunpack.c.l.b16 %v6467
    %v7641 = vunpack.c.h.b16 %v6467
    %v7642 = vunpack.c.l.b16 %v6468
    %v7643 = vunpack.c.h.b16 %v6468
    %v7644 = vunpack.c.l.b16 %v6469
    %v7645 = vunpack.c.h.b16 %v6469
    %v7646 = vunpack.c.l.b16 %v6470
    %v7647 = vunpack.c.h.b16 %v6470
    %v7648 = vunpack.c.l.b16 %v6471
    %v7649 = vunpack.c.h.b16 %v6471
    %v7650 = vunpack.c.l.b16 %v6472
    %v7651 = vunpack.c.h.b16 %v6472
    %v7652 = vunpack.c.l.b16 %v6473
    %v7653 = vunpack.c.h.b16 %v6473
    %v7654 = vunpack.c.l.b16 %v6474
    %v7655 = vunpack.c.h.b16 %v6474
    %v7656 = vunpack.c.l.b16 %v6475
    %v7657 = vunpack.c.h.b16 %v6475
    %v7658 = vunpack.c.l.b16 %v6476
    %v7659 = vunpack.c.h.b16 %v6476
    %v7660 = vunpack.c.l.b16 %v6477
    %v7661 = vunpack.c.h.b16 %v6477
    %v7662 = vunpack.c.l.b16 %v6478
    %v7663 = vunpack.c.h.b16 %v6478
    %v7664 = vunpack.c.l.b16 %v6479
    %v7665 = vunpack.c.h.b16 %v6479
    %v7666 = vunpack.c.l.b16 %v6480
    %v7667 = vunpack.c.h.b16 %v6480
    %v7668 = vunpack.c.l.b16 %v6481
    %v7669 = vunpack.c.h.b16 %v6481
    %v7670 = vunpack.c.l.b16 %v6482
    %v7671 = vunpack.c.h.b16 %v6482
    %v7672 = vunpack.c.l.b16 %v6483
    %v7673 = vunpack.c.h.b16 %v6483
    %v7674 = vunpack.c.l.b16 %v6484
    %v7675 = vunpack.c.h.b16 %v6484
    %v7676 = vunpack.c.l.b16 %v6485
    %v7677 = vunpack.c.h.b16 %v6485
    %v7678 = vunpack.c.l.b16 %v6486
    %v7679 = vunpack.c.h.b16 %v6486
    %v7680 = vunpack.c.l.b16 %v6487
    %v7681 = vunpack.c.h.b16 %v6487
    %v7682 = vunpack.c.l.b16 %v6488
    %v7683 = vunpack.c.h.b16 %v6488
    %v7684 = vunpack.c.l.b16 %v6489
    %v7685 = vunpack.c.h.b16 %v6489
    %v7686 = vunpack.c.l.b16 %v6490
    %v7687 = vunpack.c.h.b16 %v6490
    %v7688 = vunpack.c.l.b16 %v6491
    %v7689 = vunpack.c.h.b16 %v6491
    %v7690 = vunpack.c.l.b16 %v6492
    %v7691 = vunpack.c.h.b16 %v6492
    %v7692 = vunpack.c.l.b16 %v6493
    %v7693 = vunpack.c.h.b16 %v6493
    %v7694 = vunpack.c.l.b16 %v6494
    %v7695 = vunpack.c.h.b16 %v6494
    %v7696 = vunpack.c.l.b16 %v6495
    %v7697 = vunpack.c.h.b16 %v6495
    %v7698 = vunpack.c.l.b16 %v6496
    %v7699 = vunpack.c.h.b16 %v6496
    %v7700 = vunpack.c.l.b16 %v6497
    %v7701 = vunpack.c.h.b16 %v6497
    %v7702 = vunpack.c.l.b16 %v6498
    %v7703 = vunpack.c.h.b16 %v6498
    %v7704 = vunpack.c.l.b16 %v6499
    %v7705 = vunpack.c.h.b16 %v6499
    %v7706 = vunpack.c.l.b16 %v6500
    %v7707 = vunpack.c.h.b16 %v6500
    %v7708 = vunpack.c.l.b16 %v6501
    %v7709 = vunpack.c.h.b16 %v6501
    %v7710 = vunpack.c.l.b16 %v6502
    %v7711 = vunpack.c.h.b16 %v6502
    %v7712 = vunpack.c.l.b16 %v6503
    %v7713 = vunpack.c.h.b16 %v6503
    %v7714 = vunpack.c.l.b16 %v6504
    %v7715 = vunpack.c.h.b16 %v6504
    %v7716 = vunpack.c.l.b16 %v6505
    %v7717 = vunpack.c.h.b16 %v6505
    %v7718 = vunpack.c.l.b16 %v6506
    %v7719 = vunpack.c.h.b16 %v6506
    %v7720 = vunpack.c.l.b16 %v6507
    %v7721 = vunpack.c.h.b16 %v6507
    %v7722 = vunpack.c.l.b16 %v6508
    %v7723 = vunpack.c.h.b16 %v6508
    %v7724 = vunpack.c.l.b16 %v6509
    %v7725 = vunpack.c.h.b16 %v6509
    %v7726 = vunpack.c.l.b16 %v6510
    %v7727 = vunpack.c.h.b16 %v6510
    %v7728 = vunpack.c.l.b16 %v6511
    %v7729 = vunpack.c.h.b16 %v6511
    %v7730 = vunpack.c.l.b16 %v6512
    %v7731 = vunpack.c.h.b16 %v6512
    %v7732 = vunpack.c.l.b16 %v6513
    %v7733 = vunpack.c.h.b16 %v6513
    %v7734 = vunpack.c.l.b16 %v6514
    %v7735 = vunpack.c.h.b16 %v6514
    %v7736 = vunpack.c.l.b16 %v6515
    %v7737 = vunpack.c.h.b16 %v6515
    %v7738 = vunpack.c.l.b16 %v6516
    %v7739 = vunpack.c.h.b16 %v6516
    %v7740 = vunpack.c.l.b16 %v6517
    %v7741 = vunpack.c.h.b16 %v6517
    %v7742 = vunpack.c.l.b16 %v6518
    %v7743 = vunpack.c.h.b16 %v6518
    %v7744 = vunpack.c.l.b16 %v6519
    %v7745 = vunpack.c.h.b16 %v6519
    %v7746 = vunpack.c.l.b16 %v6520
    %v7747 = vunpack.c.h.b16 %v6520
    %v7748 = vunpack.c.l.b16 %v6521
    %v7749 = vunpack.c.h.b16 %v6521
    %v7750 = vunpack.c.l.b16 %v6522
    %v7751 = vunpack.c.h.b16 %v6522
    %v7752 = vunpack.c.l.b16 %v6523
    %v7753 = vunpack.c.h.b16 %v6523
    %v7754 = vunpack.c.l.b16 %v6524
    %v7755 = vunpack.c.h.b16 %v6524
    %v7756 = vunpack.c.l.b16 %v6525
    %v7757 = vunpack.c.h.b16 %v6525
    %v7758 = vunpack.c.l.b16 %v6526
    %v7759 = vunpack.c.h.b16 %v6526
    %v7760 = vunpack.c.l.b16 %v6527
    %v7761 = vunpack.c.h.b16 %v6527
    %v7762 = vunpack.c.l.b16 %v6528
    %v7763 = vunpack.c.h.b16 %v6528
    %v7764 = vunpack.c.l.b16 %v6529
    %v7765 = vunpack.c.h.b16 %v6529
    %v7766 = vunpack.c.l.b16 %v6530
    %v7767 = vunpack.c.h.b16 %v6530
    %v7768 = vunpack.c.l.b16 %v6531
    %v7769 = vunpack.c.h.b16 %v6531
    %v7770 = vunpack.c.l.b16 %v6532
    %v7771 = vunpack.c.h.b16 %v6532
    %v7772 = vunpack.c.l.b16 %v6533
    %v7773 = vunpack.c.h.b16 %v6533
    %v7774 = vunpack.c.l.b16 %v6534
    %v7775 = vunpack.c.h.b16 %v6534
    %v7776 = vunpack.c.l.b16 %v6535
    %v7777 = vunpack.c.h.b16 %v6535
    %v7778 = vunpack.c.l.b16 %v6536
    %v7779 = vunpack.c.h.b16 %v6536
    %v7780 = vunpack.c.l.b16 %v6537
    %v7781 = vunpack.c.h.b16 %v6537
    %v7782 = vunpack.c.l.b16 %v6538
    %v7783 = vunpack.c.h.b16 %v6538
    %v7784 = vunpack.c.l.b16 %v6539
    %v7785 = vunpack.c.h.b16 %v6539
    %v7786 = vunpack.c.l.b16 %v6540
    %v7787 = vunpack.c.h.b16 %v6540
    %v7788 = vunpack.c.l.b16 %v6541
    %v7789 = vunpack.c.h.b16 %v6541
    %v7790 = vunpack.c.l.b16 %v6542
    %v7791 = vunpack.c.h.b16 %v6542
    %v7792 = vunpack.c.l.b16 %v6543
    %v7793 = vunpack.c.h.b16 %v6543
    %v7794 = vunpack.c.l.b16 %v6544
    %v7795 = vunpack.c.h.b16 %v6544
    %v7796 = vunpack.c.l.b16 %v6545
    %v7797 = vunpack.c.h.b16 %v6545
    %v7798 = vunpack.c.l.b16 %v6546
    %v7799 = vunpack.c.h.b16 %v6546
    %v7800 = vunpack.c.l.b16 %v6547
    %v7801 = vunpack.c.h.b16 %v6547
    %v7802 = vunpack.c.l.b16 %v6548
    %v7803 = vunpack.c.h.b16 %v6548
    %v7804 = vunpack.c.l.b16 %v6549
    %v7805 = vunpack.c.h.b16 %v6549
    %v7806 = vunpack.c.l.b16 %v6550
    %v7807 = vunpack.c.h.b16 %v6550
    %v7808 = vunpack.c.l.b16 %v6551
    %v7809 = vunpack.c.h.b16 %v6551
    %v7810 = vunpack.c.l.b16 %v6552
    %v7811 = vunpack.c.h.b16 %v6552
    %v7812 = vunpack.c.l.b16 %v6553
    %v7813 = vunpack.c.h.b16 %v6553
    %v7814 = vunpack.c.l.b16 %v6554
    %v7815 = vunpack.c.h.b16 %v6554
    %v7816 = vunpack.c.l.b16 %v6555
    %v7817 = vunpack.c.h.b16 %v6555
    %v7818 = vunpack.c.l.b16 %v6556
    %v7819 = vunpack.c.h.b16 %v6556
    %v7820 = vunpack.c.l.b16 %v6557
    %v7821 = vunpack.c.h.b16 %v6557
    %v7822 = vunpack.c.l.b16 %v6558
    %v7823 = vunpack.c.h.b16 %v6558
    %v7824 = vunpack.c.l.b16 %v6559
    %v7825 = vunpack.c.h.b16 %v6559
    %v7826 = vunpack.c.l.b16 %v6560
    %v7827 = vunpack.c.h.b16 %v6560
    %v7828 = vunpack.c.l.b16 %v6561
    %v7829 = vunpack.c.h.b16 %v6561
    %v7830 = vunpack.c.l.b16 %v6562
    %v7831 = vunpack.c.h.b16 %v6562
    %v7832 = vunpack.c.l.b16 %v6563
    %v7833 = vunpack.c.h.b16 %v6563
    %v7834 = vunpack.c.l.b16 %v6564
    %v7835 = vunpack.c.h.b16 %v6564
    %v7836 = vunpack.c.l.b16 %v6565
    %v7837 = vunpack.c.h.b16 %v6565
    %v7838 = vunpack.c.l.b16 %v6566
    %v7839 = vunpack.c.h.b16 %v6566
    %v7840 = vunpack.c.l.b16 %v6567
    %v7841 = vunpack.c.h.b16 %v6567
    %v7842 = vunpack.c.l.b16 %v6568
    %v7843 = vunpack.c.h.b16 %v6568
    %v7844 = vunpack.c.l.b16 %v6569
    %v7845 = vunpack.c.h.b16 %v6569
    %v7846 = vunpack.c.l.b16 %v6570
    %v7847 = vunpack.c.h.b16 %v6570
    %v7848 = vunpack.c.l.b16 %v6571
    %v7849 = vunpack.c.h.b16 %v6571
    %v7850 = vunpack.c.l.b16 %v6572
    %v7851 = vunpack.c.h.b16 %v6572
    %v7852 = vunpack.c.l.b16 %v6573
    %v7853 = vunpack.c.h.b16 %v6573
    %v7854 = vunpack.c.l.b16 %v6574
    %v7855 = vunpack.c.h.b16 %v6574
    %v7856 = vunpack.c.l.b16 %v6575
    %v7857 = vunpack.c.h.b16 %v6575
    %v7858 = vunpack.c.l.b16 %v6576
    %v7859 = vunpack.c.h.b16 %v6576
    %v7860 = vunpack.c.l.b16 %v6577
    %v7861 = vunpack.c.h.b16 %v6577
    %v7862 = vunpack.c.l.b16 %v6578
    %v7863 = vunpack.c.h.b16 %v6578
    %v7864 = vunpack.c.l.b16 %v6579
    %v7865 = vunpack.c.h.b16 %v6579
    %v7866 = vunpack.c.l.b16 %v6580
    %v7867 = vunpack.c.h.b16 %v6580
    %v7868 = vunpack.c.l.b16 %v6581
    %v7869 = vunpack.c.h.b16 %v6581
    %v7870 = vunpack.c.l.b16 %v6582
    %v7871 = vunpack.c.h.b16 %v6582
    %v7872 = vunpack.c.l.b16 %v6583
    %v7873 = vunpack.c.h.b16 %v6583
    %v7874 = vunpack.c.l.b16 %v6584
    %v7875 = vunpack.c.h.b16 %v6584
    %v7876 = vunpack.c.l.b16 %v6585
    %v7877 = vunpack.c.h.b16 %v6585
    %v7878 = vunpack.c.l.b16 %v6586
    %v7879 = vunpack.c.h.b16 %v6586
    %v7880 = vunpack.c.l.b16 %v6587
    %v7881 = vunpack.c.h.b16 %v6587
    %v7882 = vunpack.c.l.b16 %v6588
    %v7883 = vunpack.c.h.b16 %v6588
    %v7884 = vunpack.c.l.b16 %v6589
    %v7885 = vunpack.c.h.b16 %v6589
    %v7886 = vunpack.c.l.b16 %v6590
    %v7887 = vunpack.c.h.b16 %v6590
    %v7888 = vunpack.c.l.b16 %v6591
    %v7889 = vunpack.c.h.b16 %v6591
    %v7890 = vunpack.c.l.b16 %v6592
    %v7891 = vunpack.c.h.b16 %v6592
    %v7892 = vunpack.c.l.b16 %v6593
    %v7893 = vunpack.c.h.b16 %v6593
    %v7894 = vunpack.c.l.b16 %v6594
    %v7895 = vunpack.c.h.b16 %v6594
    %v7896 = vunpack.c.l.b16 %v6595
    %v7897 = vunpack.c.h.b16 %v6595
    %v7898 = vunpack.c.l.b16 %v6596
    %v7899 = vunpack.c.h.b16 %v6596
    %v7900 = vunpack.c.l.b16 %v6597
    %v7901 = vunpack.c.h.b16 %v6597
    %v7902 = vunpack.c.l.b16 %v6598
    %v7903 = vunpack.c.h.b16 %v6598
    %v7904 = vunpack.c.l.b16 %v6599
    %v7905 = vunpack.c.h.b16 %v6599
    %v7906 = vunpack.c.l.b16 %v6600
    %v7907 = vunpack.c.h.b16 %v6600
    %v7908 = vunpack.c.l.b16 %v6601
    %v7909 = vunpack.c.h.b16 %v6601
    %v7910 = vunpack.c.l.b16 %v6602
    %v7911 = vunpack.c.h.b16 %v6602
    %v7912 = vunpack.c.l.b16 %v6603
    %v7913 = vunpack.c.h.b16 %v6603
    %v7914 = vunpack.c.l.b16 %v6604
    %v7915 = vunpack.c.h.b16 %v6604
    %v7916 = vunpack.c.l.b16 %v6605
    %v7917 = vunpack.c.h.b16 %v6605
    %v7918 = vunpack.c.l.b16 %v6606
    %v7919 = vunpack.c.h.b16 %v6606
    %v7920 = vunpack.c.l.b16 %v6607
    %v7921 = vunpack.c.h.b16 %v6607
    %v7922 = vunpack.c.l.b16 %v6608
    %v7923 = vunpack.c.h.b16 %v6608
    %v7924 = vunpack.c.l.b16 %v6609
    %v7925 = vunpack.c.h.b16 %v6609
    %v7926 = vunpack.c.l.b16 %v6610
    %v7927 = vunpack.c.h.b16 %v6610
    %v7928 = vunpack.c.l.b16 %v6611
    %v7929 = vunpack.c.h.b16 %v6611
    %v7930 = vunpack.c.l.b16 %v6612
    %v7931 = vunpack.c.h.b16 %v6612
    %v7932 = vunpack.c.l.b16 %v6613
    %v7933 = vunpack.c.h.b16 %v6613
    %v7934 = vunpack.c.l.b16 %v6614
    %v7935 = vunpack.c.h.b16 %v6614
    %v7936 = vunpack.c.l.b16 %v6615
    %v7937 = vunpack.c.h.b16 %v6615
    %v7938 = vunpack.c.l.b16 %v6616
    %v7939 = vunpack.c.h.b16 %v6616
    %v7940 = vunpack.c.l.b16 %v6617
    %v7941 = vunpack.c.h.b16 %v6617
    %v7942 = vunpack.c.l.b16 %v6618
    %v7943 = vunpack.c.h.b16 %v6618
    %v7944 = vunpack.c.l.b16 %v6619
    %v7945 = vunpack.c.h.b16 %v6619
    %v7946 = vunpack.c.l.b16 %v6620
    %v7947 = vunpack.c.h.b16 %v6620
    %v7948 = vunpack.c.l.b16 %v6621
    %v7949 = vunpack.c.h.b16 %v6621
    %v7950 = vunpack.c.l.b16 %v6622
    %v7951 = vunpack.c.h.b16 %v6622
    %v7952 = vunpack.c.l.b16 %v6623
    %v7953 = vunpack.c.h.b16 %v6623
    %v7954 = vunpack.c.l.b16 %v6624
    %v7955 = vunpack.c.h.b16 %v6624
    %v7956 = vunpack.c.l.b16 %v6625
    %v7957 = vunpack.c.h.b16 %v6625
    %v7958 = vunpack.c.l.b16 %v6626
    %v7959 = vunpack.c.h.b16 %v6626
    %v7960 = vunpack.c.l.b16 %v6627
    %v7961 = vunpack.c.h.b16 %v6627
    %v7962 = vunpack.c.l.b16 %v6628
    %v7963 = vunpack.c.h.b16 %v6628
    %v7964 = vunpack.c.l.b16 %v6629
    %v7965 = vunpack.c.h.b16 %v6629
    %v7966 = vunpack.c.l.b16 %v6630
    %v7967 = vunpack.c.h.b16 %v6630
    %v7968 = vunpack.c.l.b16 %v6631
    %v7969 = vunpack.c.h.b16 %v6631
    %v7970 = vunpack.c.l.b16 %v6632
    %v7971 = vunpack.c.h.b16 %v6632
    %v7972 = vunpack.c.l.b16 %v6633
    %v7973 = vunpack.c.h.b16 %v6633
    %v7974 = vunpack.c.l.b16 %v6634
    %v7975 = vunpack.c.h.b16 %v6634
    %v7976 = vunpack.c.l.b16 %v6635
    %v7977 = vunpack.c.h.b16 %v6635
    %v7978 = vunpack.c.l.b16 %v6636
    %v7979 = vunpack.c.h.b16 %v6636
    %v7980 = vunpack.c.l.b16 %v6637
    %v7981 = vunpack.c.h.b16 %v6637
    %v7982 = vunpack.c.l.b16 %v6638
    %v7983 = vunpack.c.h.b16 %v6638
    %v7984 = vunpack.c.l.b16 %v6639
    %v7985 = vunpack.c.h.b16 %v6639
    %v7986 = vunpack.c.l.b16 %v6640
    %v7987 = vunpack.c.h.b16 %v6640
    %v7988 = vunpack.c.l.b16 %v6641
    %v7989 = vunpack.c.h.b16 %v6641
    %v7990 = vunpack.c.l.b16 %v6642
    %v7991 = vunpack.c.h.b16 %v6642
    %v7992 = vunpack.c.l.b16 %v6643
    %v7993 = vunpack.c.h.b16 %v6643
    %v7994 = vunpack.c.l.b16 %v6644
    %v7995 = vunpack.c.h.b16 %v6644
    %v7996 = vunpack.c.l.b16 %v6645
    %v7997 = vunpack.c.h.b16 %v6645
    %v7998 = vunpack.c.l.b16 %v6646
    %v7999 = vunpack.c.h.b16 %v6646
    %v8000 = vunpack.c.l.b16 %v6647
    %v8001 = vunpack.c.h.b16 %v6647
    %v8002 = vunpack.c.l.b16 %v6648
    %v8003 = vunpack.c.h.b16 %v6648
    %v8004 = vunpack.c.l.b16 %v6649
    %v8005 = vunpack.c.h.b16 %v6649
    %v8006 = vunpack.c.l.b16 %v6650
    %v8007 = vunpack.c.h.b16 %v6650
    %v8008 = vunpack.c.l.b16 %v6651
    %v8009 = vunpack.c.h.b16 %v6651
    %v8010 = vunpack.c.l.b16 %v6652
    %v8011 = vunpack.c.h.b16 %v6652
    %v8012 = vunpack.c.l.b16 %v6653
    %v8013 = vunpack.c.h.b16 %v6653
    %v8014 = vunpack.c.l.b16 %v6654
    %v8015 = vunpack.c.h.b16 %v6654
    %v8016 = vunpack.c.l.b16 %v6655
    %v8017 = vunpack.c.h.b16 %v6655
    %v8018 = vunpack.c.l.b16 %v6656
    %v8019 = vunpack.c.h.b16 %v6656
    %v8020 = vunpack.c.l.b16 %v6657
    %v8021 = vunpack.c.h.b16 %v6657
    %v8022 = vunpack.c.l.b16 %v6658
    %v8023 = vunpack.c.h.b16 %v6658
    %v8024 = vunpack.c.l.b16 %v6659
    %v8025 = vunpack.c.h.b16 %v6659
    %v8026 = vunpack.c.l.b16 %v6660
    %v8027 = vunpack.c.h.b16 %v6660
    %v8028 = vunpack.c.l.b16 %v6661
    %v8029 = vunpack.c.h.b16 %v6661
    %v8030 = vunpack.c.l.b16 %v6662
    %v8031 = vunpack.c.h.b16 %v6662
    %v8032 = vunpack.c.l.b16 %v6663
    %v8033 = vunpack.c.h.b16 %v6663
    %v8034 = vunpack.c.l.b16 %v6664
    %v8035 = vunpack.c.h.b16 %v6664
    %v8036 = vunpack.c.l.b16 %v6665
    %v8037 = vunpack.c.h.b16 %v6665
    %v8038 = vunpack.c.l.b16 %v6666
    %v8039 = vunpack.c.h.b16 %v6666
    %v8040 = vunpack.c.l.b16 %v6667
    %v8041 = vunpack.c.h.b16 %v6667
    %v8042 = vunpack.c.l.b16 %v6668
    %v8043 = vunpack.c.h.b16 %v6668
    %v8044 = vunpack.c.l.b16 %v6669
    %v8045 = vunpack.c.h.b16 %v6669
    %v8046 = vunpack.c.l.b16 %v6670
    %v8047 = vunpack.c.h.b16 %v6670
    %v8048 = vunpack.c.l.b16 %v6671
    %v8049 = vunpack.c.h.b16 %v6671
    %v8050 = vunpack.c.l.b16 %v6672
    %v8051 = vunpack.c.h.b16 %v6672
    %v8052 = vunpack.c.l.b16 %v6673
    %v8053 = vunpack.c.h.b16 %v6673
    %v8054 = vunpack.c.l.b16 %v6674
    %v8055 = vunpack.c.h.b16 %v6674
    %v8056 = vunpack.c.l.b16 %v6675
    %v8057 = vunpack.c.h.b16 %v6675
    %v8058 = vunpack.c.l.b16 %v6676
    %v8059 = vunpack.c.h.b16 %v6676
    %v8060 = vunpack.c.l.b16 %v6677
    %v8061 = vunpack.c.h.b16 %v6677
    %v8062 = vunpack.c.l.b16 %v6678
    %v8063 = vunpack.c.h.b16 %v6678
    %v8064 = vunpack.c.l.b16 %v6679
    %v8065 = vunpack.c.h.b16 %v6679
    %v8066 = vunpack.c.l.b16 %v6680
    %v8067 = vunpack.c.h.b16 %v6680
    %v8068 = vunpack.c.l.b16 %v6681
    %v8069 = vunpack.c.h.b16 %v6681
    %v8070 = vunpack.c.l.b16 %v6682
    %v8071 = vunpack.c.h.b16 %v6682
    %v8072 = vunpack.c.l.b16 %v6683
    %v8073 = vunpack.c.h.b16 %v6683
    %v8074 = vunpack.c.l.b16 %v6684
    %v8075 = vunpack.c.h.b16 %v6684
    %v8076 = vunpack.c.l.b16 %v6685
    %v8077 = vunpack.c.h.b16 %v6685
    %v8078 = vunpack.c.l.b16 %v6686
    %v8079 = vunpack.c.h.b16 %v6686
    %v8080 = vunpack.c.l.b16 %v6687
    %v8081 = vunpack.c.h.b16 %v6687
    %v8082 = vunpack.c.l.b16 %v6688
    %v8083 = vunpack.c.h.b16 %v6688
    %v8084 = vunpack.c.l.b16 %v6689
    %v8085 = vunpack.c.h.b16 %v6689
    %v8086 = vunpack.c.l.b16 %v6690
    %v8087 = vunpack.c.h.b16 %v6690
    %v8088 = vunpack.c.l.b16 %v6691
    %v8089 = vunpack.c.h.b16 %v6691
    %v8090 = vunpack.c.l.b16 %v6692
    %v8091 = vunpack.c.h.b16 %v6692
    %v8092 = vunpack.c.l.b16 %v6693
    %v8093 = vunpack.c.h.b16 %v6693
    %v8094 = vunpack.c.l.b16 %v6694
    %v8095 = vunpack.c.h.b16 %v6694
    %v8096 = vunpack.c.l.b16 %v6695
    %v8097 = vunpack.c.h.b16 %v6695
    %v8098 = vunpack.c.l.b16 %v6696
    %v8099 = vunpack.c.h.b16 %v6696
    %v8100 = vunpack.c.l.b16 %v6697
    %v8101 = vunpack.c.h.b16 %v6697
    %v8102 = vunpack.c.l.b16 %v6698
    %v8103 = vunpack.c.h.b16 %v6698
    %v8104 = vunpack.c.l.b16 %v6699
    %v8105 = vunpack.c.h.b16 %v6699
    %v8106 = vunpack.c.l.b16 %v6700
    %v8107 = vunpack.c.h.b16 %v6700
    %v8108 = vunpack.c.l.b16 %v6701
    %v8109 = vunpack.c.h.b16 %v6701
    %v8110 = vunpack.c.l.b16 %v6702
    %v8111 = vunpack.c.h.b16 %v6702
    %v8112 = vunpack.c.l.b16 %v6703
    %v8113 = vunpack.c.h.b16 %v6703
    %v8114 = vunpack.c.l.b16 %v6704
    %v8115 = vunpack.c.h.b16 %v6704
    %v8116 = vunpack.c.l.b16 %v6705
    %v8117 = vunpack.c.h.b16 %v6705
    %v8118 = vunpack.c.l.b16 %v6706
    %v8119 = vunpack.c.h.b16 %v6706
    %v8120 = vunpack.c.l.b16 %v6707
    %v8121 = vunpack.c.h.b16 %v6707
    %v8122 = vunpack.c.l.b16 %v6708
    %v8123 = vunpack.c.h.b16 %v6708
    %v8124 = vunpack.c.l.b16 %v6709
    %v8125 = vunpack.c.h.b16 %v6709
    %v8126 = vunpack.c.l.b16 %v6710
    %v8127 = vunpack.c.h.b16 %v6710
    %v8128 = vunpack.c.l.b16 %v6711
    %v8129 = vunpack.c.h.b16 %v6711
    %v8130 = vunpack.c.l.b16 %v6712
    %v8131 = vunpack.c.h.b16 %v6712
    %v8132 = vunpack.c.l.b16 %v6713
    %v8133 = vunpack.c.h.b16 %v6713
    %v8134 = vunpack.c.l.b16 %v6714
    %v8135 = vunpack.c.h.b16 %v6714
    %v8136 = vunpack.c.l.b16 %v6715
    %v8137 = vunpack.c.h.b16 %v6715
    %v8138 = vunpack.c.l.b16 %v6716
    %v8139 = vunpack.c.h.b16 %v6716
    %v8140 = vunpack.c.l.b16 %v6717
    %v8141 = vunpack.c.h.b16 %v6717
    %v8142 = vunpack.c.l.b16 %v6718
    %v8143 = vunpack.c.h.b16 %v6718
    %v8144 = vunpack.c.l.b16 %v6719
    %v8145 = vunpack.c.h.b16 %v6719
    %v8146 = vunpack.c.l.b16 %v6720
    %v8147 = vunpack.c.h.b16 %v6720
    %v8148 = vunpack.c.l.b16 %v6721
    %v8149 = vunpack.c.h.b16 %v6721
    %v8150 = vunpack.c.l.b16 %v6722
    %v8151 = vunpack.c.h.b16 %v6722
    %v8152 = vunpack.c.l.b16 %v6723
    %v8153 = vunpack.c.h.b16 %v6723
    %v8154 = vunpack.c.l.b16 %v6724
    %v8155 = vunpack.c.h.b16 %v6724
    %v8156 = vunpack.c.l.b16 %v6725
    %v8157 = vunpack.c.h.b16 %v6725
    %v8158 = vunpack.c.l.b16 %v6726
    %v8159 = vunpack.c.h.b16 %v6726
    %v8160 = vunpack.c.l.b16 %v6727
    %v8161 = vunpack.c.h.b16 %v6727
    %v8162 = vunpack.c.l.b16 %v6728
    %v8163 = vunpack.c.h.b16 %v6728
    %v8164 = vunpack.c.l.b16 %v6729
    %v8165 = vunpack.c.h.b16 %v6729
    %v8166 = vunpack.c.l.b16 %v6730
    %v8167 = vunpack.c.h.b16 %v6730
    %v8168 = vunpack.c.l.b16 %v6731
    %v8169 = vunpack.c.h.b16 %v6731
    %v8170 = vunpack.c.l.b16 %v6732
    %v8171 = vunpack.c.h.b16 %v6732
    %v8172 = vunpack.c.l.b16 %v6733
    %v8173 = vunpack.c.h.b16 %v6733
    %v8174 = vunpack.c.l.b16 %v6734
    %v8175 = vunpack.c.h.b16 %v6734
    %v8176 = vunpack.c.l.b16 %v6735
    %v8177 = vunpack.c.h.b16 %v6735
    %v8178 = vunpack.c.l.b16 %v6736
    %v8179 = vunpack.c.h.b16 %v6736
    %v8180 = vunpack.c.l.b16 %v6737
    %v8181 = vunpack.c.h.b16 %v6737
    %v8182 = vunpack.c.l.b16 %v6738
    %v8183 = vunpack.c.h.b16 %v6738
    %v8184 = vunpack.c.l.b16 %v6739
    %v8185 = vunpack.c.h.b16 %v6739
    %v8186 = vunpack.c.l.b16 %v6740
    %v8187 = vunpack.c.h.b16 %v6740
    %v8188 = vunpack.c.l.b16 %v6741
    %v8189 = vunpack.c.h.b16 %v6741
    %v8190 = vunpack.c.l.b16 %v6742
    %v8191 = vunpack.c.h.b16 %v6742
    %v8192 = vunpack.c.l.b16 %v6743
    %v8193 = vunpack.c.h.b16 %v6743
    %v8194 = vunpack.c.l.b16 %v6744
    %v8195 = vunpack.c.h.b16 %v6744
    %v8196 = vunpack.c.l.b16 %v6745
    %v8197 = vunpack.c.h.b16 %v6745
    %v8198 = vunpack.c.l.b16 %v6746
    %v8199 = vunpack.c.h.b16 %v6746
    %v8200 = vunpack.c.l.b16 %v6747
    %v8201 = vunpack.c.h.b16 %v6747
    %v8202 = vunpack.c.l.b16 %v6748
    %v8203 = vunpack.c.h.b16 %v6748
    %v8204 = vunpack.c.l.b16 %v6749
    %v8205 = vunpack.c.h.b16 %v6749
    %v8206 = vunpack.c.l.b16 %v6750
    %v8207 = vunpack.c.h.b16 %v6750
    %v8208 = vunpack.c.l.b16 %v6751
    %v8209 = vunpack.c.h.b16 %v6751
    %v8210 = vunpack.c.l.b16 %v6752
    %v8211 = vunpack.c.h.b16 %v6752
    %v8212 = vunpack.c.l.b16 %v6753
    %v8213 = vunpack.c.h.b16 %v6753
    %v8214 = vunpack.c.l.b16 %v6754
    %v8215 = vunpack.c.h.b16 %v6754
    %v8216 = vunpack.c.l.b16 %v6755
    %v8217 = vunpack.c.h.b16 %v6755
    %v8218 = vunpack.c.l.b16 %v6756
    %v8219 = vunpack.c.h.b16 %v6756
    %v8220 = vunpack.c.l.b16 %v6757
    %v8221 = vunpack.c.h.b16 %v6757
    %v8222 = vunpack.c.l.b16 %v6758
    %v8223 = vunpack.c.h.b16 %v6758
    %v8224 = vunpack.c.l.b16 %v6759
    %v8225 = vunpack.c.h.b16 %v6759
    %v8226 = vunpack.c.l.b16 %v6760
    %v8227 = vunpack.c.h.b16 %v6760
    %v8228 = vunpack.c.l.b16 %v6761
    %v8229 = vunpack.c.h.b16 %v6761
    %v8230 = vunpack.c.l.b16 %v6762
    %v8231 = vunpack.c.h.b16 %v6762
    %v8232 = vunpack.c.l.b16 %v6763
    %v8233 = vunpack.c.h.b16 %v6763
    %v8234 = vunpack.c.l.b16 %v6764
    %v8235 = vunpack.c.h.b16 %v6764
    %v8236 = vunpack.c.l.b16 %v6765
    %v8237 = vunpack.c.h.b16 %v6765
    %v8238 = vunpack.c.l.b16 %v6766
    %v8239 = vunpack.c.h.b16 %v6766
    %v8240 = vunpack.c.l.b16 %v6767
    %v8241 = vunpack.c.h.b16 %v6767
    %v8242 = vunpack.c.l.b16 %v6768
    %v8243 = vunpack.c.h.b16 %v6768
    %v8244 = vunpack.c.l.b16 %v6769
    %v8245 = vunpack.c.h.b16 %v6769
    %v8246 = vunpack.c.l.b16 %v6770
    %v8247 = vunpack.c.h.b16 %v6770
    %v8248 = vunpack.c.l.b16 %v6771
    %v8249 = vunpack.c.h.b16 %v6771
    %v8250 = vunpack.c.l.b16 %v6772
    %v8251 = vunpack.c.h.b16 %v6772
    %v8252 = vunpack.c.l.b16 %v6773
    %v8253 = vunpack.c.h.b16 %v6773
    %v8254 = vunpack.c.l.b16 %v6774
    %v8255 = vunpack.c.h.b16 %v6774
    %v8256 = vunpack.c.l.b16 %v6775
    %v8257 = vunpack.c.h.b16 %v6775
    %v8258 = vunpack.c.l.b16 %v6776
    %v8259 = vunpack.c.h.b16 %v6776
    %v8260 = vunpack.c.l.b16 %v6777
    %v8261 = vunpack.c.h.b16 %v6777
    %v8262 = vunpack.c.l.b16 %v6778
    %v8263 = vunpack.c.h.b16 %v6778
    %v8264 = vunpack.c.l.b16 %v6779
    %v8265 = vunpack.c.h.b16 %v6779
    %v8266 = vunpack.c.l.b16 %v6780
    %v8267 = vunpack.c.h.b16 %v6780
    %v8268 = vunpack.c.l.b16 %v6781
    %v8269 = vunpack.c.h.b16 %v6781
    %v8270 = vunpack.c.l.b16 %v6782
    %v8271 = vunpack.c.h.b16 %v6782
    %v8272 = vunpack.c.l.b16 %v6783
    %v8273 = vunpack.c.h.b16 %v6783
    %v8274 = vunpack.c.l.b16 %v6784
    %v8275 = vunpack.c.h.b16 %v6784
    %v8276 = vunpack.c.l.b16 %v6785
    %v8277 = vunpack.c.h.b16 %v6785
    %v8278 = vunpack.c.l.b16 %v6786
    %v8279 = vunpack.c.h.b16 %v6786
    %v8280 = vunpack.c.l.b16 %v6787
    %v8281 = vunpack.c.h.b16 %v6787
    %v8282 = vunpack.c.l.b16 %v6788
    %v8283 = vunpack.c.h.b16 %v6788
    %v8284 = vunpack.c.l.b16 %v6789
    %v8285 = vunpack.c.h.b16 %v6789
    %v8286 = vunpack.c.l.b16 %v6790
    %v8287 = vunpack.c.h.b16 %v6790
    %v8288 = vunpack.c.l.b16 %v6791
    %v8289 = vunpack.c.h.b16 %v6791
    %v8290 = vunpack.c.l.b16 %v6792
    %v8291 = vunpack.c.h.b16 %v6792
    %v8292 = vunpack.c.l.b16 %v6793
    %v8293 = vunpack.c.h.b16 %v6793
    %v8294 = vunpack.c.l.b16 %v6794
    %v8295 = vunpack.c.h.b16 %v6794
    %v8296 = vunpack.c.l.b16 %v6795
    %v8297 = vunpack.c.h.b16 %v6795
    %v8298 = vunpack.c.l.b16 %v6796
    %v8299 = vunpack.c.h.b16 %v6796
    %v8300 = vunpack.c.l.b16 %v6797
    %v8301 = vunpack.c.h.b16 %v6797
    %v8302 = vunpack.c.l.b16 %v6798
    %v8303 = vunpack.c.h.b16 %v6798
    %v8304 = vunpack.c.l.b16 %v6799
    %v8305 = vunpack.c.h.b16 %v6799
    %v8306 = vunpack.c.l.b16 %v6800
    %v8307 = vunpack.c.h.b16 %v6800
    %v8308 = vunpack.c.l.b16 %v6801
    %v8309 = vunpack.c.h.b16 %v6801
    %v8310 = vunpack.c.l.b16 %v6802
    %v8311 = vunpack.c.h.b16 %v6802
    %v8312 = vunpack.c.l.b16 %v6803
    %v8313 = vunpack.c.h.b16 %v6803
    %v8314 = vunpack.c.l.b16 %v6804
    %v8315 = vunpack.c.h.b16 %v6804
    %v8316 = vunpack.c.l.b16 %v6805
    %v8317 = vunpack.c.h.b16 %v6805
    %v8318 = vunpack.c.l.b16 %v6806
    %v8319 = vunpack.c.h.b16 %v6806
    %v8320 = vunpack.c.l.b16 %v6807
    %v8321 = vunpack.c.h.b16 %v6807
    %v8322 = vunpack.c.l.b16 %v6808
    %v8323 = vunpack.c.h.b16 %v6808
    %v8324 = vunpack.c.l.b16 %v6809
    %v8325 = vunpack.c.h.b16 %v6809
    %v8326 = vunpack.c.l.b16 %v6810
    %v8327 = vunpack.c.h.b16 %v6810
    %v8328 = vunpack.c.l.b16 %v6811
    %v8329 = vunpack.c.h.b16 %v6811
    %v8330 = vunpack.c.l.b16 %v6812
    %v8331 = vunpack.c.h.b16 %v6812
    %v8332 = vunpack.c.l.b16 %v6813
    %v8333 = vunpack.c.h.b16 %v6813
    %v8334 = vunpack.c.l.b16 %v6814
    %v8335 = vunpack.c.h.b16 %v6814
    %v8336 = vunpack.c.l.b16 %v6815
    %v8337 = vunpack.c.h.b16 %v6815
    %v8338 = vunpack.c.l.b16 %v6816
    %v8339 = vunpack.c.h.b16 %v6816
    %v8340 = vunpack.c.l.b16 %v6817
    %v8341 = vunpack.c.h.b16 %v6817
    %v8342 = vunpack.c.l.b16 %v6818
    %v8343 = vunpack.c.h.b16 %v6818
    %v8344 = vunpack.c.l.b16 %v6819
    %v8345 = vunpack.c.h.b16 %v6819
    %v8346 = vunpack.c.l.b16 %v6820
    %v8347 = vunpack.c.h.b16 %v6820
    %v8348 = vunpack.c.l.b16 %v6821
    %v8349 = vunpack.c.h.b16 %v6821
    %v8350 = vunpack.c.l.b16 %v6822
    %v8351 = vunpack.c.h.b16 %v6822
    %v8352 = vunpack.c.l.b16 %v6823
    %v8353 = vunpack.c.h.b16 %v6823
    %v8354 = vunpack.c.l.b16 %v6824
    %v8355 = vunpack.c.h.b16 %v6824
    %v8356 = vunpack.c.l.b16 %v6825
    %v8357 = vunpack.c.h.b16 %v6825
    %v8358 = vunpack.c.l.b16 %v6826
    %v8359 = vunpack.c.h.b16 %v6826
    %v8360 = vunpack.c.l.b16 %v6827
    %v8361 = vunpack.c.h.b16 %v6827
    %v8362 = vunpack.c.l.b16 %v6828
    %v8363 = vunpack.c.h.b16 %v6828
    %v8364 = vunpack.c.l.b16 %v6829
    %v8365 = vunpack.c.h.b16 %v6829
    %v8366 = vunpack.c.l.b16 %v6830
    %v8367 = vunpack.c.h.b16 %v6830
    %v8368 = vunpack.c.l.b16 %v6831
    %v8369 = vunpack.c.h.b16 %v6831
    %v8370 = vunpack.c.l.b16 %v6832
    %v8371 = vunpack.c.h.b16 %v6832
    %v8372 = vunpack.c.l.b16 %v6833
    %v8373 = vunpack.c.h.b16 %v6833
    %v8374 = vunpack.c.l.b16 %v6834
    %v8375 = vunpack.c.h.b16 %v6834
    %v8376 = vunpack.c.l.b16 %v6835
    %v8377 = vunpack.c.h.b16 %v6835
    %v8378 = vunpack.c.l.b16 %v6836
    %v8379 = vunpack.c.h.b16 %v6836
    %v8380 = vunpack.c.l.b16 %v6837
    %v8381 = vunpack.c.h.b16 %v6837
    %v8382 = vunpack.c.l.b16 %v6838
    %v8383 = vunpack.c.h.b16 %v6838
    %v8384 = vunpack.c.l.b16 %v6839
    %v8385 = vunpack.c.h.b16 %v6839
    %v8386 = vunpack.c.l.b16 %v6840
    %v8387 = vunpack.c.h.b16 %v6840
    %v8388 = vunpack.c.l.b16 %v6841
    %v8389 = vunpack.c.h.b16 %v6841
    %v8390 = vunpack.c.l.b16 %v6842
    %v8391 = vunpack.c.h.b16 %v6842
    %v8392 = vunpack.c.l.b16 %v6843
    %v8393 = vunpack.c.h.b16 %v6843
    %v8394 = vunpack.c.l.b16 %v6844
    %v8395 = vunpack.c.h.b16 %v6844
    %v8396 = vunpack.c.l.b16 %v6845
    %v8397 = vunpack.c.h.b16 %v6845
    %v8398 = vunpack.c.l.b16 %v6846
    %v8399 = vunpack.c.h.b16 %v6846
    %v8400 = vunpack.c.l.b16 %v6847
    %v8401 = vunpack.c.h.b16 %v6847
    %v8402 = vunpack.c.l.b16 %v6848
    %v8403 = vunpack.c.h.b16 %v6848
    %v8404 = vunpack.c.l.b16 %v6849
    %v8405 = vunpack.c.h.b16 %v6849
    %v8406 = vunpack.c.l.b16 %v6850
    %v8407 = vunpack.c.h.b16 %v6850
    %v8408 = vunpack.c.l.b16 %v6851
    %v8409 = vunpack.c.h.b16 %v6851
    %v8410 = vunpack.c.l.b16 %v6852
    %v8411 = vunpack.c.h.b16 %v6852
    %v8412 = vunpack.c.l.b16 %v6853
    %v8413 = vunpack.c.h.b16 %v6853
    %v8414 = vunpack.c.l.b16 %v6854
    %v8415 = vunpack.c.h.b16 %v6854
    %v8416 = vunpack.c.l.b16 %v6855
    %v8417 = vunpack.c.h.b16 %v6855
    %v8418 = vunpack.c.l.b16 %v6856
    %v8419 = vunpack.c.h.b16 %v6856
    %v8420 = vunpack.c.l.b16 %v6857
    %v8421 = vunpack.c.h.b16 %v6857
    %v8422 = vunpack.c.l.b16 %v6858
    %v8423 = vunpack.c.h.b16 %v6858
    %v8424 = vunpack.c.l.b16 %v6859
    %v8425 = vunpack.c.h.b16 %v6859
    %v8426 = vunpack.c.l.b16 %v6860
    %v8427 = vunpack.c.h.b16 %v6860
    %v8428 = vunpack.c.l.b16 %v6861
    %v8429 = vunpack.c.h.b16 %v6861
    %v8430 = vunpack.c.l.b16 %v6862
    %v8431 = vunpack.c.h.b16 %v6862
    %v8432 = vunpack.c.l.b16 %v6863
    %v8433 = vunpack.c.h.b16 %v6863
    %v8434 = vunpack.c.l.b16 %v6864
    %v8435 = vunpack.c.h.b16 %v6864
    %v8436 = vunpack.c.l.b16 %v6865
    %v8437 = vunpack.c.h.b16 %v6865
    %v8438 = vunpack.c.l.b16 %v6866
    %v8439 = vunpack.c.h.b16 %v6866
    %v8440 = vunpack.c.l.b16 %v6867
    %v8441 = vunpack.c.h.b16 %v6867
    %v8442 = vunpack.c.l.b16 %v6868
    %v8443 = vunpack.c.h.b16 %v6868
    %v8444 = vunpack.c.l.b16 %v6869
    %v8445 = vunpack.c.h.b16 %v6869
    %v8446 = vunpack.c.l.b16 %v6870
    %v8447 = vunpack.c.h.b16 %v6870
    %v8448 = vunpack.c.l.b16 %v6871
    %v8449 = vunpack.c.h.b16 %v6871
    %v8450 = vpack.c.b16 %v7434, %v7426
    %v8451 = vpack.c.b16 %v7435, %v7427
    %v8452 = vpack.c.b16 %v7436, %v7428
    %v8453 = vpack.c.b16 %v7437, %v7429
    %v8454 = vpack.c.b16 %v7438, %v7430
    %v8455 = vpack.c.b16 %v7439, %v7431
    %v8456 = vpack.c.b16 %v7440, %v7432
    %v8457 = vpack.c.b16 %v7441, %v7433
    %v8458 = vpack.c.b16 %v7450, %v7442
    %v8459 = vpack.c.b16 %v7451, %v7443
    %v8460 = vpack.c.b16 %v7452, %v7444
    %v8461 = vpack.c.b16 %v7453, %v7445
    %v8462 = vpack.c.b16 %v7454, %v7446
    %v8463 = vpack.c.b16 %v7455, %v7447
    %v8464 = vpack.c.b16 %v7456, %v7448
    %v8465 = vpack.c.b16 %v7457, %v7449
    %v8466 = vpack.c.b16 %v7466, %v7458
    %v8467 = vpack.c.b16 %v7467, %v7459
    %v8468 = vpack.c.b16 %v7468, %v7460
    %v8469 = vpack.c.b16 %v7469, %v7461
    %v8470 = vpack.c.b16 %v7470, %v7462
    %v8471 = vpack.c.b16 %v7471, %v7463
    %v8472 = vpack.c.b16 %v7472, %v7464
    %v8473 = vpack.c.b16 %v7473, %v7465
    %v8474 = vpack.c.b16 %v7482, %v7474
    %v8475 = vpack.c.b16 %v7483, %v7475
    %v8476 = vpack.c.b16 %v7484, %v7476
    %v8477 = vpack.c.b16 %v7485, %v7477
    %v8478 = vpack.c.b16 %v7486, %v7478
    %v8479 = vpack.c.b16 %v7487, %v7479
    %v8480 = vpack.c.b16 %v7488, %v7480
    %v8481 = vpack.c.b16 %v7489, %v7481
    %v8482 = vpack.c.b16 %v7498, %v7490
    %v8483 = vpack.c.b16 %v7499, %v7491
    %v8484 = vpack.c.b16 %v7500, %v7492
    %v8485 = vpack.c.b16 %v7501, %v7493
    %v8486 = vpack.c.b16 %v7502, %v7494
    %v8487 = vpack.c.b16 %v7503, %v7495
    %v8488 = vpack.c.b16 %v7504, %v7496
    %v8489 = vpack.c.b16 %v7505, %v7497
    %v8490 = vpack.c.b16 %v7514, %v7506
    %v8491 = vpack.c.b16 %v7515, %v7507
    %v8492 = vpack.c.b16 %v7516, %v7508
    %v8493 = vpack.c.b16 %v7517, %v7509
    %v8494 = vpack.c.b16 %v7518, %v7510
    %v8495 = vpack.c.b16 %v7519, %v7511
    %v8496 = vpack.c.b16 %v7520, %v7512
    %v8497 = vpack.c.b16 %v7521, %v7513
    %v8498 = vpack.c.b16 %v7530, %v7522
    %v8499 = vpack.c.b16 %v7531, %v7523
    %v8500 = vpack.c.b16 %v7532, %v7524
    %v8501 = vpack.c.b16 %v7533, %v7525
    %v8502 = vpack.c.b16 %v7534, %v7526
    %v8503 = vpack.c.b16 %v7535, %v7527
    %v8504 = vpack.c.b16 %v7536, %v7528
    %v8505 = vpack.c.b16 %v7537, %v7529
    %v8506 = vpack.c.b16 %v7546, %v7538
    %v8507 = vpack.c.b16 %v7547, %v7539
    %v8508 = vpack.c.b16 %v7548, %v7540
    %v8509 = vpack.c.b16 %v7549, %v7541
    %v8510 = vpack.c.b16 %v7550, %v7542
    %v8511 = vpack.c.b16 %v7551, %v7543
    %v8512 = vpack.c.b16 %v7552, %v7544
    %v8513 = vpack.c.b16 %v7553, %v7545
    %v8514 = vpack.c.b16 %v7562, %v7554
    %v8515 = vpack.c.b16 %v7563, %v7555
    %v8516 = vpack.c.b16 %v7564, %v7556
    %v8517 = vpack.c.b16 %v7565, %v7557
    %v8518 = vpack.c.b16 %v7566, %v7558
    %v8519 = vpack.c.b16 %v7567, %v7559
    %v8520 = vpack.c.b16 %v7568, %v7560
    %v8521 = vpack.c.b16 %v7569, %v7561
    %v8522 = vpack.c.b16 %v7578, %v7570
    %v8523 = vpack.c.b16 %v7579, %v7571
    %v8524 = vpack.c.b16 %v7580, %v7572
    %v8525 = vpack.c.b16 %v7581, %v7573
    %v8526 = vpack.c.b16 %v7582, %v7574
    %v8527 = vpack.c.b16 %v7583, %v7575
    %v8528 = vpack.c.b16 %v7584, %v7576
    %v8529 = vpack.c.b16 %v7585, %v7577
    %v8530 = vpack.c.b16 %v7594, %v7586
    %v8531 = vpack.c.b16 %v7595, %v7587
    %v8532 = vpack.c.b16 %v7596, %v7588
    %v8533 = vpack.c.b16 %v7597, %v7589
    %v8534 = vpack.c.b16 %v7598, %v7590
    %v8535 = vpack.c.b16 %v7599, %v7591
    %v8536 = vpack.c.b16 %v7600, %v7592
    %v8537 = vpack.c.b16 %v7601, %v7593
    %v8538 = vpack.c.b16 %v7610, %v7602
    %v8539 = vpack.c.b16 %v7611, %v7603
    %v8540 = vpack.c.b16 %v7612, %v7604
    %v8541 = vpack.c.b16 %v7613, %v7605
    %v8542 = vpack.c.b16 %v7614, %v7606
    %v8543 = vpack.c.b16 %v7615, %v7607
    %v8544 = vpack.c.b16 %v7616, %v7608
    %v8545 = vpack.c.b16 %v7617, %v7609
    %v8546 = vpack.c.b16 %v7626, %v7618
    %v8547 = vpack.c.b16 %v7627, %v7619
    %v8548 = vpack.c.b16 %v7628, %v7620
    %v8549 = vpack.c.b16 %v7629, %v7621
    %v8550 = vpack.c.b16 %v7630, %v7622
    %v8551 = vpack.c.b16 %v7631, %v7623
    %v8552 = vpack.c.b16 %v7632, %v7624
    %v8553 = vpack.c.b16 %v7633, %v7625
    %v8554 = vpack.c.b16 %v7642, %v7634
    %v8555 = vpack.c.b16 %v7643, %v7635
    %v8556 = vpack.c.b16 %v7644, %v7636
    %v8557 = vpack.c.b16 %v7645, %v7637
    %v8558 = vpack.c.b16 %v7646, %v7638
    %v8559 = vpack.c.b16 %v7647, %v7639
    %v8560 = vpack.c.b16 %v7648, %v7640
    %v8561 = vpack.c.b16 %v7649, %v7641
    %v8562 = vpack.c.b16 %v7658, %v7650
    %v8563 = vpack.c.b16 %v7659, %v7651
    %v8564 = vpack.c.b16 %v7660, %v7652
    %v8565 = vpack.c.b16 %v7661, %v7653
    %v8566 = vpack.c.b16 %v7662, %v7654
    %v8567 = vpack.c.b16 %v7663, %v7655
    %v8568 = vpack.c.b16 %v7664, %v7656
    %v8569 = vpack.c.b16 %v7665, %v7657
    %v8570 = vpack.c.b16 %v7674, %v7666
    %v8571 = vpack.c.b16 %v7675, %v7667
    %v8572 = vpack.c.b16 %v7676, %v7668
    %v8573 = vpack.c.b16 %v7677, %v7669
    %v8574 = vpack.c.b16 %v7678, %v7670
    %v8575 = vpack.c.b16 %v7679, %v7671
    %v8576 = vpack.c.b16 %v7680, %v7672
    %v8577 = vpack.c.b16 %v7681, %v7673
    %v8578 = vpack.c.b16 %v7690, %v7682
    %v8579 = vpack.c.b16 %v7691, %v7683
    %v8580 = vpack.c.b16 %v7692, %v7684
    %v8581 = vpack.c.b16 %v7693, %v7685
    %v8582 = vpack.c.b16 %v7694, %v7686
    %v8583 = vpack.c.b16 %v7695, %v7687
    %v8584 = vpack.c.b16 %v7696, %v7688
    %v8585 = vpack.c.b16 %v7697, %v7689
    %v8586 = vpack.c.b16 %v7706, %v7698
    %v8587 = vpack.c.b16 %v7707, %v7699
    %v8588 = vpack.c.b16 %v7708, %v7700
    %v8589 = vpack.c.b16 %v7709, %v7701
    %v8590 = vpack.c.b16 %v7710, %v7702
    %v8591 = vpack.c.b16 %v7711, %v7703
    %v8592 = vpack.c.b16 %v7712, %v7704
    %v8593 = vpack.c.b16 %v7713, %v7705
    %v8594 = vpack.c.b16 %v7722, %v7714
    %v8595 = vpack.c.b16 %v7723, %v7715
    %v8596 = vpack.c.b16 %v7724, %v7716
    %v8597 = vpack.c.b16 %v7725, %v7717
    %v8598 = vpack.c.b16 %v7726, %v7718
    %v8599 = vpack.c.b16 %v7727, %v7719
    %v8600 = vpack.c.b16 %v7728, %v7720
    %v8601 = vpack.c.b16 %v7729, %v7721
    %v8602 = vpack.c.b16 %v7738, %v7730
    %v8603 = vpack.c.b16 %v7739, %v7731
    %v8604 = vpack.c.b16 %v7740, %v7732
    %v8605 = vpack.c.b16 %v7741, %v7733
    %v8606 = vpack.c.b16 %v7742, %v7734
    %v8607 = vpack.c.b16 %v7743, %v7735
    %v8608 = vpack.c.b16 %v7744, %v7736
    %v8609 = vpack.c.b16 %v7745, %v7737
    %v8610 = vpack.c.b16 %v7754, %v7746
    %v8611 = vpack.c.b16 %v7755, %v7747
    %v8612 = vpack.c.b16 %v7756, %v7748
    %v8613 = vpack.c.b16 %v7757, %v7749
    %v8614 = vpack.c.b16 %v7758, %v7750
    %v8615 = vpack.c.b16 %v7759, %v7751
    %v8616 = vpack.c.b16 %v7760, %v7752
    %v8617 = vpack.c.b16 %v7761, %v7753
    %v8618 = vpack.c.b16 %v7770, %v7762
    %v8619 = vpack.c.b16 %v7771, %v7763
    %v8620 = vpack.c.b16 %v7772, %v7764
    %v8621 = vpack.c.b16 %v7773, %v7765
    %v8622 = vpack.c.b16 %v7774, %v7766
    %v8623 = vpack.c.b16 %v7775, %v7767
    %v8624 = vpack.c.b16 %v7776, %v7768
    %v8625 = vpack.c.b16 %v7777, %v7769
    %v8626 = vpack.c.b16 %v7786, %v7778
    %v8627 = vpack.c.b16 %v7787, %v7779
    %v8628 = vpack.c.b16 %v7788, %v7780
    %v8629 = vpack.c.b16 %v7789, %v7781
    %v8630 = vpack.c.b16 %v7790, %v7782
    %v8631 = vpack.c.b16 %v7791, %v7783
    %v8632 = vpack.c.b16 %v7792, %v7784
    %v8633 = vpack.c.b16 %v7793, %v7785
    %v8634 = vpack.c.b16 %v7802, %v7794
    %v8635 = vpack.c.b16 %v7803, %v7795
    %v8636 = vpack.c.b16 %v7804, %v7796
    %v8637 = vpack.c.b16 %v7805, %v7797
    %v8638 = vpack.c.b16 %v7806, %v7798
    %v8639 = vpack.c.b16 %v7807, %v7799
    %v8640 = vpack.c.b16 %v7808, %v7800
    %v8641 = vpack.c.b16 %v7809, %v7801
    %v8642 = vpack.c.b16 %v7818, %v7810
    %v8643 = vpack.c.b16 %v7819, %v7811
    %v8644 = vpack.c.b16 %v7820, %v7812
    %v8645 = vpack.c.b16 %v7821, %v7813
    %v8646 = vpack.c.b16 %v7822, %v7814
    %v8647 = vpack.c.b16 %v7823, %v7815
    %v8648 = vpack.c.b16 %v7824, %v7816
    %v8649 = vpack.c.b16 %v7825, %v7817
    %v8650 = vpack.c.b16 %v7834, %v7826
    %v8651 = vpack.c.b16 %v7835, %v7827
    %v8652 = vpack.c.b16 %v7836, %v7828
    %v8653 = vpack.c.b16 %v7837, %v7829
    %v8654 = vpack.c.b16 %v7838, %v7830
    %v8655 = vpack.c.b16 %v7839, %v7831
    %v8656 = vpack.c.b16 %v7840, %v7832
    %v8657 = vpack.c.b16 %v7841, %v7833
    %v8658 = vpack.c.b16 %v7850, %v7842
    %v8659 = vpack.c.b16 %v7851, %v7843
    %v8660 = vpack.c.b16 %v7852, %v7844
    %v8661 = vpack.c.b16 %v7853, %v7845
    %v8662 = vpack.c.b16 %v7854, %v7846
    %v8663 = vpack.c.b16 %v7855, %v7847
    %v8664 = vpack.c.b16 %v7856, %v7848
    %v8665 = vpack.c.b16 %v7857, %v7849
    %v8666 = vpack.c.b16 %v7866, %v7858
    %v8667 = vpack.c.b16 %v7867, %v7859
    %v8668 = vpack.c.b16 %v7868, %v7860
    %v8669 = vpack.c.b16 %v7869, %v7861
    %v8670 = vpack.c.b16 %v7870, %v7862
    %v8671 = vpack.c.b16 %v7871, %v7863
    %v8672 = vpack.c.b16 %v7872, %v7864
    %v8673 = vpack.c.b16 %v7873, %v7865
    %v8674 = vpack.c.b16 %v7882, %v7874
    %v8675 = vpack.c.b16 %v7883, %v7875
    %v8676 = vpack.c.b16 %v7884, %v7876
    %v8677 = vpack.c.b16 %v7885, %v7877
    %v8678 = vpack.c.b16 %v7886, %v7878
    %v8679 = vpack.c.b16 %v7887, %v7879
    %v8680 = vpack.c.b16 %v7888, %v7880
    %v8681 = vpack.c.b16 %v7889, %v7881
    %v8682 = vpack.c.b16 %v7898, %v7890
    %v8683 = vpack.c.b16 %v7899, %v7891
    %v8684 = vpack.c.b16 %v7900, %v7892
    %v8685 = vpack.c.b16 %v7901, %v7893
    %v8686 = vpack.c.b16 %v7902, %v7894
    %v8687 = vpack.c.b16 %v7903, %v7895
    %v8688 = vpack.c.b16 %v7904, %v7896
    %v8689 = vpack.c.b16 %v7905, %v7897
    %v8690 = vpack.c.b16 %v7914, %v7906
    %v8691 = vpack.c.b16 %v7915, %v7907
    %v8692 = vpack.c.b16 %v7916, %v7908
    %v8693 = vpack.c.b16 %v7917, %v7909
    %v8694 = vpack.c.b16 %v7918, %v7910
    %v8695 = vpack.c.b16 %v7919, %v7911
    %v8696 = vpack.c.b16 %v7920, %v7912
    %v8697 = vpack.c.b16 %v7921, %v7913
    %v8698 = vpack.c.b16 %v7930, %v7922
    %v8699 = vpack.c.b16 %v7931, %v7923
    %v8700 = vpack.c.b16 %v7932, %v7924
    %v8701 = vpack.c.b16 %v7933, %v7925
    %v8702 = vpack.c.b16 %v7934, %v7926
    %v8703 = vpack.c.b16 %v7935, %v7927
    %v8704 = vpack.c.b16 %v7936, %v7928
    %v8705 = vpack.c.b16 %v7937, %v7929
    %v8706 = vpack.c.b16 %v7946, %v7938
    %v8707 = vpack.c.b16 %v7947, %v7939
    %v8708 = vpack.c.b16 %v7948, %v7940
    %v8709 = vpack.c.b16 %v7949, %v7941
    %v8710 = vpack.c.b16 %v7950, %v7942
    %v8711 = vpack.c.b16 %v7951, %v7943
    %v8712 = vpack.c.b16 %v7952, %v7944
    %v8713 = vpack.c.b16 %v7953, %v7945
    %v8714 = vpack.c.b16 %v7962, %v7954
    %v8715 = vpack.c.b16 %v7963, %v7955
    %v8716 = vpack.c.b16 %v7964, %v7956
    %v8717 = vpack.c.b16 %v7965, %v7957
    %v8718 = vpack.c.b16 %v7966, %v7958
    %v8719 = vpack.c.b16 %v7967, %v7959
    %v8720 = vpack.c.b16 %v7968, %v7960
    %v8721 = vpack.c.b16 %v7969, %v7961
    %v8722 = vpack.c.b16 %v7978, %v7970
    %v8723 = vpack.c.b16 %v7979, %v7971
    %v8724 = vpack.c.b16 %v7980, %v7972
    %v8725 = vpack.c.b16 %v7981, %v7973
    %v8726 = vpack.c.b16 %v7982, %v7974
    %v8727 = vpack.c.b16 %v7983, %v7975
    %v8728 = vpack.c.b16 %v7984, %v7976
    %v8729 = vpack.c.b16 %v7985, %v7977
    %v8730 = vpack.c.b16 %v7994, %v7986
    %v8731 = vpack.c.b16 %v7995, %v7987
    %v8732 = vpack.c.b16 %v7996, %v7988
    %v8733 = vpack.c.b16 %v7997, %v7989
    %v8734 = vpack.c.b16 %v7998, %v7990
    %v8735 = vpack.c.b16 %v7999, %v7991
    %v8736 = vpack.c.b16 %v8000, %v7992
    %v8737 = vpack.c.b16 %v8001, %v7993
    %v8738 = vpack.c.b16 %v8010, %v8002
    %v8739 = vpack.c.b16 %v8011, %v8003
    %v8740 = vpack.c.b16 %v8012, %v8004
    %v8741 = vpack.c.b16 %v8013, %v8005
    %v8742 = vpack.c.b16 %v8014, %v8006
    %v8743 = vpack.c.b16 %v8015, %v8007
    %v8744 = vpack.c.b16 %v8016, %v8008
    %v8745 = vpack.c.b16 %v8017, %v8009
    %v8746 = vpack.c.b16 %v8026, %v8018
    %v8747 = vpack.c.b16 %v8027, %v8019
    %v8748 = vpack.c.b16 %v8028, %v8020
    %v8749 = vpack.c.b16 %v8029, %v8021
    %v8750 = vpack.c.b16 %v8030, %v8022
    %v8751 = vpack.c.b16 %v8031, %v8023
    %v8752 = vpack.c.b16 %v8032, %v8024
    %v8753 = vpack.c.b16 %v8033, %v8025
    %v8754 = vpack.c.b16 %v8042, %v8034
    %v8755 = vpack.c.b16 %v8043, %v8035
    %v8756 = vpack.c.b16 %v8044, %v8036
    %v8757 = vpack.c.b16 %v8045, %v8037
    %v8758 = vpack.c.b16 %v8046, %v8038
    %v8759 = vpack.c.b16 %v8047, %v8039
    %v8760 = vpack.c.b16 %v8048, %v8040
    %v8761 = vpack.c.b16 %v8049, %v8041
    %v8762 = vpack.c.b16 %v8058, %v8050
    %v8763 = vpack.c.b16 %v8059, %v8051
    %v8764 = vpack.c.b16 %v8060, %v8052
    %v8765 = vpack.c.b16 %v8061, %v8053
    %v8766 = vpack.c.b16 %v8062, %v8054
    %v8767 = vpack.c.b16 %v8063, %v8055
    %v8768 = vpack.c.b16 %v8064, %v8056
    %v8769 = vpack.c.b16 %v8065, %v8057
    %v8770 = vpack.c.b16 %v8074, %v8066
    %v8771 = vpack.c.b16 %v8075, %v8067
    %v8772 = vpack.c.b16 %v8076, %v8068
    %v8773 = vpack.c.b16 %v8077, %v8069
    %v8774 = vpack.c.b16 %v8078, %v8070
    %v8775 = vpack.c.b16 %v8079, %v8071
    %v8776 = vpack.c.b16 %v8080, %v8072
    %v8777 = vpack.c.b16 %v8081, %v8073
    %v8778 = vpack.c.b16 %v8090, %v8082
    %v8779 = vpack.c.b16 %v8091, %v8083
    %v8780 = vpack.c.b16 %v8092, %v8084
    %v8781 = vpack.c.b16 %v8093, %v8085
    %v8782 = vpack.c.b16 %v8094, %v8086
    %v8783 = vpack.c.b16 %v8095, %v8087
    %v8784 = vpack.c.b16 %v8096, %v8088
    %v8785 = vpack.c.b16 %v8097, %v8089
    %v8786 = vpack.c.b16 %v8106, %v8098
    %v8787 = vpack.c.b16 %v8107, %v8099
    %v8788 = vpack.c.b16 %v8108, %v8100
    %v8789 = vpack.c.b16 %v8109, %v8101
    %v8790 = vpack.c.b16 %v8110, %v8102
    %v8791 = vpack.c.b16 %v8111, %v8103
    %v8792 = vpack.c.b16 %v8112, %v8104
    %v8793 = vpack.c.b16 %v8113, %v8105
    %v8794 = vpack.c.b16 %v8122, %v8114
    %v8795 = vpack.c.b16 %v8123, %v8115
    %v8796 = vpack.c.b16 %v8124, %v8116
    %v8797 = vpack.c.b16 %v8125, %v8117
    %v8798 = vpack.c.b16 %v8126, %v8118
    %v8799 = vpack.c.b16 %v8127, %v8119
    %v8800 = vpack.c.b16 %v8128, %v8120
    %v8801 = vpack.c.b16 %v8129, %v8121
    %v8802 = vpack.c.b16 %v8138, %v8130
    %v8803 = vpack.c.b16 %v8139, %v8131
    %v8804 = vpack.c.b16 %v8140, %v8132
    %v8805 = vpack.c.b16 %v8141, %v8133
    %v8806 = vpack.c.b16 %v8142, %v8134
    %v8807 = vpack.c.b16 %v8143, %v8135
    %v8808 = vpack.c.b16 %v8144, %v8136
    %v8809 = vpack.c.b16 %v8145, %v8137
    %v8810 = vpack.c.b16 %v8154, %v8146
    %v8811 = vpack.c.b16 %v8155, %v8147
    %v8812 = vpack.c.b16 %v8156, %v8148
    %v8813 = vpack.c.b16 %v8157, %v8149
    %v8814 = vpack.c.b16 %v8158, %v8150
    %v8815 = vpack.c.b16 %v8159, %v8151
    %v8816 = vpack.c.b16 %v8160, %v8152
    %v8817 = vpack.c.b16 %v8161, %v8153
    %v8818 = vpack.c.b16 %v8170, %v8162
    %v8819 = vpack.c.b16 %v8171, %v8163
    %v8820 = vpack.c.b16 %v8172, %v8164
    %v8821 = vpack.c.b16 %v8173, %v8165
    %v8822 = vpack.c.b16 %v8174, %v8166
    %v8823 = vpack.c.b16 %v8175, %v8167
    %v8824 = vpack.c.b16 %v8176, %v8168
    %v8825 = vpack.c.b16 %v8177, %v8169
    %v8826 = vpack.c.b16 %v8186, %v8178
    %v8827 = vpack.c.b16 %v8187, %v8179
    %v8828 = vpack.c.b16 %v8188, %v8180
    %v8829 = vpack.c.b16 %v8189, %v8181
    %v8830 = vpack.c.b16 %v8190, %v8182
    %v8831 = vpack.c.b16 %v8191, %v8183
    %v8832 = vpack.c.b16 %v8192, %v8184
    %v8833 = vpack.c.b16 %v8193, %v8185
    %v8834 = vpack.c.b16 %v8202, %v8194
    %v8835 = vpack.c.b16 %v8203, %v8195
    %v8836 = vpack.c.b16 %v8204, %v8196
    %v8837 = vpack.c.b16 %v8205, %v8197
    %v8838 = vpack.c.b16 %v8206, %v8198
    %v8839 = vpack.c.b16 %v8207, %v8199
    %v8840 = vpack.c.b16 %v8208, %v8200
    %v8841 = vpack.c.b16 %v8209, %v8201
    %v8842 = vpack.c.b16 %v8218, %v8210
    %v8843 = vpack.c.b16 %v8219, %v8211
    %v8844 = vpack.c.b16 %v8220, %v8212
    %v8845 = vpack.c.b16 %v8221, %v8213
    %v8846 = vpack.c.b16 %v8222, %v8214
    %v8847 = vpack.c.b16 %v8223, %v8215
    %v8848 = vpack.c.b16 %v8224, %v8216
    %v8849 = vpack.c.b16 %v8225, %v8217
    %v8850 = vpack.c.b16 %v8234, %v8226
    %v8851 = vpack.c.b16 %v8235, %v8227
    %v8852 = vpack.c.b16 %v8236, %v8228
    %v8853 = vpack.c.b16 %v8237, %v8229
    %v8854 = vpack.c.b16 %v8238, %v8230
    %v8855 = vpack.c.b16 %v8239, %v8231
    %v8856 = vpack.c.b16 %v8240, %v8232
    %v8857 = vpack.c.b16 %v8241, %v8233
    %v8858 = vpack.c.b16 %v8250, %v8242
    %v8859 = vpack.c.b16 %v8251, %v8243
    %v8860 = vpack.c.b16 %v8252, %v8244
    %v8861 = vpack.c.b16 %v8253, %v8245
    %v8862 = vpack.c.b16 %v8254, %v8246
    %v8863 = vpack.c.b16 %v8255, %v8247
    %v8864 = vpack.c.b16 %v8256, %v8248
    %v8865 = vpack.c.b16 %v8257, %v8249
    %v8866 = vpack.c.b16 %v8266, %v8258
    %v8867 = vpack.c.b16 %v8267, %v8259
    %v8868 = vpack.c.b16 %v8268, %v8260
    %v8869 = vpack.c.b16 %v8269, %v8261
    %v8870 = vpack.c.b16 %v8270, %v8262
    %v8871 = vpack.c.b16 %v8271, %v8263
    %v8872 = vpack.c.b16 %v8272, %v8264
    %v8873 = vpack.c.b16 %v8273, %v8265
    %v8874 = vpack.c.b16 %v8282, %v8274
    %v8875 = vpack.c.b16 %v8283, %v8275
    %v8876 = vpack.c.b16 %v8284, %v8276
    %v8877 = vpack.c.b16 %v8285, %v8277
    %v8878 = vpack.c.b16 %v8286, %v8278
    %v8879 = vpack.c.b16 %v8287, %v8279
    %v8880 = vpack.c.b16 %v8288, %v8280
    %v8881 = vpack.c.b16 %v8289, %v8281
    %v8882 = vpack.c.b16 %v8298, %v8290
    %v8883 = vpack.c.b16 %v8299, %v8291
    %v8884 = vpack.c.b16 %v8300, %v8292
    %v8885 = vpack.c.b16 %v8301, %v8293
    %v8886 = vpack.c.b16 %v8302, %v8294
    %v8887 = vpack.c.b16 %v8303, %v8295
    %v8888 = vpack.c.b16 %v8304, %v8296
    %v8889 = vpack.c.b16 %v8305, %v8297
    %v8890 = vpack.c.b16 %v8314, %v8306
    %v8891 = vpack.c.b16 %v8315, %v8307
    %v8892 = vpack.c.b16 %v8316, %v8308
    %v8893 = vpack.c.b16 %v8317, %v8309
    %v8894 = vpack.c.b16 %v8318, %v8310
    %v8895 = vpack.c.b16 %v8319, %v8311
    %v8896 = vpack.c.b16 %v8320, %v8312
    %v8897 = vpack.c.b16 %v8321, %v8313
    %v8898 = vpack.c.b16 %v8330, %v8322
    %v8899 = vpack.c.b16 %v8331, %v8323
    %v8900 = vpack.c.b16 %v8332, %v8324
    %v8901 = vpack.c.b16 %v8333, %v8325
    %v8902 = vpack.c.b16 %v8334, %v8326
    %v8903 = vpack.c.b16 %v8335, %v8327
    %v8904 = vpack.c.b16 %v8336, %v8328
    %v8905 = vpack.c.b16 %v8337, %v8329
    %v8906 = vpack.c.b16 %v8346, %v8338
    %v8907 = vpack.c.b16 %v8347, %v8339
    %v8908 = vpack.c.b16 %v8348, %v8340
    %v8909 = vpack.c.b16 %v8349, %v8341
    %v8910 = vpack.c.b16 %v8350, %v8342
    %v8911 = vpack.c.b16 %v8351, %v8343
    %v8912 = vpack.c.b16 %v8352, %v8344
    %v8913 = vpack.c.b16 %v8353, %v8345
    %v8914 = vpack.c.b16 %v8362, %v8354
    %v8915 = vpack.c.b16 %v8363, %v8355
    %v8916 = vpack.c.b16 %v8364, %v8356
    %v8917 = vpack.c.b16 %v8365, %v8357
    %v8918 = vpack.c.b16 %v8366, %v8358
    %v8919 = vpack.c.b16 %v8367, %v8359
    %v8920 = vpack.c.b16 %v8368, %v8360
    %v8921 = vpack.c.b16 %v8369, %v8361
    %v8922 = vpack.c.b16 %v8378, %v8370
    %v8923 = vpack.c.b16 %v8379, %v8371
    %v8924 = vpack.c.b16 %v8380, %v8372
    %v8925 = vpack.c.b16 %v8381, %v8373
    %v8926 = vpack.c.b16 %v8382, %v8374
    %v8927 = vpack.c.b16 %v8383, %v8375
    %v8928 = vpack.c.b16 %v8384, %v8376
    %v8929 = vpack.c.b16 %v8385, %v8377
    %v8930 = vpack.c.b16 %v8394, %v8386
    %v8931 = vpack.c.b16 %v8395, %v8387
    %v8932 = vpack.c.b16 %v8396, %v8388
    %v8933 = vpack.c.b16 %v8397, %v8389
    %v8934 = vpack.c.b16 %v8398, %v8390
    %v8935 = vpack.c.b16 %v8399, %v8391
    %v8936 = vpack.c.b16 %v8400, %v8392
    %v8937 = vpack.c.b16 %v8401, %v8393
    %v8938 = vpack.c.b16 %v8410, %v8402
    %v8939 = vpack.c.b16 %v8411, %v8403
    %v8940 = vpack.c.b16 %v8412, %v8404
    %v8941 = vpack.c.b16 %v8413, %v8405
    %v8942 = vpack.c.b16 %v8414, %v8406
    %v8943 = vpack.c.b16 %v8415, %v8407
    %v8944 = vpack.c.b16 %v8416, %v8408
    %v8945 = vpack.c.b16 %v8417, %v8409
    %v8946 = vpack.c.b16 %v8426, %v8418
    %v8947 = vpack.c.b16 %v8427, %v8419
    %v8948 = vpack.c.b16 %v8428, %v8420
    %v8949 = vpack.c.b16 %v8429, %v8421
    %v8950 = vpack.c.b16 %v8430, %v8422
    %v8951 = vpack.c.b16 %v8431, %v8423
    %v8952 = vpack.c.b16 %v8432, %v8424
    %v8953 = vpack.c.b16 %v8433, %v8425
    %v8954 = vpack.c.b16 %v8442, %v8434
    %v8955 = vpack.c.b16 %v8443, %v8435
    %v8956 = vpack.c.b16 %v8444, %v8436
    %v8957 = vpack.c.b16 %v8445, %v8437
    %v8958 = vpack.c.b16 %v8446, %v8438
    %v8959 = vpack.c.b16 %v8447, %v8439
    %v8960 = vpack.c.b16 %v8448, %v8440
    %v8961 = vpack.c.b16 %v8449, %v8441
    %9474 = vmatprep.subr.bf16.mxu0 %v8507
    %9475 = vmatpush1.bf16.msra.mxu0 %v8506
    %9476 = vmatprep.subr.bf16.mxu0 %v8499
    %9477 = vmatpush1.bf16.msra.mxu0 %v8498
    %9478 = vmatprep.subr.bf16.mxu0 %v8491
    %9479 = vmatpush1.bf16.msra.mxu0 %v8490
    %9480 = vmatprep.subr.bf16.mxu0 %v8483
    %9481 = vmatpush1.bf16.msra.mxu0 %v8482
    %9482 = vmatprep.subr.bf16.mxu0 %v8475
    %9483 = vmatpush1.bf16.msra.mxu0 %v8474
    %9484 = vmatprep.subr.bf16.mxu0 %v8467
    %9485 = vmatpush1.bf16.msra.mxu0 %v8466
    %9486 = vmatprep.subr.bf16.mxu0 %v8459
    %9487 = vmatpush1.bf16.msra.mxu0 %v8458
    %9488 = vmatprep.subr.bf16.mxu0 %v8451
    %9489 = vmatpush1.bf16.msra.mxu0 %v8450
    %9490 = vmatprep.subr.bf16.mxu0 %v8571
    %9491 = vmatpush2.bf16.msra.mxu0 %v8570
    %9492 = vmatprep.subr.bf16.mxu0 %v8563
    %9493 = vmatpush2.bf16.msra.mxu0 %v8562
    %9494 = vmatprep.subr.bf16.mxu0 %v8555
    %9495 = vmatpush2.bf16.msra.mxu0 %v8554
    %9496 = vmatprep.subr.bf16.mxu0 %v8547
    %9497 = vmatpush2.bf16.msra.mxu0 %v8546
    %9498 = vmatprep.subr.bf16.mxu0 %v8539
    %9499 = vmatpush2.bf16.msra.mxu0 %v8538
    %9500 = vmatprep.subr.bf16.mxu0 %v8531
    %9501 = vmatpush2.bf16.msra.mxu0 %v8530
    %9502 = vmatprep.subr.bf16.mxu0 %v8523
    %9503 = vmatpush2.bf16.msra.mxu0 %v8522
    %9504 = vmatprep.subr.bf16.mxu0 %v8515
    %9505 = vmatpush2.bf16.msra.mxu0 %v8514
    %9506 = vmatprep.mubr.bf16.mxu0 %v6353
    %9507 = vmatmul.mubr.bf16.gmra.mxu0 %v6352
    %v9508 = vpop.f32.mrf.mxu0
    %v9509 = vadd.f32 %v6877, %v9508
    %v9510 = vpop.f32.mrf.mxu0
    %v9511 = vadd.f32 %v6881, %v9510
    %v9512 = vpop.f32.mrf.mxu0
    %v9513 = vadd.f32 %v6877, %v9512
    %v9514 = vpop.f32.mrf.mxu0
    %v9515 = vadd.f32 %v6881, %v9514
    %9516 = vdwg.mxu0
    %9517 = vmatprep.subr.bf16.mxu0 %v8635
    %9518 = vmatpush1.bf16.msra.mxu0 %v8634
    %9519 = vmatprep.subr.bf16.mxu0 %v8627
    %9520 = vmatpush1.bf16.msra.mxu0 %v8626
    %9521 = vmatprep.subr.bf16.mxu0 %v8619
    %9522 = vmatpush1.bf16.msra.mxu0 %v8618
    %9523 = vmatprep.subr.bf16.mxu0 %v8611
    %9524 = vmatpush1.bf16.msra.mxu0 %v8610
    %9525 = vmatprep.subr.bf16.mxu0 %v8603
    %9526 = vmatpush1.bf16.msra.mxu0 %v8602
    %9527 = vmatprep.subr.bf16.mxu0 %v8595
    %9528 = vmatpush1.bf16.msra.mxu0 %v8594
    %9529 = vmatprep.subr.bf16.mxu0 %v8587
    %9530 = vmatpush1.bf16.msra.mxu0 %v8586
    %9531 = vmatprep.subr.bf16.mxu0 %v8579
    %9532 = vmatpush1.bf16.msra.mxu0 %v8578
    %9533 = vmatprep.subr.bf16.mxu0 %v8699
    %9534 = vmatpush2.bf16.msra.mxu0 %v8698
    %9535 = vmatprep.subr.bf16.mxu0 %v8691
    %9536 = vmatpush2.bf16.msra.mxu0 %v8690
    %9537 = vmatprep.subr.bf16.mxu0 %v8683
    %9538 = vmatpush2.bf16.msra.mxu0 %v8682
    %9539 = vmatprep.subr.bf16.mxu0 %v8675
    %9540 = vmatpush2.bf16.msra.mxu0 %v8674
    %9541 = vmatprep.subr.bf16.mxu0 %v8667
    %9542 = vmatpush2.bf16.msra.mxu0 %v8666
    %9543 = vmatprep.subr.bf16.mxu0 %v8659
    %9544 = vmatpush2.bf16.msra.mxu0 %v8658
    %9545 = vmatprep.subr.bf16.mxu0 %v8651
    %9546 = vmatpush2.bf16.msra.mxu0 %v8650
    %9547 = vmatprep.subr.bf16.mxu0 %v8643
    %9548 = vmatpush2.bf16.msra.mxu0 %v8642
    %9549 = vmatprep.mubr.bf16.mxu0 %v6355
    %9550 = vmatmul.mubr.bf16.gmra.mxu0 %v6354
    %v9551 = vpop.f32.mrf.mxu0
    %v9552 = vadd.f32 %v9509, %v9551
    %v9553 = vpop.f32.mrf.mxu0
    %v9554 = vadd.f32 %v9511, %v9553
    %v9555 = vpop.f32.mrf.mxu0
    %v9556 = vadd.f32 %v9513, %v9555
    %v9557 = vpop.f32.mrf.mxu0
    %v9558 = vadd.f32 %v9515, %v9557
    %9559 = vdwg.mxu0
    %9560 = vmatprep.subr.bf16.mxu0 %v8763
    %9561 = vmatpush1.bf16.msra.mxu0 %v8762
    %9562 = vmatprep.subr.bf16.mxu0 %v8755
    %9563 = vmatpush1.bf16.msra.mxu0 %v8754
    %9564 = vmatprep.subr.bf16.mxu0 %v8747
    %9565 = vmatpush1.bf16.msra.mxu0 %v8746
    %9566 = vmatprep.subr.bf16.mxu0 %v8739
    %9567 = vmatpush1.bf16.msra.mxu0 %v8738
    %9568 = vmatprep.subr.bf16.mxu0 %v8731
    %9569 = vmatpush1.bf16.msra.mxu0 %v8730
    %9570 = vmatprep.subr.bf16.mxu0 %v8723
    %9571 = vmatpush1.bf16.msra.mxu0 %v8722
    %9572 = vmatprep.subr.bf16.mxu0 %v8715
    %9573 = vmatpush1.bf16.msra.mxu0 %v8714
    %9574 = vmatprep.subr.bf16.mxu0 %v8707
    %9575 = vmatpush1.bf16.msra.mxu0 %v8706
    %9576 = vmatprep.subr.bf16.mxu0 %v8827
    %9577 = vmatpush2.bf16.msra.mxu0 %v8826
    %9578 = vmatprep.subr.bf16.mxu0 %v8819
    %9579 = vmatpush2.bf16.msra.mxu0 %v8818
    %9580 = vmatprep.subr.bf16.mxu0 %v8811
    %9581 = vmatpush2.bf16.msra.mxu0 %v8810
    %9582 = vmatprep.subr.bf16.mxu0 %v8803
    %9583 = vmatpush2.bf16.msra.mxu0 %v8802
    %9584 = vmatprep.subr.bf16.mxu0 %v8795
    %9585 = vmatpush2.bf16.msra.mxu0 %v8794
    %9586 = vmatprep.subr.bf16.mxu0 %v8787
    %9587 = vmatpush2.bf16.msra.mxu0 %v8786
    %9588 = vmatprep.subr.bf16.mxu0 %v8779
    %9589 = vmatpush2.bf16.msra.mxu0 %v8778
    %9590 = vmatprep.subr.bf16.mxu0 %v8771
    %9591 = vmatpush2.bf16.msra.mxu0 %v8770
    %9592 = vmatprep.mubr.bf16.mxu0 %v6357
    %9593 = vmatmul.mubr.bf16.gmra.mxu0 %v6356
    %v9594 = vpop.f32.mrf.mxu0
    %v9595 = vadd.f32 %v9552, %v9594
    %v9596 = vpop.f32.mrf.mxu0
    %v9597 = vadd.f32 %v9554, %v9596
    %v9598 = vpop.f32.mrf.mxu0
    %v9599 = vadd.f32 %v9556, %v9598
    %v9600 = vpop.f32.mrf.mxu0
    %v9601 = vadd.f32 %v9558, %v9600
    %9602 = vdwg.mxu0
    %9603 = vmatprep.subr.bf16.mxu0 %v8891
    %9604 = vmatpush1.bf16.msra.mxu0 %v8890
    %9605 = vmatprep.subr.bf16.mxu0 %v8883
    %9606 = vmatpush1.bf16.msra.mxu0 %v8882
    %9607 = vmatprep.subr.bf16.mxu0 %v8875
    %9608 = vmatpush1.bf16.msra.mxu0 %v8874
    %9609 = vmatprep.subr.bf16.mxu0 %v8867
    %9610 = vmatpush1.bf16.msra.mxu0 %v8866
    %9611 = vmatprep.subr.bf16.mxu0 %v8859
    %9612 = vmatpush1.bf16.msra.mxu0 %v8858
    %9613 = vmatprep.subr.bf16.mxu0 %v8851
    %9614 = vmatpush1.bf16.msra.mxu0 %v8850
    %9615 = vmatprep.subr.bf16.mxu0 %v8843
    %9616 = vmatpush1.bf16.msra.mxu0 %v8842
    %9617 = vmatprep.subr.bf16.mxu0 %v8835
    %9618 = vmatpush1.bf16.msra.mxu0 %v8834
    %9619 = vmatprep.subr.bf16.mxu0 %v8955
    %9620 = vmatpush2.bf16.msra.mxu0 %v8954
    %9621 = vmatprep.subr.bf16.mxu0 %v8947
    %9622 = vmatpush2.bf16.msra.mxu0 %v8946
    %9623 = vmatprep.subr.bf16.mxu0 %v8939
    %9624 = vmatpush2.bf16.msra.mxu0 %v8938
    %9625 = vmatprep.subr.bf16.mxu0 %v8931
    %9626 = vmatpush2.bf16.msra.mxu0 %v8930
    %9627 = vmatprep.subr.bf16.mxu0 %v8923
    %9628 = vmatpush2.bf16.msra.mxu0 %v8922
    %9629 = vmatprep.subr.bf16.mxu0 %v8915
    %9630 = vmatpush2.bf16.msra.mxu0 %v8914
    %9631 = vmatprep.subr.bf16.mxu0 %v8907
    %9632 = vmatpush2.bf16.msra.mxu0 %v8906
    %9633 = vmatprep.subr.bf16.mxu0 %v8899
    %9634 = vmatpush2.bf16.msra.mxu0 %v8898
    %9635 = vmatprep.mubr.bf16.mxu0 %v6359
    %9636 = vmatmul.mubr.bf16.gmra.mxu0 %v6358
    %v9637 = vpop.f32.mrf.mxu0
    %v9638 = vadd.f32 %v9595, %v9637
    %v9639 = vpop.f32.mrf.mxu0
    %v9640 = vadd.f32 %v9597, %v9639
    %v9641 = vpop.f32.mrf.mxu0
    %v9642 = vadd.f32 %v9599, %v9641
    %v9643 = vpop.f32.mrf.mxu0
    %v9644 = vadd.f32 %v9601, %v9643
    %9645 = vdwg.mxu0
    %9646 = vmatprep.subr.bf16.mxu0 %v8509
    %9647 = vmatpush1.bf16.msra.mxu0 %v8508
    %9648 = vmatprep.subr.bf16.mxu0 %v8501
    %9649 = vmatpush1.bf16.msra.mxu0 %v8500
    %9650 = vmatprep.subr.bf16.mxu0 %v8493
    %9651 = vmatpush1.bf16.msra.mxu0 %v8492
    %9652 = vmatprep.subr.bf16.mxu0 %v8485
    %9653 = vmatpush1.bf16.msra.mxu0 %v8484
    %9654 = vmatprep.subr.bf16.mxu0 %v8477
    %9655 = vmatpush1.bf16.msra.mxu0 %v8476
    %9656 = vmatprep.subr.bf16.mxu0 %v8469
    %9657 = vmatpush1.bf16.msra.mxu0 %v8468
    %9658 = vmatprep.subr.bf16.mxu0 %v8461
    %9659 = vmatpush1.bf16.msra.mxu0 %v8460
    %9660 = vmatprep.subr.bf16.mxu0 %v8453
    %9661 = vmatpush1.bf16.msra.mxu0 %v8452
    %9662 = vmatprep.subr.bf16.mxu0 %v8573
    %9663 = vmatpush2.bf16.msra.mxu0 %v8572
    %9664 = vmatprep.subr.bf16.mxu0 %v8565
    %9665 = vmatpush2.bf16.msra.mxu0 %v8564
    %9666 = vmatprep.subr.bf16.mxu0 %v8557
    %9667 = vmatpush2.bf16.msra.mxu0 %v8556
    %9668 = vmatprep.subr.bf16.mxu0 %v8549
    %9669 = vmatpush2.bf16.msra.mxu0 %v8548
    %9670 = vmatprep.subr.bf16.mxu0 %v8541
    %9671 = vmatpush2.bf16.msra.mxu0 %v8540
    %9672 = vmatprep.subr.bf16.mxu0 %v8533
    %9673 = vmatpush2.bf16.msra.mxu0 %v8532
    %9674 = vmatprep.subr.bf16.mxu0 %v8525
    %9675 = vmatpush2.bf16.msra.mxu0 %v8524
    %9676 = vmatprep.subr.bf16.mxu0 %v8517
    %9677 = vmatpush2.bf16.msra.mxu0 %v8516
    %9678 = vmatprep.mubr.bf16.mxu0 %v6353
    %9679 = vmatmul.mubr.bf16.gmra.mxu0 %v6352
    %v9680 = vpop.f32.mrf.mxu0
    %v9681 = vadd.f32 %v6885, %v9680
    %v9682 = vpop.f32.mrf.mxu0
    %v9683 = vadd.f32 %v6889, %v9682
    %v9684 = vpop.f32.mrf.mxu0
    %v9685 = vadd.f32 %v6885, %v9684
    %v9686 = vpop.f32.mrf.mxu0
    %v9687 = vadd.f32 %v6889, %v9686
    %9688 = vdwg.mxu0
    %9689 = vmatprep.subr.bf16.mxu0 %v8637
    %9690 = vmatpush1.bf16.msra.mxu0 %v8636
    %9691 = vmatprep.subr.bf16.mxu0 %v8629
    %9692 = vmatpush1.bf16.msra.mxu0 %v8628
    %9693 = vmatprep.subr.bf16.mxu0 %v8621
    %9694 = vmatpush1.bf16.msra.mxu0 %v8620
    %9695 = vmatprep.subr.bf16.mxu0 %v8613
    %9696 = vmatpush1.bf16.msra.mxu0 %v8612
    %9697 = vmatprep.subr.bf16.mxu0 %v8605
    %9698 = vmatpush1.bf16.msra.mxu0 %v8604
    %9699 = vmatprep.subr.bf16.mxu0 %v8597
    %9700 = vmatpush1.bf16.msra.mxu0 %v8596
    %9701 = vmatprep.subr.bf16.mxu0 %v8589
    %9702 = vmatpush1.bf16.msra.mxu0 %v8588
    %9703 = vmatprep.subr.bf16.mxu0 %v8581
    %9704 = vmatpush1.bf16.msra.mxu0 %v8580
    %9705 = vmatprep.subr.bf16.mxu0 %v8701
    %9706 = vmatpush2.bf16.msra.mxu0 %v8700
    %9707 = vmatprep.subr.bf16.mxu0 %v8693
    %9708 = vmatpush2.bf16.msra.mxu0 %v8692
    %9709 = vmatprep.subr.bf16.mxu0 %v8685
    %9710 = vmatpush2.bf16.msra.mxu0 %v8684
    %9711 = vmatprep.subr.bf16.mxu0 %v8677
    %9712 = vmatpush2.bf16.msra.mxu0 %v8676
    %9713 = vmatprep.subr.bf16.mxu0 %v8669
    %9714 = vmatpush2.bf16.msra.mxu0 %v8668
    %9715 = vmatprep.subr.bf16.mxu0 %v8661
    %9716 = vmatpush2.bf16.msra.mxu0 %v8660
    %9717 = vmatprep.subr.bf16.mxu0 %v8653
    %9718 = vmatpush2.bf16.msra.mxu0 %v8652
    %9719 = vmatprep.subr.bf16.mxu0 %v8645
    %9720 = vmatpush2.bf16.msra.mxu0 %v8644
    %9721 = vmatprep.mubr.bf16.mxu0 %v6355
    %9722 = vmatmul.mubr.bf16.gmra.mxu0 %v6354
    %v9723 = vpop.f32.mrf.mxu0
    %v9724 = vadd.f32 %v9681, %v9723
    %v9725 = vpop.f32.mrf.mxu0
    %v9726 = vadd.f32 %v9683, %v9725
    %v9727 = vpop.f32.mrf.mxu0
    %v9728 = vadd.f32 %v9685, %v9727
    %v9729 = vpop.f32.mrf.mxu0
    %v9730 = vadd.f32 %v9687, %v9729
    %9731 = vdwg.mxu0
    %9732 = vmatprep.subr.bf16.mxu0 %v8765
    %9733 = vmatpush1.bf16.msra.mxu0 %v8764
    %9734 = vmatprep.subr.bf16.mxu0 %v8757
    %9735 = vmatpush1.bf16.msra.mxu0 %v8756
    %9736 = vmatprep.subr.bf16.mxu0 %v8749
    %9737 = vmatpush1.bf16.msra.mxu0 %v8748
    %9738 = vmatprep.subr.bf16.mxu0 %v8741
    %9739 = vmatpush1.bf16.msra.mxu0 %v8740
    %9740 = vmatprep.subr.bf16.mxu0 %v8733
    %9741 = vmatpush1.bf16.msra.mxu0 %v8732
    %9742 = vmatprep.subr.bf16.mxu0 %v8725
    %9743 = vmatpush1.bf16.msra.mxu0 %v8724
    %9744 = vmatprep.subr.bf16.mxu0 %v8717
    %9745 = vmatpush1.bf16.msra.mxu0 %v8716
    %9746 = vmatprep.subr.bf16.mxu0 %v8709
    %9747 = vmatpush1.bf16.msra.mxu0 %v8708
    %9748 = vmatprep.subr.bf16.mxu0 %v8829
    %9749 = vmatpush2.bf16.msra.mxu0 %v8828
    %9750 = vmatprep.subr.bf16.mxu0 %v8821
    %9751 = vmatpush2.bf16.msra.mxu0 %v8820
    %9752 = vmatprep.subr.bf16.mxu0 %v8813
    %9753 = vmatpush2.bf16.msra.mxu0 %v8812
    %9754 = vmatprep.subr.bf16.mxu0 %v8805
    %9755 = vmatpush2.bf16.msra.mxu0 %v8804
    %9756 = vmatprep.subr.bf16.mxu0 %v8797
    %9757 = vmatpush2.bf16.msra.mxu0 %v8796
    %9758 = vmatprep.subr.bf16.mxu0 %v8789
    %9759 = vmatpush2.bf16.msra.mxu0 %v8788
    %9760 = vmatprep.subr.bf16.mxu0 %v8781
    %9761 = vmatpush2.bf16.msra.mxu0 %v8780
    %9762 = vmatprep.subr.bf16.mxu0 %v8773
    %9763 = vmatpush2.bf16.msra.mxu0 %v8772
    %9764 = vmatprep.mubr.bf16.mxu0 %v6357
    %9765 = vmatmul.mubr.bf16.gmra.mxu0 %v6356
    %v9766 = vpop.f32.mrf.mxu0
    %v9767 = vadd.f32 %v9724, %v9766
    %v9768 = vpop.f32.mrf.mxu0
    %v9769 = vadd.f32 %v9726, %v9768
    %v9770 = vpop.f32.mrf.mxu0
    %v9771 = vadd.f32 %v9728, %v9770
    %v9772 = vpop.f32.mrf.mxu0
    %v9773 = vadd.f32 %v9730, %v9772
    %9774 = vdwg.mxu0
    %9775 = vmatprep.subr.bf16.mxu0 %v8893
    %9776 = vmatpush1.bf16.msra.mxu0 %v8892
    %9777 = vmatprep.subr.bf16.mxu0 %v8885
    %9778 = vmatpush1.bf16.msra.mxu0 %v8884
    %9779 = vmatprep.subr.bf16.mxu0 %v8877
    %9780 = vmatpush1.bf16.msra.mxu0 %v8876
    %9781 = vmatprep.subr.bf16.mxu0 %v8869
    %9782 = vmatpush1.bf16.msra.mxu0 %v8868
    %9783 = vmatprep.subr.bf16.mxu0 %v8861
    %9784 = vmatpush1.bf16.msra.mxu0 %v8860
    %9785 = vmatprep.subr.bf16.mxu0 %v8853
    %9786 = vmatpush1.bf16.msra.mxu0 %v8852
    %9787 = vmatprep.subr.bf16.mxu0 %v8845
    %9788 = vmatpush1.bf16.msra.mxu0 %v8844
    %9789 = vmatprep.subr.bf16.mxu0 %v8837
    %9790 = vmatpush1.bf16.msra.mxu0 %v8836
    %9791 = vmatprep.subr.bf16.mxu0 %v8957
    %9792 = vmatpush2.bf16.msra.mxu0 %v8956
    %9793 = vmatprep.subr.bf16.mxu0 %v8949
    %9794 = vmatpush2.bf16.msra.mxu0 %v8948
    %9795 = vmatprep.subr.bf16.mxu0 %v8941
    %9796 = vmatpush2.bf16.msra.mxu0 %v8940
    %9797 = vmatprep.subr.bf16.mxu0 %v8933
    %9798 = vmatpush2.bf16.msra.mxu0 %v8932
    %9799 = vmatprep.subr.bf16.mxu0 %v8925
    %9800 = vmatpush2.bf16.msra.mxu0 %v8924
    %9801 = vmatprep.subr.bf16.mxu0 %v8917
    %9802 = vmatpush2.bf16.msra.mxu0 %v8916
    %9803 = vmatprep.subr.bf16.mxu0 %v8909
    %9804 = vmatpush2.bf16.msra.mxu0 %v8908
    %9805 = vmatprep.subr.bf16.mxu0 %v8901
    %9806 = vmatpush2.bf16.msra.mxu0 %v8900
    %9807 = vmatprep.mubr.bf16.mxu0 %v6359
    %9808 = vmatmul.mubr.bf16.gmra.mxu0 %v6358
    %v9809 = vpop.f32.mrf.mxu0
    %v9810 = vadd.f32 %v9767, %v9809
    %v9811 = vpop.f32.mrf.mxu0
    %v9812 = vadd.f32 %v9769, %v9811
    %v9813 = vpop.f32.mrf.mxu0
    %v9814 = vadd.f32 %v9771, %v9813
    %v9815 = vpop.f32.mrf.mxu0
    %v9816 = vadd.f32 %v9773, %v9815
    %9817 = vdwg.mxu0
    %9818 = vmatprep.subr.bf16.mxu0 %v8511
    %9819 = vmatpush1.bf16.msra.mxu0 %v8510
    %9820 = vmatprep.subr.bf16.mxu0 %v8503
    %9821 = vmatpush1.bf16.msra.mxu0 %v8502
    %9822 = vmatprep.subr.bf16.mxu0 %v8495
    %9823 = vmatpush1.bf16.msra.mxu0 %v8494
    %9824 = vmatprep.subr.bf16.mxu0 %v8487
    %9825 = vmatpush1.bf16.msra.mxu0 %v8486
    %9826 = vmatprep.subr.bf16.mxu0 %v8479
    %9827 = vmatpush1.bf16.msra.mxu0 %v8478
    %9828 = vmatprep.subr.bf16.mxu0 %v8471
    %9829 = vmatpush1.bf16.msra.mxu0 %v8470
    %9830 = vmatprep.subr.bf16.mxu0 %v8463
    %9831 = vmatpush1.bf16.msra.mxu0 %v8462
    %9832 = vmatprep.subr.bf16.mxu0 %v8455
    %9833 = vmatpush1.bf16.msra.mxu0 %v8454
    %9834 = vmatprep.subr.bf16.mxu0 %v8575
    %9835 = vmatpush2.bf16.msra.mxu0 %v8574
    %9836 = vmatprep.subr.bf16.mxu0 %v8567
    %9837 = vmatpush2.bf16.msra.mxu0 %v8566
    %9838 = vmatprep.subr.bf16.mxu0 %v8559
    %9839 = vmatpush2.bf16.msra.mxu0 %v8558
    %9840 = vmatprep.subr.bf16.mxu0 %v8551
    %9841 = vmatpush2.bf16.msra.mxu0 %v8550
    %9842 = vmatprep.subr.bf16.mxu0 %v8543
    %9843 = vmatpush2.bf16.msra.mxu0 %v8542
    %9844 = vmatprep.subr.bf16.mxu0 %v8535
    %9845 = vmatpush2.bf16.msra.mxu0 %v8534
    %9846 = vmatprep.subr.bf16.mxu0 %v8527
    %9847 = vmatpush2.bf16.msra.mxu0 %v8526
    %9848 = vmatprep.subr.bf16.mxu0 %v8519
    %9849 = vmatpush2.bf16.msra.mxu0 %v8518
    %9850 = vmatprep.mubr.bf16.mxu0 %v6353
    %9851 = vmatmul.mubr.bf16.gmra.mxu0 %v6352
    %v9852 = vpop.f32.mrf.mxu0
    %v9853 = vadd.f32 %v6893, %v9852
    %v9854 = vpop.f32.mrf.mxu0
    %v9855 = vadd.f32 %v6897, %v9854
    %v9856 = vpop.f32.mrf.mxu0
    %v9857 = vadd.f32 %v6893, %v9856
    %v9858 = vpop.f32.mrf.mxu0
    %v9859 = vadd.f32 %v6897, %v9858
    %9860 = vdwg.mxu0
    %9861 = vmatprep.subr.bf16.mxu0 %v8639
    %9862 = vmatpush1.bf16.msra.mxu0 %v8638
    %9863 = vmatprep.subr.bf16.mxu0 %v8631
    %9864 = vmatpush1.bf16.msra.mxu0 %v8630
    %9865 = vmatprep.subr.bf16.mxu0 %v8623
    %9866 = vmatpush1.bf16.msra.mxu0 %v8622
    %9867 = vmatprep.subr.bf16.mxu0 %v8615
    %9868 = vmatpush1.bf16.msra.mxu0 %v8614
    %9869 = vmatprep.subr.bf16.mxu0 %v8607
    %9870 = vmatpush1.bf16.msra.mxu0 %v8606
    %9871 = vmatprep.subr.bf16.mxu0 %v8599
    %9872 = vmatpush1.bf16.msra.mxu0 %v8598
    %9873 = vmatprep.subr.bf16.mxu0 %v8591
    %9874 = vmatpush1.bf16.msra.mxu0 %v8590
    %9875 = vmatprep.subr.bf16.mxu0 %v8583
    %9876 = vmatpush1.bf16.msra.mxu0 %v8582
    %9877 = vmatprep.subr.bf16.mxu0 %v8703
    %9878 = vmatpush2.bf16.msra.mxu0 %v8702
    %9879 = vmatprep.subr.bf16.mxu0 %v8695
    %9880 = vmatpush2.bf16.msra.mxu0 %v8694
    %9881 = vmatprep.subr.bf16.mxu0 %v8687
    %9882 = vmatpush2.bf16.msra.mxu0 %v8686
    %9883 = vmatprep.subr.bf16.mxu0 %v8679
    %9884 = vmatpush2.bf16.msra.mxu0 %v8678
    %9885 = vmatprep.subr.bf16.mxu0 %v8671
    %9886 = vmatpush2.bf16.msra.mxu0 %v8670
    %9887 = vmatprep.subr.bf16.mxu0 %v8663
    %9888 = vmatpush2.bf16.msra.mxu0 %v8662
    %9889 = vmatprep.subr.bf16.mxu0 %v8655
    %9890 = vmatpush2.bf16.msra.mxu0 %v8654
    %9891 = vmatprep.subr.bf16.mxu0 %v8647
    %9892 = vmatpush2.bf16.msra.mxu0 %v8646
    %9893 = vmatprep.mubr.bf16.mxu0 %v6355
    %9894 = vmatmul.mubr.bf16.gmra.mxu0 %v6354
    %v9895 = vpop.f32.mrf.mxu0
    %v9896 = vadd.f32 %v9853, %v9895
    %v9897 = vpop.f32.mrf.mxu0
    %v9898 = vadd.f32 %v9855, %v9897
    %v9899 = vpop.f32.mrf.mxu0
    %v9900 = vadd.f32 %v9857, %v9899
    %v9901 = vpop.f32.mrf.mxu0
    %v9902 = vadd.f32 %v9859, %v9901
    %9903 = vdwg.mxu0
    %9904 = vmatprep.subr.bf16.mxu0 %v8767
    %9905 = vmatpush1.bf16.msra.mxu0 %v8766
    %9906 = vmatprep.subr.bf16.mxu0 %v8759
    %9907 = vmatpush1.bf16.msra.mxu0 %v8758
    %9908 = vmatprep.subr.bf16.mxu0 %v8751
    %9909 = vmatpush1.bf16.msra.mxu0 %v8750
    %9910 = vmatprep.subr.bf16.mxu0 %v8743
    %9911 = vmatpush1.bf16.msra.mxu0 %v8742
    %9912 = vmatprep.subr.bf16.mxu0 %v8735
    %9913 = vmatpush1.bf16.msra.mxu0 %v8734
    %9914 = vmatprep.subr.bf16.mxu0 %v8727
    %9915 = vmatpush1.bf16.msra.mxu0 %v8726
    %9916 = vmatprep.subr.bf16.mxu0 %v8719
    %9917 = vmatpush1.bf16.msra.mxu0 %v8718
    %9918 = vmatprep.subr.bf16.mxu0 %v8711
    %9919 = vmatpush1.bf16.msra.mxu0 %v8710
    %9920 = vmatprep.subr.bf16.mxu0 %v8831
    %9921 = vmatpush2.bf16.msra.mxu0 %v8830
    %9922 = vmatprep.subr.bf16.mxu0 %v8823
    %9923 = vmatpush2.bf16.msra.mxu0 %v8822
    %9924 = vmatprep.subr.bf16.mxu0 %v8815
    %9925 = vmatpush2.bf16.msra.mxu0 %v8814
    %9926 = vmatprep.subr.bf16.mxu0 %v8807
    %9927 = vmatpush2.bf16.msra.mxu0 %v8806
    %9928 = vmatprep.subr.bf16.mxu0 %v8799
    %9929 = vmatpush2.bf16.msra.mxu0 %v8798
    %9930 = vmatprep.subr.bf16.mxu0 %v8791
    %9931 = vmatpush2.bf16.msra.mxu0 %v8790
    %9932 = vmatprep.subr.bf16.mxu0 %v8783
    %9933 = vmatpush2.bf16.msra.mxu0 %v8782
    %9934 = vmatprep.subr.bf16.mxu0 %v8775
    %9935 = vmatpush2.bf16.msra.mxu0 %v8774
    %9936 = vmatprep.mubr.bf16.mxu0 %v6357
    %9937 = vmatmul.mubr.bf16.gmra.mxu0 %v6356
    %v9938 = vpop.f32.mrf.mxu0
    %v9939 = vadd.f32 %v9896, %v9938
    %v9940 = vpop.f32.mrf.mxu0
    %v9941 = vadd.f32 %v9898, %v9940
    %v9942 = vpop.f32.mrf.mxu0
    %v9943 = vadd.f32 %v9900, %v9942
    %v9944 = vpop.f32.mrf.mxu0
    %v9945 = vadd.f32 %v9902, %v9944
    %9946 = vdwg.mxu0
    %9947 = vmatprep.subr.bf16.mxu0 %v8895
    %9948 = vmatpush1.bf16.msra.mxu0 %v8894
    %9949 = vmatprep.subr.bf16.mxu0 %v8887
    %9950 = vmatpush1.bf16.msra.mxu0 %v8886
    %9951 = vmatprep.subr.bf16.mxu0 %v8879
    %9952 = vmatpush1.bf16.msra.mxu0 %v8878
    %9953 = vmatprep.subr.bf16.mxu0 %v8871
    %9954 = vmatpush1.bf16.msra.mxu0 %v8870
    %9955 = vmatprep.subr.bf16.mxu0 %v8863
    %9956 = vmatpush1.bf16.msra.mxu0 %v8862
    %9957 = vmatprep.subr.bf16.mxu0 %v8855
    %9958 = vmatpush1.bf16.msra.mxu0 %v8854
    %9959 = vmatprep.subr.bf16.mxu0 %v8847
    %9960 = vmatpush1.bf16.msra.mxu0 %v8846
    %9961 = vmatprep.subr.bf16.mxu0 %v8839
    %9962 = vmatpush1.bf16.msra.mxu0 %v8838
    %9963 = vmatprep.subr.bf16.mxu0 %v8959
    %9964 = vmatpush2.bf16.msra.mxu0 %v8958
    %9965 = vmatprep.subr.bf16.mxu0 %v8951
    %9966 = vmatpush2.bf16.msra.mxu0 %v8950
    %9967 = vmatprep.subr.bf16.mxu0 %v8943
    %9968 = vmatpush2.bf16.msra.mxu0 %v8942
    %9969 = vmatprep.subr.bf16.mxu0 %v8935
    %9970 = vmatpush2.bf16.msra.mxu0 %v8934
    %9971 = vmatprep.subr.bf16.mxu0 %v8927
    %9972 = vmatpush2.bf16.msra.mxu0 %v8926
    %9973 = vmatprep.subr.bf16.mxu0 %v8919
    %9974 = vmatpush2.bf16.msra.mxu0 %v8918
    %9975 = vmatprep.subr.bf16.mxu0 %v8911
    %9976 = vmatpush2.bf16.msra.mxu0 %v8910
    %9977 = vmatprep.subr.bf16.mxu0 %v8903
    %9978 = vmatpush2.bf16.msra.mxu0 %v8902
    %9979 = vmatprep.mubr.bf16.mxu0 %v6359
    %9980 = vmatmul.mubr.bf16.gmra.mxu0 %v6358
    %v9981 = vpop.f32.mrf.mxu0
    %v9982 = vadd.f32 %v9939, %v9981
    %v9983 = vpop.f32.mrf.mxu0
    %v9984 = vadd.f32 %v9941, %v9983
    %v9985 = vpop.f32.mrf.mxu0
    %v9986 = vadd.f32 %v9943, %v9985
    %v9987 = vpop.f32.mrf.mxu0
    %v9988 = vadd.f32 %v9945, %v9987
    %9989 = vdwg.mxu0
    %9990 = vmatprep.subr.bf16.mxu0 %v8513
    %9991 = vmatpush1.bf16.msra.mxu0 %v8512
    %9992 = vmatprep.subr.bf16.mxu0 %v8505
    %9993 = vmatpush1.bf16.msra.mxu0 %v8504
    %9994 = vmatprep.subr.bf16.mxu0 %v8497
    %9995 = vmatpush1.bf16.msra.mxu0 %v8496
    %9996 = vmatprep.subr.bf16.mxu0 %v8489
    %9997 = vmatpush1.bf16.msra.mxu0 %v8488
    %9998 = vmatprep.subr.bf16.mxu0 %v8481
    %9999 = vmatpush1.bf16.msra.mxu0 %v8480
    %10000 = vmatprep.subr.bf16.mxu0 %v8473
    %10001 = vmatpush1.bf16.msra.mxu0 %v8472
    %10002 = vmatprep.subr.bf16.mxu0 %v8465
    %10003 = vmatpush1.bf16.msra.mxu0 %v8464
    %10004 = vmatprep.subr.bf16.mxu0 %v8457
    %10005 = vmatpush1.bf16.msra.mxu0 %v8456
    %10006 = vmatprep.subr.bf16.mxu0 %v8577
    %10007 = vmatpush2.bf16.msra.mxu0 %v8576
    %10008 = vmatprep.subr.bf16.mxu0 %v8569
    %10009 = vmatpush2.bf16.msra.mxu0 %v8568
    %10010 = vmatprep.subr.bf16.mxu0 %v8561
    %10011 = vmatpush2.bf16.msra.mxu0 %v8560
    %10012 = vmatprep.subr.bf16.mxu0 %v8553
    %10013 = vmatpush2.bf16.msra.mxu0 %v8552
    %10014 = vmatprep.subr.bf16.mxu0 %v8545
    %10015 = vmatpush2.bf16.msra.mxu0 %v8544
    %10016 = vmatprep.subr.bf16.mxu0 %v8537
    %10017 = vmatpush2.bf16.msra.mxu0 %v8536
    %10018 = vmatprep.subr.bf16.mxu0 %v8529
    %10019 = vmatpush2.bf16.msra.mxu0 %v8528
    %10020 = vmatprep.subr.bf16.mxu0 %v8521
    %10021 = vmatpush2.bf16.msra.mxu0 %v8520
    %10022 = vmatprep.mubr.bf16.mxu0 %v6353
    %10023 = vmatmul.mubr.bf16.gmra.mxu0 %v6352
    %v10024 = vpop.f32.mrf.mxu0
    %v10025 = vadd.f32 %v6901, %v10024
    %v10026 = vpop.f32.mrf.mxu0
    %v10027 = vadd.f32 %v6905, %v10026
    %v10028 = vpop.f32.mrf.mxu0
    %v10029 = vadd.f32 %v6901, %v10028
    %v10030 = vpop.f32.mrf.mxu0
    %v10031 = vadd.f32 %v6905, %v10030
    %10032 = vdwg.mxu0
    %10033 = vmatprep.subr.bf16.mxu0 %v8641
    %10034 = vmatpush1.bf16.msra.mxu0 %v8640
    %10035 = vmatprep.subr.bf16.mxu0 %v8633
    %10036 = vmatpush1.bf16.msra.mxu0 %v8632
    %10037 = vmatprep.subr.bf16.mxu0 %v8625
    %10038 = vmatpush1.bf16.msra.mxu0 %v8624
    %10039 = vmatprep.subr.bf16.mxu0 %v8617
    %10040 = vmatpush1.bf16.msra.mxu0 %v8616
    %10041 = vmatprep.subr.bf16.mxu0 %v8609
    %10042 = vmatpush1.bf16.msra.mxu0 %v8608
    %10043 = vmatprep.subr.bf16.mxu0 %v8601
    %10044 = vmatpush1.bf16.msra.mxu0 %v8600
    %10045 = vmatprep.subr.bf16.mxu0 %v8593
    %10046 = vmatpush1.bf16.msra.mxu0 %v8592
    %10047 = vmatprep.subr.bf16.mxu0 %v8585
    %10048 = vmatpush1.bf16.msra.mxu0 %v8584
    %10049 = vmatprep.subr.bf16.mxu0 %v8705
    %10050 = vmatpush2.bf16.msra.mxu0 %v8704
    %10051 = vmatprep.subr.bf16.mxu0 %v8697
    %10052 = vmatpush2.bf16.msra.mxu0 %v8696
    %10053 = vmatprep.subr.bf16.mxu0 %v8689
    %10054 = vmatpush2.bf16.msra.mxu0 %v8688
    %10055 = vmatprep.subr.bf16.mxu0 %v8681
    %10056 = vmatpush2.bf16.msra.mxu0 %v8680
    %10057 = vmatprep.subr.bf16.mxu0 %v8673
    %10058 = vmatpush2.bf16.msra.mxu0 %v8672
    %10059 = vmatprep.subr.bf16.mxu0 %v8665
    %10060 = vmatpush2.bf16.msra.mxu0 %v8664
    %10061 = vmatprep.subr.bf16.mxu0 %v8657
    %10062 = vmatpush2.bf16.msra.mxu0 %v8656
    %10063 = vmatprep.subr.bf16.mxu0 %v8649
    %10064 = vmatpush2.bf16.msra.mxu0 %v8648
    %10065 = vmatprep.mubr.bf16.mxu0 %v6355
    %10066 = vmatmul.mubr.bf16.gmra.mxu0 %v6354
    %v10067 = vpop.f32.mrf.mxu0
    %v10068 = vadd.f32 %v10025, %v10067
    %v10069 = vpop.f32.mrf.mxu0
    %v10070 = vadd.f32 %v10027, %v10069
    %v10071 = vpop.f32.mrf.mxu0
    %v10072 = vadd.f32 %v10029, %v10071
    %v10073 = vpop.f32.mrf.mxu0
    %v10074 = vadd.f32 %v10031, %v10073
    %10075 = vdwg.mxu0
    %10076 = vmatprep.subr.bf16.mxu0 %v8769
    %10077 = vmatpush1.bf16.msra.mxu0 %v8768
    %10078 = vmatprep.subr.bf16.mxu0 %v8761
    %10079 = vmatpush1.bf16.msra.mxu0 %v8760
    %10080 = vmatprep.subr.bf16.mxu0 %v8753
    %10081 = vmatpush1.bf16.msra.mxu0 %v8752
    %10082 = vmatprep.subr.bf16.mxu0 %v8745
    %10083 = vmatpush1.bf16.msra.mxu0 %v8744
    %10084 = vmatprep.subr.bf16.mxu0 %v8737
    %10085 = vmatpush1.bf16.msra.mxu0 %v8736
    %10086 = vmatprep.subr.bf16.mxu0 %v8729
    %10087 = vmatpush1.bf16.msra.mxu0 %v8728
    %10088 = vmatprep.subr.bf16.mxu0 %v8721
    %10089 = vmatpush1.bf16.msra.mxu0 %v8720
    %10090 = vmatprep.subr.bf16.mxu0 %v8713
    %10091 = vmatpush1.bf16.msra.mxu0 %v8712
    %10092 = vmatprep.subr.bf16.mxu0 %v8833
    %10093 = vmatpush2.bf16.msra.mxu0 %v8832
    %10094 = vmatprep.subr.bf16.mxu0 %v8825
    %10095 = vmatpush2.bf16.msra.mxu0 %v8824
    %10096 = vmatprep.subr.bf16.mxu0 %v8817
    %10097 = vmatpush2.bf16.msra.mxu0 %v8816
    %10098 = vmatprep.subr.bf16.mxu0 %v8809
    %10099 = vmatpush2.bf16.msra.mxu0 %v8808
    %10100 = vmatprep.subr.bf16.mxu0 %v8801
    %10101 = vmatpush2.bf16.msra.mxu0 %v8800
    %10102 = vmatprep.subr.bf16.mxu0 %v8793
    %10103 = vmatpush2.bf16.msra.mxu0 %v8792
    %10104 = vmatprep.subr.bf16.mxu0 %v8785
    %10105 = vmatpush2.bf16.msra.mxu0 %v8784
    %10106 = vmatprep.subr.bf16.mxu0 %v8777
    %10107 = vmatpush2.bf16.msra.mxu0 %v8776
    %10108 = vmatprep.mubr.bf16.mxu0 %v6357
    %10109 = vmatmul.mubr.bf16.gmra.mxu0 %v6356
    %v10110 = vpop.f32.mrf.mxu0
    %v10111 = vadd.f32 %v10068, %v10110
    %v10112 = vpop.f32.mrf.mxu0
    %v10113 = vadd.f32 %v10070, %v10112
    %v10114 = vpop.f32.mrf.mxu0
    %v10115 = vadd.f32 %v10072, %v10114
    %v10116 = vpop.f32.mrf.mxu0
    %v10117 = vadd.f32 %v10074, %v10116
    %10118 = vdwg.mxu0
    %10119 = vmatprep.subr.bf16.mxu0 %v8897
    %10120 = vmatpush1.bf16.msra.mxu0 %v8896
    %10121 = vmatprep.subr.bf16.mxu0 %v8889
    %10122 = vmatpush1.bf16.msra.mxu0 %v8888
    %10123 = vmatprep.subr.bf16.mxu0 %v8881
    %10124 = vmatpush1.bf16.msra.mxu0 %v8880
    %10125 = vmatprep.subr.bf16.mxu0 %v8873
    %10126 = vmatpush1.bf16.msra.mxu0 %v8872
    %10127 = vmatprep.subr.bf16.mxu0 %v8865
    %10128 = vmatpush1.bf16.msra.mxu0 %v8864
    %10129 = vmatprep.subr.bf16.mxu0 %v8857
    %10130 = vmatpush1.bf16.msra.mxu0 %v8856
    %10131 = vmatprep.subr.bf16.mxu0 %v8849
    %10132 = vmatpush1.bf16.msra.mxu0 %v8848
    %10133 = vmatprep.subr.bf16.mxu0 %v8841
    %10134 = vmatpush1.bf16.msra.mxu0 %v8840
    %10135 = vmatprep.subr.bf16.mxu0 %v8961
    %10136 = vmatpush2.bf16.msra.mxu0 %v8960
    %10137 = vmatprep.subr.bf16.mxu0 %v8953
    %10138 = vmatpush2.bf16.msra.mxu0 %v8952
    %10139 = vmatprep.subr.bf16.mxu0 %v8945
    %10140 = vmatpush2.bf16.msra.mxu0 %v8944
    %10141 = vmatprep.subr.bf16.mxu0 %v8937
    %10142 = vmatpush2.bf16.msra.mxu0 %v8936
    %10143 = vmatprep.subr.bf16.mxu0 %v8929
    %10144 = vmatpush2.bf16.msra.mxu0 %v8928
    %10145 = vmatprep.subr.bf16.mxu0 %v8921
    %10146 = vmatpush2.bf16.msra.mxu0 %v8920
    %10147 = vmatprep.subr.bf16.mxu0 %v8913
    %10148 = vmatpush2.bf16.msra.mxu0 %v8912
    %10149 = vmatprep.subr.bf16.mxu0 %v8905
    %10150 = vmatpush2.bf16.msra.mxu0 %v8904
    %10151 = vmatprep.mubr.bf16.mxu0 %v6359
    %10152 = vmatmul.mubr.bf16.gmra.mxu0 %v6358
    %v10153 = vpop.f32.mrf.mxu0
    %v10154 = vadd.f32 %v10111, %v10153
    %v10155 = vpop.f32.mrf.mxu0
    %v10156 = vadd.f32 %v10113, %v10155
    %v10157 = vpop.f32.mrf.mxu0
    %v10158 = vadd.f32 %v10115, %v10157
    %v10159 = vpop.f32.mrf.mxu0
    %v10160 = vadd.f32 %v10117, %v10159
    %10161 = vdwg.mxu0
    %v10162 = vadd.f32 %v9638, %v2478
    %v10163 = vadd.f32 %v9640, %v2479
    %v10164 = vadd.f32 %v9810, %v2480
    %v10165 = vadd.f32 %v9812, %v2481
    %v10166 = vadd.f32 %v9982, %v2482
    %v10167 = vadd.f32 %v9984, %v2483
    %v10168 = vadd.f32 %v10154, %v2484
    %v10169 = vadd.f32 %v10156, %v2485
    %v10170 = vadd.f32 %v9642, %v2486
    %v10171 = vadd.f32 %v9644, %v2487
    %v10172 = vadd.f32 %v9814, %v2488
    %v10173 = vadd.f32 %v9816, %v2489
    %v10174 = vadd.f32 %v9986, %v2490
    %v10175 = vadd.f32 %v9988, %v2491
    %v10176 = vadd.f32 %v10158, %v2492
    %v10177 = vadd.f32 %v10160, %v2493
    %v10178 = vpack.c.bf16 %v816, %v813
    %v10179 = vld [vmem:[#allocation31] sm:$0xf]
    %v10180 = vld [vmem:[#allocation31 + $0x4] sm:$0xf]
    %v10181 = vld [vmem:[#allocation31 + $0x8] sm:$0xf]
    %v10182 = vld [vmem:[#allocation31 + $0xc] sm:$0xf]
    %v10183 = vld [vmem:[#allocation31 + $0x10] sm:$0xf]
    %v10184 = vld [vmem:[#allocation31 + $0x14] sm:$0xf]
    %v10185 = vld [vmem:[#allocation31 + $0x18] sm:$0xf]
    %v10186 = vld [vmem:[#allocation31 + $0x1c] sm:$0xf]
    %v10187 = vld [vmem:[#allocation31 + $0x20] sm:$0xf]
    %v10188 = vld [vmem:[#allocation31 + $0x24] sm:$0xf]
    %v10189 = vld [vmem:[#allocation31 + $0x28] sm:$0xf]
    %v10190 = vld [vmem:[#allocation31 + $0x2c] sm:$0xf]
    %v10191 = vld [vmem:[#allocation31 + $0x30] sm:$0xf]
    %v10192 = vld [vmem:[#allocation31 + $0x34] sm:$0xf]
    %v10193 = vld [vmem:[#allocation31 + $0x38] sm:$0xf]
    %v10194 = vld [vmem:[#allocation31 + $0x3c] sm:$0xf]
    %v10195 = vpack.c.bf16 %v10170, %v10162
    %v10196 = vpack.c.bf16 %v10171, %v10163
    %v10197 = vpack.c.bf16 %v10172, %v10164
    %v10198 = vpack.c.bf16 %v10173, %v10165
    %v10199 = vpack.c.bf16 %v10174, %v10166
    %v10200 = vpack.c.bf16 %v10175, %v10167
    %v10201 = vpack.c.bf16 %v10176, %v10168
    %v10202 = vpack.c.bf16 %v10177, %v10169
    %v10203 = vld [vmem:[#allocation32] sm:$0xf]
    %v10204 = vld [vmem:[#allocation32 + $0x4] sm:$0xf]
    %v10205 = vld [vmem:[#allocation32 + $0x8] sm:$0xf]
    %v10206 = vld [vmem:[#allocation32 + $0xc] sm:$0xf]
    %v10207 = vld [vmem:[#allocation32 + $0x10] sm:$0xf]
    %v10208 = vld [vmem:[#allocation32 + $0x14] sm:$0xf]
    %v10209 = vld [vmem:[#allocation32 + $0x18] sm:$0xf]
    %v10210 = vld [vmem:[#allocation32 + $0x1c] sm:$0xf]
    %v10211 = vld [vmem:[#allocation32 + $0x20] sm:$0xf]
    %v10212 = vld [vmem:[#allocation32 + $0x24] sm:$0xf]
    %v10213 = vld [vmem:[#allocation32 + $0x28] sm:$0xf]
    %v10214 = vld [vmem:[#allocation32 + $0x2c] sm:$0xf]
    %v10215 = vld [vmem:[#allocation32 + $0x30] sm:$0xf]
    %v10216 = vld [vmem:[#allocation32 + $0x34] sm:$0xf]
    %v10217 = vld [vmem:[#allocation32 + $0x38] sm:$0xf]
    %v10218 = vld [vmem:[#allocation32 + $0x3c] sm:$0xf]
    %v10219 = vld [vmem:[#allocation32 + $0x40] sm:$0xf]
    %v10220 = vld [vmem:[#allocation32 + $0x44] sm:$0xf]
    %v10221 = vld [vmem:[#allocation32 + $0x48] sm:$0xf]
    %v10222 = vld [vmem:[#allocation32 + $0x4c] sm:$0xf]
    %v10223 = vld [vmem:[#allocation32 + $0x50] sm:$0xf]
    %v10224 = vld [vmem:[#allocation32 + $0x54] sm:$0xf]
    %v10225 = vld [vmem:[#allocation32 + $0x58] sm:$0xf]
    %v10226 = vld [vmem:[#allocation32 + $0x5c] sm:$0xf]
    %v10227 = vld [vmem:[#allocation32 + $0x60] sm:$0xf]
    %v10228 = vld [vmem:[#allocation32 + $0x64] sm:$0xf]
    %v10229 = vld [vmem:[#allocation32 + $0x68] sm:$0xf]
    %v10230 = vld [vmem:[#allocation32 + $0x6c] sm:$0xf]
    %v10231 = vld [vmem:[#allocation32 + $0x70] sm:$0xf]
    %v10232 = vld [vmem:[#allocation32 + $0x74] sm:$0xf]
    %v10233 = vld [vmem:[#allocation32 + $0x78] sm:$0xf]
    %v10234 = vld [vmem:[#allocation32 + $0x7c] sm:$0xf]
    %v10235 = vld [vmem:[#allocation32 + $0x80] sm:$0xf]
    %v10236 = vld [vmem:[#allocation32 + $0x84] sm:$0xf]
    %v10237 = vld [vmem:[#allocation32 + $0x88] sm:$0xf]
    %v10238 = vld [vmem:[#allocation32 + $0x8c] sm:$0xf]
    %v10239 = vld [vmem:[#allocation32 + $0x90] sm:$0xf]
    %v10240 = vld [vmem:[#allocation32 + $0x94] sm:$0xf]
    %v10241 = vld [vmem:[#allocation32 + $0x98] sm:$0xf]
    %v10242 = vld [vmem:[#allocation32 + $0x9c] sm:$0xf]
    %v10243 = vld [vmem:[#allocation32 + $0xa0] sm:$0xf]
    %v10244 = vld [vmem:[#allocation32 + $0xa4] sm:$0xf]
    %v10245 = vld [vmem:[#allocation32 + $0xa8] sm:$0xf]
    %v10246 = vld [vmem:[#allocation32 + $0xac] sm:$0xf]
    %v10247 = vld [vmem:[#allocation32 + $0xb0] sm:$0xf]
    %v10248 = vld [vmem:[#allocation32 + $0xb4] sm:$0xf]
    %v10249 = vld [vmem:[#allocation32 + $0xb8] sm:$0xf]
    %v10250 = vld [vmem:[#allocation32 + $0xbc] sm:$0xf]
    %v10251 = vld [vmem:[#allocation32 + $0xc0] sm:$0xf]
    %v10252 = vld [vmem:[#allocation32 + $0xc4] sm:$0xf]
    %v10253 = vld [vmem:[#allocation32 + $0xc8] sm:$0xf]
    %v10254 = vld [vmem:[#allocation32 + $0xcc] sm:$0xf]
    %v10255 = vld [vmem:[#allocation32 + $0xd0] sm:$0xf]
    %v10256 = vld [vmem:[#allocation32 + $0xd4] sm:$0xf]
    %v10257 = vld [vmem:[#allocation32 + $0xd8] sm:$0xf]
    %v10258 = vld [vmem:[#allocation32 + $0xdc] sm:$0xf]
    %v10259 = vld [vmem:[#allocation32 + $0xe0] sm:$0xf]
    %v10260 = vld [vmem:[#allocation32 + $0xe4] sm:$0xf]
    %v10261 = vld [vmem:[#allocation32 + $0xe8] sm:$0xf]
    %v10262 = vld [vmem:[#allocation32 + $0xec] sm:$0xf]
    %v10263 = vld [vmem:[#allocation32 + $0xf0] sm:$0xf]
    %v10264 = vld [vmem:[#allocation32 + $0xf4] sm:$0xf]
    %v10265 = vld [vmem:[#allocation32 + $0xf8] sm:$0xf]
    %v10266 = vld [vmem:[#allocation32 + $0xfc] sm:$0xf]
    %v10267 = vld [vmem:[#allocation32 + $0x100] sm:$0xf]
    %v10268 = vld [vmem:[#allocation32 + $0x104] sm:$0xf]
    %v10269 = vld [vmem:[#allocation32 + $0x108] sm:$0xf]
    %v10270 = vld [vmem:[#allocation32 + $0x10c] sm:$0xf]
    %v10271 = vld [vmem:[#allocation32 + $0x110] sm:$0xf]
    %v10272 = vld [vmem:[#allocation32 + $0x114] sm:$0xf]
    %v10273 = vld [vmem:[#allocation32 + $0x118] sm:$0xf]
    %v10274 = vld [vmem:[#allocation32 + $0x11c] sm:$0xf]
    %v10275 = vld [vmem:[#allocation32 + $0x120] sm:$0xf]
    %v10276 = vld [vmem:[#allocation32 + $0x124] sm:$0xf]
    %v10277 = vld [vmem:[#allocation32 + $0x128] sm:$0xf]
    %v10278 = vld [vmem:[#allocation32 + $0x12c] sm:$0xf]
    %v10279 = vld [vmem:[#allocation32 + $0x130] sm:$0xf]
    %v10280 = vld [vmem:[#allocation32 + $0x134] sm:$0xf]
    %v10281 = vld [vmem:[#allocation32 + $0x138] sm:$0xf]
    %v10282 = vld [vmem:[#allocation32 + $0x13c] sm:$0xf]
    %v10283 = vld [vmem:[#allocation32 + $0x140] sm:$0xf]
    %v10284 = vld [vmem:[#allocation32 + $0x144] sm:$0xf]
    %v10285 = vld [vmem:[#allocation32 + $0x148] sm:$0xf]
    %v10286 = vld [vmem:[#allocation32 + $0x14c] sm:$0xf]
    %v10287 = vld [vmem:[#allocation32 + $0x150] sm:$0xf]
    %v10288 = vld [vmem:[#allocation32 + $0x154] sm:$0xf]
    %v10289 = vld [vmem:[#allocation32 + $0x158] sm:$0xf]
    %v10290 = vld [vmem:[#allocation32 + $0x15c] sm:$0xf]
    %v10291 = vld [vmem:[#allocation32 + $0x160] sm:$0xf]
    %v10292 = vld [vmem:[#allocation32 + $0x164] sm:$0xf]
    %v10293 = vld [vmem:[#allocation32 + $0x168] sm:$0xf]
    %v10294 = vld [vmem:[#allocation32 + $0x16c] sm:$0xf]
    %v10295 = vld [vmem:[#allocation32 + $0x170] sm:$0xf]
    %v10296 = vld [vmem:[#allocation32 + $0x174] sm:$0xf]
    %v10297 = vld [vmem:[#allocation32 + $0x178] sm:$0xf]
    %v10298 = vld [vmem:[#allocation32 + $0x17c] sm:$0xf]
    %v10299 = vld [vmem:[#allocation32 + $0x180] sm:$0xf]
    %v10300 = vld [vmem:[#allocation32 + $0x184] sm:$0xf]
    %v10301 = vld [vmem:[#allocation32 + $0x188] sm:$0xf]
    %v10302 = vld [vmem:[#allocation32 + $0x18c] sm:$0xf]
    %v10303 = vld [vmem:[#allocation32 + $0x190] sm:$0xf]
    %v10304 = vld [vmem:[#allocation32 + $0x194] sm:$0xf]
    %v10305 = vld [vmem:[#allocation32 + $0x198] sm:$0xf]
    %v10306 = vld [vmem:[#allocation32 + $0x19c] sm:$0xf]
    %v10307 = vld [vmem:[#allocation32 + $0x1a0] sm:$0xf]
    %v10308 = vld [vmem:[#allocation32 + $0x1a4] sm:$0xf]
    %v10309 = vld [vmem:[#allocation32 + $0x1a8] sm:$0xf]
    %v10310 = vld [vmem:[#allocation32 + $0x1ac] sm:$0xf]
    %v10311 = vld [vmem:[#allocation32 + $0x1b0] sm:$0xf]
    %v10312 = vld [vmem:[#allocation32 + $0x1b4] sm:$0xf]
    %v10313 = vld [vmem:[#allocation32 + $0x1b8] sm:$0xf]
    %v10314 = vld [vmem:[#allocation32 + $0x1bc] sm:$0xf]
    %v10315 = vld [vmem:[#allocation32 + $0x1c0] sm:$0xf]
    %v10316 = vld [vmem:[#allocation32 + $0x1c4] sm:$0xf]
    %v10317 = vld [vmem:[#allocation32 + $0x1c8] sm:$0xf]
    %v10318 = vld [vmem:[#allocation32 + $0x1cc] sm:$0xf]
    %v10319 = vld [vmem:[#allocation32 + $0x1d0] sm:$0xf]
    %v10320 = vld [vmem:[#allocation32 + $0x1d4] sm:$0xf]
    %v10321 = vld [vmem:[#allocation32 + $0x1d8] sm:$0xf]
    %v10322 = vld [vmem:[#allocation32 + $0x1dc] sm:$0xf]
    %v10323 = vld [vmem:[#allocation32 + $0x1e0] sm:$0xf]
    %v10324 = vld [vmem:[#allocation32 + $0x1e4] sm:$0xf]
    %v10325 = vld [vmem:[#allocation32 + $0x1e8] sm:$0xf]
    %v10326 = vld [vmem:[#allocation32 + $0x1ec] sm:$0xf]
    %v10327 = vld [vmem:[#allocation32 + $0x1f0] sm:$0xf]
    %v10328 = vld [vmem:[#allocation32 + $0x1f4] sm:$0xf]
    %v10329 = vld [vmem:[#allocation32 + $0x1f8] sm:$0xf]
    %v10330 = vld [vmem:[#allocation32 + $0x1fc] sm:$0xf]
    %v10459 = vunpack.c.l.b16 %v10203
    %v10460 = vunpack.c.l.b16 %v10204
    %v10461 = vunpack.c.l.b16 %v10205
    %v10462 = vunpack.c.l.b16 %v10206
    %v10463 = vunpack.c.l.b16 %v10207
    %v10464 = vunpack.c.l.b16 %v10208
    %v10465 = vunpack.c.l.b16 %v10209
    %v10466 = vunpack.c.l.b16 %v10210
    %v10467 = vunpack.c.l.b16 %v10211
    %v10468 = vunpack.c.l.b16 %v10212
    %v10469 = vunpack.c.l.b16 %v10213
    %v10470 = vunpack.c.l.b16 %v10214
    %v10471 = vunpack.c.l.b16 %v10215
    %v10472 = vunpack.c.l.b16 %v10216
    %v10473 = vunpack.c.l.b16 %v10217
    %v10474 = vunpack.c.l.b16 %v10218
    %v10475 = vunpack.c.l.b16 %v10219
    %v10476 = vunpack.c.l.b16 %v10220
    %v10477 = vunpack.c.l.b16 %v10221
    %v10478 = vunpack.c.l.b16 %v10222
    %v10479 = vunpack.c.l.b16 %v10223
    %v10480 = vunpack.c.l.b16 %v10224
    %v10481 = vunpack.c.l.b16 %v10225
    %v10482 = vunpack.c.l.b16 %v10226
    %v10483 = vunpack.c.l.b16 %v10227
    %v10484 = vunpack.c.l.b16 %v10228
    %v10485 = vunpack.c.l.b16 %v10229
    %v10486 = vunpack.c.l.b16 %v10230
    %v10487 = vunpack.c.l.b16 %v10231
    %v10488 = vunpack.c.l.b16 %v10232
    %v10489 = vunpack.c.l.b16 %v10233
    %v10490 = vunpack.c.l.b16 %v10234
    %v10491 = vunpack.c.l.b16 %v10235
    %v10492 = vunpack.c.l.b16 %v10236
    %v10493 = vunpack.c.l.b16 %v10237
    %v10494 = vunpack.c.l.b16 %v10238
    %v10495 = vunpack.c.l.b16 %v10239
    %v10496 = vunpack.c.l.b16 %v10240
    %v10497 = vunpack.c.l.b16 %v10241
    %v10498 = vunpack.c.l.b16 %v10242
    %v10499 = vunpack.c.l.b16 %v10243
    %v10500 = vunpack.c.l.b16 %v10244
    %v10501 = vunpack.c.l.b16 %v10245
    %v10502 = vunpack.c.l.b16 %v10246
    %v10503 = vunpack.c.l.b16 %v10247
    %v10504 = vunpack.c.l.b16 %v10248
    %v10505 = vunpack.c.l.b16 %v10249
    %v10506 = vunpack.c.l.b16 %v10250
    %v10507 = vunpack.c.l.b16 %v10251
    %v10508 = vunpack.c.l.b16 %v10252
    %v10509 = vunpack.c.l.b16 %v10253
    %v10510 = vunpack.c.l.b16 %v10254
    %v10511 = vunpack.c.l.b16 %v10255
    %v10512 = vunpack.c.l.b16 %v10256
    %v10513 = vunpack.c.l.b16 %v10257
    %v10514 = vunpack.c.l.b16 %v10258
    %v10515 = vunpack.c.l.b16 %v10259
    %v10516 = vunpack.c.l.b16 %v10260
    %v10517 = vunpack.c.l.b16 %v10261
    %v10518 = vunpack.c.l.b16 %v10262
    %v10519 = vunpack.c.l.b16 %v10263
    %v10520 = vunpack.c.l.b16 %v10264
    %v10521 = vunpack.c.l.b16 %v10265
    %v10522 = vunpack.c.l.b16 %v10266
    %v10523 = vunpack.c.l.b16 %v10267
    %v10524 = vunpack.c.l.b16 %v10268
    %v10525 = vunpack.c.l.b16 %v10269
    %v10526 = vunpack.c.l.b16 %v10270
    %v10527 = vunpack.c.l.b16 %v10271
    %v10528 = vunpack.c.l.b16 %v10272
    %v10529 = vunpack.c.l.b16 %v10273
    %v10530 = vunpack.c.l.b16 %v10274
    %v10531 = vunpack.c.l.b16 %v10275
    %v10532 = vunpack.c.l.b16 %v10276
    %v10533 = vunpack.c.l.b16 %v10277
    %v10534 = vunpack.c.l.b16 %v10278
    %v10535 = vunpack.c.l.b16 %v10279
    %v10536 = vunpack.c.l.b16 %v10280
    %v10537 = vunpack.c.l.b16 %v10281
    %v10538 = vunpack.c.l.b16 %v10282
    %v10539 = vunpack.c.l.b16 %v10283
    %v10540 = vunpack.c.l.b16 %v10284
    %v10541 = vunpack.c.l.b16 %v10285
    %v10542 = vunpack.c.l.b16 %v10286
    %v10543 = vunpack.c.l.b16 %v10287
    %v10544 = vunpack.c.l.b16 %v10288
    %v10545 = vunpack.c.l.b16 %v10289
    %v10546 = vunpack.c.l.b16 %v10290
    %v10547 = vunpack.c.l.b16 %v10291
    %v10548 = vunpack.c.l.b16 %v10292
    %v10549 = vunpack.c.l.b16 %v10293
    %v10550 = vunpack.c.l.b16 %v10294
    %v10551 = vunpack.c.l.b16 %v10295
    %v10552 = vunpack.c.l.b16 %v10296
    %v10553 = vunpack.c.l.b16 %v10297
    %v10554 = vunpack.c.l.b16 %v10298
    %v10555 = vunpack.c.l.b16 %v10299
    %v10556 = vunpack.c.l.b16 %v10300
    %v10557 = vunpack.c.l.b16 %v10301
    %v10558 = vunpack.c.l.b16 %v10302
    %v10559 = vunpack.c.l.b16 %v10303
    %v10560 = vunpack.c.l.b16 %v10304
    %v10561 = vunpack.c.l.b16 %v10305
    %v10562 = vunpack.c.l.b16 %v10306
    %v10563 = vunpack.c.l.b16 %v10307
    %v10564 = vunpack.c.l.b16 %v10308
    %v10565 = vunpack.c.l.b16 %v10309
    %v10566 = vunpack.c.l.b16 %v10310
    %v10567 = vunpack.c.l.b16 %v10311
    %v10568 = vunpack.c.l.b16 %v10312
    %v10569 = vunpack.c.l.b16 %v10313
    %v10570 = vunpack.c.l.b16 %v10314
    %v10571 = vunpack.c.l.b16 %v10315
    %v10572 = vunpack.c.l.b16 %v10316
    %v10573 = vunpack.c.l.b16 %v10317
    %v10574 = vunpack.c.l.b16 %v10318
    %v10575 = vunpack.c.l.b16 %v10319
    %v10576 = vunpack.c.l.b16 %v10320
    %v10577 = vunpack.c.l.b16 %v10321
    %v10578 = vunpack.c.l.b16 %v10322
    %v10579 = vunpack.c.l.b16 %v10323
    %v10580 = vunpack.c.l.b16 %v10324
    %v10581 = vunpack.c.l.b16 %v10325
    %v10582 = vunpack.c.l.b16 %v10326
    %v10583 = vunpack.c.l.b16 %v10327
    %v10584 = vunpack.c.l.b16 %v10328
    %v10585 = vunpack.c.l.b16 %v10329
    %v10586 = vunpack.c.l.b16 %v10330
    %v10587 = vpack.c.b16 %v10460, %v10459
    %v10588 = vpack.c.b16 %v10462, %v10461
    %v10589 = vpack.c.b16 %v10464, %v10463
    %v10590 = vpack.c.b16 %v10466, %v10465
    %v10591 = vpack.c.b16 %v10468, %v10467
    %v10592 = vpack.c.b16 %v10470, %v10469
    %v10593 = vpack.c.b16 %v10472, %v10471
    %v10594 = vpack.c.b16 %v10474, %v10473
    %v10595 = vpack.c.b16 %v10476, %v10475
    %v10596 = vpack.c.b16 %v10478, %v10477
    %v10597 = vpack.c.b16 %v10480, %v10479
    %v10598 = vpack.c.b16 %v10482, %v10481
    %v10599 = vpack.c.b16 %v10484, %v10483
    %v10600 = vpack.c.b16 %v10486, %v10485
    %v10601 = vpack.c.b16 %v10488, %v10487
    %v10602 = vpack.c.b16 %v10490, %v10489
    %v10603 = vpack.c.b16 %v10492, %v10491
    %v10604 = vpack.c.b16 %v10494, %v10493
    %v10605 = vpack.c.b16 %v10496, %v10495
    %v10606 = vpack.c.b16 %v10498, %v10497
    %v10607 = vpack.c.b16 %v10500, %v10499
    %v10608 = vpack.c.b16 %v10502, %v10501
    %v10609 = vpack.c.b16 %v10504, %v10503
    %v10610 = vpack.c.b16 %v10506, %v10505
    %v10611 = vpack.c.b16 %v10508, %v10507
    %v10612 = vpack.c.b16 %v10510, %v10509
    %v10613 = vpack.c.b16 %v10512, %v10511
    %v10614 = vpack.c.b16 %v10514, %v10513
    %v10615 = vpack.c.b16 %v10516, %v10515
    %v10616 = vpack.c.b16 %v10518, %v10517
    %v10617 = vpack.c.b16 %v10520, %v10519
    %v10618 = vpack.c.b16 %v10522, %v10521
    %v10619 = vpack.c.b16 %v10524, %v10523
    %v10620 = vpack.c.b16 %v10526, %v10525
    %v10621 = vpack.c.b16 %v10528, %v10527
    %v10622 = vpack.c.b16 %v10530, %v10529
    %v10623 = vpack.c.b16 %v10532, %v10531
    %v10624 = vpack.c.b16 %v10534, %v10533
    %v10625 = vpack.c.b16 %v10536, %v10535
    %v10626 = vpack.c.b16 %v10538, %v10537
    %v10627 = vpack.c.b16 %v10540, %v10539
    %v10628 = vpack.c.b16 %v10542, %v10541
    %v10629 = vpack.c.b16 %v10544, %v10543
    %v10630 = vpack.c.b16 %v10546, %v10545
    %v10631 = vpack.c.b16 %v10548, %v10547
    %v10632 = vpack.c.b16 %v10550, %v10549
    %v10633 = vpack.c.b16 %v10552, %v10551
    %v10634 = vpack.c.b16 %v10554, %v10553
    %v10635 = vpack.c.b16 %v10556, %v10555
    %v10636 = vpack.c.b16 %v10558, %v10557
    %v10637 = vpack.c.b16 %v10560, %v10559
    %v10638 = vpack.c.b16 %v10562, %v10561
    %v10639 = vpack.c.b16 %v10564, %v10563
    %v10640 = vpack.c.b16 %v10566, %v10565
    %v10641 = vpack.c.b16 %v10568, %v10567
    %v10642 = vpack.c.b16 %v10570, %v10569
    %v10643 = vpack.c.b16 %v10572, %v10571
    %v10644 = vpack.c.b16 %v10574, %v10573
    %v10645 = vpack.c.b16 %v10576, %v10575
    %v10646 = vpack.c.b16 %v10578, %v10577
    %v10647 = vpack.c.b16 %v10580, %v10579
    %v10648 = vpack.c.b16 %v10582, %v10581
    %v10649 = vpack.c.b16 %v10584, %v10583
    %v10650 = vpack.c.b16 %v10586, %v10585
    %10715 = vmatprep.subr.bf16.mxu0 0
    %10716 = vmatpush1.bf16.msra.mxu0 %v10594
    %10717 = vmatprep.subr.bf16.mxu0 0
    %10718 = vmatpush1.bf16.msra.mxu0 %v10593
    %10719 = vmatprep.subr.bf16.mxu0 0
    %10720 = vmatpush1.bf16.msra.mxu0 %v10592
    %10721 = vmatprep.subr.bf16.mxu0 0
    %10722 = vmatpush1.bf16.msra.mxu0 %v10591
    %10723 = vmatprep.subr.bf16.mxu0 0
    %10724 = vmatpush1.bf16.msra.mxu0 %v10590
    %10725 = vmatprep.subr.bf16.mxu0 0
    %10726 = vmatpush1.bf16.msra.mxu0 %v10589
    %10727 = vmatprep.subr.bf16.mxu0 0
    %10728 = vmatpush1.bf16.msra.mxu0 %v10588
    %10729 = vmatprep.subr.bf16.mxu0 0
    %10730 = vmatpush1.bf16.msra.mxu0 %v10587
    %10731 = vmatprep.subr.bf16.mxu0 0
    %10732 = vmatpush2.bf16.msra.mxu0 %v10602
    %10733 = vmatprep.subr.bf16.mxu0 0
    %10734 = vmatpush2.bf16.msra.mxu0 %v10601
    %10735 = vmatprep.subr.bf16.mxu0 0
    %10736 = vmatpush2.bf16.msra.mxu0 %v10600
    %10737 = vmatprep.subr.bf16.mxu0 0
    %10738 = vmatpush2.bf16.msra.mxu0 %v10599
    %10739 = vmatprep.subr.bf16.mxu0 0
    %10740 = vmatpush2.bf16.msra.mxu0 %v10598
    %10741 = vmatprep.subr.bf16.mxu0 0
    %10742 = vmatpush2.bf16.msra.mxu0 %v10597
    %10743 = vmatprep.subr.bf16.mxu0 0
    %10744 = vmatpush2.bf16.msra.mxu0 %v10596
    %10745 = vmatprep.subr.bf16.mxu0 0
    %10746 = vmatpush2.bf16.msra.mxu0 %v10595
    %10747 = vmatprep.mubr.bf16.mxu0 %v10196
    %10748 = vmatmul.mubr.bf16.gmra.mxu0 %v10195
    %v10749 = vpop.f32.mrf.mxu0
    %v10750 = vadd.f32 0.0, %v10749
    %v10751 = vpop.f32.mrf.mxu0
    %v10752 = vpop.f32.mrf.mxu0
    %v10753 = vadd.f32 0.0, %v10752
    %v10754 = vpop.f32.mrf.mxu0
    %10755 = vdwg.mxu0
    %10756 = vmatprep.subr.bf16.mxu0 0
    %10757 = vmatpush1.bf16.msra.mxu0 %v10610
    %10758 = vmatprep.subr.bf16.mxu0 0
    %10759 = vmatpush1.bf16.msra.mxu0 %v10609
    %10760 = vmatprep.subr.bf16.mxu0 0
    %10761 = vmatpush1.bf16.msra.mxu0 %v10608
    %10762 = vmatprep.subr.bf16.mxu0 0
    %10763 = vmatpush1.bf16.msra.mxu0 %v10607
    %10764 = vmatprep.subr.bf16.mxu0 0
    %10765 = vmatpush1.bf16.msra.mxu0 %v10606
    %10766 = vmatprep.subr.bf16.mxu0 0
    %10767 = vmatpush1.bf16.msra.mxu0 %v10605
    %10768 = vmatprep.subr.bf16.mxu0 0
    %10769 = vmatpush1.bf16.msra.mxu0 %v10604
    %10770 = vmatprep.subr.bf16.mxu0 0
    %10771 = vmatpush1.bf16.msra.mxu0 %v10603
    %10772 = vmatprep.subr.bf16.mxu0 0
    %10773 = vmatpush2.bf16.msra.mxu0 %v10618
    %10774 = vmatprep.subr.bf16.mxu0 0
    %10775 = vmatpush2.bf16.msra.mxu0 %v10617
    %10776 = vmatprep.subr.bf16.mxu0 0
    %10777 = vmatpush2.bf16.msra.mxu0 %v10616
    %10778 = vmatprep.subr.bf16.mxu0 0
    %10779 = vmatpush2.bf16.msra.mxu0 %v10615
    %10780 = vmatprep.subr.bf16.mxu0 0
    %10781 = vmatpush2.bf16.msra.mxu0 %v10614
    %10782 = vmatprep.subr.bf16.mxu0 0
    %10783 = vmatpush2.bf16.msra.mxu0 %v10613
    %10784 = vmatprep.subr.bf16.mxu0 0
    %10785 = vmatpush2.bf16.msra.mxu0 %v10612
    %10786 = vmatprep.subr.bf16.mxu0 0
    %10787 = vmatpush2.bf16.msra.mxu0 %v10611
    %10788 = vmatprep.mubr.bf16.mxu0 %v10198
    %10789 = vmatmul.mubr.bf16.gmra.mxu0 %v10197
    %v10790 = vpop.f32.mrf.mxu0
    %v10791 = vadd.f32 %v10750, %v10790
    %v10792 = vpop.f32.mrf.mxu0
    %v10793 = vpop.f32.mrf.mxu0
    %v10794 = vadd.f32 %v10753, %v10793
    %v10795 = vpop.f32.mrf.mxu0
    %10796 = vdwg.mxu0
    %10797 = vmatprep.subr.bf16.mxu0 0
    %10798 = vmatpush1.bf16.msra.mxu0 %v10626
    %10799 = vmatprep.subr.bf16.mxu0 0
    %10800 = vmatpush1.bf16.msra.mxu0 %v10625
    %10801 = vmatprep.subr.bf16.mxu0 0
    %10802 = vmatpush1.bf16.msra.mxu0 %v10624
    %10803 = vmatprep.subr.bf16.mxu0 0
    %10804 = vmatpush1.bf16.msra.mxu0 %v10623
    %10805 = vmatprep.subr.bf16.mxu0 0
    %10806 = vmatpush1.bf16.msra.mxu0 %v10622
    %10807 = vmatprep.subr.bf16.mxu0 0
    %10808 = vmatpush1.bf16.msra.mxu0 %v10621
    %10809 = vmatprep.subr.bf16.mxu0 0
    %10810 = vmatpush1.bf16.msra.mxu0 %v10620
    %10811 = vmatprep.subr.bf16.mxu0 0
    %10812 = vmatpush1.bf16.msra.mxu0 %v10619
    %10813 = vmatprep.subr.bf16.mxu0 0
    %10814 = vmatpush2.bf16.msra.mxu0 %v10634
    %10815 = vmatprep.subr.bf16.mxu0 0
    %10816 = vmatpush2.bf16.msra.mxu0 %v10633
    %10817 = vmatprep.subr.bf16.mxu0 0
    %10818 = vmatpush2.bf16.msra.mxu0 %v10632
    %10819 = vmatprep.subr.bf16.mxu0 0
    %10820 = vmatpush2.bf16.msra.mxu0 %v10631
    %10821 = vmatprep.subr.bf16.mxu0 0
    %10822 = vmatpush2.bf16.msra.mxu0 %v10630
    %10823 = vmatprep.subr.bf16.mxu0 0
    %10824 = vmatpush2.bf16.msra.mxu0 %v10629
    %10825 = vmatprep.subr.bf16.mxu0 0
    %10826 = vmatpush2.bf16.msra.mxu0 %v10628
    %10827 = vmatprep.subr.bf16.mxu0 0
    %10828 = vmatpush2.bf16.msra.mxu0 %v10627
    %10829 = vmatprep.mubr.bf16.mxu0 %v10200
    %10830 = vmatmul.mubr.bf16.gmra.mxu0 %v10199
    %v10831 = vpop.f32.mrf.mxu0
    %v10832 = vadd.f32 %v10791, %v10831
    %v10833 = vpop.f32.mrf.mxu0
    %v10834 = vpop.f32.mrf.mxu0
    %v10835 = vadd.f32 %v10794, %v10834
    %v10836 = vpop.f32.mrf.mxu0
    %10837 = vdwg.mxu0
    %10838 = vmatprep.subr.bf16.mxu0 0
    %10839 = vmatpush1.bf16.msra.mxu0 %v10642
    %10840 = vmatprep.subr.bf16.mxu0 0
    %10841 = vmatpush1.bf16.msra.mxu0 %v10641
    %10842 = vmatprep.subr.bf16.mxu0 0
    %10843 = vmatpush1.bf16.msra.mxu0 %v10640
    %10844 = vmatprep.subr.bf16.mxu0 0
    %10845 = vmatpush1.bf16.msra.mxu0 %v10639
    %10846 = vmatprep.subr.bf16.mxu0 0
    %10847 = vmatpush1.bf16.msra.mxu0 %v10638
    %10848 = vmatprep.subr.bf16.mxu0 0
    %10849 = vmatpush1.bf16.msra.mxu0 %v10637
    %10850 = vmatprep.subr.bf16.mxu0 0
    %10851 = vmatpush1.bf16.msra.mxu0 %v10636
    %10852 = vmatprep.subr.bf16.mxu0 0
    %10853 = vmatpush1.bf16.msra.mxu0 %v10635
    %10854 = vmatprep.subr.bf16.mxu0 0
    %10855 = vmatpush2.bf16.msra.mxu0 %v10650
    %10856 = vmatprep.subr.bf16.mxu0 0
    %10857 = vmatpush2.bf16.msra.mxu0 %v10649
    %10858 = vmatprep.subr.bf16.mxu0 0
    %10859 = vmatpush2.bf16.msra.mxu0 %v10648
    %10860 = vmatprep.subr.bf16.mxu0 0
    %10861 = vmatpush2.bf16.msra.mxu0 %v10647
    %10862 = vmatprep.subr.bf16.mxu0 0
    %10863 = vmatpush2.bf16.msra.mxu0 %v10646
    %10864 = vmatprep.subr.bf16.mxu0 0
    %10865 = vmatpush2.bf16.msra.mxu0 %v10645
    %10866 = vmatprep.subr.bf16.mxu0 0
    %10867 = vmatpush2.bf16.msra.mxu0 %v10644
    %10868 = vmatprep.subr.bf16.mxu0 0
    %10869 = vmatpush2.bf16.msra.mxu0 %v10643
    %10870 = vmatprep.mubr.bf16.mxu0 %v10202
    %10871 = vmatmul.mubr.bf16.gmra.mxu0 %v10201
    %v10872 = vpop.f32.mrf.mxu0
    %v10873 = vadd.f32 %v10832, %v10872
    %v10874 = vpop.f32.mrf.mxu0
    %v10875 = vpop.f32.mrf.mxu0
    %v10876 = vadd.f32 %v10835, %v10875
    %v10877 = vpop.f32.mrf.mxu0
    %10878 = vdwg.mxu0
    %v10895 = vunpack.c.l.b16 %v10179
    %v10896 = vunpack.c.l.b16 %v10180
    %v10897 = vunpack.c.l.b16 %v10181
    %v10898 = vunpack.c.l.b16 %v10182
    %v10899 = vunpack.c.l.b16 %v10183
    %v10900 = vunpack.c.l.b16 %v10184
    %v10901 = vunpack.c.l.b16 %v10185
    %v10902 = vunpack.c.l.b16 %v10186
    %v10903 = vunpack.c.l.b16 %v10187
    %v10904 = vunpack.c.l.b16 %v10188
    %v10905 = vunpack.c.l.b16 %v10189
    %v10906 = vunpack.c.l.b16 %v10190
    %v10907 = vunpack.c.l.b16 %v10191
    %v10908 = vunpack.c.l.b16 %v10192
    %v10909 = vunpack.c.l.b16 %v10193
    %v10910 = vunpack.c.l.b16 %v10194
    %v10911 = vpack.c.b16 %v10896, %v10895
    %v10912 = vpack.c.b16 %v10898, %v10897
    %v10913 = vpack.c.b16 %v10900, %v10899
    %v10914 = vpack.c.b16 %v10902, %v10901
    %v10915 = vpack.c.b16 %v10904, %v10903
    %v10916 = vpack.c.b16 %v10906, %v10905
    %v10917 = vpack.c.b16 %v10908, %v10907
    %v10918 = vpack.c.b16 %v10910, %v10909
    %10927 = vmatprep.subr.bf16.mxu0 0
    %10928 = vmatpush1.bf16.msra.mxu0 %v10918
    %10929 = vmatprep.subr.bf16.mxu0 0
    %10930 = vmatpush1.bf16.msra.mxu0 %v10917
    %10931 = vmatprep.subr.bf16.mxu0 0
    %10932 = vmatpush1.bf16.msra.mxu0 %v10916
    %10933 = vmatprep.subr.bf16.mxu0 0
    %10934 = vmatpush1.bf16.msra.mxu0 %v10915
    %10935 = vmatprep.subr.bf16.mxu0 0
    %10936 = vmatpush1.bf16.msra.mxu0 %v10914
    %10937 = vmatprep.subr.bf16.mxu0 0
    %10938 = vmatpush1.bf16.msra.mxu0 %v10913
    %10939 = vmatprep.subr.bf16.mxu0 0
    %10940 = vmatpush1.bf16.msra.mxu0 %v10912
    %10941 = vmatprep.subr.bf16.mxu0 0
    %10942 = vmatpush1.bf16.msra.mxu0 %v10911
    %10943 = vmatprep.subr.bf16.mxu0 0
    %10944 = vmatpush2.bf16.msra.mxu0 0
    %10945 = vmatprep.subr.bf16.mxu0 0
    %10946 = vmatpush2.bf16.msra.mxu0 0
    %10947 = vmatprep.subr.bf16.mxu0 0
    %10948 = vmatpush2.bf16.msra.mxu0 0
    %10949 = vmatprep.subr.bf16.mxu0 0
    %10950 = vmatpush2.bf16.msra.mxu0 0
    %10951 = vmatprep.subr.bf16.mxu0 0
    %10952 = vmatpush2.bf16.msra.mxu0 0
    %10953 = vmatprep.subr.bf16.mxu0 0
    %10954 = vmatpush2.bf16.msra.mxu0 0
    %10955 = vmatprep.subr.bf16.mxu0 0
    %10956 = vmatpush2.bf16.msra.mxu0 0
    %10957 = vmatprep.subr.bf16.mxu0 0
    %10958 = vmatpush2.bf16.msra.mxu0 0
    %10959 = vmatprep.mubr.bf16.mxu0 0
    %10960 = vmatmul.mubr.bf16.gmra.mxu0 %v10178
    %v10961 = vpop.f32.mrf.mxu0
    %v10962 = vadd.f32 %v10873, %v10961
    %v10963 = vpop.f32.mrf.mxu0
    %v10964 = vpop.f32.mrf.mxu0
    %v10965 = vadd.f32 %v10876, %v10964
    %v10966 = vpop.f32.mrf.mxu0
    %10967 = vdwg.mxu0
    %v10968 = vld [vmem:[#allocation34] sm:$0x1]
    %v10970 = vlaneseq
    %v10971 = vshrl.u32 %v10970, 7
    %v10972 = vsub.s32 0, %v10971
    %v10973 = vrot.slane %v10968, %v10972
    %v10975 = vadd.f32 %v10962, %v10973
    %v10976 = vadd.f32 %v10965, %v10973
    %vm10977 = vcmp.ge.f32.partialorder %v10975, 0.0
    %vm10978 = vcmp.ge.f32.partialorder %v10976, 0.0
    %v10979 = vmul.f32 %v10975, 0.01
    %v10980 = vmul.f32 %v10976, 0.01
    %v10981 = vsel %vm10977, %v10975, %v10979
    %v10982 = vsel %vm10978, %v10976, %v10980
    %v10983 = vpack.c.bf16 %v10982, %v10981
    %v10984 = vld [vmem:[#allocation35] sm:$0xf]
    %v10985 = vld [vmem:[#allocation35 + $0x4] sm:$0xf]
    %v10986 = vld [vmem:[#allocation35 + $0x8] sm:$0xf]
    %v10987 = vld [vmem:[#allocation35 + $0xc] sm:$0xf]
    %v10988 = vld [vmem:[#allocation35 + $0x10] sm:$0xf]
    %v10989 = vld [vmem:[#allocation35 + $0x14] sm:$0xf]
    %v10990 = vld [vmem:[#allocation35 + $0x18] sm:$0xf]
    %v10991 = vld [vmem:[#allocation35 + $0x1c] sm:$0xf]
    %v10992 = vld [vmem:[#allocation35 + $0x20] sm:$0xf]
    %v10993 = vld [vmem:[#allocation35 + $0x24] sm:$0xf]
    %v10994 = vld [vmem:[#allocation35 + $0x28] sm:$0xf]
    %v10995 = vld [vmem:[#allocation35 + $0x2c] sm:$0xf]
    %v10996 = vld [vmem:[#allocation35 + $0x30] sm:$0xf]
    %v10997 = vld [vmem:[#allocation35 + $0x34] sm:$0xf]
    %v10998 = vld [vmem:[#allocation35 + $0x38] sm:$0xf]
    %v10999 = vld [vmem:[#allocation35 + $0x3c] sm:$0xf]
    %v11000 = vld [vmem:[#allocation37] sm:$0x1]
    %v11002 = vlaneseq
    %v11003 = vshrl.u32 %v11002, 7
    %v11004 = vsub.s32 0, %v11003
    %v11005 = vrot.slane %v11000, %v11004
    %v11023 = vunpack.c.l.b16 %v10984
    %v11024 = vunpack.c.l.b16 %v10985
    %v11025 = vunpack.c.l.b16 %v10986
    %v11026 = vunpack.c.l.b16 %v10987
    %v11027 = vunpack.c.l.b16 %v10988
    %v11028 = vunpack.c.l.b16 %v10989
    %v11029 = vunpack.c.l.b16 %v10990
    %v11030 = vunpack.c.l.b16 %v10991
    %v11031 = vunpack.c.l.b16 %v10992
    %v11032 = vunpack.c.l.b16 %v10993
    %v11033 = vunpack.c.l.b16 %v10994
    %v11034 = vunpack.c.l.b16 %v10995
    %v11035 = vunpack.c.l.b16 %v10996
    %v11036 = vunpack.c.l.b16 %v10997
    %v11037 = vunpack.c.l.b16 %v10998
    %v11038 = vunpack.c.l.b16 %v10999
    %v11039 = vpack.c.b16 %v11024, %v11023
    %v11040 = vpack.c.b16 %v11026, %v11025
    %v11041 = vpack.c.b16 %v11028, %v11027
    %v11042 = vpack.c.b16 %v11030, %v11029
    %v11043 = vpack.c.b16 %v11032, %v11031
    %v11044 = vpack.c.b16 %v11034, %v11033
    %v11045 = vpack.c.b16 %v11036, %v11035
    %v11046 = vpack.c.b16 %v11038, %v11037
    %11055 = vmatprep.subr.bf16.mxu0 0
    %11056 = vmatpush1.bf16.msra.mxu0 %v11046
    %11057 = vmatprep.subr.bf16.mxu0 0
    %11058 = vmatpush1.bf16.msra.mxu0 %v11045
    %11059 = vmatprep.subr.bf16.mxu0 0
    %11060 = vmatpush1.bf16.msra.mxu0 %v11044
    %11061 = vmatprep.subr.bf16.mxu0 0
    %11062 = vmatpush1.bf16.msra.mxu0 %v11043
    %11063 = vmatprep.subr.bf16.mxu0 0
    %11064 = vmatpush1.bf16.msra.mxu0 %v11042
    %11065 = vmatprep.subr.bf16.mxu0 0
    %11066 = vmatpush1.bf16.msra.mxu0 %v11041
    %11067 = vmatprep.subr.bf16.mxu0 0
    %11068 = vmatpush1.bf16.msra.mxu0 %v11040
    %11069 = vmatprep.subr.bf16.mxu0 0
    %11070 = vmatpush1.bf16.msra.mxu0 %v11039
    %11071 = vmatprep.subr.bf16.mxu0 0
    %11072 = vmatpush2.bf16.msra.mxu0 0
    %11073 = vmatprep.subr.bf16.mxu0 0
    %11074 = vmatpush2.bf16.msra.mxu0 0
    %11075 = vmatprep.subr.bf16.mxu0 0
    %11076 = vmatpush2.bf16.msra.mxu0 0
    %11077 = vmatprep.subr.bf16.mxu0 0
    %11078 = vmatpush2.bf16.msra.mxu0 0
    %11079 = vmatprep.subr.bf16.mxu0 0
    %11080 = vmatpush2.bf16.msra.mxu0 0
    %11081 = vmatprep.subr.bf16.mxu0 0
    %11082 = vmatpush2.bf16.msra.mxu0 0
    %11083 = vmatprep.subr.bf16.mxu0 0
    %11084 = vmatpush2.bf16.msra.mxu0 0
    %11085 = vmatprep.subr.bf16.mxu0 0
    %11086 = vmatpush2.bf16.msra.mxu0 0
    %11087 = vmatprep.mubr.bf16.mxu0 0
    %11088 = vmatmul.mubr.bf16.gmra.mxu0 %v10983
    %v11089 = vpop.f32.mrf.mxu0
    %v11090 = vadd.f32 %v11005, %v11089
    %v11091 = vpop.f32.mrf.mxu0
    %v11092 = vpop.f32.mrf.mxu0
    %v11093 = vadd.f32 %v11005, %v11092
    %v11094 = vpop.f32.mrf.mxu0
    %11095 = vdwg.mxu0
    %11096 = vst [vmem:[#allocation38] sm:$0xff] %v11090
    %11097 = vst [vmem:[#allocation38 + $0x8] sm:$0xff] %v11093
    // Predicated region
    $region186: #{tpu_custom_call.1} parent=1 // pred_check
      _
    $region187: #{tpu_custom_call.1} parent=1 // pred_check_branch
      %11099 = sbr.rel (0) target = $region189
    $region188: #{tpu_custom_call.1} parent=1 // pred_region
      %s11101 = ssub.s32 256, 256
      %11102 = vsyncadd [#allocation4], %s11101
      %s11103 = sshll.u32 [#allocation38], 4
      %s11104 = int_to_ptr.vmem [resolvable:$true] %s11103
      %11109 = dma.vmem_to_hbm [thread:$0]  %s11104, 256, %s23, [#allocation4], 128, 128, 8
    $region189: #{tpu_custom_call.1} parent=1 // pred_fallthru
      _
    // Predicated region
    $region190: #{tpu_custom_call.1} parent=1 // pred_check
      _
    $region191: #{tpu_custom_call.1} parent=1 // pred_check_branch
      %11111 = sbr.rel (0) target = $region193
    $region192: #{tpu_custom_call.1} parent=1 // pred_region
      %11112 = dma.done [#allocation4], 256
    $region193: #{tpu_custom_call.1} parent=1 // pred_fallthru
      _
    %11113 = vsyncpa [#allocation3], 1
    %11114 = vsyncpa [#allocation6], 1
    %11115 = vsyncpa [#allocation9], 1
    %11116 = vsyncpa [#allocation12], 1
    %11117 = vsyncpa [#allocation15], 1
    %11118 = vsyncpa [#allocation18], 1
    %11119 = vsyncpa [#allocation21], 1
    %11120 = vsyncpa [#allocation24], 1
    %11121 = vsyncpa [#allocation27], 1
    %11122 = vsyncpa [#allocation30], 1
    %11123 = vsyncpa [#allocation33], 1
    %11124 = vsyncpa [#allocation36], 1
    %11125 = vsyncpa [#allocation4], 1

</llo_original>
